<compile_context>
chip_gen: v7x
topology: tpu7x:2x2x1
jax: 0.10.0
libtpu: 0.0.40
codegen_flags: <defaults>
</compile_context>

<pallas_src>
import jax
import jax.numpy as jnp
from jax.experimental import pallas as pl
from jax.experimental.pallas import tpu as pltpu


CPAD = 128           # lane-dense channel padding for conv outputs
K1_PAD = 128         # conv1 patch feature dim padded 75 -> 128


# ---------------------------------------------------------------------------
# Pallas kernels (compute)
# ---------------------------------------------------------------------------

def _conv_pool_relu_kernel(p_ref, w_ref, b_ref, o_ref):
    # p: (4, tm, K)  -- the 4 members of each 2x2 pool window, im2col'd
    # w: (K, 128) bf16, b: (1, 128) f32   ->   o: (tm, 128) bf16
    # Computes relu(max_pool2d(conv(x), 2)) for one tile of pooled positions.
    w = w_ref[...]
    z0 = jnp.dot(p_ref[0], w, preferred_element_type=jnp.float32)
    z1 = jnp.dot(p_ref[1], w, preferred_element_type=jnp.float32)
    z2 = jnp.dot(p_ref[2], w, preferred_element_type=jnp.float32)
    z3 = jnp.dot(p_ref[3], w, preferred_element_type=jnp.float32)
    # bias is per-channel, identical for all 4 window members -> add after max
    z = jnp.maximum(jnp.maximum(z0, z1), jnp.maximum(z2, z3)) + b_ref[...]
    o_ref[...] = jnp.maximum(z, 0.0).astype(o_ref.dtype)


def _head_kernel(x_ref, w1_ref, b1_ref, w2_ref, b2_ref, o_ref):
    # fc1 + relu + (dropout=identity) + fc2 + relu + log_softmax, all fused.
    h = jnp.dot(x_ref[...], w1_ref[...], preferred_element_type=jnp.float32)
    h = jnp.maximum(h + b1_ref[...], 0.0)
    z = jnp.dot(h.astype(w2_ref.dtype), w2_ref[...],
                preferred_element_type=jnp.float32)
    z = jnp.maximum(z + b2_ref[...], 0.0)
    m = jnp.max(z, axis=-1, keepdims=True)
    s = jnp.sum(jnp.exp(z - m), axis=-1, keepdims=True)
    o_ref[...] = ((z - m) - jnp.log(s)).astype(o_ref.dtype)


# ---------------------------------------------------------------------------
# pallas_call wrappers
# ---------------------------------------------------------------------------

def _pick_tm(mp, tm_max=512):
    """Largest row tile <= tm_max keeping (8,128) alignment; prefer even split."""
    if mp <= tm_max:
        return mp                            # single block == full dim (legal)
    for tm in range(tm_max - tm_max % 8, 7, -8):
        if mp % tm == 0:
            return tm                        # even split
    return tm_max - tm_max % 8               # uneven; Pallas masks edge block


def conv_pool_relu(patches4, w_mat, b):
    """Fused conv-as-matmul + bias + 2x2 max-pool + ReLU."""
    _, mp, kdim = patches4.shape
    n = w_mat.shape[1]
    tm = _pick_tm(mp)
    return pl.pallas_call(
        _conv_pool_relu_kernel,
        out_shape=jax.ShapeDtypeStruct((mp, n), jnp.bfloat16),
        grid=(pl.cdiv(mp, tm),),
        in_specs=[
            pl.BlockSpec((4, tm, kdim), lambda i: (0, i, 0)),
            pl.BlockSpec((kdim, n), lambda i: (0, 0)),
            pl.BlockSpec((1, n), lambda i: (0, 0)),
        ],
        out_specs=pl.BlockSpec((tm, n), lambda i: (i, 0)),
        compiler_params=pltpu.CompilerParams(
            dimension_semantics=("parallel",),
            vmem_limit_bytes=32 * 1024 * 1024),
    )(patches4, w_mat, b)


def head(x, w1, b1, w2, b2):
    """Fused fc1 + ReLU + fc2 + ReLU + log_softmax."""
    vm = pl.BlockSpec(memory_space=pltpu.MemorySpace.VMEM)
    return pl.pallas_call(
        _head_kernel,
        out_shape=jax.ShapeDtypeStruct((x.shape[0], w2.shape[1]), jnp.float32),
        in_specs=[vm, vm, vm, vm, vm],
        out_specs=vm,
    )(x, w1, b1, w2, b2)


# ---------------------------------------------------------------------------
# Glue (patch extraction only; stays in NHWC, no big transposes)
# ---------------------------------------------------------------------------

def _pool_patches(x_nhwc, k):
    """im2col patches grouped by 2x2 pool-window member.

    Returns (4, B*Hp*Wp, k*k*C): axis 0 indexes (dh, dw) of the pool window,
    rows are ordered (b, hp, wp), features are in (kh, kw, cin) order.
    """
    # TODO(synk): at the original 156416-feature spectrogram scale, do patch
    # extraction inside the kernel (k*k shifted matmuls) to avoid the 25x
    # im2col expansion through HBM; fine at this small test scale.
    b, h, w, c = x_nhwc.shape
    ho, wo = h - k + 1, w - k + 1
    hp, wp = ho // 2, wo // 2            # PyTorch max_pool2d floors odd dims
    cols = [x_nhwc[:, kh:kh + ho, kw:kw + wo, :]
            for kh in range(k) for kw in range(k)]
    p = jnp.concatenate(cols, axis=-1)   # (B, Ho, Wo, k*k*C)
    members = []
    for dh in range(2):
        for dw in range(2):
            m = p[:, dh:2 * hp:2, dw:2 * wp:2, :]
            members.append(m.reshape(b * hp * wp, k * k * c))
    return jnp.stack(members, axis=0), (b, hp, wp)


def _pad_features(p4, k_pad):
    kdim = p4.shape[-1]
    if kdim == k_pad:
        return p4
    return jnp.pad(p4, ((0, 0), (0, 0), (0, k_pad - kdim)))


# ---------------------------------------------------------------------------
# Parameters + forward
# ---------------------------------------------------------------------------

def init_params(key, in_hw=(28, 28)):
    h, w = in_hw
    hp1, wp1 = (h - 4) // 2, (w - 4) // 2
    hp2, wp2 = (hp1 - 4) // 2, (wp1 - 4) // 2
    kfc = 64 * hp2 * wp2                    # 156416 in the original module
    keys = jax.random.split(key, 8)

    def u(k, shape, fan_in):
        bound = 1.0 / jnp.sqrt(float(fan_in))
        return jax.random.uniform(k, shape, jnp.float32, -bound, bound)

    def conv_w_mat(w_oihw, cin_pad, k_pad):
        cout, cin, kh, kw = w_oihw.shape
        wm = jnp.transpose(w_oihw, (2, 3, 1, 0))                 # (kh,kw,ci,co)
        wm = jnp.pad(wm, ((0, 0), (0, 0),
                          (0, cin_pad - cin), (0, CPAD - cout)))
        wm = wm.reshape(kh * kw * cin_pad, CPAD)
        wm = jnp.pad(wm, ((0, k_pad - wm.shape[0]), (0, 0)))
        return wm.astype(jnp.bfloat16)

    def pad_bias(bvec):
        return jnp.pad(bvec, (0, CPAD - bvec.shape[0])).reshape(1, CPAD)

    conv1_w = u(keys[0], (32, 3, 5, 5), 3 * 25)
    conv1_b = u(keys[1], (32,), 3 * 25)
    conv2_w = u(keys[2], (64, 32, 5, 5), 32 * 25)
    conv2_b = u(keys[3], (64,), 32 * 25)
    fc1_w = u(keys[4], (50, kfc), kfc)       # PyTorch (out, C*H*W) layout
    fc1_b = u(keys[5], (50,), kfc)
    fc2_w = u(keys[6], (3, 50), 50)
    fc2_b = u(keys[7], (3,), 50)

    # Re-layout fc1 weight rows to the NHWC(+channel-pad) flatten order so the
    # forward pass needs no activation transpose before fc1; zero rows for the
    # padded channels match the exactly-zero padded activation channels.
    w1 = fc1_w.reshape(50, 64, hp2, wp2)
    w1 = jnp.transpose(w1, (2, 3, 1, 0))                        # (H, W, C, out)
    w1 = jnp.pad(w1, ((0, 0), (0, 0), (0, CPAD - 64), (0, 0)))
    fc1_w_kn = w1.reshape(hp2 * wp2 * CPAD, 50).astype(jnp.bfloat16)

    return {
        "conv1_w": conv_w_mat(conv1_w, 3, K1_PAD),      # (128, 128) bf16
        "conv1_b": pad_bias(conv1_b),                   # (1, 128) f32
        "conv2_w": conv_w_mat(conv2_w, CPAD, 25 * CPAD),  # (3200, 128) bf16
        "conv2_b": pad_bias(conv2_b),                   # (1, 128) f32
        "fc1_w": fc1_w_kn,                              # (H*W*128, 50) bf16
        "fc1_b": fc1_b.reshape(1, 50),                  # f32
        "fc2_w": fc2_w.T.astype(jnp.bfloat16),          # (50, 3) bf16
        "fc2_b": fc2_b.reshape(1, 3),                   # f32
    }


def cnnet_forward(params, x_nchw):
    b = x_nchw.shape[0]
    x = jnp.transpose(x_nchw, (0, 2, 3, 1)).astype(jnp.bfloat16)  # NCHW->NHWC

    # x = relu(max_pool2d(conv1(x), 2))            -- one fused pallas_call
    p4, (b, hp1, wp1) = _pool_patches(x, 5)
    p4 = _pad_features(p4, K1_PAD)
    x1 = conv_pool_relu(p4, params["conv1_w"], params["conv1_b"])
    x1 = x1.reshape(b, hp1, wp1, CPAD)

    # x = relu(max_pool2d(conv2_drop(conv2(x)), 2)) -- one fused pallas_call
    # TODO(synk): nn.Dropout2d / F.dropout are identity (inference/eval mode).
    p4, (b, hp2, wp2) = _pool_patches(x1, 5)
    x2 = conv_pool_relu(p4, params["conv2_w"], params["conv2_b"])

    # Flatten: rows are already (b, hp, wp) and fc1 weight rows were permuted
    # to NHWC(+pad) order at init, so this is a pure reshape.
    flat = x2.reshape(b, hp2 * wp2 * CPAD)

    # log_softmax(relu(fc2(relu(fc1(x)))), dim=1)   -- one fused pallas_call
    return head(flat, params["fc1_w"], params["fc1_b"],
                params["fc2_w"], params["fc2_b"])


if __name__ == "__main__":
    key = jax.random.PRNGKey(0)
    pkey, xkey = jax.random.split(key)

    x = jax.random.normal(xkey, (2, 3, 28, 28), jnp.float32)   # NCHW input
    params = init_params(pkey, in_hw=(28, 28))

    out = jax.jit(cnnet_forward)(params, x)
    out = jax.block_until_ready(out)

    assert out.shape == (2, 3), out.shape
    assert bool(jnp.all(jnp.isfinite(out)))
    # log_softmax rows should sum to ~1 in prob space
    assert bool(jnp.allclose(jnp.sum(jnp.exp(out), axis=1), 1.0, atol=1e-3))
    print("KERNEL_OK")
</pallas_src>

<mosaic_0001>
module attributes {stable_mosaic.version = 11 : i64} {
  func.func @_conv_pool_relu_kernel(%arg0: i32, %arg1: memref<4x288x128xbf16, #tpu.memory_space<vmem>>, %arg2: memref<128x128xbf16, #tpu.memory_space<vmem>>, %arg3: memref<1x128xf32, #tpu.memory_space<vmem>>, %arg4: memref<288x128xbf16, #tpu.memory_space<vmem>>) attributes {dimension_semantics = [#tpu.dimension_semantics<parallel>], iteration_bounds = array<i64: 1>, scalar_prefetch = 0 : i64, scratch_operands = 0 : i64, tpu.core_type = #tpu.core_type<tc>, window_params = [{transform_indices = @transform_0, window_bounds = array<i64: 4, 288, 128>}, {pipeline_mode = #tpu.pipeline_mode<synchronous>, transform_indices = @transform_1, window_bounds = array<i64: 128, 128>}, {pipeline_mode = #tpu.pipeline_mode<synchronous>, transform_indices = @transform_2, window_bounds = array<i64: 1, 128>}, {transform_indices = @transform_3, window_bounds = array<i64: 288, 128>}]} {
    %c0 = arith.constant 0 : index
    %c0_0 = arith.constant 0 : index
    %0 = vector.load %arg2[%c0, %c0_0] : memref<128x128xbf16, #tpu.memory_space<vmem>>, vector<128x128xbf16>
    %c0_1 = arith.constant 0 : index
    %c0_2 = arith.constant 0 : index
    %c0_3 = arith.constant 0 : index
    %1 = vector.load %arg1[%c0_1, %c0_2, %c0_3] : memref<4x288x128xbf16, #tpu.memory_space<vmem>>, vector<1x288x128xbf16>
    %2 = vector.shape_cast %1 : vector<1x288x128xbf16> to vector<288x128xbf16>
    %cst = arith.constant dense<0.000000e+00> : vector<288x128xf32>
    %3 = tpu.matmul %2, %0, %cst {dimension_numbers = #tpu.dot_dimension_numbers<[1], [0], [0], [1], [0, 0, 1, 1], [], []>} : vector<288x128xbf16>, vector<128x128xbf16>, vector<288x128xf32> -> vector<288x128xf32>
    %c1 = arith.constant 1 : index
    %c0_4 = arith.constant 0 : index
    %c0_5 = arith.constant 0 : index
    %4 = vector.load %arg1[%c1, %c0_4, %c0_5] : memref<4x288x128xbf16, #tpu.memory_space<vmem>>, vector<1x288x128xbf16>
    %5 = vector.shape_cast %4 : vector<1x288x128xbf16> to vector<288x128xbf16>
    %cst_6 = arith.constant dense<0.000000e+00> : vector<288x128xf32>
    %6 = tpu.matmul %5, %0, %cst_6 {dimension_numbers = #tpu.dot_dimension_numbers<[1], [0], [0], [1], [0, 0, 1, 1], [], []>} : vector<288x128xbf16>, vector<128x128xbf16>, vector<288x128xf32> -> vector<288x128xf32>
    %c2 = arith.constant 2 : index
    %c0_7 = arith.constant 0 : index
    %c0_8 = arith.constant 0 : index
    %7 = vector.load %arg1[%c2, %c0_7, %c0_8] : memref<4x288x128xbf16, #tpu.memory_space<vmem>>, vector<1x288x128xbf16>
    %8 = vector.shape_cast %7 : vector<1x288x128xbf16> to vector<288x128xbf16>
    %cst_9 = arith.constant dense<0.000000e+00> : vector<288x128xf32>
    %9 = tpu.matmul %8, %0, %cst_9 {dimension_numbers = #tpu.dot_dimension_numbers<[1], [0], [0], [1], [0, 0, 1, 1], [], []>} : vector<288x128xbf16>, vector<128x128xbf16>, vector<288x128xf32> -> vector<288x128xf32>
    %c3 = arith.constant 3 : index
    %c0_10 = arith.constant 0 : index
    %c0_11 = arith.constant 0 : index
    %10 = vector.load %arg1[%c3, %c0_10, %c0_11] : memref<4x288x128xbf16, #tpu.memory_space<vmem>>, vector<1x288x128xbf16>
    %11 = vector.shape_cast %10 : vector<1x288x128xbf16> to vector<288x128xbf16>
    %cst_12 = arith.constant dense<0.000000e+00> : vector<288x128xf32>
    %12 = tpu.matmul %11, %0, %cst_12 {dimension_numbers = #tpu.dot_dimension_numbers<[1], [0], [0], [1], [0, 0, 1, 1], [], []>} : vector<288x128xbf16>, vector<128x128xbf16>, vector<288x128xf32> -> vector<288x128xf32>
    %13 = arith.maximumf %3, %6 : vector<288x128xf32>
    %14 = arith.maximumf %9, %12 : vector<288x128xf32>
    %15 = arith.maximumf %13, %14 : vector<288x128xf32>
    %c0_13 = arith.constant 0 : index
    %c0_14 = arith.constant 0 : index
    %16 = vector.load %arg3[%c0_13, %c0_14] : memref<1x128xf32, #tpu.memory_space<vmem>>, vector<1x128xf32>
    %17 = vector.broadcast %16 : vector<1x128xf32> to vector<288x128xf32>
    %18 = arith.addf %15, %17 : vector<288x128xf32>
    %cst_15 = arith.constant 0.000000e+00 : f32
    %19 = vector.broadcast %cst_15 : f32 to vector<288x128xf32>
    %20 = arith.maximumf %18, %19 : vector<288x128xf32>
    %21 = arith.truncf %20 : vector<288x128xf32> to vector<288x128xbf16>
    %c0_16 = arith.constant 0 : index
    %c0_17 = arith.constant 0 : index
    %22 = vector.load %arg4[%c0_16, %c0_17] : memref<288x128xbf16, #tpu.memory_space<vmem>>, vector<288x128xbf16>
    tpu.vector_store %arg4[%c0_16, %c0_17], %21 {strides = array<i32>} : memref<288x128xbf16, #tpu.memory_space<vmem>>, vector<288x128xbf16>,
    return
  }
  func.func @transform_0(%arg0: i32) -> (i32, i32, i32) {
    %c0_i32 = arith.constant 0 : i32
    %c0_i32_0 = arith.constant 0 : i32
    %c0_i32_1 = arith.constant 0 : i32
    return %c0_i32, %arg0, %c0_i32_0 : i32, i32, i32
  }
  func.func @transform_1(%arg0: i32) -> (i32, i32) {
    %c0_i32 = arith.constant 0 : i32
    %c0_i32_0 = arith.constant 0 : i32
    %c0_i32_1 = arith.constant 0 : i32
    return %c0_i32, %c0_i32_0 : i32, i32
  }
  func.func @transform_2(%arg0: i32) -> (i32, i32) {
    %c0_i32 = arith.constant 0 : i32
    %c0_i32_0 = arith.constant 0 : i32
    %c0_i32_1 = arith.constant 0 : i32
    return %c0_i32, %c0_i32_0 : i32, i32
  }
  func.func @transform_3(%arg0: i32) -> (i32, i32) {
    %c0_i32 = arith.constant 0 : i32
    %c0_i32_0 = arith.constant 0 : i32
    return %arg0, %c0_i32 : i32, i32
  }
}

module attributes {stable_mosaic.version = 11 : i64} {
  func.func @_conv_pool_relu_kernel(%arg0: i32, %arg1: memref<4x32x3200xbf16, #tpu.memory_space<vmem>>, %arg2: memref<3200x128xbf16, #tpu.memory_space<vmem>>, %arg3: memref<1x128xf32, #tpu.memory_space<vmem>>, %arg4: memref<32x128xbf16, #tpu.memory_space<vmem>>) attributes {dimension_semantics = [#tpu.dimension_semantics<parallel>], iteration_bounds = array<i64: 1>, scalar_prefetch = 0 : i64, scratch_operands = 0 : i64, tpu.core_type = #tpu.core_type<tc>, window_params = [{transform_indices = @transform_0, window_bounds = array<i64: 4, 32, 3200>}, {pipeline_mode = #tpu.pipeline_mode<synchronous>, transform_indices = @transform_1, window_bounds = array<i64: 3200, 128>}, {pipeline_mode = #tpu.pipeline_mode<synchronous>, transform_indices = @transform_2, window_bounds = array<i64: 1, 128>}, {transform_indices = @transform_3, window_bounds = array<i64: 32, 128>}]} {
    %c0 = arith.constant 0 : index
    %c0_0 = arith.constant 0 : index
    %0 = vector.load %arg2[%c0, %c0_0] : memref<3200x128xbf16, #tpu.memory_space<vmem>>, vector<3200x128xbf16>
    %c0_1 = arith.constant 0 : index
    %c0_2 = arith.constant 0 : index
    %c0_3 = arith.constant 0 : index
    %1 = vector.load %arg1[%c0_1, %c0_2, %c0_3] : memref<4x32x3200xbf16, #tpu.memory_space<vmem>>, vector<1x32x3200xbf16>
    %2 = vector.shape_cast %1 : vector<1x32x3200xbf16> to vector<32x3200xbf16>
    %cst = arith.constant dense<0.000000e+00> : vector<32x128xf32>
    %3 = tpu.matmul %2, %0, %cst {dimension_numbers = #tpu.dot_dimension_numbers<[1], [0], [0], [1], [0, 0, 1, 1], [], []>} : vector<32x3200xbf16>, vector<3200x128xbf16>, vector<32x128xf32> -> vector<32x128xf32>
    %c1 = arith.constant 1 : index
    %c0_4 = arith.constant 0 : index
    %c0_5 = arith.constant 0 : index
    %4 = vector.load %arg1[%c1, %c0_4, %c0_5] : memref<4x32x3200xbf16, #tpu.memory_space<vmem>>, vector<1x32x3200xbf16>
    %5 = vector.shape_cast %4 : vector<1x32x3200xbf16> to vector<32x3200xbf16>
    %cst_6 = arith.constant dense<0.000000e+00> : vector<32x128xf32>
    %6 = tpu.matmul %5, %0, %cst_6 {dimension_numbers = #tpu.dot_dimension_numbers<[1], [0], [0], [1], [0, 0, 1, 1], [], []>} : vector<32x3200xbf16>, vector<3200x128xbf16>, vector<32x128xf32> -> vector<32x128xf32>
    %c2 = arith.constant 2 : index
    %c0_7 = arith.constant 0 : index
    %c0_8 = arith.constant 0 : index
    %7 = vector.load %arg1[%c2, %c0_7, %c0_8] : memref<4x32x3200xbf16, #tpu.memory_space<vmem>>, vector<1x32x3200xbf16>
    %8 = vector.shape_cast %7 : vector<1x32x3200xbf16> to vector<32x3200xbf16>
    %cst_9 = arith.constant dense<0.000000e+00> : vector<32x128xf32>
    %9 = tpu.matmul %8, %0, %cst_9 {dimension_numbers = #tpu.dot_dimension_numbers<[1], [0], [0], [1], [0, 0, 1, 1], [], []>} : vector<32x3200xbf16>, vector<3200x128xbf16>, vector<32x128xf32> -> vector<32x128xf32>
    %c3 = arith.constant 3 : index
    %c0_10 = arith.constant 0 : index
    %c0_11 = arith.constant 0 : index
    %10 = vector.load %arg1[%c3, %c0_10, %c0_11] : memref<4x32x3200xbf16, #tpu.memory_space<vmem>>, vector<1x32x3200xbf16>
    %11 = vector.shape_cast %10 : vector<1x32x3200xbf16> to vector<32x3200xbf16>
    %cst_12 = arith.constant dense<0.000000e+00> : vector<32x128xf32>
    %12 = tpu.matmul %11, %0, %cst_12 {dimension_numbers = #tpu.dot_dimension_numbers<[1], [0], [0], [1], [0, 0, 1, 1], [], []>} : vector<32x3200xbf16>, vector<3200x128xbf16>, vector<32x128xf32> -> vector<32x128xf32>
    %13 = arith.maximumf %3, %6 : vector<32x128xf32>
    %14 = arith.maximumf %9, %12 : vector<32x128xf32>
    %15 = arith.maximumf %13, %14 : vector<32x128xf32>
    %c0_13 = arith.constant 0 : index
    %c0_14 = arith.constant 0 : index
    %16 = vector.load %arg3[%c0_13, %c0_14] : memref<1x128xf32, #tpu.memory_space<vmem>>, vector<1x128xf32>
    %17 = vector.broadcast %16 : vector<1x128xf32> to vector<32x128xf32>
    %18 = arith.addf %15, %17 : vector<32x128xf32>
    %cst_15 = arith.constant 0.000000e+00 : f32
    %19 = vector.broadcast %cst_15 : f32 to vector<32x128xf32>
    %20 = arith.maximumf %18, %19 : vector<32x128xf32>
    %21 = arith.truncf %20 : vector<32x128xf32> to vector<32x128xbf16>
    %c0_16 = arith.constant 0 : index
    %c0_17 = arith.constant 0 : index
    %22 = vector.load %arg4[%c0_16, %c0_17] : memref<32x128xbf16, #tpu.memory_space<vmem>>, vector<32x128xbf16>
    tpu.vector_store %arg4[%c0_16, %c0_17], %21 {strides = array<i32>} : memref<32x128xbf16, #tpu.memory_space<vmem>>, vector<32x128xbf16>,
    return
  }
  func.func @transform_0(%arg0: i32) -> (i32, i32, i32) {
    %c0_i32 = arith.constant 0 : i32
    %c0_i32_0 = arith.constant 0 : i32
    %c0_i32_1 = arith.constant 0 : i32
    return %c0_i32, %arg0, %c0_i32_0 : i32, i32, i32
  }
  func.func @transform_1(%arg0: i32) -> (i32, i32) {
    %c0_i32 = arith.constant 0 : i32
    %c0_i32_0 = arith.constant 0 : i32
    %c0_i32_1 = arith.constant 0 : i32
    return %c0_i32, %c0_i32_0 : i32, i32
  }
  func.func @transform_2(%arg0: i32) -> (i32, i32) {
    %c0_i32 = arith.constant 0 : i32
    %c0_i32_0 = arith.constant 0 : i32
    %c0_i32_1 = arith.constant 0 : i32
    return %c0_i32, %c0_i32_0 : i32, i32
  }
  func.func @transform_3(%arg0: i32) -> (i32, i32) {
    %c0_i32 = arith.constant 0 : i32
    %c0_i32_0 = arith.constant 0 : i32
    return %arg0, %c0_i32 : i32, i32
  }
}

module attributes {stable_mosaic.version = 11 : i64} {
  func.func @_head_kernel(%arg0: memref<2x2048xbf16, #tpu.memory_space<vmem>>, %arg1: memref<2048x50xbf16, #tpu.memory_space<vmem>>, %arg2: memref<1x50xf32, #tpu.memory_space<vmem>>, %arg3: memref<50x3xbf16, #tpu.memory_space<vmem>>, %arg4: memref<1x3xf32, #tpu.memory_space<vmem>>, %arg5: memref<2x3xf32, #tpu.memory_space<vmem>>) attributes {dimension_semantics = [], scalar_prefetch = 0 : i64, scratch_operands = 0 : i64, tpu.core_type = #tpu.core_type<tc>} {
    %c0 = arith.constant 0 : index
    %c0_0 = arith.constant 0 : index
    %0 = vector.load %arg0[%c0, %c0_0] : memref<2x2048xbf16, #tpu.memory_space<vmem>>, vector<2x2048xbf16>
    %c0_1 = arith.constant 0 : index
    %c0_2 = arith.constant 0 : index
    %1 = vector.load %arg1[%c0_1, %c0_2] : memref<2048x50xbf16, #tpu.memory_space<vmem>>, vector<2048x50xbf16>
    %cst = arith.constant dense<0.000000e+00> : vector<2x50xf32>
    %2 = tpu.matmul %0, %1, %cst {dimension_numbers = #tpu.dot_dimension_numbers<[1], [0], [0], [1], [0, 0, 1, 1], [], []>} : vector<2x2048xbf16>, vector<2048x50xbf16>, vector<2x50xf32> -> vector<2x50xf32>
    %c0_3 = arith.constant 0 : index
    %c0_4 = arith.constant 0 : index
    %3 = vector.load %arg2[%c0_3, %c0_4] : memref<1x50xf32, #tpu.memory_space<vmem>>, vector<1x50xf32>
    %4 = vector.broadcast %3 : vector<1x50xf32> to vector<2x50xf32>
    %5 = arith.addf %2, %4 : vector<2x50xf32>
    %cst_5 = arith.constant 0.000000e+00 : f32
    %6 = vector.broadcast %cst_5 : f32 to vector<2x50xf32>
    %7 = arith.maximumf %5, %6 : vector<2x50xf32>
    %8 = arith.truncf %7 : vector<2x50xf32> to vector<2x50xbf16>
    %c0_6 = arith.constant 0 : index
    %c0_7 = arith.constant 0 : index
    %9 = vector.load %arg3[%c0_6, %c0_7] : memref<50x3xbf16, #tpu.memory_space<vmem>>, vector<50x3xbf16>
    %cst_8 = arith.constant dense<0.000000e+00> : vector<2x3xf32>
    %10 = tpu.matmul %8, %9, %cst_8 {dimension_numbers = #tpu.dot_dimension_numbers<[1], [0], [0], [1], [0, 0, 1, 1], [], []>} : vector<2x50xbf16>, vector<50x3xbf16>, vector<2x3xf32> -> vector<2x3xf32>
    %c0_9 = arith.constant 0 : index
    %c0_10 = arith.constant 0 : index
    %11 = vector.load %arg4[%c0_9, %c0_10] : memref<1x3xf32, #tpu.memory_space<vmem>>, vector<1x3xf32>
    %12 = vector.broadcast %11 : vector<1x3xf32> to vector<2x3xf32>
    %13 = arith.addf %10, %12 : vector<2x3xf32>
    %cst_11 = arith.constant 0.000000e+00 : f32
    %14 = vector.broadcast %cst_11 : f32 to vector<2x3xf32>
    %15 = arith.maximumf %13, %14 : vector<2x3xf32>
    %cst_12 = arith.constant dense<0xFF800000> : vector<2xf32>
    %16 = vector.multi_reduction <maximumf>, %15, %cst_12 [1] : vector<2x3xf32> to vector<2xf32>
    %17 = vector.shape_cast %16 : vector<2xf32> to vector<2x1xf32>
    %18 = vector.broadcast %17 : vector<2x1xf32> to vector<2x3xf32>
    %19 = arith.subf %15, %18 : vector<2x3xf32>
    %20 = math.exp %19 : vector<2x3xf32>
    %cst_13 = arith.constant dense<0.000000e+00> : vector<2xf32>
    %21 = vector.multi_reduction <add>, %20, %cst_13 [1] : vector<2x3xf32> to vector<2xf32>
    %22 = vector.shape_cast %21 : vector<2xf32> to vector<2x1xf32>
    %23 = vector.broadcast %17 : vector<2x1xf32> to vector<2x3xf32>
    %24 = arith.subf %15, %23 : vector<2x3xf32>
    %25 = math.log %22 : vector<2x1xf32>
    %26 = vector.broadcast %25 : vector<2x1xf32> to vector<2x3xf32>
    %27 = arith.subf %24, %26 : vector<2x3xf32>
    %c0_14 = arith.constant 0 : index
    %c0_15 = arith.constant 0 : index
    %28 = vector.load %arg5[%c0_14, %c0_15] : memref<2x3xf32, #tpu.memory_space<vmem>>, vector<2x3xf32>
    tpu.vector_store %arg5[%c0_14, %c0_15], %27 {strides = array<i32>} : memref<2x3xf32, #tpu.memory_space<vmem>>, vector<2x3xf32>,
    return
  }
}

</mosaic_0001>

<llo_original>
// kernel: cnnet_forward.3
$region0: #{cnnet_forward.3}
  #allocation0 [shape = 'u32[]', space=smem, size = 0x4, offset = 0x4, fixed_abs, tag = 'smem constant byte address 0x4 - core index']
  #allocation1 [shape = 'u32[144,128]{1,0:T(1,128)}', space=vmem, size = 0x12000, scoped, tag = 'internal scratch']
  %s0 = inlined_call_operand.vmem [shape: bf16[4,288,128], index: 0, kind: input, shape index: {}]
  %s1 = inlined_call_operand.vmem [shape: bf16[128,128], index: 1, kind: input, shape index: {}]
  %s2 = inlined_call_operand.vmem [shape: f32[1,128], index: 2, kind: input, shape index: {}]
  %s3 = inlined_call_operand.vmem [shape: bf16[288,128], index: 3, kind: output, shape index: {}]
  %s4 = sld [smem:[#allocation0]]
  $region22: #{cnnet_forward.3} parent=0
    _
  %s6 = ssub.s32 1, %s4
  %s7 = scalar_select 0, %s6, %s4
  // Predicated region
  $region2: #{cnnet_forward.3} parent=0 // pred_check
    _
  $region3: #{cnnet_forward.3} parent=0 // pred_check_branch
    %9 = sbr.rel (0) target = $region5
  $region4: #{cnnet_forward.3} parent=0 // pred_region
    _
  $region5: #{cnnet_forward.3} parent=0 // pred_fallthru
    _
  // Predicated region
  $region6: #{cnnet_forward.3} parent=0 // pred_check
    _
  $region7: #{cnnet_forward.3} parent=0 // pred_check_branch
    %11 = sbr.rel (0) target = $region9
  $region8: #{cnnet_forward.3} parent=0 // pred_region
    _
  $region9: #{cnnet_forward.3} parent=0 // pred_fallthru
    _
  // Predicated region
  $region10: #{cnnet_forward.3} parent=0 // pred_check
    _
  $region11: #{cnnet_forward.3} parent=0 // pred_check_branch
    %13 = sbr.rel (0) target = $region13
  $region12: #{cnnet_forward.3} parent=0 // pred_region
    _
  $region13: #{cnnet_forward.3} parent=0 // pred_fallthru
    _
  %v15 = vld [vmem:[%s1] sm:$0xf]
  %v16 = vld [vmem:[%s1 + $0x4] sm:$0xf]
  %v17 = vld [vmem:[%s1 + $0x8] sm:$0xf]
  %v18 = vld [vmem:[%s1 + $0xc] sm:$0xf]
  %v19 = vld [vmem:[%s1 + $0x10] sm:$0xf]
  %v20 = vld [vmem:[%s1 + $0x14] sm:$0xf]
  %v21 = vld [vmem:[%s1 + $0x18] sm:$0xf]
  %v22 = vld [vmem:[%s1 + $0x1c] sm:$0xf]
  %v23 = vld [vmem:[%s1 + $0x20] sm:$0xf]
  %v24 = vld [vmem:[%s1 + $0x24] sm:$0xf]
  %v25 = vld [vmem:[%s1 + $0x28] sm:$0xf]
  %v26 = vld [vmem:[%s1 + $0x2c] sm:$0xf]
  %v27 = vld [vmem:[%s1 + $0x30] sm:$0xf]
  %v28 = vld [vmem:[%s1 + $0x34] sm:$0xf]
  %v29 = vld [vmem:[%s1 + $0x38] sm:$0xf]
  %v30 = vld [vmem:[%s1 + $0x3c] sm:$0xf]
  %v31 = vld [vmem:[%s0] sm:$0xf]
  %v32 = vld [vmem:[%s0 + $0x4] sm:$0xf]
  %v33 = vld [vmem:[%s0 + $0x8] sm:$0xf]
  %v34 = vld [vmem:[%s0 + $0xc] sm:$0xf]
  %v35 = vld [vmem:[%s0 + $0x10] sm:$0xf]
  %v36 = vld [vmem:[%s0 + $0x14] sm:$0xf]
  %v37 = vld [vmem:[%s0 + $0x18] sm:$0xf]
  %v38 = vld [vmem:[%s0 + $0x1c] sm:$0xf]
  %v39 = vld [vmem:[%s0 + $0x20] sm:$0xf]
  %v40 = vld [vmem:[%s0 + $0x24] sm:$0xf]
  %v41 = vld [vmem:[%s0 + $0x28] sm:$0xf]
  %v42 = vld [vmem:[%s0 + $0x2c] sm:$0xf]
  %v43 = vld [vmem:[%s0 + $0x30] sm:$0xf]
  %v44 = vld [vmem:[%s0 + $0x34] sm:$0xf]
  %v45 = vld [vmem:[%s0 + $0x38] sm:$0xf]
  %v46 = vld [vmem:[%s0 + $0x3c] sm:$0xf]
  %v47 = vld [vmem:[%s0 + $0x40] sm:$0xf]
  %v48 = vld [vmem:[%s0 + $0x44] sm:$0xf]
  %v49 = vld [vmem:[%s0 + $0x48] sm:$0xf]
  %v50 = vld [vmem:[%s0 + $0x4c] sm:$0xf]
  %v51 = vld [vmem:[%s0 + $0x50] sm:$0xf]
  %v52 = vld [vmem:[%s0 + $0x54] sm:$0xf]
  %v53 = vld [vmem:[%s0 + $0x58] sm:$0xf]
  %v54 = vld [vmem:[%s0 + $0x5c] sm:$0xf]
  %v55 = vld [vmem:[%s0 + $0x60] sm:$0xf]
  %v56 = vld [vmem:[%s0 + $0x64] sm:$0xf]
  %v57 = vld [vmem:[%s0 + $0x68] sm:$0xf]
  %v58 = vld [vmem:[%s0 + $0x6c] sm:$0xf]
  %v59 = vld [vmem:[%s0 + $0x70] sm:$0xf]
  %v60 = vld [vmem:[%s0 + $0x74] sm:$0xf]
  %v61 = vld [vmem:[%s0 + $0x78] sm:$0xf]
  %v62 = vld [vmem:[%s0 + $0x7c] sm:$0xf]
  %v63 = vld [vmem:[%s0 + $0x80] sm:$0xf]
  %v64 = vld [vmem:[%s0 + $0x84] sm:$0xf]
  %v65 = vld [vmem:[%s0 + $0x88] sm:$0xf]
  %v66 = vld [vmem:[%s0 + $0x8c] sm:$0xf]
  %v103 = vunpack.c.l.b16 %v31
  %v104 = vunpack.c.l.b16 %v32
  %v105 = vunpack.c.l.b16 %v33
  %v106 = vunpack.c.l.b16 %v34
  %v107 = vunpack.c.l.b16 %v35
  %v108 = vunpack.c.l.b16 %v36
  %v109 = vunpack.c.l.b16 %v37
  %v110 = vunpack.c.l.b16 %v38
  %v111 = vunpack.c.l.b16 %v39
  %v112 = vunpack.c.l.b16 %v40
  %v113 = vunpack.c.l.b16 %v41
  %v114 = vunpack.c.l.b16 %v42
  %v115 = vunpack.c.l.b16 %v43
  %v116 = vunpack.c.l.b16 %v44
  %v117 = vunpack.c.l.b16 %v45
  %v118 = vunpack.c.l.b16 %v46
  %v119 = vunpack.c.l.b16 %v47
  %v120 = vunpack.c.l.b16 %v48
  %v121 = vunpack.c.l.b16 %v49
  %v122 = vunpack.c.l.b16 %v50
  %v123 = vunpack.c.l.b16 %v51
  %v124 = vunpack.c.l.b16 %v52
  %v125 = vunpack.c.l.b16 %v53
  %v126 = vunpack.c.l.b16 %v54
  %v127 = vunpack.c.l.b16 %v55
  %v128 = vunpack.c.l.b16 %v56
  %v129 = vunpack.c.l.b16 %v57
  %v130 = vunpack.c.l.b16 %v58
  %v131 = vunpack.c.l.b16 %v59
  %v132 = vunpack.c.l.b16 %v60
  %v133 = vunpack.c.l.b16 %v61
  %v134 = vunpack.c.l.b16 %v62
  %v135 = vunpack.c.l.b16 %v63
  %v136 = vunpack.c.l.b16 %v64
  %v137 = vunpack.c.l.b16 %v65
  %v138 = vunpack.c.l.b16 %v66
  %v139 = vpack.c.b16 %v104, %v103
  %v140 = vpack.c.b16 %v106, %v105
  %v141 = vpack.c.b16 %v108, %v107
  %v142 = vpack.c.b16 %v110, %v109
  %v143 = vpack.c.b16 %v112, %v111
  %v144 = vpack.c.b16 %v114, %v113
  %v145 = vpack.c.b16 %v116, %v115
  %v146 = vpack.c.b16 %v118, %v117
  %v147 = vpack.c.b16 %v120, %v119
  %v148 = vpack.c.b16 %v122, %v121
  %v149 = vpack.c.b16 %v124, %v123
  %v150 = vpack.c.b16 %v126, %v125
  %v151 = vpack.c.b16 %v128, %v127
  %v152 = vpack.c.b16 %v130, %v129
  %v153 = vpack.c.b16 %v132, %v131
  %v154 = vpack.c.b16 %v134, %v133
  %v155 = vpack.c.b16 %v136, %v135
  %v156 = vpack.c.b16 %v138, %v137
  %v191 = vunpack.c.l.b16 %v15
  %v192 = vunpack.c.l.b16 %v16
  %v193 = vunpack.c.l.b16 %v17
  %v194 = vunpack.c.l.b16 %v18
  %v195 = vunpack.c.l.b16 %v19
  %v196 = vunpack.c.l.b16 %v20
  %v197 = vunpack.c.l.b16 %v21
  %v198 = vunpack.c.l.b16 %v22
  %v199 = vunpack.c.l.b16 %v23
  %v200 = vunpack.c.l.b16 %v24
  %v201 = vunpack.c.l.b16 %v25
  %v202 = vunpack.c.l.b16 %v26
  %v203 = vunpack.c.l.b16 %v27
  %v204 = vunpack.c.l.b16 %v28
  %v205 = vunpack.c.l.b16 %v29
  %v206 = vunpack.c.l.b16 %v30
  %v207 = vpack.c.b16 %v192, %v191
  %v208 = vpack.c.b16 %v194, %v193
  %v209 = vpack.c.b16 %v196, %v195
  %v210 = vpack.c.b16 %v198, %v197
  %v211 = vpack.c.b16 %v200, %v199
  %v212 = vpack.c.b16 %v202, %v201
  %v213 = vpack.c.b16 %v204, %v203
  %v214 = vpack.c.b16 %v206, %v205
  %223 = vmatprep.subr.bf16.mxu0 0
  %224 = vmatpush1.bf16.msra.mxu0 %v207
  %225 = vmatprep.subr.bf16.mxu0 0
  %226 = vmatpush1.bf16.msra.mxu0 %v208
  %227 = vmatprep.subr.bf16.mxu0 0
  %228 = vmatpush1.bf16.msra.mxu0 %v209
  %229 = vmatprep.subr.bf16.mxu0 0
  %230 = vmatpush1.bf16.msra.mxu0 %v210
  %231 = vmatprep.subr.bf16.mxu0 0
  %232 = vmatpush1.bf16.msra.mxu0 %v211
  %233 = vmatprep.subr.bf16.mxu0 0
  %234 = vmatpush1.bf16.msra.mxu0 %v212
  %235 = vmatprep.subr.bf16.mxu0 0
  %236 = vmatpush1.bf16.msra.mxu0 %v213
  %237 = vmatprep.subr.bf16.mxu0 0
  %238 = vmatpush1.bf16.msra.mxu0 %v214
  %239 = vmatprep.subr.bf16.mxu0 0
  %240 = vmatpush1.bf16.msra.mxu0 0
  %241 = vmatprep.subr.bf16.mxu0 0
  %242 = vmatpush1.bf16.msra.mxu0 0
  %243 = vmatprep.subr.bf16.mxu0 0
  %244 = vmatpush1.bf16.msra.mxu0 0
  %245 = vmatprep.subr.bf16.mxu0 0
  %246 = vmatpush1.bf16.msra.mxu0 0
  %247 = vmatprep.subr.bf16.mxu0 0
  %248 = vmatpush1.bf16.msra.mxu0 0
  %249 = vmatprep.subr.bf16.mxu0 0
  %250 = vmatpush1.bf16.msra.mxu0 0
  %251 = vmatprep.subr.bf16.mxu0 0
  %252 = vmatpush1.bf16.msra.mxu0 0
  %253 = vmatprep.subr.bf16.mxu0 0
  %254 = vmatpush1.bf16.msra.mxu0 0
  %255 = vmatprep.mubr.bf16.mxu0 0
  %256 = vmatmul.mubr.bf16.gmra.mrb[0].mxu0 %v139
  %v257 = vpop.f32.mrb[0].mxu0
  %v258 = vadd.f32 0.0, %v257
  %v259 = vpop.f32.mrb[0].mxu0
  %v260 = vpop.f32.mrb[0].mxu0
  %v261 = vadd.f32 0.0, %v260
  %v262 = vpop.f32.mrb[0].mxu0
  %263 = vmatprep.mubr.bf16.mxu0 0
  %264 = vmatmul.mubr.bf16.gmra.mrb[0].mxu0 %v140
  %v265 = vpop.f32.mrb[0].mxu0
  %v266 = vadd.f32 0.0, %v265
  %v267 = vpop.f32.mrb[0].mxu0
  %v268 = vpop.f32.mrb[0].mxu0
  %v269 = vadd.f32 0.0, %v268
  %v270 = vpop.f32.mrb[0].mxu0
  %271 = vmatprep.mubr.bf16.mxu0 0
  %272 = vmatmul.mubr.bf16.gmra.mrb[0].mxu0 %v141
  %v273 = vpop.f32.mrb[0].mxu0
  %v274 = vadd.f32 0.0, %v273
  %v275 = vpop.f32.mrb[0].mxu0
  %v276 = vpop.f32.mrb[0].mxu0
  %v277 = vadd.f32 0.0, %v276
  %v278 = vpop.f32.mrb[0].mxu0
  %279 = vmatprep.mubr.bf16.mxu0 0
  %280 = vmatmul.mubr.bf16.gmra.mrb[0].mxu0 %v142
  %v281 = vpop.f32.mrb[0].mxu0
  %v282 = vadd.f32 0.0, %v281
  %v283 = vpop.f32.mrb[0].mxu0
  %v284 = vpop.f32.mrb[0].mxu0
  %v285 = vadd.f32 0.0, %v284
  %v286 = vpop.f32.mrb[0].mxu0
  %287 = vmatprep.mubr.bf16.mxu0 0
  %288 = vmatmul.mubr.bf16.gmra.mrb[0].mxu0 %v143
  %v289 = vpop.f32.mrb[0].mxu0
  %v290 = vadd.f32 0.0, %v289
  %v291 = vpop.f32.mrb[0].mxu0
  %v292 = vpop.f32.mrb[0].mxu0
  %v293 = vadd.f32 0.0, %v292
  %v294 = vpop.f32.mrb[0].mxu0
  %295 = vmatprep.mubr.bf16.mxu0 0
  %296 = vmatmul.mubr.bf16.gmra.mrb[0].mxu0 %v144
  %v297 = vpop.f32.mrb[0].mxu0
  %v298 = vadd.f32 0.0, %v297
  %v299 = vpop.f32.mrb[0].mxu0
  %v300 = vpop.f32.mrb[0].mxu0
  %v301 = vadd.f32 0.0, %v300
  %v302 = vpop.f32.mrb[0].mxu0
  %303 = vmatprep.mubr.bf16.mxu0 0
  %304 = vmatmul.mubr.bf16.gmra.mrb[0].mxu0 %v145
  %v305 = vpop.f32.mrb[0].mxu0
  %v306 = vadd.f32 0.0, %v305
  %v307 = vpop.f32.mrb[0].mxu0
  %v308 = vpop.f32.mrb[0].mxu0
  %v309 = vadd.f32 0.0, %v308
  %v310 = vpop.f32.mrb[0].mxu0
  %311 = vmatprep.mubr.bf16.mxu0 0
  %312 = vmatmul.mubr.bf16.gmra.mrb[0].mxu0 %v146
  %v313 = vpop.f32.mrb[0].mxu0
  %v314 = vadd.f32 0.0, %v313
  %v315 = vpop.f32.mrb[0].mxu0
  %v316 = vpop.f32.mrb[0].mxu0
  %v317 = vadd.f32 0.0, %v316
  %v318 = vpop.f32.mrb[0].mxu0
  %319 = vmatprep.mubr.bf16.mxu0 0
  %320 = vmatmul.mubr.bf16.gmra.mrb[0].mxu0 %v147
  %v321 = vpop.f32.mrb[0].mxu0
  %v322 = vadd.f32 0.0, %v321
  %v323 = vpop.f32.mrb[0].mxu0
  %v324 = vpop.f32.mrb[0].mxu0
  %v325 = vadd.f32 0.0, %v324
  %v326 = vpop.f32.mrb[0].mxu0
  %327 = vmatprep.mubr.bf16.mxu0 0
  %328 = vmatmul.mubr.bf16.gmra.mrb[0].mxu0 %v148
  %v329 = vpop.f32.mrb[0].mxu0
  %v330 = vadd.f32 0.0, %v329
  %v331 = vpop.f32.mrb[0].mxu0
  %v332 = vpop.f32.mrb[0].mxu0
  %v333 = vadd.f32 0.0, %v332
  %v334 = vpop.f32.mrb[0].mxu0
  %335 = vmatprep.mubr.bf16.mxu0 0
  %336 = vmatmul.mubr.bf16.gmra.mrb[0].mxu0 %v149
  %v337 = vpop.f32.mrb[0].mxu0
  %v338 = vadd.f32 0.0, %v337
  %v339 = vpop.f32.mrb[0].mxu0
  %v340 = vpop.f32.mrb[0].mxu0
  %v341 = vadd.f32 0.0, %v340
  %v342 = vpop.f32.mrb[0].mxu0
  %343 = vmatprep.mubr.bf16.mxu0 0
  %344 = vmatmul.mubr.bf16.gmra.mrb[0].mxu0 %v150
  %v345 = vpop.f32.mrb[0].mxu0
  %v346 = vadd.f32 0.0, %v345
  %v347 = vpop.f32.mrb[0].mxu0
  %v348 = vpop.f32.mrb[0].mxu0
  %v349 = vadd.f32 0.0, %v348
  %v350 = vpop.f32.mrb[0].mxu0
  %351 = vmatprep.mubr.bf16.mxu0 0
  %352 = vmatmul.mubr.bf16.gmra.mrb[0].mxu0 %v151
  %v353 = vpop.f32.mrb[0].mxu0
  %v354 = vadd.f32 0.0, %v353
  %v355 = vpop.f32.mrb[0].mxu0
  %v356 = vpop.f32.mrb[0].mxu0
  %v357 = vadd.f32 0.0, %v356
  %v358 = vpop.f32.mrb[0].mxu0
  %359 = vmatprep.mubr.bf16.mxu0 0
  %360 = vmatmul.mubr.bf16.gmra.mrb[0].mxu0 %v152
  %v361 = vpop.f32.mrb[0].mxu0
  %v362 = vadd.f32 0.0, %v361
  %v363 = vpop.f32.mrb[0].mxu0
  %v364 = vpop.f32.mrb[0].mxu0
  %v365 = vadd.f32 0.0, %v364
  %v366 = vpop.f32.mrb[0].mxu0
  %367 = vmatprep.mubr.bf16.mxu0 0
  %368 = vmatmul.mubr.bf16.gmra.mrb[0].mxu0 %v153
  %v369 = vpop.f32.mrb[0].mxu0
  %v370 = vadd.f32 0.0, %v369
  %v371 = vpop.f32.mrb[0].mxu0
  %v372 = vpop.f32.mrb[0].mxu0
  %v373 = vadd.f32 0.0, %v372
  %v374 = vpop.f32.mrb[0].mxu0
  %375 = vmatprep.mubr.bf16.mxu0 0
  %376 = vmatmul.mubr.bf16.gmra.mrb[0].mxu0 %v154
  %v377 = vpop.f32.mrb[0].mxu0
  %v378 = vadd.f32 0.0, %v377
  %v379 = vpop.f32.mrb[0].mxu0
  %v380 = vpop.f32.mrb[0].mxu0
  %v381 = vadd.f32 0.0, %v380
  %v382 = vpop.f32.mrb[0].mxu0
  %383 = vmatprep.mubr.bf16.mxu0 0
  %384 = vmatmul.mubr.bf16.gmra.mrb[0].mxu0 %v155
  %v385 = vpop.f32.mrb[0].mxu0
  %v386 = vadd.f32 0.0, %v385
  %v387 = vpop.f32.mrb[0].mxu0
  %v388 = vpop.f32.mrb[0].mxu0
  %v389 = vadd.f32 0.0, %v388
  %v390 = vpop.f32.mrb[0].mxu0
  %391 = vmatprep.mubr.bf16.mxu0 0
  %392 = vmatmul.mubr.bf16.gmra.mrb[0].mxu0 %v156
  %v393 = vpop.f32.mrb[0].mxu0
  %v394 = vadd.f32 0.0, %v393
  %v395 = vpop.f32.mrb[0].mxu0
  %v396 = vpop.f32.mrb[0].mxu0
  %v397 = vadd.f32 0.0, %v396
  %v398 = vpop.f32.mrb[0].mxu0
  %399 = vdwg.mxu0
  %s400 = scalar_lea.vmem %s0, 144
  %v401 = vld [vmem:[%s400] sm:$0xf]
  %v402 = vld [vmem:[%s400 + $0x4] sm:$0xf]
  %v403 = vld [vmem:[%s400 + $0x8] sm:$0xf]
  %v404 = vld [vmem:[%s400 + $0xc] sm:$0xf]
  %v405 = vld [vmem:[%s400 + $0x10] sm:$0xf]
  %v406 = vld [vmem:[%s400 + $0x14] sm:$0xf]
  %v407 = vld [vmem:[%s400 + $0x18] sm:$0xf]
  %v408 = vld [vmem:[%s400 + $0x1c] sm:$0xf]
  %v409 = vld [vmem:[%s400 + $0x20] sm:$0xf]
  %v410 = vld [vmem:[%s400 + $0x24] sm:$0xf]
  %v411 = vld [vmem:[%s400 + $0x28] sm:$0xf]
  %v412 = vld [vmem:[%s400 + $0x2c] sm:$0xf]
  %v413 = vld [vmem:[%s400 + $0x30] sm:$0xf]
  %v414 = vld [vmem:[%s400 + $0x34] sm:$0xf]
  %v415 = vld [vmem:[%s400 + $0x38] sm:$0xf]
  %v416 = vld [vmem:[%s400 + $0x3c] sm:$0xf]
  %v417 = vld [vmem:[%s400 + $0x40] sm:$0xf]
  %v418 = vld [vmem:[%s400 + $0x44] sm:$0xf]
  %v419 = vld [vmem:[%s400 + $0x48] sm:$0xf]
  %v420 = vld [vmem:[%s400 + $0x4c] sm:$0xf]
  %v421 = vld [vmem:[%s400 + $0x50] sm:$0xf]
  %v422 = vld [vmem:[%s400 + $0x54] sm:$0xf]
  %v423 = vld [vmem:[%s400 + $0x58] sm:$0xf]
  %v424 = vld [vmem:[%s400 + $0x5c] sm:$0xf]
  %v425 = vld [vmem:[%s400 + $0x60] sm:$0xf]
  %v426 = vld [vmem:[%s400 + $0x64] sm:$0xf]
  %v427 = vld [vmem:[%s400 + $0x68] sm:$0xf]
  %v428 = vld [vmem:[%s400 + $0x6c] sm:$0xf]
  %v429 = vld [vmem:[%s400 + $0x70] sm:$0xf]
  %v430 = vld [vmem:[%s400 + $0x74] sm:$0xf]
  %v431 = vld [vmem:[%s400 + $0x78] sm:$0xf]
  %v432 = vld [vmem:[%s400 + $0x7c] sm:$0xf]
  %v433 = vld [vmem:[%s400 + $0x80] sm:$0xf]
  %v434 = vld [vmem:[%s400 + $0x84] sm:$0xf]
  %v435 = vld [vmem:[%s400 + $0x88] sm:$0xf]
  %v436 = vld [vmem:[%s400 + $0x8c] sm:$0xf]
  %v473 = vunpack.c.l.b16 %v401
  %v474 = vunpack.c.l.b16 %v402
  %v475 = vunpack.c.l.b16 %v403
  %v476 = vunpack.c.l.b16 %v404
  %v477 = vunpack.c.l.b16 %v405
  %v478 = vunpack.c.l.b16 %v406
  %v479 = vunpack.c.l.b16 %v407
  %v480 = vunpack.c.l.b16 %v408
  %v481 = vunpack.c.l.b16 %v409
  %v482 = vunpack.c.l.b16 %v410
  %v483 = vunpack.c.l.b16 %v411
  %v484 = vunpack.c.l.b16 %v412
  %v485 = vunpack.c.l.b16 %v413
  %v486 = vunpack.c.l.b16 %v414
  %v487 = vunpack.c.l.b16 %v415
  %v488 = vunpack.c.l.b16 %v416
  %v489 = vunpack.c.l.b16 %v417
  %v490 = vunpack.c.l.b16 %v418
  %v491 = vunpack.c.l.b16 %v419
  %v492 = vunpack.c.l.b16 %v420
  %v493 = vunpack.c.l.b16 %v421
  %v494 = vunpack.c.l.b16 %v422
  %v495 = vunpack.c.l.b16 %v423
  %v496 = vunpack.c.l.b16 %v424
  %v497 = vunpack.c.l.b16 %v425
  %v498 = vunpack.c.l.b16 %v426
  %v499 = vunpack.c.l.b16 %v427
  %v500 = vunpack.c.l.b16 %v428
  %v501 = vunpack.c.l.b16 %v429
  %v502 = vunpack.c.l.b16 %v430
  %v503 = vunpack.c.l.b16 %v431
  %v504 = vunpack.c.l.b16 %v432
  %v505 = vunpack.c.l.b16 %v433
  %v506 = vunpack.c.l.b16 %v434
  %v507 = vunpack.c.l.b16 %v435
  %v508 = vunpack.c.l.b16 %v436
  %v509 = vpack.c.b16 %v474, %v473
  %v510 = vpack.c.b16 %v476, %v475
  %v511 = vpack.c.b16 %v478, %v477
  %v512 = vpack.c.b16 %v480, %v479
  %v513 = vpack.c.b16 %v482, %v481
  %v514 = vpack.c.b16 %v484, %v483
  %v515 = vpack.c.b16 %v486, %v485
  %v516 = vpack.c.b16 %v488, %v487
  %v517 = vpack.c.b16 %v490, %v489
  %v518 = vpack.c.b16 %v492, %v491
  %v519 = vpack.c.b16 %v494, %v493
  %v520 = vpack.c.b16 %v496, %v495
  %v521 = vpack.c.b16 %v498, %v497
  %v522 = vpack.c.b16 %v500, %v499
  %v523 = vpack.c.b16 %v502, %v501
  %v524 = vpack.c.b16 %v504, %v503
  %v525 = vpack.c.b16 %v506, %v505
  %v526 = vpack.c.b16 %v508, %v507
  %545 = vmatprep.subr.bf16.mxu0 0
  %546 = vmatpush1.bf16.msra.mxu0 %v207
  %547 = vmatprep.subr.bf16.mxu0 0
  %548 = vmatpush1.bf16.msra.mxu0 %v208
  %549 = vmatprep.subr.bf16.mxu0 0
  %550 = vmatpush1.bf16.msra.mxu0 %v209
  %551 = vmatprep.subr.bf16.mxu0 0
  %552 = vmatpush1.bf16.msra.mxu0 %v210
  %553 = vmatprep.subr.bf16.mxu0 0
  %554 = vmatpush1.bf16.msra.mxu0 %v211
  %555 = vmatprep.subr.bf16.mxu0 0
  %556 = vmatpush1.bf16.msra.mxu0 %v212
  %557 = vmatprep.subr.bf16.mxu0 0
  %558 = vmatpush1.bf16.msra.mxu0 %v213
  %559 = vmatprep.subr.bf16.mxu0 0
  %560 = vmatpush1.bf16.msra.mxu0 %v214
  %561 = vmatprep.subr.bf16.mxu0 0
  %562 = vmatpush1.bf16.msra.mxu0 0
  %563 = vmatprep.subr.bf16.mxu0 0
  %564 = vmatpush1.bf16.msra.mxu0 0
  %565 = vmatprep.subr.bf16.mxu0 0
  %566 = vmatpush1.bf16.msra.mxu0 0
  %567 = vmatprep.subr.bf16.mxu0 0
  %568 = vmatpush1.bf16.msra.mxu0 0
  %569 = vmatprep.subr.bf16.mxu0 0
  %570 = vmatpush1.bf16.msra.mxu0 0
  %571 = vmatprep.subr.bf16.mxu0 0
  %572 = vmatpush1.bf16.msra.mxu0 0
  %573 = vmatprep.subr.bf16.mxu0 0
  %574 = vmatpush1.bf16.msra.mxu0 0
  %575 = vmatprep.subr.bf16.mxu0 0
  %576 = vmatpush1.bf16.msra.mxu0 0
  %577 = vmatprep.mubr.bf16.mxu0 0
  %578 = vmatmul.mubr.bf16.gmra.mrb[0].mxu0 %v509
  %v579 = vpop.f32.mrb[0].mxu0
  %v580 = vadd.f32 0.0, %v579
  %v581 = vpop.f32.mrb[0].mxu0
  %v582 = vpop.f32.mrb[0].mxu0
  %v583 = vadd.f32 0.0, %v582
  %v584 = vpop.f32.mrb[0].mxu0
  %585 = vmatprep.mubr.bf16.mxu0 0
  %586 = vmatmul.mubr.bf16.gmra.mrb[0].mxu0 %v510
  %v587 = vpop.f32.mrb[0].mxu0
  %v588 = vadd.f32 0.0, %v587
  %v589 = vpop.f32.mrb[0].mxu0
  %v590 = vpop.f32.mrb[0].mxu0
  %v591 = vadd.f32 0.0, %v590
  %v592 = vpop.f32.mrb[0].mxu0
  %593 = vmatprep.mubr.bf16.mxu0 0
  %594 = vmatmul.mubr.bf16.gmra.mrb[0].mxu0 %v511
  %v595 = vpop.f32.mrb[0].mxu0
  %v596 = vadd.f32 0.0, %v595
  %v597 = vpop.f32.mrb[0].mxu0
  %v598 = vpop.f32.mrb[0].mxu0
  %v599 = vadd.f32 0.0, %v598
  %v600 = vpop.f32.mrb[0].mxu0
  %601 = vmatprep.mubr.bf16.mxu0 0
  %602 = vmatmul.mubr.bf16.gmra.mrb[0].mxu0 %v512
  %v603 = vpop.f32.mrb[0].mxu0
  %v604 = vadd.f32 0.0, %v603
  %v605 = vpop.f32.mrb[0].mxu0
  %v606 = vpop.f32.mrb[0].mxu0
  %v607 = vadd.f32 0.0, %v606
  %v608 = vpop.f32.mrb[0].mxu0
  %609 = vmatprep.mubr.bf16.mxu0 0
  %610 = vmatmul.mubr.bf16.gmra.mrb[0].mxu0 %v513
  %v611 = vpop.f32.mrb[0].mxu0
  %v612 = vadd.f32 0.0, %v611
  %v613 = vpop.f32.mrb[0].mxu0
  %v614 = vpop.f32.mrb[0].mxu0
  %v615 = vadd.f32 0.0, %v614
  %v616 = vpop.f32.mrb[0].mxu0
  %617 = vmatprep.mubr.bf16.mxu0 0
  %618 = vmatmul.mubr.bf16.gmra.mrb[0].mxu0 %v514
  %v619 = vpop.f32.mrb[0].mxu0
  %v620 = vadd.f32 0.0, %v619
  %v621 = vpop.f32.mrb[0].mxu0
  %v622 = vpop.f32.mrb[0].mxu0
  %v623 = vadd.f32 0.0, %v622
  %v624 = vpop.f32.mrb[0].mxu0
  %625 = vmatprep.mubr.bf16.mxu0 0
  %626 = vmatmul.mubr.bf16.gmra.mrb[0].mxu0 %v515
  %v627 = vpop.f32.mrb[0].mxu0
  %v628 = vadd.f32 0.0, %v627
  %v629 = vpop.f32.mrb[0].mxu0
  %v630 = vpop.f32.mrb[0].mxu0
  %v631 = vadd.f32 0.0, %v630
  %v632 = vpop.f32.mrb[0].mxu0
  %633 = vmatprep.mubr.bf16.mxu0 0
  %634 = vmatmul.mubr.bf16.gmra.mrb[0].mxu0 %v516
  %v635 = vpop.f32.mrb[0].mxu0
  %v636 = vadd.f32 0.0, %v635
  %v637 = vpop.f32.mrb[0].mxu0
  %v638 = vpop.f32.mrb[0].mxu0
  %v639 = vadd.f32 0.0, %v638
  %v640 = vpop.f32.mrb[0].mxu0
  %641 = vmatprep.mubr.bf16.mxu0 0
  %642 = vmatmul.mubr.bf16.gmra.mrb[0].mxu0 %v517
  %v643 = vpop.f32.mrb[0].mxu0
  %v644 = vadd.f32 0.0, %v643
  %v645 = vpop.f32.mrb[0].mxu0
  %v646 = vpop.f32.mrb[0].mxu0
  %v647 = vadd.f32 0.0, %v646
  %v648 = vpop.f32.mrb[0].mxu0
  %649 = vmatprep.mubr.bf16.mxu0 0
  %650 = vmatmul.mubr.bf16.gmra.mrb[0].mxu0 %v518
  %v651 = vpop.f32.mrb[0].mxu0
  %v652 = vadd.f32 0.0, %v651
  %v653 = vpop.f32.mrb[0].mxu0
  %v654 = vpop.f32.mrb[0].mxu0
  %v655 = vadd.f32 0.0, %v654
  %v656 = vpop.f32.mrb[0].mxu0
  %657 = vmatprep.mubr.bf16.mxu0 0
  %658 = vmatmul.mubr.bf16.gmra.mrb[0].mxu0 %v519
  %v659 = vpop.f32.mrb[0].mxu0
  %v660 = vadd.f32 0.0, %v659
  %v661 = vpop.f32.mrb[0].mxu0
  %v662 = vpop.f32.mrb[0].mxu0
  %v663 = vadd.f32 0.0, %v662
  %v664 = vpop.f32.mrb[0].mxu0
  %665 = vmatprep.mubr.bf16.mxu0 0
  %666 = vmatmul.mubr.bf16.gmra.mrb[0].mxu0 %v520
  %v667 = vpop.f32.mrb[0].mxu0
  %v668 = vadd.f32 0.0, %v667
  %v669 = vpop.f32.mrb[0].mxu0
  %v670 = vpop.f32.mrb[0].mxu0
  %v671 = vadd.f32 0.0, %v670
  %v672 = vpop.f32.mrb[0].mxu0
  %673 = vmatprep.mubr.bf16.mxu0 0
  %674 = vmatmul.mubr.bf16.gmra.mrb[0].mxu0 %v521
  %v675 = vpop.f32.mrb[0].mxu0
  %v676 = vadd.f32 0.0, %v675
  %v677 = vpop.f32.mrb[0].mxu0
  %v678 = vpop.f32.mrb[0].mxu0
  %v679 = vadd.f32 0.0, %v678
  %v680 = vpop.f32.mrb[0].mxu0
  %681 = vmatprep.mubr.bf16.mxu0 0
  %682 = vmatmul.mubr.bf16.gmra.mrb[0].mxu0 %v522
  %v683 = vpop.f32.mrb[0].mxu0
  %v684 = vadd.f32 0.0, %v683
  %v685 = vpop.f32.mrb[0].mxu0
  %v686 = vpop.f32.mrb[0].mxu0
  %v687 = vadd.f32 0.0, %v686
  %v688 = vpop.f32.mrb[0].mxu0
  %689 = vmatprep.mubr.bf16.mxu0 0
  %690 = vmatmul.mubr.bf16.gmra.mrb[0].mxu0 %v523
  %v691 = vpop.f32.mrb[0].mxu0
  %v692 = vadd.f32 0.0, %v691
  %v693 = vpop.f32.mrb[0].mxu0
  %v694 = vpop.f32.mrb[0].mxu0
  %v695 = vadd.f32 0.0, %v694
  %v696 = vpop.f32.mrb[0].mxu0
  %697 = vmatprep.mubr.bf16.mxu0 0
  %698 = vmatmul.mubr.bf16.gmra.mrb[0].mxu0 %v524
  %v699 = vpop.f32.mrb[0].mxu0
  %v700 = vadd.f32 0.0, %v699
  %v701 = vpop.f32.mrb[0].mxu0
  %v702 = vpop.f32.mrb[0].mxu0
  %v703 = vadd.f32 0.0, %v702
  %v704 = vpop.f32.mrb[0].mxu0
  %705 = vmatprep.mubr.bf16.mxu0 0
  %706 = vmatmul.mubr.bf16.gmra.mrb[0].mxu0 %v525
  %v707 = vpop.f32.mrb[0].mxu0
  %v708 = vadd.f32 0.0, %v707
  %v709 = vpop.f32.mrb[0].mxu0
  %v710 = vpop.f32.mrb[0].mxu0
  %v711 = vadd.f32 0.0, %v710
  %v712 = vpop.f32.mrb[0].mxu0
  %713 = vmatprep.mubr.bf16.mxu0 0
  %714 = vmatmul.mubr.bf16.gmra.mrb[0].mxu0 %v526
  %v715 = vpop.f32.mrb[0].mxu0
  %v716 = vadd.f32 0.0, %v715
  %v717 = vpop.f32.mrb[0].mxu0
  %v718 = vpop.f32.mrb[0].mxu0
  %v719 = vadd.f32 0.0, %v718
  %v720 = vpop.f32.mrb[0].mxu0
  %721 = vdwg.mxu0
  %s722 = scalar_lea.vmem %s0, 288
  %v723 = vld [vmem:[%s722] sm:$0xf]
  %v724 = vld [vmem:[%s722 + $0x4] sm:$0xf]
  %v725 = vld [vmem:[%s722 + $0x8] sm:$0xf]
  %v726 = vld [vmem:[%s722 + $0xc] sm:$0xf]
  %v727 = vld [vmem:[%s722 + $0x10] sm:$0xf]
  %v728 = vld [vmem:[%s722 + $0x14] sm:$0xf]
  %v729 = vld [vmem:[%s722 + $0x18] sm:$0xf]
  %v730 = vld [vmem:[%s722 + $0x1c] sm:$0xf]
  %v731 = vld [vmem:[%s722 + $0x20] sm:$0xf]
  %v732 = vld [vmem:[%s722 + $0x24] sm:$0xf]
  %v733 = vld [vmem:[%s722 + $0x28] sm:$0xf]
  %v734 = vld [vmem:[%s722 + $0x2c] sm:$0xf]
  %v735 = vld [vmem:[%s722 + $0x30] sm:$0xf]
  %v736 = vld [vmem:[%s722 + $0x34] sm:$0xf]
  %v737 = vld [vmem:[%s722 + $0x38] sm:$0xf]
  %v738 = vld [vmem:[%s722 + $0x3c] sm:$0xf]
  %v739 = vld [vmem:[%s722 + $0x40] sm:$0xf]
  %v740 = vld [vmem:[%s722 + $0x44] sm:$0xf]
  %v741 = vld [vmem:[%s722 + $0x48] sm:$0xf]
  %v742 = vld [vmem:[%s722 + $0x4c] sm:$0xf]
  %v743 = vld [vmem:[%s722 + $0x50] sm:$0xf]
  %v744 = vld [vmem:[%s722 + $0x54] sm:$0xf]
  %v745 = vld [vmem:[%s722 + $0x58] sm:$0xf]
  %v746 = vld [vmem:[%s722 + $0x5c] sm:$0xf]
  %v747 = vld [vmem:[%s722 + $0x60] sm:$0xf]
  %v748 = vld [vmem:[%s722 + $0x64] sm:$0xf]
  %v749 = vld [vmem:[%s722 + $0x68] sm:$0xf]
  %v750 = vld [vmem:[%s722 + $0x6c] sm:$0xf]
  %v751 = vld [vmem:[%s722 + $0x70] sm:$0xf]
  %v752 = vld [vmem:[%s722 + $0x74] sm:$0xf]
  %v753 = vld [vmem:[%s722 + $0x78] sm:$0xf]
  %v754 = vld [vmem:[%s722 + $0x7c] sm:$0xf]
  %v755 = vld [vmem:[%s722 + $0x80] sm:$0xf]
  %v756 = vld [vmem:[%s722 + $0x84] sm:$0xf]
  %v757 = vld [vmem:[%s722 + $0x88] sm:$0xf]
  %v758 = vld [vmem:[%s722 + $0x8c] sm:$0xf]
  %v795 = vunpack.c.l.b16 %v723
  %v796 = vunpack.c.l.b16 %v724
  %v797 = vunpack.c.l.b16 %v725
  %v798 = vunpack.c.l.b16 %v726
  %v799 = vunpack.c.l.b16 %v727
  %v800 = vunpack.c.l.b16 %v728
  %v801 = vunpack.c.l.b16 %v729
  %v802 = vunpack.c.l.b16 %v730
  %v803 = vunpack.c.l.b16 %v731
  %v804 = vunpack.c.l.b16 %v732
  %v805 = vunpack.c.l.b16 %v733
  %v806 = vunpack.c.l.b16 %v734
  %v807 = vunpack.c.l.b16 %v735
  %v808 = vunpack.c.l.b16 %v736
  %v809 = vunpack.c.l.b16 %v737
  %v810 = vunpack.c.l.b16 %v738
  %v811 = vunpack.c.l.b16 %v739
  %v812 = vunpack.c.l.b16 %v740
  %v813 = vunpack.c.l.b16 %v741
  %v814 = vunpack.c.l.b16 %v742
  %v815 = vunpack.c.l.b16 %v743
  %v816 = vunpack.c.l.b16 %v744
  %v817 = vunpack.c.l.b16 %v745
  %v818 = vunpack.c.l.b16 %v746
  %v819 = vunpack.c.l.b16 %v747
  %v820 = vunpack.c.l.b16 %v748
  %v821 = vunpack.c.l.b16 %v749
  %v822 = vunpack.c.l.b16 %v750
  %v823 = vunpack.c.l.b16 %v751
  %v824 = vunpack.c.l.b16 %v752
  %v825 = vunpack.c.l.b16 %v753
  %v826 = vunpack.c.l.b16 %v754
  %v827 = vunpack.c.l.b16 %v755
  %v828 = vunpack.c.l.b16 %v756
  %v829 = vunpack.c.l.b16 %v757
  %v830 = vunpack.c.l.b16 %v758
  %v831 = vpack.c.b16 %v796, %v795
  %v832 = vpack.c.b16 %v798, %v797
  %v833 = vpack.c.b16 %v800, %v799
  %v834 = vpack.c.b16 %v802, %v801
  %v835 = vpack.c.b16 %v804, %v803
  %v836 = vpack.c.b16 %v806, %v805
  %v837 = vpack.c.b16 %v808, %v807
  %v838 = vpack.c.b16 %v810, %v809
  %v839 = vpack.c.b16 %v812, %v811
  %v840 = vpack.c.b16 %v814, %v813
  %v841 = vpack.c.b16 %v816, %v815
  %v842 = vpack.c.b16 %v818, %v817
  %v843 = vpack.c.b16 %v820, %v819
  %v844 = vpack.c.b16 %v822, %v821
  %v845 = vpack.c.b16 %v824, %v823
  %v846 = vpack.c.b16 %v826, %v825
  %v847 = vpack.c.b16 %v828, %v827
  %v848 = vpack.c.b16 %v830, %v829
  %867 = vmatprep.subr.bf16.mxu0 0
  %868 = vmatpush1.bf16.msra.mxu0 %v207
  %869 = vmatprep.subr.bf16.mxu0 0
  %870 = vmatpush1.bf16.msra.mxu0 %v208
  %871 = vmatprep.subr.bf16.mxu0 0
  %872 = vmatpush1.bf16.msra.mxu0 %v209
  %873 = vmatprep.subr.bf16.mxu0 0
  %874 = vmatpush1.bf16.msra.mxu0 %v210
  %875 = vmatprep.subr.bf16.mxu0 0
  %876 = vmatpush1.bf16.msra.mxu0 %v211
  %877 = vmatprep.subr.bf16.mxu0 0
  %878 = vmatpush1.bf16.msra.mxu0 %v212
  %879 = vmatprep.subr.bf16.mxu0 0
  %880 = vmatpush1.bf16.msra.mxu0 %v213
  %881 = vmatprep.subr.bf16.mxu0 0
  %882 = vmatpush1.bf16.msra.mxu0 %v214
  %883 = vmatprep.subr.bf16.mxu0 0
  %884 = vmatpush1.bf16.msra.mxu0 0
  %885 = vmatprep.subr.bf16.mxu0 0
  %886 = vmatpush1.bf16.msra.mxu0 0
  %887 = vmatprep.subr.bf16.mxu0 0
  %888 = vmatpush1.bf16.msra.mxu0 0
  %889 = vmatprep.subr.bf16.mxu0 0
  %890 = vmatpush1.bf16.msra.mxu0 0
  %891 = vmatprep.subr.bf16.mxu0 0
  %892 = vmatpush1.bf16.msra.mxu0 0
  %893 = vmatprep.subr.bf16.mxu0 0
  %894 = vmatpush1.bf16.msra.mxu0 0
  %895 = vmatprep.subr.bf16.mxu0 0
  %896 = vmatpush1.bf16.msra.mxu0 0
  %897 = vmatprep.subr.bf16.mxu0 0
  %898 = vmatpush1.bf16.msra.mxu0 0
  %899 = vmatprep.mubr.bf16.mxu0 0
  %900 = vmatmul.mubr.bf16.gmra.mrb[0].mxu0 %v831
  %v901 = vpop.f32.mrb[0].mxu0
  %v902 = vadd.f32 0.0, %v901
  %v903 = vpop.f32.mrb[0].mxu0
  %v904 = vpop.f32.mrb[0].mxu0
  %v905 = vadd.f32 0.0, %v904
  %v906 = vpop.f32.mrb[0].mxu0
  %907 = vmatprep.mubr.bf16.mxu0 0
  %908 = vmatmul.mubr.bf16.gmra.mrb[0].mxu0 %v832
  %v909 = vpop.f32.mrb[0].mxu0
  %v910 = vadd.f32 0.0, %v909
  %v911 = vpop.f32.mrb[0].mxu0
  %v912 = vpop.f32.mrb[0].mxu0
  %v913 = vadd.f32 0.0, %v912
  %v914 = vpop.f32.mrb[0].mxu0
  %915 = vmatprep.mubr.bf16.mxu0 0
  %916 = vmatmul.mubr.bf16.gmra.mrb[0].mxu0 %v833
  %v917 = vpop.f32.mrb[0].mxu0
  %v918 = vadd.f32 0.0, %v917
  %v919 = vpop.f32.mrb[0].mxu0
  %v920 = vpop.f32.mrb[0].mxu0
  %v921 = vadd.f32 0.0, %v920
  %v922 = vpop.f32.mrb[0].mxu0
  %923 = vmatprep.mubr.bf16.mxu0 0
  %924 = vmatmul.mubr.bf16.gmra.mrb[0].mxu0 %v834
  %v925 = vpop.f32.mrb[0].mxu0
  %v926 = vadd.f32 0.0, %v925
  %v927 = vpop.f32.mrb[0].mxu0
  %v928 = vpop.f32.mrb[0].mxu0
  %v929 = vadd.f32 0.0, %v928
  %v930 = vpop.f32.mrb[0].mxu0
  %931 = vmatprep.mubr.bf16.mxu0 0
  %932 = vmatmul.mubr.bf16.gmra.mrb[0].mxu0 %v835
  %v933 = vpop.f32.mrb[0].mxu0
  %v934 = vadd.f32 0.0, %v933
  %v935 = vpop.f32.mrb[0].mxu0
  %v936 = vpop.f32.mrb[0].mxu0
  %v937 = vadd.f32 0.0, %v936
  %v938 = vpop.f32.mrb[0].mxu0
  %939 = vmatprep.mubr.bf16.mxu0 0
  %940 = vmatmul.mubr.bf16.gmra.mrb[0].mxu0 %v836
  %v941 = vpop.f32.mrb[0].mxu0
  %v942 = vadd.f32 0.0, %v941
  %v943 = vpop.f32.mrb[0].mxu0
  %v944 = vpop.f32.mrb[0].mxu0
  %v945 = vadd.f32 0.0, %v944
  %v946 = vpop.f32.mrb[0].mxu0
  %947 = vmatprep.mubr.bf16.mxu0 0
  %948 = vmatmul.mubr.bf16.gmra.mrb[0].mxu0 %v837
  %v949 = vpop.f32.mrb[0].mxu0
  %v950 = vadd.f32 0.0, %v949
  %v951 = vpop.f32.mrb[0].mxu0
  %v952 = vpop.f32.mrb[0].mxu0
  %v953 = vadd.f32 0.0, %v952
  %v954 = vpop.f32.mrb[0].mxu0
  %955 = vmatprep.mubr.bf16.mxu0 0
  %956 = vmatmul.mubr.bf16.gmra.mrb[0].mxu0 %v838
  %v957 = vpop.f32.mrb[0].mxu0
  %v958 = vadd.f32 0.0, %v957
  %v959 = vpop.f32.mrb[0].mxu0
  %v960 = vpop.f32.mrb[0].mxu0
  %v961 = vadd.f32 0.0, %v960
  %v962 = vpop.f32.mrb[0].mxu0
  %963 = vmatprep.mubr.bf16.mxu0 0
  %964 = vmatmul.mubr.bf16.gmra.mrb[0].mxu0 %v839
  %v965 = vpop.f32.mrb[0].mxu0
  %v966 = vadd.f32 0.0, %v965
  %v967 = vpop.f32.mrb[0].mxu0
  %v968 = vpop.f32.mrb[0].mxu0
  %v969 = vadd.f32 0.0, %v968
  %v970 = vpop.f32.mrb[0].mxu0
  %971 = vmatprep.mubr.bf16.mxu0 0
  %972 = vmatmul.mubr.bf16.gmra.mrb[0].mxu0 %v840
  %v973 = vpop.f32.mrb[0].mxu0
  %v974 = vadd.f32 0.0, %v973
  %v975 = vpop.f32.mrb[0].mxu0
  %v976 = vpop.f32.mrb[0].mxu0
  %v977 = vadd.f32 0.0, %v976
  %v978 = vpop.f32.mrb[0].mxu0
  %979 = vmatprep.mubr.bf16.mxu0 0
  %980 = vmatmul.mubr.bf16.gmra.mrb[0].mxu0 %v841
  %v981 = vpop.f32.mrb[0].mxu0
  %v982 = vadd.f32 0.0, %v981
  %v983 = vpop.f32.mrb[0].mxu0
  %v984 = vpop.f32.mrb[0].mxu0
  %v985 = vadd.f32 0.0, %v984
  %v986 = vpop.f32.mrb[0].mxu0
  %987 = vmatprep.mubr.bf16.mxu0 0
  %988 = vmatmul.mubr.bf16.gmra.mrb[0].mxu0 %v842
  %v989 = vpop.f32.mrb[0].mxu0
  %v990 = vadd.f32 0.0, %v989
  %v991 = vpop.f32.mrb[0].mxu0
  %v992 = vpop.f32.mrb[0].mxu0
  %v993 = vadd.f32 0.0, %v992
  %v994 = vpop.f32.mrb[0].mxu0
  %995 = vmatprep.mubr.bf16.mxu0 0
  %996 = vmatmul.mubr.bf16.gmra.mrb[0].mxu0 %v843
  %v997 = vpop.f32.mrb[0].mxu0
  %v998 = vadd.f32 0.0, %v997
  %v999 = vpop.f32.mrb[0].mxu0
  %v1000 = vpop.f32.mrb[0].mxu0
  %v1001 = vadd.f32 0.0, %v1000
  %v1002 = vpop.f32.mrb[0].mxu0
  %1003 = vmatprep.mubr.bf16.mxu0 0
  %1004 = vmatmul.mubr.bf16.gmra.mrb[0].mxu0 %v844
  %v1005 = vpop.f32.mrb[0].mxu0
  %v1006 = vadd.f32 0.0, %v1005
  %v1007 = vpop.f32.mrb[0].mxu0
  %v1008 = vpop.f32.mrb[0].mxu0
  %v1009 = vadd.f32 0.0, %v1008
  %v1010 = vpop.f32.mrb[0].mxu0
  %1011 = vmatprep.mubr.bf16.mxu0 0
  %1012 = vmatmul.mubr.bf16.gmra.mrb[0].mxu0 %v845
  %v1013 = vpop.f32.mrb[0].mxu0
  %v1014 = vadd.f32 0.0, %v1013
  %v1015 = vpop.f32.mrb[0].mxu0
  %v1016 = vpop.f32.mrb[0].mxu0
  %v1017 = vadd.f32 0.0, %v1016
  %v1018 = vpop.f32.mrb[0].mxu0
  %1019 = vmatprep.mubr.bf16.mxu0 0
  %1020 = vmatmul.mubr.bf16.gmra.mrb[0].mxu0 %v846
  %v1021 = vpop.f32.mrb[0].mxu0
  %v1022 = vadd.f32 0.0, %v1021
  %v1023 = vpop.f32.mrb[0].mxu0
  %v1024 = vpop.f32.mrb[0].mxu0
  %v1025 = vadd.f32 0.0, %v1024
  %v1026 = vpop.f32.mrb[0].mxu0
  %1027 = vmatprep.mubr.bf16.mxu0 0
  %1028 = vmatmul.mubr.bf16.gmra.mrb[0].mxu0 %v847
  %v1029 = vpop.f32.mrb[0].mxu0
  %v1030 = vadd.f32 0.0, %v1029
  %v1031 = vpop.f32.mrb[0].mxu0
  %v1032 = vpop.f32.mrb[0].mxu0
  %v1033 = vadd.f32 0.0, %v1032
  %v1034 = vpop.f32.mrb[0].mxu0
  %1035 = vmatprep.mubr.bf16.mxu0 0
  %1036 = vmatmul.mubr.bf16.gmra.mrb[0].mxu0 %v848
  %v1037 = vpop.f32.mrb[0].mxu0
  %v1038 = vadd.f32 0.0, %v1037
  %v1039 = vpop.f32.mrb[0].mxu0
  %v1040 = vpop.f32.mrb[0].mxu0
  %v1041 = vadd.f32 0.0, %v1040
  %v1042 = vpop.f32.mrb[0].mxu0
  %1043 = vdwg.mxu0
  %s1044 = scalar_lea.vmem %s0, 432
  %v1045 = vld [vmem:[%s1044] sm:$0xf]
  %v1046 = vld [vmem:[%s1044 + $0x4] sm:$0xf]
  %v1047 = vld [vmem:[%s1044 + $0x8] sm:$0xf]
  %v1048 = vld [vmem:[%s1044 + $0xc] sm:$0xf]
  %v1049 = vld [vmem:[%s1044 + $0x10] sm:$0xf]
  %v1050 = vld [vmem:[%s1044 + $0x14] sm:$0xf]
  %v1051 = vld [vmem:[%s1044 + $0x18] sm:$0xf]
  %v1052 = vld [vmem:[%s1044 + $0x1c] sm:$0xf]
  %v1053 = vld [vmem:[%s1044 + $0x20] sm:$0xf]
  %v1054 = vld [vmem:[%s1044 + $0x24] sm:$0xf]
  %v1055 = vld [vmem:[%s1044 + $0x28] sm:$0xf]
  %v1056 = vld [vmem:[%s1044 + $0x2c] sm:$0xf]
  %v1057 = vld [vmem:[%s1044 + $0x30] sm:$0xf]
  %v1058 = vld [vmem:[%s1044 + $0x34] sm:$0xf]
  %v1059 = vld [vmem:[%s1044 + $0x38] sm:$0xf]
  %v1060 = vld [vmem:[%s1044 + $0x3c] sm:$0xf]
  %v1061 = vld [vmem:[%s1044 + $0x40] sm:$0xf]
  %v1062 = vld [vmem:[%s1044 + $0x44] sm:$0xf]
  %v1063 = vld [vmem:[%s1044 + $0x48] sm:$0xf]
  %v1064 = vld [vmem:[%s1044 + $0x4c] sm:$0xf]
  %v1065 = vld [vmem:[%s1044 + $0x50] sm:$0xf]
  %v1066 = vld [vmem:[%s1044 + $0x54] sm:$0xf]
  %v1067 = vld [vmem:[%s1044 + $0x58] sm:$0xf]
  %v1068 = vld [vmem:[%s1044 + $0x5c] sm:$0xf]
  %v1069 = vld [vmem:[%s1044 + $0x60] sm:$0xf]
  %v1070 = vld [vmem:[%s1044 + $0x64] sm:$0xf]
  %v1071 = vld [vmem:[%s1044 + $0x68] sm:$0xf]
  %v1072 = vld [vmem:[%s1044 + $0x6c] sm:$0xf]
  %v1073 = vld [vmem:[%s1044 + $0x70] sm:$0xf]
  %v1074 = vld [vmem:[%s1044 + $0x74] sm:$0xf]
  %v1075 = vld [vmem:[%s1044 + $0x78] sm:$0xf]
  %v1076 = vld [vmem:[%s1044 + $0x7c] sm:$0xf]
  %v1077 = vld [vmem:[%s1044 + $0x80] sm:$0xf]
  %v1078 = vld [vmem:[%s1044 + $0x84] sm:$0xf]
  %v1079 = vld [vmem:[%s1044 + $0x88] sm:$0xf]
  %v1080 = vld [vmem:[%s1044 + $0x8c] sm:$0xf]
  %v1117 = vunpack.c.l.b16 %v1045
  %v1118 = vunpack.c.l.b16 %v1046
  %v1119 = vunpack.c.l.b16 %v1047
  %v1120 = vunpack.c.l.b16 %v1048
  %v1121 = vunpack.c.l.b16 %v1049
  %v1122 = vunpack.c.l.b16 %v1050
  %v1123 = vunpack.c.l.b16 %v1051
  %v1124 = vunpack.c.l.b16 %v1052
  %v1125 = vunpack.c.l.b16 %v1053
  %v1126 = vunpack.c.l.b16 %v1054
  %v1127 = vunpack.c.l.b16 %v1055
  %v1128 = vunpack.c.l.b16 %v1056
  %v1129 = vunpack.c.l.b16 %v1057
  %v1130 = vunpack.c.l.b16 %v1058
  %v1131 = vunpack.c.l.b16 %v1059
  %v1132 = vunpack.c.l.b16 %v1060
  %v1133 = vunpack.c.l.b16 %v1061
  %v1134 = vunpack.c.l.b16 %v1062
  %v1135 = vunpack.c.l.b16 %v1063
  %v1136 = vunpack.c.l.b16 %v1064
  %v1137 = vunpack.c.l.b16 %v1065
  %v1138 = vunpack.c.l.b16 %v1066
  %v1139 = vunpack.c.l.b16 %v1067
  %v1140 = vunpack.c.l.b16 %v1068
  %v1141 = vunpack.c.l.b16 %v1069
  %v1142 = vunpack.c.l.b16 %v1070
  %v1143 = vunpack.c.l.b16 %v1071
  %v1144 = vunpack.c.l.b16 %v1072
  %v1145 = vunpack.c.l.b16 %v1073
  %v1146 = vunpack.c.l.b16 %v1074
  %v1147 = vunpack.c.l.b16 %v1075
  %v1148 = vunpack.c.l.b16 %v1076
  %v1149 = vunpack.c.l.b16 %v1077
  %v1150 = vunpack.c.l.b16 %v1078
  %v1151 = vunpack.c.l.b16 %v1079
  %v1152 = vunpack.c.l.b16 %v1080
  %v1153 = vpack.c.b16 %v1118, %v1117
  %v1154 = vpack.c.b16 %v1120, %v1119
  %v1155 = vpack.c.b16 %v1122, %v1121
  %v1156 = vpack.c.b16 %v1124, %v1123
  %v1157 = vpack.c.b16 %v1126, %v1125
  %v1158 = vpack.c.b16 %v1128, %v1127
  %v1159 = vpack.c.b16 %v1130, %v1129
  %v1160 = vpack.c.b16 %v1132, %v1131
  %v1161 = vpack.c.b16 %v1134, %v1133
  %v1162 = vpack.c.b16 %v1136, %v1135
  %v1163 = vpack.c.b16 %v1138, %v1137
  %v1164 = vpack.c.b16 %v1140, %v1139
  %v1165 = vpack.c.b16 %v1142, %v1141
  %v1166 = vpack.c.b16 %v1144, %v1143
  %v1167 = vpack.c.b16 %v1146, %v1145
  %v1168 = vpack.c.b16 %v1148, %v1147
  %v1169 = vpack.c.b16 %v1150, %v1149
  %v1170 = vpack.c.b16 %v1152, %v1151
  %1189 = vmatprep.subr.bf16.mxu0 0
  %1190 = vmatpush1.bf16.msra.mxu0 %v207
  %1191 = vmatprep.subr.bf16.mxu0 0
  %1192 = vmatpush1.bf16.msra.mxu0 %v208
  %1193 = vmatprep.subr.bf16.mxu0 0
  %1194 = vmatpush1.bf16.msra.mxu0 %v209
  %1195 = vmatprep.subr.bf16.mxu0 0
  %1196 = vmatpush1.bf16.msra.mxu0 %v210
  %1197 = vmatprep.subr.bf16.mxu0 0
  %1198 = vmatpush1.bf16.msra.mxu0 %v211
  %1199 = vmatprep.subr.bf16.mxu0 0
  %1200 = vmatpush1.bf16.msra.mxu0 %v212
  %1201 = vmatprep.subr.bf16.mxu0 0
  %1202 = vmatpush1.bf16.msra.mxu0 %v213
  %1203 = vmatprep.subr.bf16.mxu0 0
  %1204 = vmatpush1.bf16.msra.mxu0 %v214
  %1205 = vmatprep.subr.bf16.mxu0 0
  %1206 = vmatpush1.bf16.msra.mxu0 0
  %1207 = vmatprep.subr.bf16.mxu0 0
  %1208 = vmatpush1.bf16.msra.mxu0 0
  %1209 = vmatprep.subr.bf16.mxu0 0
  %1210 = vmatpush1.bf16.msra.mxu0 0
  %1211 = vmatprep.subr.bf16.mxu0 0
  %1212 = vmatpush1.bf16.msra.mxu0 0
  %1213 = vmatprep.subr.bf16.mxu0 0
  %1214 = vmatpush1.bf16.msra.mxu0 0
  %1215 = vmatprep.subr.bf16.mxu0 0
  %1216 = vmatpush1.bf16.msra.mxu0 0
  %1217 = vmatprep.subr.bf16.mxu0 0
  %1218 = vmatpush1.bf16.msra.mxu0 0
  %1219 = vmatprep.subr.bf16.mxu0 0
  %1220 = vmatpush1.bf16.msra.mxu0 0
  %1221 = vmatprep.mubr.bf16.mxu0 0
  %1222 = vmatmul.mubr.bf16.gmra.mrb[0].mxu0 %v1153
  %v1223 = vpop.f32.mrb[0].mxu0
  %v1224 = vadd.f32 0.0, %v1223
  %v1225 = vpop.f32.mrb[0].mxu0
  %v1226 = vpop.f32.mrb[0].mxu0
  %v1227 = vadd.f32 0.0, %v1226
  %v1228 = vpop.f32.mrb[0].mxu0
  %1229 = vmatprep.mubr.bf16.mxu0 0
  %1230 = vmatmul.mubr.bf16.gmra.mrb[0].mxu0 %v1154
  %v1231 = vpop.f32.mrb[0].mxu0
  %v1232 = vadd.f32 0.0, %v1231
  %v1233 = vpop.f32.mrb[0].mxu0
  %v1234 = vpop.f32.mrb[0].mxu0
  %v1235 = vadd.f32 0.0, %v1234
  %v1236 = vpop.f32.mrb[0].mxu0
  %1237 = vmatprep.mubr.bf16.mxu0 0
  %1238 = vmatmul.mubr.bf16.gmra.mrb[0].mxu0 %v1155
  %v1239 = vpop.f32.mrb[0].mxu0
  %v1240 = vadd.f32 0.0, %v1239
  %v1241 = vpop.f32.mrb[0].mxu0
  %v1242 = vpop.f32.mrb[0].mxu0
  %v1243 = vadd.f32 0.0, %v1242
  %v1244 = vpop.f32.mrb[0].mxu0
  %1245 = vmatprep.mubr.bf16.mxu0 0
  %1246 = vmatmul.mubr.bf16.gmra.mrb[0].mxu0 %v1156
  %v1247 = vpop.f32.mrb[0].mxu0
  %v1248 = vadd.f32 0.0, %v1247
  %v1249 = vpop.f32.mrb[0].mxu0
  %v1250 = vpop.f32.mrb[0].mxu0
  %v1251 = vadd.f32 0.0, %v1250
  %v1252 = vpop.f32.mrb[0].mxu0
  %1253 = vmatprep.mubr.bf16.mxu0 0
  %1254 = vmatmul.mubr.bf16.gmra.mrb[0].mxu0 %v1157
  %v1255 = vpop.f32.mrb[0].mxu0
  %v1256 = vadd.f32 0.0, %v1255
  %v1257 = vpop.f32.mrb[0].mxu0
  %v1258 = vpop.f32.mrb[0].mxu0
  %v1259 = vadd.f32 0.0, %v1258
  %v1260 = vpop.f32.mrb[0].mxu0
  %1261 = vmatprep.mubr.bf16.mxu0 0
  %1262 = vmatmul.mubr.bf16.gmra.mrb[0].mxu0 %v1158
  %v1263 = vpop.f32.mrb[0].mxu0
  %v1264 = vadd.f32 0.0, %v1263
  %v1265 = vpop.f32.mrb[0].mxu0
  %v1266 = vpop.f32.mrb[0].mxu0
  %v1267 = vadd.f32 0.0, %v1266
  %v1268 = vpop.f32.mrb[0].mxu0
  %1269 = vmatprep.mubr.bf16.mxu0 0
  %1270 = vmatmul.mubr.bf16.gmra.mrb[0].mxu0 %v1159
  %v1271 = vpop.f32.mrb[0].mxu0
  %v1272 = vadd.f32 0.0, %v1271
  %v1273 = vpop.f32.mrb[0].mxu0
  %v1274 = vpop.f32.mrb[0].mxu0
  %v1275 = vadd.f32 0.0, %v1274
  %v1276 = vpop.f32.mrb[0].mxu0
  %1277 = vmatprep.mubr.bf16.mxu0 0
  %1278 = vmatmul.mubr.bf16.gmra.mrb[0].mxu0 %v1160
  %v1279 = vpop.f32.mrb[0].mxu0
  %v1280 = vadd.f32 0.0, %v1279
  %v1281 = vpop.f32.mrb[0].mxu0
  %v1282 = vpop.f32.mrb[0].mxu0
  %v1283 = vadd.f32 0.0, %v1282
  %v1284 = vpop.f32.mrb[0].mxu0
  %1285 = vmatprep.mubr.bf16.mxu0 0
  %1286 = vmatmul.mubr.bf16.gmra.mrb[0].mxu0 %v1161
  %v1287 = vpop.f32.mrb[0].mxu0
  %v1288 = vadd.f32 0.0, %v1287
  %v1289 = vpop.f32.mrb[0].mxu0
  %v1290 = vpop.f32.mrb[0].mxu0
  %v1291 = vadd.f32 0.0, %v1290
  %v1292 = vpop.f32.mrb[0].mxu0
  %1293 = vmatprep.mubr.bf16.mxu0 0
  %1294 = vmatmul.mubr.bf16.gmra.mrb[0].mxu0 %v1162
  %v1295 = vpop.f32.mrb[0].mxu0
  %v1296 = vadd.f32 0.0, %v1295
  %v1297 = vpop.f32.mrb[0].mxu0
  %v1298 = vpop.f32.mrb[0].mxu0
  %v1299 = vadd.f32 0.0, %v1298
  %v1300 = vpop.f32.mrb[0].mxu0
  %1301 = vmatprep.mubr.bf16.mxu0 0
  %1302 = vmatmul.mubr.bf16.gmra.mrb[0].mxu0 %v1163
  %v1303 = vpop.f32.mrb[0].mxu0
  %v1304 = vadd.f32 0.0, %v1303
  %v1305 = vpop.f32.mrb[0].mxu0
  %v1306 = vpop.f32.mrb[0].mxu0
  %v1307 = vadd.f32 0.0, %v1306
  %v1308 = vpop.f32.mrb[0].mxu0
  %1309 = vmatprep.mubr.bf16.mxu0 0
  %1310 = vmatmul.mubr.bf16.gmra.mrb[0].mxu0 %v1164
  %v1311 = vpop.f32.mrb[0].mxu0
  %v1312 = vadd.f32 0.0, %v1311
  %v1313 = vpop.f32.mrb[0].mxu0
  %v1314 = vpop.f32.mrb[0].mxu0
  %v1315 = vadd.f32 0.0, %v1314
  %v1316 = vpop.f32.mrb[0].mxu0
  %1317 = vmatprep.mubr.bf16.mxu0 0
  %1318 = vmatmul.mubr.bf16.gmra.mrb[0].mxu0 %v1165
  %v1319 = vpop.f32.mrb[0].mxu0
  %v1320 = vadd.f32 0.0, %v1319
  %v1321 = vpop.f32.mrb[0].mxu0
  %v1322 = vpop.f32.mrb[0].mxu0
  %v1323 = vadd.f32 0.0, %v1322
  %v1324 = vpop.f32.mrb[0].mxu0
  %1325 = vmatprep.mubr.bf16.mxu0 0
  %1326 = vmatmul.mubr.bf16.gmra.mrb[0].mxu0 %v1166
  %v1327 = vpop.f32.mrb[0].mxu0
  %v1328 = vadd.f32 0.0, %v1327
  %v1329 = vpop.f32.mrb[0].mxu0
  %v1330 = vpop.f32.mrb[0].mxu0
  %v1331 = vadd.f32 0.0, %v1330
  %v1332 = vpop.f32.mrb[0].mxu0
  %1333 = vmatprep.mubr.bf16.mxu0 0
  %1334 = vmatmul.mubr.bf16.gmra.mrb[0].mxu0 %v1167
  %v1335 = vpop.f32.mrb[0].mxu0
  %v1336 = vadd.f32 0.0, %v1335
  %v1337 = vpop.f32.mrb[0].mxu0
  %v1338 = vpop.f32.mrb[0].mxu0
  %v1339 = vadd.f32 0.0, %v1338
  %v1340 = vpop.f32.mrb[0].mxu0
  %1341 = vmatprep.mubr.bf16.mxu0 0
  %1342 = vmatmul.mubr.bf16.gmra.mrb[0].mxu0 %v1168
  %v1343 = vpop.f32.mrb[0].mxu0
  %v1344 = vadd.f32 0.0, %v1343
  %v1345 = vpop.f32.mrb[0].mxu0
  %v1346 = vpop.f32.mrb[0].mxu0
  %v1347 = vadd.f32 0.0, %v1346
  %v1348 = vpop.f32.mrb[0].mxu0
  %1349 = vmatprep.mubr.bf16.mxu0 0
  %1350 = vmatmul.mubr.bf16.gmra.mrb[0].mxu0 %v1169
  %v1351 = vpop.f32.mrb[0].mxu0
  %v1352 = vadd.f32 0.0, %v1351
  %v1353 = vpop.f32.mrb[0].mxu0
  %v1354 = vpop.f32.mrb[0].mxu0
  %v1355 = vadd.f32 0.0, %v1354
  %v1356 = vpop.f32.mrb[0].mxu0
  %1357 = vmatprep.mubr.bf16.mxu0 0
  %1358 = vmatmul.mubr.bf16.gmra.mrb[0].mxu0 %v1170
  %v1359 = vpop.f32.mrb[0].mxu0
  %v1360 = vadd.f32 0.0, %v1359
  %v1361 = vpop.f32.mrb[0].mxu0
  %v1362 = vpop.f32.mrb[0].mxu0
  %v1363 = vadd.f32 0.0, %v1362
  %v1364 = vpop.f32.mrb[0].mxu0
  %1365 = vdwg.mxu0
  %v1366 = vmax.f32 %v258, %v580
  %v1367 = vmax.f32 %v261, %v583
  %v1368 = vmax.f32 %v266, %v588
  %v1369 = vmax.f32 %v269, %v591
  %v1370 = vmax.f32 %v274, %v596
  %v1371 = vmax.f32 %v277, %v599
  %v1372 = vmax.f32 %v282, %v604
  %v1373 = vmax.f32 %v285, %v607
  %v1374 = vmax.f32 %v290, %v612
  %v1375 = vmax.f32 %v293, %v615
  %v1376 = vmax.f32 %v298, %v620
  %v1377 = vmax.f32 %v301, %v623
  %v1378 = vmax.f32 %v306, %v628
  %v1379 = vmax.f32 %v309, %v631
  %v1380 = vmax.f32 %v314, %v636
  %v1381 = vmax.f32 %v317, %v639
  %v1382 = vmax.f32 %v322, %v644
  %v1383 = vmax.f32 %v325, %v647
  %v1384 = vmax.f32 %v330, %v652
  %v1385 = vmax.f32 %v333, %v655
  %v1386 = vmax.f32 %v338, %v660
  %v1387 = vmax.f32 %v341, %v663
  %v1388 = vmax.f32 %v346, %v668
  %v1389 = vmax.f32 %v349, %v671
  %v1390 = vmax.f32 %v354, %v676
  %v1391 = vmax.f32 %v357, %v679
  %v1392 = vmax.f32 %v362, %v684
  %v1393 = vmax.f32 %v365, %v687
  %v1394 = vmax.f32 %v370, %v692
  %v1395 = vmax.f32 %v373, %v695
  %v1396 = vmax.f32 %v378, %v700
  %v1397 = vmax.f32 %v381, %v703
  %v1398 = vmax.f32 %v386, %v708
  %v1399 = vmax.f32 %v389, %v711
  %v1400 = vmax.f32 %v394, %v716
  %v1401 = vmax.f32 %v397, %v719
  %v1402 = vmax.f32 %v902, %v1224
  %v1403 = vmax.f32 %v905, %v1227
  %v1404 = vmax.f32 %v910, %v1232
  %v1405 = vmax.f32 %v913, %v1235
  %v1406 = vmax.f32 %v918, %v1240
  %v1407 = vmax.f32 %v921, %v1243
  %v1408 = vmax.f32 %v926, %v1248
  %v1409 = vmax.f32 %v929, %v1251
  %v1410 = vmax.f32 %v934, %v1256
  %v1411 = vmax.f32 %v937, %v1259
  %v1412 = vmax.f32 %v942, %v1264
  %v1413 = vmax.f32 %v945, %v1267
  %v1414 = vmax.f32 %v950, %v1272
  %v1415 = vmax.f32 %v953, %v1275
  %v1416 = vmax.f32 %v958, %v1280
  %v1417 = vmax.f32 %v961, %v1283
  %v1418 = vmax.f32 %v966, %v1288
  %v1419 = vmax.f32 %v969, %v1291
  %v1420 = vmax.f32 %v974, %v1296
  %v1421 = vmax.f32 %v977, %v1299
  %v1422 = vmax.f32 %v982, %v1304
  %v1423 = vmax.f32 %v985, %v1307
  %v1424 = vmax.f32 %v990, %v1312
  %v1425 = vmax.f32 %v993, %v1315
  %v1426 = vmax.f32 %v998, %v1320
  %v1427 = vmax.f32 %v1001, %v1323
  %v1428 = vmax.f32 %v1006, %v1328
  %v1429 = vmax.f32 %v1009, %v1331
  %v1430 = vmax.f32 %v1014, %v1336
  %v1431 = vmax.f32 %v1017, %v1339
  %v1432 = vmax.f32 %v1022, %v1344
  %v1433 = vmax.f32 %v1025, %v1347
  %v1434 = vmax.f32 %v1030, %v1352
  %v1435 = vmax.f32 %v1033, %v1355
  %v1436 = vmax.f32 %v1038, %v1360
  %v1437 = vmax.f32 %v1041, %v1363
  %v1438 = vmax.f32 %v1366, %v1402
  %v1439 = vmax.f32 %v1367, %v1403
  %v1440 = vmax.f32 %v1368, %v1404
  %v1441 = vmax.f32 %v1369, %v1405
  %v1442 = vmax.f32 %v1370, %v1406
  %v1443 = vmax.f32 %v1371, %v1407
  %v1444 = vmax.f32 %v1372, %v1408
  %v1445 = vmax.f32 %v1373, %v1409
  %v1446 = vmax.f32 %v1374, %v1410
  %v1447 = vmax.f32 %v1375, %v1411
  %v1448 = vmax.f32 %v1376, %v1412
  %v1449 = vmax.f32 %v1377, %v1413
  %v1450 = vmax.f32 %v1378, %v1414
  %v1451 = vmax.f32 %v1379, %v1415
  %v1452 = vmax.f32 %v1380, %v1416
  %v1453 = vmax.f32 %v1381, %v1417
  %v1454 = vmax.f32 %v1382, %v1418
  %v1455 = vmax.f32 %v1383, %v1419
  %v1456 = vmax.f32 %v1384, %v1420
  %v1457 = vmax.f32 %v1385, %v1421
  %v1458 = vmax.f32 %v1386, %v1422
  %v1459 = vmax.f32 %v1387, %v1423
  %v1460 = vmax.f32 %v1388, %v1424
  %v1461 = vmax.f32 %v1389, %v1425
  %v1462 = vmax.f32 %v1390, %v1426
  %v1463 = vmax.f32 %v1391, %v1427
  %v1464 = vmax.f32 %v1392, %v1428
  %v1465 = vmax.f32 %v1393, %v1429
  %v1466 = vmax.f32 %v1394, %v1430
  %v1467 = vmax.f32 %v1395, %v1431
  %v1468 = vmax.f32 %v1396, %v1432
  %v1469 = vmax.f32 %v1397, %v1433
  %v1470 = vmax.f32 %v1398, %v1434
  %v1471 = vmax.f32 %v1399, %v1435
  %v1472 = vmax.f32 %v1400, %v1436
  %v1473 = vmax.f32 %v1401, %v1437
  %v1474 = vld [vmem:[%s2] sm:$0x1]
  %v1476 = vlaneseq
  %v1477 = vshrl.u32 %v1476, 7
  %v1478 = vsub.s32 0, %v1477
  %v1479 = vrot.slane %v1474, %v1478
  %v1481 = vadd.f32 %v1438, %v1479
  %v1482 = vadd.f32 %v1439, %v1479
  %v1483 = vadd.f32 %v1440, %v1479
  %v1484 = vadd.f32 %v1441, %v1479
  %v1485 = vadd.f32 %v1442, %v1479
  %v1486 = vadd.f32 %v1443, %v1479
  %v1487 = vadd.f32 %v1444, %v1479
  %v1488 = vadd.f32 %v1445, %v1479
  %v1489 = vadd.f32 %v1446, %v1479
  %v1490 = vadd.f32 %v1447, %v1479
  %v1491 = vadd.f32 %v1448, %v1479
  %v1492 = vadd.f32 %v1449, %v1479
  %v1493 = vadd.f32 %v1450, %v1479
  %v1494 = vadd.f32 %v1451, %v1479
  %v1495 = vadd.f32 %v1452, %v1479
  %v1496 = vadd.f32 %v1453, %v1479
  %v1497 = vadd.f32 %v1454, %v1479
  %v1498 = vadd.f32 %v1455, %v1479
  %v1499 = vadd.f32 %v1456, %v1479
  %v1500 = vadd.f32 %v1457, %v1479
  %v1501 = vadd.f32 %v1458, %v1479
  %v1502 = vadd.f32 %v1459, %v1479
  %v1503 = vadd.f32 %v1460, %v1479
  %v1504 = vadd.f32 %v1461, %v1479
  %v1505 = vadd.f32 %v1462, %v1479
  %v1506 = vadd.f32 %v1463, %v1479
  %v1507 = vadd.f32 %v1464, %v1479
  %v1508 = vadd.f32 %v1465, %v1479
  %v1509 = vadd.f32 %v1466, %v1479
  %v1510 = vadd.f32 %v1467, %v1479
  %v1511 = vadd.f32 %v1468, %v1479
  %v1512 = vadd.f32 %v1469, %v1479
  %v1513 = vadd.f32 %v1470, %v1479
  %v1514 = vadd.f32 %v1471, %v1479
  %v1515 = vadd.f32 %v1472, %v1479
  %v1516 = vadd.f32 %v1473, %v1479
  %v1517 = vmax.f32 %v1481, 0.0
  %v1518 = vmax.f32 %v1482, 0.0
  %v1519 = vmax.f32 %v1483, 0.0
  %v1520 = vmax.f32 %v1484, 0.0
  %v1521 = vmax.f32 %v1485, 0.0
  %v1522 = vmax.f32 %v1486, 0.0
  %v1523 = vmax.f32 %v1487, 0.0
  %v1524 = vmax.f32 %v1488, 0.0
  %v1525 = vmax.f32 %v1489, 0.0
  %v1526 = vmax.f32 %v1490, 0.0
  %v1527 = vmax.f32 %v1491, 0.0
  %v1528 = vmax.f32 %v1492, 0.0
  %v1529 = vmax.f32 %v1493, 0.0
  %v1530 = vmax.f32 %v1494, 0.0
  %v1531 = vmax.f32 %v1495, 0.0
  %v1532 = vmax.f32 %v1496, 0.0
  %v1533 = vmax.f32 %v1497, 0.0
  %v1534 = vmax.f32 %v1498, 0.0
  %v1535 = vmax.f32 %v1499, 0.0
  %v1536 = vmax.f32 %v1500, 0.0
  %v1537 = vmax.f32 %v1501, 0.0
  %v1538 = vmax.f32 %v1502, 0.0
  %v1539 = vmax.f32 %v1503, 0.0
  %v1540 = vmax.f32 %v1504, 0.0
  %v1541 = vmax.f32 %v1505, 0.0
  %v1542 = vmax.f32 %v1506, 0.0
  %v1543 = vmax.f32 %v1507, 0.0
  %v1544 = vmax.f32 %v1508, 0.0
  %v1545 = vmax.f32 %v1509, 0.0
  %v1546 = vmax.f32 %v1510, 0.0
  %v1547 = vmax.f32 %v1511, 0.0
  %v1548 = vmax.f32 %v1512, 0.0
  %v1549 = vmax.f32 %v1513, 0.0
  %v1550 = vmax.f32 %v1514, 0.0
  %v1551 = vmax.f32 %v1515, 0.0
  %v1552 = vmax.f32 %v1516, 0.0
  %v1553 = vpack.c.bf16 %v1518, %v1517
  %v1554 = vpack.c.bf16 %v1520, %v1519
  %v1555 = vpack.c.bf16 %v1522, %v1521
  %v1556 = vpack.c.bf16 %v1524, %v1523
  %v1557 = vpack.c.bf16 %v1526, %v1525
  %v1558 = vpack.c.bf16 %v1528, %v1527
  %v1559 = vpack.c.bf16 %v1530, %v1529
  %v1560 = vpack.c.bf16 %v1532, %v1531
  %v1561 = vpack.c.bf16 %v1534, %v1533
  %v1562 = vpack.c.bf16 %v1536, %v1535
  %v1563 = vpack.c.bf16 %v1538, %v1537
  %v1564 = vpack.c.bf16 %v1540, %v1539
  %v1565 = vpack.c.bf16 %v1542, %v1541
  %v1566 = vpack.c.bf16 %v1544, %v1543
  %v1567 = vpack.c.bf16 %v1546, %v1545
  %v1568 = vpack.c.bf16 %v1548, %v1547
  %v1569 = vpack.c.bf16 %v1550, %v1549
  %v1570 = vpack.c.bf16 %v1552, %v1551
  %v1589 = vunpack.c.l.b16 %v1553
  %v1590 = vunpack.c.h.b16 %v1553
  %v1591 = vunpack.c.l.b16 %v1554
  %v1592 = vunpack.c.h.b16 %v1554
  %v1593 = vunpack.c.l.b16 %v1555
  %v1594 = vunpack.c.h.b16 %v1555
  %v1595 = vunpack.c.l.b16 %v1556
  %v1596 = vunpack.c.h.b16 %v1556
  %v1597 = vunpack.c.l.b16 %v1557
  %v1598 = vunpack.c.h.b16 %v1557
  %v1599 = vunpack.c.l.b16 %v1558
  %v1600 = vunpack.c.h.b16 %v1558
  %v1601 = vunpack.c.l.b16 %v1559
  %v1602 = vunpack.c.h.b16 %v1559
  %v1603 = vunpack.c.l.b16 %v1560
  %v1604 = vunpack.c.h.b16 %v1560
  %v1605 = vunpack.c.l.b16 %v1561
  %v1606 = vunpack.c.h.b16 %v1561
  %v1607 = vunpack.c.l.b16 %v1562
  %v1608 = vunpack.c.h.b16 %v1562
  %v1609 = vunpack.c.l.b16 %v1563
  %v1610 = vunpack.c.h.b16 %v1563
  %v1611 = vunpack.c.l.b16 %v1564
  %v1612 = vunpack.c.h.b16 %v1564
  %v1613 = vunpack.c.l.b16 %v1565
  %v1614 = vunpack.c.h.b16 %v1565
  %v1615 = vunpack.c.l.b16 %v1566
  %v1616 = vunpack.c.h.b16 %v1566
  %v1617 = vunpack.c.l.b16 %v1567
  %v1618 = vunpack.c.h.b16 %v1567
  %v1619 = vunpack.c.l.b16 %v1568
  %v1620 = vunpack.c.h.b16 %v1568
  %v1621 = vunpack.c.l.b16 %v1569
  %v1622 = vunpack.c.h.b16 %v1569
  %v1623 = vunpack.c.l.b16 %v1570
  %v1624 = vunpack.c.h.b16 %v1570
  %v1625 = vpack.c.b16 %v1589, %v1589
  %v1626 = vpack.c.b16 %v1590, %v1590
  %v1627 = vpack.c.b16 %v1591, %v1591
  %v1628 = vpack.c.b16 %v1592, %v1592
  %v1629 = vpack.c.b16 %v1593, %v1593
  %v1630 = vpack.c.b16 %v1594, %v1594
  %v1631 = vpack.c.b16 %v1595, %v1595
  %v1632 = vpack.c.b16 %v1596, %v1596
  %v1633 = vpack.c.b16 %v1597, %v1597
  %v1634 = vpack.c.b16 %v1598, %v1598
  %v1635 = vpack.c.b16 %v1599, %v1599
  %v1636 = vpack.c.b16 %v1600, %v1600
  %v1637 = vpack.c.b16 %v1601, %v1601
  %v1638 = vpack.c.b16 %v1602, %v1602
  %v1639 = vpack.c.b16 %v1603, %v1603
  %v1640 = vpack.c.b16 %v1604, %v1604
  %v1641 = vpack.c.b16 %v1605, %v1605
  %v1642 = vpack.c.b16 %v1606, %v1606
  %v1643 = vpack.c.b16 %v1607, %v1607
  %v1644 = vpack.c.b16 %v1608, %v1608
  %v1645 = vpack.c.b16 %v1609, %v1609
  %v1646 = vpack.c.b16 %v1610, %v1610
  %v1647 = vpack.c.b16 %v1611, %v1611
  %v1648 = vpack.c.b16 %v1612, %v1612
  %v1649 = vpack.c.b16 %v1613, %v1613
  %v1650 = vpack.c.b16 %v1614, %v1614
  %v1651 = vpack.c.b16 %v1615, %v1615
  %v1652 = vpack.c.b16 %v1616, %v1616
  %v1653 = vpack.c.b16 %v1617, %v1617
  %v1654 = vpack.c.b16 %v1618, %v1618
  %v1655 = vpack.c.b16 %v1619, %v1619
  %v1656 = vpack.c.b16 %v1620, %v1620
  %v1657 = vpack.c.b16 %v1621, %v1621
  %v1658 = vpack.c.b16 %v1622, %v1622
  %v1659 = vpack.c.b16 %v1623, %v1623
  %v1660 = vpack.c.b16 %v1624, %v1624
  %1697 = vst [vmem:[%s3] sm:$0xf] %v1625
  %1698 = vst [vmem:[%s3 + $0x4] sm:$0xf] %v1626
  %1699 = vst [vmem:[%s3 + $0x8] sm:$0xf] %v1627
  %1700 = vst [vmem:[%s3 + $0xc] sm:$0xf] %v1628
  %1701 = vst [vmem:[%s3 + $0x10] sm:$0xf] %v1629
  %1702 = vst [vmem:[%s3 + $0x14] sm:$0xf] %v1630
  %1703 = vst [vmem:[%s3 + $0x18] sm:$0xf] %v1631
  %1704 = vst [vmem:[%s3 + $0x1c] sm:$0xf] %v1632
  %1705 = vst [vmem:[%s3 + $0x20] sm:$0xf] %v1633
  %1706 = vst [vmem:[%s3 + $0x24] sm:$0xf] %v1634
  %1707 = vst [vmem:[%s3 + $0x28] sm:$0xf] %v1635
  %1708 = vst [vmem:[%s3 + $0x2c] sm:$0xf] %v1636
  %1709 = vst [vmem:[%s3 + $0x30] sm:$0xf] %v1637
  %1710 = vst [vmem:[%s3 + $0x34] sm:$0xf] %v1638
  %1711 = vst [vmem:[%s3 + $0x38] sm:$0xf] %v1639
  %1712 = vst [vmem:[%s3 + $0x3c] sm:$0xf] %v1640
  %1713 = vst [vmem:[%s3 + $0x40] sm:$0xf] %v1641
  %1714 = vst [vmem:[%s3 + $0x44] sm:$0xf] %v1642
  %1715 = vst [vmem:[%s3 + $0x48] sm:$0xf] %v1643
  %1716 = vst [vmem:[%s3 + $0x4c] sm:$0xf] %v1644
  %1717 = vst [vmem:[%s3 + $0x50] sm:$0xf] %v1645
  %1718 = vst [vmem:[%s3 + $0x54] sm:$0xf] %v1646
  %1719 = vst [vmem:[%s3 + $0x58] sm:$0xf] %v1647
  %1720 = vst [vmem:[%s3 + $0x5c] sm:$0xf] %v1648
  %1721 = vst [vmem:[%s3 + $0x60] sm:$0xf] %v1649
  %1722 = vst [vmem:[%s3 + $0x64] sm:$0xf] %v1650
  %1723 = vst [vmem:[%s3 + $0x68] sm:$0xf] %v1651
  %1724 = vst [vmem:[%s3 + $0x6c] sm:$0xf] %v1652
  %1725 = vst [vmem:[%s3 + $0x70] sm:$0xf] %v1653
  %1726 = vst [vmem:[%s3 + $0x74] sm:$0xf] %v1654
  %1727 = vst [vmem:[%s3 + $0x78] sm:$0xf] %v1655
  %1728 = vst [vmem:[%s3 + $0x7c] sm:$0xf] %v1656
  %1729 = vst [vmem:[%s3 + $0x80] sm:$0xf] %v1657
  %1730 = vst [vmem:[%s3 + $0x84] sm:$0xf] %v1658
  %1731 = vst [vmem:[%s3 + $0x88] sm:$0xf] %v1659
  %1732 = vst [vmem:[%s3 + $0x8c] sm:$0xf] %v1660
  // Predicated region
  $region14: #{cnnet_forward.3} parent=0 // pred_check
    _
  $region15: #{cnnet_forward.3} parent=0 // pred_check_branch
    %1734 = sbr.rel (0) target = $region17
  $region16: #{cnnet_forward.3} parent=0 // pred_region
    _
  $region17: #{cnnet_forward.3} parent=0 // pred_fallthru
    _
  // Predicated region
  $region18: #{cnnet_forward.3} parent=0 // pred_check
    _
  $region19: #{cnnet_forward.3} parent=0 // pred_check_branch
    %1736 = sbr.rel (0) target = $region21
  $region20: #{cnnet_forward.3} parent=0 // pred_region
    _
  $region21: #{cnnet_forward.3} parent=0 // pred_fallthru
    _

// kernel: cnnet_forward.5
$region0: #{cnnet_forward.5}
  #allocation0 [shape = 'u32[]', space=smem, size = 0x4, offset = 0x4, fixed_abs, tag = 'smem constant byte address 0x4 - core index']
  #allocation1 [shape = 'u32[144,128]{1,0:T(1,128)}', space=vmem, size = 0x12000, scoped, tag = 'internal scratch']
  %s0 = inlined_call_operand.vmem [shape: bf16[2,2048], index: 0, kind: input, shape index: {}]
  %s1 = inlined_call_operand.vmem [shape: bf16[2048,50], index: 1, kind: input, shape index: {}]
  %s2 = inlined_call_operand.vmem [shape: f32[1,50], index: 2, kind: input, shape index: {}]
  %s3 = inlined_call_operand.vmem [shape: bf16[50,3], index: 3, kind: input, shape index: {}]
  %s4 = inlined_call_operand.vmem [shape: f32[1,3], index: 4, kind: input, shape index: {}]
  %s5 = inlined_call_operand.hbm [shape: f32[2,3], index: 5, kind: output, shape index: {}]
  %s6 = sld [smem:[#allocation0]]
  $region30: #{cnnet_forward.5} parent=0
    _
  %s8 = ssub.s32 1, %s6
  %s9 = scalar_select 0, %s8, %s6
  $region1: #{cnnet_forward.5} parent=0
    #allocation2 [shape = 'u8[1024]{0}', space=vmem, size = 0x400, scoped, tag = 'output window, operand 0, single buffered']
    #allocation3 [shape = 's32[1]{0}', space=sflag, size = 0x4, scoped, tag = 'scoped memory for cnnet_forward.5']
    %10 = vsyncpa [#allocation3], 0
    // Predicated region
    $region2: #{cnnet_forward.5} parent=1 // pred_check
      _
    $region3: #{cnnet_forward.5} parent=1 // pred_check_branch
      %12 = sbr.rel (0) target = $region5
    $region4: #{cnnet_forward.5} parent=1 // pred_region
      _
    $region5: #{cnnet_forward.5} parent=1 // pred_fallthru
      _
    // Predicated region
    $region6: #{cnnet_forward.5} parent=1 // pred_check
      _
    $region7: #{cnnet_forward.5} parent=1 // pred_check_branch
      %14 = sbr.rel (0) target = $region9
    $region8: #{cnnet_forward.5} parent=1 // pred_region
      _
    $region9: #{cnnet_forward.5} parent=1 // pred_fallthru
      _
    // Predicated region
    $region10: #{cnnet_forward.5} parent=1 // pred_check
      _
    $region11: #{cnnet_forward.5} parent=1 // pred_check_branch
      %16 = sbr.rel (0) target = $region13
    $region12: #{cnnet_forward.5} parent=1 // pred_region
      _
    $region13: #{cnnet_forward.5} parent=1 // pred_fallthru
      _
    // Predicated region
    $region14: #{cnnet_forward.5} parent=1 // pred_check
      _
    $region15: #{cnnet_forward.5} parent=1 // pred_check_branch
      %18 = sbr.rel (0) target = $region17
    $region16: #{cnnet_forward.5} parent=1 // pred_region
      _
    $region17: #{cnnet_forward.5} parent=1 // pred_fallthru
      _
    // Predicated region
    $region18: #{cnnet_forward.5} parent=1 // pred_check
      _
    $region19: #{cnnet_forward.5} parent=1 // pred_check_branch
      %20 = sbr.rel (0) target = $region21
    $region20: #{cnnet_forward.5} parent=1 // pred_region
      _
    $region21: #{cnnet_forward.5} parent=1 // pred_fallthru
      _
    %v22 = vld [vmem:[%s0] sm:$0xff]
    %v23 = vld [vmem:[%s0 + $0x8] sm:$0xff]
    %v24 = vld [vmem:[%s1] sm:$0xf]
    %v25 = vld [vmem:[%s1 + $0x4] sm:$0xf]
    %v26 = vld [vmem:[%s1 + $0x8] sm:$0xf]
    %v27 = vld [vmem:[%s1 + $0xc] sm:$0xf]
    %v28 = vld [vmem:[%s1 + $0x10] sm:$0xf]
    %v29 = vld [vmem:[%s1 + $0x14] sm:$0xf]
    %v30 = vld [vmem:[%s1 + $0x18] sm:$0xf]
    %v31 = vld [vmem:[%s1 + $0x1c] sm:$0xf]
    %v32 = vld [vmem:[%s1 + $0x20] sm:$0xf]
    %v33 = vld [vmem:[%s1 + $0x24] sm:$0xf]
    %v34 = vld [vmem:[%s1 + $0x28] sm:$0xf]
    %v35 = vld [vmem:[%s1 + $0x2c] sm:$0xf]
    %v36 = vld [vmem:[%s1 + $0x30] sm:$0xf]
    %v37 = vld [vmem:[%s1 + $0x34] sm:$0xf]
    %v38 = vld [vmem:[%s1 + $0x38] sm:$0xf]
    %v39 = vld [vmem:[%s1 + $0x3c] sm:$0xf]
    %v40 = vld [vmem:[%s1 + $0x40] sm:$0xf]
    %v41 = vld [vmem:[%s1 + $0x44] sm:$0xf]
    %v42 = vld [vmem:[%s1 + $0x48] sm:$0xf]
    %v43 = vld [vmem:[%s1 + $0x4c] sm:$0xf]
    %v44 = vld [vmem:[%s1 + $0x50] sm:$0xf]
    %v45 = vld [vmem:[%s1 + $0x54] sm:$0xf]
    %v46 = vld [vmem:[%s1 + $0x58] sm:$0xf]
    %v47 = vld [vmem:[%s1 + $0x5c] sm:$0xf]
    %v48 = vld [vmem:[%s1 + $0x60] sm:$0xf]
    %v49 = vld [vmem:[%s1 + $0x64] sm:$0xf]
    %v50 = vld [vmem:[%s1 + $0x68] sm:$0xf]
    %v51 = vld [vmem:[%s1 + $0x6c] sm:$0xf]
    %v52 = vld [vmem:[%s1 + $0x70] sm:$0xf]
    %v53 = vld [vmem:[%s1 + $0x74] sm:$0xf]
    %v54 = vld [vmem:[%s1 + $0x78] sm:$0xf]
    %v55 = vld [vmem:[%s1 + $0x7c] sm:$0xf]
    %v56 = vld [vmem:[%s1 + $0x80] sm:$0xf]
    %v57 = vld [vmem:[%s1 + $0x84] sm:$0xf]
    %v58 = vld [vmem:[%s1 + $0x88] sm:$0xf]
    %v59 = vld [vmem:[%s1 + $0x8c] sm:$0xf]
    %v60 = vld [vmem:[%s1 + $0x90] sm:$0xf]
    %v61 = vld [vmem:[%s1 + $0x94] sm:$0xf]
    %v62 = vld [vmem:[%s1 + $0x98] sm:$0xf]
    %v63 = vld [vmem:[%s1 + $0x9c] sm:$0xf]
    %v64 = vld [vmem:[%s1 + $0xa0] sm:$0xf]
    %v65 = vld [vmem:[%s1 + $0xa4] sm:$0xf]
    %v66 = vld [vmem:[%s1 + $0xa8] sm:$0xf]
    %v67 = vld [vmem:[%s1 + $0xac] sm:$0xf]
    %v68 = vld [vmem:[%s1 + $0xb0] sm:$0xf]
    %v69 = vld [vmem:[%s1 + $0xb4] sm:$0xf]
    %v70 = vld [vmem:[%s1 + $0xb8] sm:$0xf]
    %v71 = vld [vmem:[%s1 + $0xbc] sm:$0xf]
    %v72 = vld [vmem:[%s1 + $0xc0] sm:$0xf]
    %v73 = vld [vmem:[%s1 + $0xc4] sm:$0xf]
    %v74 = vld [vmem:[%s1 + $0xc8] sm:$0xf]
    %v75 = vld [vmem:[%s1 + $0xcc] sm:$0xf]
    %v76 = vld [vmem:[%s1 + $0xd0] sm:$0xf]
    %v77 = vld [vmem:[%s1 + $0xd4] sm:$0xf]
    %v78 = vld [vmem:[%s1 + $0xd8] sm:$0xf]
    %v79 = vld [vmem:[%s1 + $0xdc] sm:$0xf]
    %v80 = vld [vmem:[%s1 + $0xe0] sm:$0xf]
    %v81 = vld [vmem:[%s1 + $0xe4] sm:$0xf]
    %v82 = vld [vmem:[%s1 + $0xe8] sm:$0xf]
    %v83 = vld [vmem:[%s1 + $0xec] sm:$0xf]
    %v84 = vld [vmem:[%s1 + $0xf0] sm:$0xf]
    %v85 = vld [vmem:[%s1 + $0xf4] sm:$0xf]
    %v86 = vld [vmem:[%s1 + $0xf8] sm:$0xf]
    %v87 = vld [vmem:[%s1 + $0xfc] sm:$0xf]
    %v88 = vld [vmem:[%s1 + $0x100] sm:$0xf]
    %v89 = vld [vmem:[%s1 + $0x104] sm:$0xf]
    %v90 = vld [vmem:[%s1 + $0x108] sm:$0xf]
    %v91 = vld [vmem:[%s1 + $0x10c] sm:$0xf]
    %v92 = vld [vmem:[%s1 + $0x110] sm:$0xf]
    %v93 = vld [vmem:[%s1 + $0x114] sm:$0xf]
    %v94 = vld [vmem:[%s1 + $0x118] sm:$0xf]
    %v95 = vld [vmem:[%s1 + $0x11c] sm:$0xf]
    %v96 = vld [vmem:[%s1 + $0x120] sm:$0xf]
    %v97 = vld [vmem:[%s1 + $0x124] sm:$0xf]
    %v98 = vld [vmem:[%s1 + $0x128] sm:$0xf]
    %v99 = vld [vmem:[%s1 + $0x12c] sm:$0xf]
    %v100 = vld [vmem:[%s1 + $0x130] sm:$0xf]
    %v101 = vld [vmem:[%s1 + $0x134] sm:$0xf]
    %v102 = vld [vmem:[%s1 + $0x138] sm:$0xf]
    %v103 = vld [vmem:[%s1 + $0x13c] sm:$0xf]
    %v104 = vld [vmem:[%s1 + $0x140] sm:$0xf]
    %v105 = vld [vmem:[%s1 + $0x144] sm:$0xf]
    %v106 = vld [vmem:[%s1 + $0x148] sm:$0xf]
    %v107 = vld [vmem:[%s1 + $0x14c] sm:$0xf]
    %v108 = vld [vmem:[%s1 + $0x150] sm:$0xf]
    %v109 = vld [vmem:[%s1 + $0x154] sm:$0xf]
    %v110 = vld [vmem:[%s1 + $0x158] sm:$0xf]
    %v111 = vld [vmem:[%s1 + $0x15c] sm:$0xf]
    %v112 = vld [vmem:[%s1 + $0x160] sm:$0xf]
    %v113 = vld [vmem:[%s1 + $0x164] sm:$0xf]
    %v114 = vld [vmem:[%s1 + $0x168] sm:$0xf]
    %v115 = vld [vmem:[%s1 + $0x16c] sm:$0xf]
    %v116 = vld [vmem:[%s1 + $0x170] sm:$0xf]
    %v117 = vld [vmem:[%s1 + $0x174] sm:$0xf]
    %v118 = vld [vmem:[%s1 + $0x178] sm:$0xf]
    %v119 = vld [vmem:[%s1 + $0x17c] sm:$0xf]
    %v120 = vld [vmem:[%s1 + $0x180] sm:$0xf]
    %v121 = vld [vmem:[%s1 + $0x184] sm:$0xf]
    %v122 = vld [vmem:[%s1 + $0x188] sm:$0xf]
    %v123 = vld [vmem:[%s1 + $0x18c] sm:$0xf]
    %v124 = vld [vmem:[%s1 + $0x190] sm:$0xf]
    %v125 = vld [vmem:[%s1 + $0x194] sm:$0xf]
    %v126 = vld [vmem:[%s1 + $0x198] sm:$0xf]
    %v127 = vld [vmem:[%s1 + $0x19c] sm:$0xf]
    %v128 = vld [vmem:[%s1 + $0x1a0] sm:$0xf]
    %v129 = vld [vmem:[%s1 + $0x1a4] sm:$0xf]
    %v130 = vld [vmem:[%s1 + $0x1a8] sm:$0xf]
    %v131 = vld [vmem:[%s1 + $0x1ac] sm:$0xf]
    %v132 = vld [vmem:[%s1 + $0x1b0] sm:$0xf]
    %v133 = vld [vmem:[%s1 + $0x1b4] sm:$0xf]
    %v134 = vld [vmem:[%s1 + $0x1b8] sm:$0xf]
    %v135 = vld [vmem:[%s1 + $0x1bc] sm:$0xf]
    %v136 = vld [vmem:[%s1 + $0x1c0] sm:$0xf]
    %v137 = vld [vmem:[%s1 + $0x1c4] sm:$0xf]
    %v138 = vld [vmem:[%s1 + $0x1c8] sm:$0xf]
    %v139 = vld [vmem:[%s1 + $0x1cc] sm:$0xf]
    %v140 = vld [vmem:[%s1 + $0x1d0] sm:$0xf]
    %v141 = vld [vmem:[%s1 + $0x1d4] sm:$0xf]
    %v142 = vld [vmem:[%s1 + $0x1d8] sm:$0xf]
    %v143 = vld [vmem:[%s1 + $0x1dc] sm:$0xf]
    %v144 = vld [vmem:[%s1 + $0x1e0] sm:$0xf]
    %v145 = vld [vmem:[%s1 + $0x1e4] sm:$0xf]
    %v146 = vld [vmem:[%s1 + $0x1e8] sm:$0xf]
    %v147 = vld [vmem:[%s1 + $0x1ec] sm:$0xf]
    %v148 = vld [vmem:[%s1 + $0x1f0] sm:$0xf]
    %v149 = vld [vmem:[%s1 + $0x1f4] sm:$0xf]
    %v150 = vld [vmem:[%s1 + $0x1f8] sm:$0xf]
    %v151 = vld [vmem:[%s1 + $0x1fc] sm:$0xf]
    %v152 = vld [vmem:[%s1 + $0x200] sm:$0xf]
    %v153 = vld [vmem:[%s1 + $0x204] sm:$0xf]
    %v154 = vld [vmem:[%s1 + $0x208] sm:$0xf]
    %v155 = vld [vmem:[%s1 + $0x20c] sm:$0xf]
    %v156 = vld [vmem:[%s1 + $0x210] sm:$0xf]
    %v157 = vld [vmem:[%s1 + $0x214] sm:$0xf]
    %v158 = vld [vmem:[%s1 + $0x218] sm:$0xf]
    %v159 = vld [vmem:[%s1 + $0x21c] sm:$0xf]
    %v160 = vld [vmem:[%s1 + $0x220] sm:$0xf]
    %v161 = vld [vmem:[%s1 + $0x224] sm:$0xf]
    %v162 = vld [vmem:[%s1 + $0x228] sm:$0xf]
    %v163 = vld [vmem:[%s1 + $0x22c] sm:$0xf]
    %v164 = vld [vmem:[%s1 + $0x230] sm:$0xf]
    %v165 = vld [vmem:[%s1 + $0x234] sm:$0xf]
    %v166 = vld [vmem:[%s1 + $0x238] sm:$0xf]
    %v167 = vld [vmem:[%s1 + $0x23c] sm:$0xf]
    %v168 = vld [vmem:[%s1 + $0x240] sm:$0xf]
    %v169 = vld [vmem:[%s1 + $0x244] sm:$0xf]
    %v170 = vld [vmem:[%s1 + $0x248] sm:$0xf]
    %v171 = vld [vmem:[%s1 + $0x24c] sm:$0xf]
    %v172 = vld [vmem:[%s1 + $0x250] sm:$0xf]
    %v173 = vld [vmem:[%s1 + $0x254] sm:$0xf]
    %v174 = vld [vmem:[%s1 + $0x258] sm:$0xf]
    %v175 = vld [vmem:[%s1 + $0x25c] sm:$0xf]
    %v176 = vld [vmem:[%s1 + $0x260] sm:$0xf]
    %v177 = vld [vmem:[%s1 + $0x264] sm:$0xf]
    %v178 = vld [vmem:[%s1 + $0x268] sm:$0xf]
    %v179 = vld [vmem:[%s1 + $0x26c] sm:$0xf]
    %v180 = vld [vmem:[%s1 + $0x270] sm:$0xf]
    %v181 = vld [vmem:[%s1 + $0x274] sm:$0xf]
    %v182 = vld [vmem:[%s1 + $0x278] sm:$0xf]
    %v183 = vld [vmem:[%s1 + $0x27c] sm:$0xf]
    %v184 = vld [vmem:[%s1 + $0x280] sm:$0xf]
    %v185 = vld [vmem:[%s1 + $0x284] sm:$0xf]
    %v186 = vld [vmem:[%s1 + $0x288] sm:$0xf]
    %v187 = vld [vmem:[%s1 + $0x28c] sm:$0xf]
    %v188 = vld [vmem:[%s1 + $0x290] sm:$0xf]
    %v189 = vld [vmem:[%s1 + $0x294] sm:$0xf]
    %v190 = vld [vmem:[%s1 + $0x298] sm:$0xf]
    %v191 = vld [vmem:[%s1 + $0x29c] sm:$0xf]
    %v192 = vld [vmem:[%s1 + $0x2a0] sm:$0xf]
    %v193 = vld [vmem:[%s1 + $0x2a4] sm:$0xf]
    %v194 = vld [vmem:[%s1 + $0x2a8] sm:$0xf]
    %v195 = vld [vmem:[%s1 + $0x2ac] sm:$0xf]
    %v196 = vld [vmem:[%s1 + $0x2b0] sm:$0xf]
    %v197 = vld [vmem:[%s1 + $0x2b4] sm:$0xf]
    %v198 = vld [vmem:[%s1 + $0x2b8] sm:$0xf]
    %v199 = vld [vmem:[%s1 + $0x2bc] sm:$0xf]
    %v200 = vld [vmem:[%s1 + $0x2c0] sm:$0xf]
    %v201 = vld [vmem:[%s1 + $0x2c4] sm:$0xf]
    %v202 = vld [vmem:[%s1 + $0x2c8] sm:$0xf]
    %v203 = vld [vmem:[%s1 + $0x2cc] sm:$0xf]
    %v204 = vld [vmem:[%s1 + $0x2d0] sm:$0xf]
    %v205 = vld [vmem:[%s1 + $0x2d4] sm:$0xf]
    %v206 = vld [vmem:[%s1 + $0x2d8] sm:$0xf]
    %v207 = vld [vmem:[%s1 + $0x2dc] sm:$0xf]
    %v208 = vld [vmem:[%s1 + $0x2e0] sm:$0xf]
    %v209 = vld [vmem:[%s1 + $0x2e4] sm:$0xf]
    %v210 = vld [vmem:[%s1 + $0x2e8] sm:$0xf]
    %v211 = vld [vmem:[%s1 + $0x2ec] sm:$0xf]
    %v212 = vld [vmem:[%s1 + $0x2f0] sm:$0xf]
    %v213 = vld [vmem:[%s1 + $0x2f4] sm:$0xf]
    %v214 = vld [vmem:[%s1 + $0x2f8] sm:$0xf]
    %v215 = vld [vmem:[%s1 + $0x2fc] sm:$0xf]
    %v216 = vld [vmem:[%s1 + $0x300] sm:$0xf]
    %v217 = vld [vmem:[%s1 + $0x304] sm:$0xf]
    %v218 = vld [vmem:[%s1 + $0x308] sm:$0xf]
    %v219 = vld [vmem:[%s1 + $0x30c] sm:$0xf]
    %v220 = vld [vmem:[%s1 + $0x310] sm:$0xf]
    %v221 = vld [vmem:[%s1 + $0x314] sm:$0xf]
    %v222 = vld [vmem:[%s1 + $0x318] sm:$0xf]
    %v223 = vld [vmem:[%s1 + $0x31c] sm:$0xf]
    %v224 = vld [vmem:[%s1 + $0x320] sm:$0xf]
    %v225 = vld [vmem:[%s1 + $0x324] sm:$0xf]
    %v226 = vld [vmem:[%s1 + $0x328] sm:$0xf]
    %v227 = vld [vmem:[%s1 + $0x32c] sm:$0xf]
    %v228 = vld [vmem:[%s1 + $0x330] sm:$0xf]
    %v229 = vld [vmem:[%s1 + $0x334] sm:$0xf]
    %v230 = vld [vmem:[%s1 + $0x338] sm:$0xf]
    %v231 = vld [vmem:[%s1 + $0x33c] sm:$0xf]
    %v232 = vld [vmem:[%s1 + $0x340] sm:$0xf]
    %v233 = vld [vmem:[%s1 + $0x344] sm:$0xf]
    %v234 = vld [vmem:[%s1 + $0x348] sm:$0xf]
    %v235 = vld [vmem:[%s1 + $0x34c] sm:$0xf]
    %v236 = vld [vmem:[%s1 + $0x350] sm:$0xf]
    %v237 = vld [vmem:[%s1 + $0x354] sm:$0xf]
    %v238 = vld [vmem:[%s1 + $0x358] sm:$0xf]
    %v239 = vld [vmem:[%s1 + $0x35c] sm:$0xf]
    %v240 = vld [vmem:[%s1 + $0x360] sm:$0xf]
    %v241 = vld [vmem:[%s1 + $0x364] sm:$0xf]
    %v242 = vld [vmem:[%s1 + $0x368] sm:$0xf]
    %v243 = vld [vmem:[%s1 + $0x36c] sm:$0xf]
    %v244 = vld [vmem:[%s1 + $0x370] sm:$0xf]
    %v245 = vld [vmem:[%s1 + $0x374] sm:$0xf]
    %v246 = vld [vmem:[%s1 + $0x378] sm:$0xf]
    %v247 = vld [vmem:[%s1 + $0x37c] sm:$0xf]
    %v248 = vld [vmem:[%s1 + $0x380] sm:$0xf]
    %v249 = vld [vmem:[%s1 + $0x384] sm:$0xf]
    %v250 = vld [vmem:[%s1 + $0x388] sm:$0xf]
    %v251 = vld [vmem:[%s1 + $0x38c] sm:$0xf]
    %v252 = vld [vmem:[%s1 + $0x390] sm:$0xf]
    %v253 = vld [vmem:[%s1 + $0x394] sm:$0xf]
    %v254 = vld [vmem:[%s1 + $0x398] sm:$0xf]
    %v255 = vld [vmem:[%s1 + $0x39c] sm:$0xf]
    %v256 = vld [vmem:[%s1 + $0x3a0] sm:$0xf]
    %v257 = vld [vmem:[%s1 + $0x3a4] sm:$0xf]
    %v258 = vld [vmem:[%s1 + $0x3a8] sm:$0xf]
    %v259 = vld [vmem:[%s1 + $0x3ac] sm:$0xf]
    %v260 = vld [vmem:[%s1 + $0x3b0] sm:$0xf]
    %v261 = vld [vmem:[%s1 + $0x3b4] sm:$0xf]
    %v262 = vld [vmem:[%s1 + $0x3b8] sm:$0xf]
    %v263 = vld [vmem:[%s1 + $0x3bc] sm:$0xf]
    %v264 = vld [vmem:[%s1 + $0x3c0] sm:$0xf]
    %v265 = vld [vmem:[%s1 + $0x3c4] sm:$0xf]
    %v266 = vld [vmem:[%s1 + $0x3c8] sm:$0xf]
    %v267 = vld [vmem:[%s1 + $0x3cc] sm:$0xf]
    %v268 = vld [vmem:[%s1 + $0x3d0] sm:$0xf]
    %v269 = vld [vmem:[%s1 + $0x3d4] sm:$0xf]
    %v270 = vld [vmem:[%s1 + $0x3d8] sm:$0xf]
    %v271 = vld [vmem:[%s1 + $0x3dc] sm:$0xf]
    %v272 = vld [vmem:[%s1 + $0x3e0] sm:$0xf]
    %v273 = vld [vmem:[%s1 + $0x3e4] sm:$0xf]
    %v274 = vld [vmem:[%s1 + $0x3e8] sm:$0xf]
    %v275 = vld [vmem:[%s1 + $0x3ec] sm:$0xf]
    %v276 = vld [vmem:[%s1 + $0x3f0] sm:$0xf]
    %v277 = vld [vmem:[%s1 + $0x3f4] sm:$0xf]
    %v278 = vld [vmem:[%s1 + $0x3f8] sm:$0xf]
    %v279 = vld [vmem:[%s1 + $0x3fc] sm:$0xf]
    %v280 = vld [vmem:[%s2] sm:$0x1]
    %v282 = vlaneseq
    %v283 = vshrl.u32 %v282, 7
    %v284 = vsub.s32 0, %v283
    %v285 = vrot.slane %v280, %v284
    %v289 = vcombine.high %v22, %v22
    %v291 = vunpack.c.l.s4 1966171168
    %v292 = vunpack.c.0.s8 %v291
    %v293 = vlaneseq
    %v294 = vshrl.u32 %v293, 7
    %v295 = vsub.s32 %v292, %v294
    %v296 = vrot.slane %v22, %v295
    %v298 = vunpack.c.l.s4 1966171168
    %v299 = vunpack.c.0.s8 %v298
    %v300 = vlaneseq
    %v301 = vshrl.u32 %v300, 7
    %v302 = vsub.s32 %v299, %v301
    %v303 = vrot.slane %v289, %v302
    %v304 = vcombine.high %v296, %v296
    %v305 = vcombine.high %v303, %v303
    %v307 = vunpack.c.l.s4 1966171168
    %v308 = vunpack.c.0.s8 %v307
    %v309 = vlaneseq
    %v310 = vshrl.u32 %v309, 7
    %v311 = vsub.s32 %v308, %v310
    %v312 = vrot.slane %v296, %v311
    %v314 = vunpack.c.l.s4 1966171168
    %v315 = vunpack.c.0.s8 %v314
    %v316 = vlaneseq
    %v317 = vshrl.u32 %v316, 7
    %v318 = vsub.s32 %v315, %v317
    %v319 = vrot.slane %v303, %v318
    %v321 = vunpack.c.l.s4 1966171168
    %v322 = vunpack.c.0.s8 %v321
    %v323 = vlaneseq
    %v324 = vshrl.u32 %v323, 7
    %v325 = vsub.s32 %v322, %v324
    %v326 = vrot.slane %v304, %v325
    %v328 = vunpack.c.l.s4 1966171168
    %v329 = vunpack.c.0.s8 %v328
    %v330 = vlaneseq
    %v331 = vshrl.u32 %v330, 7
    %v332 = vsub.s32 %v329, %v331
    %v333 = vrot.slane %v305, %v332
    %v334 = vcombine.high %v312, %v312
    %v335 = vcombine.high %v319, %v319
    %v336 = vcombine.high %v326, %v326
    %v337 = vcombine.high %v333, %v333
    %v338 = vcombine.high %v23, %v23
    %v340 = vunpack.c.l.s4 1966171168
    %v341 = vunpack.c.0.s8 %v340
    %v342 = vlaneseq
    %v343 = vshrl.u32 %v342, 7
    %v344 = vsub.s32 %v341, %v343
    %v345 = vrot.slane %v23, %v344
    %v347 = vunpack.c.l.s4 1966171168
    %v348 = vunpack.c.0.s8 %v347
    %v349 = vlaneseq
    %v350 = vshrl.u32 %v349, 7
    %v351 = vsub.s32 %v348, %v350
    %v352 = vrot.slane %v338, %v351
    %v353 = vcombine.high %v345, %v345
    %v354 = vcombine.high %v352, %v352
    %v356 = vunpack.c.l.s4 1966171168
    %v357 = vunpack.c.0.s8 %v356
    %v358 = vlaneseq
    %v359 = vshrl.u32 %v358, 7
    %v360 = vsub.s32 %v357, %v359
    %v361 = vrot.slane %v345, %v360
    %v363 = vunpack.c.l.s4 1966171168
    %v364 = vunpack.c.0.s8 %v363
    %v365 = vlaneseq
    %v366 = vshrl.u32 %v365, 7
    %v367 = vsub.s32 %v364, %v366
    %v368 = vrot.slane %v352, %v367
    %v370 = vunpack.c.l.s4 1966171168
    %v371 = vunpack.c.0.s8 %v370
    %v372 = vlaneseq
    %v373 = vshrl.u32 %v372, 7
    %v374 = vsub.s32 %v371, %v373
    %v375 = vrot.slane %v353, %v374
    %v377 = vunpack.c.l.s4 1966171168
    %v378 = vunpack.c.0.s8 %v377
    %v379 = vlaneseq
    %v380 = vshrl.u32 %v379, 7
    %v381 = vsub.s32 %v378, %v380
    %v382 = vrot.slane %v354, %v381
    %v383 = vcombine.high %v361, %v361
    %v384 = vcombine.high %v368, %v368
    %v385 = vcombine.high %v375, %v375
    %v386 = vcombine.high %v382, %v382
    %v659 = vunpack.c.l.b16 %v24
    %v660 = vunpack.c.l.b16 %v25
    %v661 = vunpack.c.l.b16 %v26
    %v662 = vunpack.c.l.b16 %v27
    %v663 = vunpack.c.l.b16 %v28
    %v664 = vunpack.c.l.b16 %v29
    %v665 = vunpack.c.l.b16 %v30
    %v666 = vunpack.c.l.b16 %v31
    %v667 = vunpack.c.l.b16 %v32
    %v668 = vunpack.c.l.b16 %v33
    %v669 = vunpack.c.l.b16 %v34
    %v670 = vunpack.c.l.b16 %v35
    %v671 = vunpack.c.l.b16 %v36
    %v672 = vunpack.c.l.b16 %v37
    %v673 = vunpack.c.l.b16 %v38
    %v674 = vunpack.c.l.b16 %v39
    %v675 = vunpack.c.l.b16 %v40
    %v676 = vunpack.c.l.b16 %v41
    %v677 = vunpack.c.l.b16 %v42
    %v678 = vunpack.c.l.b16 %v43
    %v679 = vunpack.c.l.b16 %v44
    %v680 = vunpack.c.l.b16 %v45
    %v681 = vunpack.c.l.b16 %v46
    %v682 = vunpack.c.l.b16 %v47
    %v683 = vunpack.c.l.b16 %v48
    %v684 = vunpack.c.l.b16 %v49
    %v685 = vunpack.c.l.b16 %v50
    %v686 = vunpack.c.l.b16 %v51
    %v687 = vunpack.c.l.b16 %v52
    %v688 = vunpack.c.l.b16 %v53
    %v689 = vunpack.c.l.b16 %v54
    %v690 = vunpack.c.l.b16 %v55
    %v691 = vunpack.c.l.b16 %v56
    %v692 = vunpack.c.l.b16 %v57
    %v693 = vunpack.c.l.b16 %v58
    %v694 = vunpack.c.l.b16 %v59
    %v695 = vunpack.c.l.b16 %v60
    %v696 = vunpack.c.l.b16 %v61
    %v697 = vunpack.c.l.b16 %v62
    %v698 = vunpack.c.l.b16 %v63
    %v699 = vunpack.c.l.b16 %v64
    %v700 = vunpack.c.l.b16 %v65
    %v701 = vunpack.c.l.b16 %v66
    %v702 = vunpack.c.l.b16 %v67
    %v703 = vunpack.c.l.b16 %v68
    %v704 = vunpack.c.l.b16 %v69
    %v705 = vunpack.c.l.b16 %v70
    %v706 = vunpack.c.l.b16 %v71
    %v707 = vunpack.c.l.b16 %v72
    %v708 = vunpack.c.l.b16 %v73
    %v709 = vunpack.c.l.b16 %v74
    %v710 = vunpack.c.l.b16 %v75
    %v711 = vunpack.c.l.b16 %v76
    %v712 = vunpack.c.l.b16 %v77
    %v713 = vunpack.c.l.b16 %v78
    %v714 = vunpack.c.l.b16 %v79
    %v715 = vunpack.c.l.b16 %v80
    %v716 = vunpack.c.l.b16 %v81
    %v717 = vunpack.c.l.b16 %v82
    %v718 = vunpack.c.l.b16 %v83
    %v719 = vunpack.c.l.b16 %v84
    %v720 = vunpack.c.l.b16 %v85
    %v721 = vunpack.c.l.b16 %v86
    %v722 = vunpack.c.l.b16 %v87
    %v723 = vunpack.c.l.b16 %v88
    %v724 = vunpack.c.l.b16 %v89
    %v725 = vunpack.c.l.b16 %v90
    %v726 = vunpack.c.l.b16 %v91
    %v727 = vunpack.c.l.b16 %v92
    %v728 = vunpack.c.l.b16 %v93
    %v729 = vunpack.c.l.b16 %v94
    %v730 = vunpack.c.l.b16 %v95
    %v731 = vunpack.c.l.b16 %v96
    %v732 = vunpack.c.l.b16 %v97
    %v733 = vunpack.c.l.b16 %v98
    %v734 = vunpack.c.l.b16 %v99
    %v735 = vunpack.c.l.b16 %v100
    %v736 = vunpack.c.l.b16 %v101
    %v737 = vunpack.c.l.b16 %v102
    %v738 = vunpack.c.l.b16 %v103
    %v739 = vunpack.c.l.b16 %v104
    %v740 = vunpack.c.l.b16 %v105
    %v741 = vunpack.c.l.b16 %v106
    %v742 = vunpack.c.l.b16 %v107
    %v743 = vunpack.c.l.b16 %v108
    %v744 = vunpack.c.l.b16 %v109
    %v745 = vunpack.c.l.b16 %v110
    %v746 = vunpack.c.l.b16 %v111
    %v747 = vunpack.c.l.b16 %v112
    %v748 = vunpack.c.l.b16 %v113
    %v749 = vunpack.c.l.b16 %v114
    %v750 = vunpack.c.l.b16 %v115
    %v751 = vunpack.c.l.b16 %v116
    %v752 = vunpack.c.l.b16 %v117
    %v753 = vunpack.c.l.b16 %v118
    %v754 = vunpack.c.l.b16 %v119
    %v755 = vunpack.c.l.b16 %v120
    %v756 = vunpack.c.l.b16 %v121
    %v757 = vunpack.c.l.b16 %v122
    %v758 = vunpack.c.l.b16 %v123
    %v759 = vunpack.c.l.b16 %v124
    %v760 = vunpack.c.l.b16 %v125
    %v761 = vunpack.c.l.b16 %v126
    %v762 = vunpack.c.l.b16 %v127
    %v763 = vunpack.c.l.b16 %v128
    %v764 = vunpack.c.l.b16 %v129
    %v765 = vunpack.c.l.b16 %v130
    %v766 = vunpack.c.l.b16 %v131
    %v767 = vunpack.c.l.b16 %v132
    %v768 = vunpack.c.l.b16 %v133
    %v769 = vunpack.c.l.b16 %v134
    %v770 = vunpack.c.l.b16 %v135
    %v771 = vunpack.c.l.b16 %v136
    %v772 = vunpack.c.l.b16 %v137
    %v773 = vunpack.c.l.b16 %v138
    %v774 = vunpack.c.l.b16 %v139
    %v775 = vunpack.c.l.b16 %v140
    %v776 = vunpack.c.l.b16 %v141
    %v777 = vunpack.c.l.b16 %v142
    %v778 = vunpack.c.l.b16 %v143
    %v779 = vunpack.c.l.b16 %v144
    %v780 = vunpack.c.l.b16 %v145
    %v781 = vunpack.c.l.b16 %v146
    %v782 = vunpack.c.l.b16 %v147
    %v783 = vunpack.c.l.b16 %v148
    %v784 = vunpack.c.l.b16 %v149
    %v785 = vunpack.c.l.b16 %v150
    %v786 = vunpack.c.l.b16 %v151
    %v787 = vunpack.c.l.b16 %v152
    %v788 = vunpack.c.l.b16 %v153
    %v789 = vunpack.c.l.b16 %v154
    %v790 = vunpack.c.l.b16 %v155
    %v791 = vunpack.c.l.b16 %v156
    %v792 = vunpack.c.l.b16 %v157
    %v793 = vunpack.c.l.b16 %v158
    %v794 = vunpack.c.l.b16 %v159
    %v795 = vunpack.c.l.b16 %v160
    %v796 = vunpack.c.l.b16 %v161
    %v797 = vunpack.c.l.b16 %v162
    %v798 = vunpack.c.l.b16 %v163
    %v799 = vunpack.c.l.b16 %v164
    %v800 = vunpack.c.l.b16 %v165
    %v801 = vunpack.c.l.b16 %v166
    %v802 = vunpack.c.l.b16 %v167
    %v803 = vunpack.c.l.b16 %v168
    %v804 = vunpack.c.l.b16 %v169
    %v805 = vunpack.c.l.b16 %v170
    %v806 = vunpack.c.l.b16 %v171
    %v807 = vunpack.c.l.b16 %v172
    %v808 = vunpack.c.l.b16 %v173
    %v809 = vunpack.c.l.b16 %v174
    %v810 = vunpack.c.l.b16 %v175
    %v811 = vunpack.c.l.b16 %v176
    %v812 = vunpack.c.l.b16 %v177
    %v813 = vunpack.c.l.b16 %v178
    %v814 = vunpack.c.l.b16 %v179
    %v815 = vunpack.c.l.b16 %v180
    %v816 = vunpack.c.l.b16 %v181
    %v817 = vunpack.c.l.b16 %v182
    %v818 = vunpack.c.l.b16 %v183
    %v819 = vunpack.c.l.b16 %v184
    %v820 = vunpack.c.l.b16 %v185
    %v821 = vunpack.c.l.b16 %v186
    %v822 = vunpack.c.l.b16 %v187
    %v823 = vunpack.c.l.b16 %v188
    %v824 = vunpack.c.l.b16 %v189
    %v825 = vunpack.c.l.b16 %v190
    %v826 = vunpack.c.l.b16 %v191
    %v827 = vunpack.c.l.b16 %v192
    %v828 = vunpack.c.l.b16 %v193
    %v829 = vunpack.c.l.b16 %v194
    %v830 = vunpack.c.l.b16 %v195
    %v831 = vunpack.c.l.b16 %v196
    %v832 = vunpack.c.l.b16 %v197
    %v833 = vunpack.c.l.b16 %v198
    %v834 = vunpack.c.l.b16 %v199
    %v835 = vunpack.c.l.b16 %v200
    %v836 = vunpack.c.l.b16 %v201
    %v837 = vunpack.c.l.b16 %v202
    %v838 = vunpack.c.l.b16 %v203
    %v839 = vunpack.c.l.b16 %v204
    %v840 = vunpack.c.l.b16 %v205
    %v841 = vunpack.c.l.b16 %v206
    %v842 = vunpack.c.l.b16 %v207
    %v843 = vunpack.c.l.b16 %v208
    %v844 = vunpack.c.l.b16 %v209
    %v845 = vunpack.c.l.b16 %v210
    %v846 = vunpack.c.l.b16 %v211
    %v847 = vunpack.c.l.b16 %v212
    %v848 = vunpack.c.l.b16 %v213
    %v849 = vunpack.c.l.b16 %v214
    %v850 = vunpack.c.l.b16 %v215
    %v851 = vunpack.c.l.b16 %v216
    %v852 = vunpack.c.l.b16 %v217
    %v853 = vunpack.c.l.b16 %v218
    %v854 = vunpack.c.l.b16 %v219
    %v855 = vunpack.c.l.b16 %v220
    %v856 = vunpack.c.l.b16 %v221
    %v857 = vunpack.c.l.b16 %v222
    %v858 = vunpack.c.l.b16 %v223
    %v859 = vunpack.c.l.b16 %v224
    %v860 = vunpack.c.l.b16 %v225
    %v861 = vunpack.c.l.b16 %v226
    %v862 = vunpack.c.l.b16 %v227
    %v863 = vunpack.c.l.b16 %v228
    %v864 = vunpack.c.l.b16 %v229
    %v865 = vunpack.c.l.b16 %v230
    %v866 = vunpack.c.l.b16 %v231
    %v867 = vunpack.c.l.b16 %v232
    %v868 = vunpack.c.l.b16 %v233
    %v869 = vunpack.c.l.b16 %v234
    %v870 = vunpack.c.l.b16 %v235
    %v871 = vunpack.c.l.b16 %v236
    %v872 = vunpack.c.l.b16 %v237
    %v873 = vunpack.c.l.b16 %v238
    %v874 = vunpack.c.l.b16 %v239
    %v875 = vunpack.c.l.b16 %v240
    %v876 = vunpack.c.l.b16 %v241
    %v877 = vunpack.c.l.b16 %v242
    %v878 = vunpack.c.l.b16 %v243
    %v879 = vunpack.c.l.b16 %v244
    %v880 = vunpack.c.l.b16 %v245
    %v881 = vunpack.c.l.b16 %v246
    %v882 = vunpack.c.l.b16 %v247
    %v883 = vunpack.c.l.b16 %v248
    %v884 = vunpack.c.l.b16 %v249
    %v885 = vunpack.c.l.b16 %v250
    %v886 = vunpack.c.l.b16 %v251
    %v887 = vunpack.c.l.b16 %v252
    %v888 = vunpack.c.l.b16 %v253
    %v889 = vunpack.c.l.b16 %v254
    %v890 = vunpack.c.l.b16 %v255
    %v891 = vunpack.c.l.b16 %v256
    %v892 = vunpack.c.l.b16 %v257
    %v893 = vunpack.c.l.b16 %v258
    %v894 = vunpack.c.l.b16 %v259
    %v895 = vunpack.c.l.b16 %v260
    %v896 = vunpack.c.l.b16 %v261
    %v897 = vunpack.c.l.b16 %v262
    %v898 = vunpack.c.l.b16 %v263
    %v899 = vunpack.c.l.b16 %v264
    %v900 = vunpack.c.l.b16 %v265
    %v901 = vunpack.c.l.b16 %v266
    %v902 = vunpack.c.l.b16 %v267
    %v903 = vunpack.c.l.b16 %v268
    %v904 = vunpack.c.l.b16 %v269
    %v905 = vunpack.c.l.b16 %v270
    %v906 = vunpack.c.l.b16 %v271
    %v907 = vunpack.c.l.b16 %v272
    %v908 = vunpack.c.l.b16 %v273
    %v909 = vunpack.c.l.b16 %v274
    %v910 = vunpack.c.l.b16 %v275
    %v911 = vunpack.c.l.b16 %v276
    %v912 = vunpack.c.l.b16 %v277
    %v913 = vunpack.c.l.b16 %v278
    %v914 = vunpack.c.l.b16 %v279
    %v915 = vpack.c.b16 %v660, %v659
    %v916 = vpack.c.b16 %v662, %v661
    %v917 = vpack.c.b16 %v664, %v663
    %v918 = vpack.c.b16 %v666, %v665
    %v919 = vpack.c.b16 %v668, %v667
    %v920 = vpack.c.b16 %v670, %v669
    %v921 = vpack.c.b16 %v672, %v671
    %v922 = vpack.c.b16 %v674, %v673
    %v923 = vpack.c.b16 %v676, %v675
    %v924 = vpack.c.b16 %v678, %v677
    %v925 = vpack.c.b16 %v680, %v679
    %v926 = vpack.c.b16 %v682, %v681
    %v927 = vpack.c.b16 %v684, %v683
    %v928 = vpack.c.b16 %v686, %v685
    %v929 = vpack.c.b16 %v688, %v687
    %v930 = vpack.c.b16 %v690, %v689
    %v931 = vpack.c.b16 %v692, %v691
    %v932 = vpack.c.b16 %v694, %v693
    %v933 = vpack.c.b16 %v696, %v695
    %v934 = vpack.c.b16 %v698, %v697
    %v935 = vpack.c.b16 %v700, %v699
    %v936 = vpack.c.b16 %v702, %v701
    %v937 = vpack.c.b16 %v704, %v703
    %v938 = vpack.c.b16 %v706, %v705
    %v939 = vpack.c.b16 %v708, %v707
    %v940 = vpack.c.b16 %v710, %v709
    %v941 = vpack.c.b16 %v712, %v711
    %v942 = vpack.c.b16 %v714, %v713
    %v943 = vpack.c.b16 %v716, %v715
    %v944 = vpack.c.b16 %v718, %v717
    %v945 = vpack.c.b16 %v720, %v719
    %v946 = vpack.c.b16 %v722, %v721
    %v947 = vpack.c.b16 %v724, %v723
    %v948 = vpack.c.b16 %v726, %v725
    %v949 = vpack.c.b16 %v728, %v727
    %v950 = vpack.c.b16 %v730, %v729
    %v951 = vpack.c.b16 %v732, %v731
    %v952 = vpack.c.b16 %v734, %v733
    %v953 = vpack.c.b16 %v736, %v735
    %v954 = vpack.c.b16 %v738, %v737
    %v955 = vpack.c.b16 %v740, %v739
    %v956 = vpack.c.b16 %v742, %v741
    %v957 = vpack.c.b16 %v744, %v743
    %v958 = vpack.c.b16 %v746, %v745
    %v959 = vpack.c.b16 %v748, %v747
    %v960 = vpack.c.b16 %v750, %v749
    %v961 = vpack.c.b16 %v752, %v751
    %v962 = vpack.c.b16 %v754, %v753
    %v963 = vpack.c.b16 %v756, %v755
    %v964 = vpack.c.b16 %v758, %v757
    %v965 = vpack.c.b16 %v760, %v759
    %v966 = vpack.c.b16 %v762, %v761
    %v967 = vpack.c.b16 %v764, %v763
    %v968 = vpack.c.b16 %v766, %v765
    %v969 = vpack.c.b16 %v768, %v767
    %v970 = vpack.c.b16 %v770, %v769
    %v971 = vpack.c.b16 %v772, %v771
    %v972 = vpack.c.b16 %v774, %v773
    %v973 = vpack.c.b16 %v776, %v775
    %v974 = vpack.c.b16 %v778, %v777
    %v975 = vpack.c.b16 %v780, %v779
    %v976 = vpack.c.b16 %v782, %v781
    %v977 = vpack.c.b16 %v784, %v783
    %v978 = vpack.c.b16 %v786, %v785
    %v979 = vpack.c.b16 %v788, %v787
    %v980 = vpack.c.b16 %v790, %v789
    %v981 = vpack.c.b16 %v792, %v791
    %v982 = vpack.c.b16 %v794, %v793
    %v983 = vpack.c.b16 %v796, %v795
    %v984 = vpack.c.b16 %v798, %v797
    %v985 = vpack.c.b16 %v800, %v799
    %v986 = vpack.c.b16 %v802, %v801
    %v987 = vpack.c.b16 %v804, %v803
    %v988 = vpack.c.b16 %v806, %v805
    %v989 = vpack.c.b16 %v808, %v807
    %v990 = vpack.c.b16 %v810, %v809
    %v991 = vpack.c.b16 %v812, %v811
    %v992 = vpack.c.b16 %v814, %v813
    %v993 = vpack.c.b16 %v816, %v815
    %v994 = vpack.c.b16 %v818, %v817
    %v995 = vpack.c.b16 %v820, %v819
    %v996 = vpack.c.b16 %v822, %v821
    %v997 = vpack.c.b16 %v824, %v823
    %v998 = vpack.c.b16 %v826, %v825
    %v999 = vpack.c.b16 %v828, %v827
    %v1000 = vpack.c.b16 %v830, %v829
    %v1001 = vpack.c.b16 %v832, %v831
    %v1002 = vpack.c.b16 %v834, %v833
    %v1003 = vpack.c.b16 %v836, %v835
    %v1004 = vpack.c.b16 %v838, %v837
    %v1005 = vpack.c.b16 %v840, %v839
    %v1006 = vpack.c.b16 %v842, %v841
    %v1007 = vpack.c.b16 %v844, %v843
    %v1008 = vpack.c.b16 %v846, %v845
    %v1009 = vpack.c.b16 %v848, %v847
    %v1010 = vpack.c.b16 %v850, %v849
    %v1011 = vpack.c.b16 %v852, %v851
    %v1012 = vpack.c.b16 %v854, %v853
    %v1013 = vpack.c.b16 %v856, %v855
    %v1014 = vpack.c.b16 %v858, %v857
    %v1015 = vpack.c.b16 %v860, %v859
    %v1016 = vpack.c.b16 %v862, %v861
    %v1017 = vpack.c.b16 %v864, %v863
    %v1018 = vpack.c.b16 %v866, %v865
    %v1019 = vpack.c.b16 %v868, %v867
    %v1020 = vpack.c.b16 %v870, %v869
    %v1021 = vpack.c.b16 %v872, %v871
    %v1022 = vpack.c.b16 %v874, %v873
    %v1023 = vpack.c.b16 %v876, %v875
    %v1024 = vpack.c.b16 %v878, %v877
    %v1025 = vpack.c.b16 %v880, %v879
    %v1026 = vpack.c.b16 %v882, %v881
    %v1027 = vpack.c.b16 %v884, %v883
    %v1028 = vpack.c.b16 %v886, %v885
    %v1029 = vpack.c.b16 %v888, %v887
    %v1030 = vpack.c.b16 %v890, %v889
    %v1031 = vpack.c.b16 %v892, %v891
    %v1032 = vpack.c.b16 %v894, %v893
    %v1033 = vpack.c.b16 %v896, %v895
    %v1034 = vpack.c.b16 %v898, %v897
    %v1035 = vpack.c.b16 %v900, %v899
    %v1036 = vpack.c.b16 %v902, %v901
    %v1037 = vpack.c.b16 %v904, %v903
    %v1038 = vpack.c.b16 %v906, %v905
    %v1039 = vpack.c.b16 %v908, %v907
    %v1040 = vpack.c.b16 %v910, %v909
    %v1041 = vpack.c.b16 %v912, %v911
    %v1042 = vpack.c.b16 %v914, %v913
    %1171 = vmatprep.subr.bf16.mxu0 0
    %1172 = vmatpush1.bf16.msra.mxu0 %v915
    %1173 = vmatprep.subr.bf16.mxu0 0
    %1174 = vmatpush1.bf16.msra.mxu0 %v916
    %1175 = vmatprep.subr.bf16.mxu0 0
    %1176 = vmatpush1.bf16.msra.mxu0 %v917
    %1177 = vmatprep.subr.bf16.mxu0 0
    %1178 = vmatpush1.bf16.msra.mxu0 %v918
    %1179 = vmatprep.subr.bf16.mxu0 0
    %1180 = vmatpush1.bf16.msra.mxu0 %v919
    %1181 = vmatprep.subr.bf16.mxu0 0
    %1182 = vmatpush1.bf16.msra.mxu0 %v920
    %1183 = vmatprep.subr.bf16.mxu0 0
    %1184 = vmatpush1.bf16.msra.mxu0 %v921
    %1185 = vmatprep.subr.bf16.mxu0 0
    %1186 = vmatpush1.bf16.msra.mxu0 %v922
    %1187 = vmatprep.subr.bf16.mxu0 0
    %1188 = vmatpush1.bf16.msra.mxu0 %v923
    %1189 = vmatprep.subr.bf16.mxu0 0
    %1190 = vmatpush1.bf16.msra.mxu0 %v924
    %1191 = vmatprep.subr.bf16.mxu0 0
    %1192 = vmatpush1.bf16.msra.mxu0 %v925
    %1193 = vmatprep.subr.bf16.mxu0 0
    %1194 = vmatpush1.bf16.msra.mxu0 %v926
    %1195 = vmatprep.subr.bf16.mxu0 0
    %1196 = vmatpush1.bf16.msra.mxu0 %v927
    %1197 = vmatprep.subr.bf16.mxu0 0
    %1198 = vmatpush1.bf16.msra.mxu0 %v928
    %1199 = vmatprep.subr.bf16.mxu0 0
    %1200 = vmatpush1.bf16.msra.mxu0 %v929
    %1201 = vmatprep.subr.bf16.mxu0 0
    %1202 = vmatpush1.bf16.msra.mxu0 %v930
    %1203 = vmatprep.mubr.bf16.mxu0 %v326
    %1204 = vmatmul.mubr.bf16.gmra.mrb[0].mxu0 %v312
    %v1205 = vpop.f32.mrb[0].mxu0
    %v1206 = vadd.f32 %v285, %v1205
    %v1207 = vpop.f32.mrb[0].mxu0
    %v1208 = vpop.f32.mrb[0].mxu0
    %v1209 = vpop.f32.mrb[0].mxu0
    %1210 = vdwg.mxu0
    %1211 = vmatprep.subr.bf16.mxu0 0
    %1212 = vmatpush1.bf16.msra.mxu0 %v931
    %1213 = vmatprep.subr.bf16.mxu0 0
    %1214 = vmatpush1.bf16.msra.mxu0 %v932
    %1215 = vmatprep.subr.bf16.mxu0 0
    %1216 = vmatpush1.bf16.msra.mxu0 %v933
    %1217 = vmatprep.subr.bf16.mxu0 0
    %1218 = vmatpush1.bf16.msra.mxu0 %v934
    %1219 = vmatprep.subr.bf16.mxu0 0
    %1220 = vmatpush1.bf16.msra.mxu0 %v935
    %1221 = vmatprep.subr.bf16.mxu0 0
    %1222 = vmatpush1.bf16.msra.mxu0 %v936
    %1223 = vmatprep.subr.bf16.mxu0 0
    %1224 = vmatpush1.bf16.msra.mxu0 %v937
    %1225 = vmatprep.subr.bf16.mxu0 0
    %1226 = vmatpush1.bf16.msra.mxu0 %v938
    %1227 = vmatprep.subr.bf16.mxu0 0
    %1228 = vmatpush1.bf16.msra.mxu0 %v939
    %1229 = vmatprep.subr.bf16.mxu0 0
    %1230 = vmatpush1.bf16.msra.mxu0 %v940
    %1231 = vmatprep.subr.bf16.mxu0 0
    %1232 = vmatpush1.bf16.msra.mxu0 %v941
    %1233 = vmatprep.subr.bf16.mxu0 0
    %1234 = vmatpush1.bf16.msra.mxu0 %v942
    %1235 = vmatprep.subr.bf16.mxu0 0
    %1236 = vmatpush1.bf16.msra.mxu0 %v943
    %1237 = vmatprep.subr.bf16.mxu0 0
    %1238 = vmatpush1.bf16.msra.mxu0 %v944
    %1239 = vmatprep.subr.bf16.mxu0 0
    %1240 = vmatpush1.bf16.msra.mxu0 %v945
    %1241 = vmatprep.subr.bf16.mxu0 0
    %1242 = vmatpush1.bf16.msra.mxu0 %v946
    %1243 = vmatprep.mubr.bf16.mxu0 %v336
    %1244 = vmatmul.mubr.bf16.gmra.mrb[0].mxu0 %v334
    %v1245 = vpop.f32.mrb[0].mxu0
    %v1246 = vadd.f32 %v1206, %v1245
    %v1247 = vpop.f32.mrb[0].mxu0
    %v1248 = vpop.f32.mrb[0].mxu0
    %v1249 = vpop.f32.mrb[0].mxu0
    %1250 = vdwg.mxu0
    %1251 = vmatprep.subr.bf16.mxu0 0
    %1252 = vmatpush1.bf16.msra.mxu0 %v947
    %1253 = vmatprep.subr.bf16.mxu0 0
    %1254 = vmatpush1.bf16.msra.mxu0 %v948
    %1255 = vmatprep.subr.bf16.mxu0 0
    %1256 = vmatpush1.bf16.msra.mxu0 %v949
    %1257 = vmatprep.subr.bf16.mxu0 0
    %1258 = vmatpush1.bf16.msra.mxu0 %v950
    %1259 = vmatprep.subr.bf16.mxu0 0
    %1260 = vmatpush1.bf16.msra.mxu0 %v951
    %1261 = vmatprep.subr.bf16.mxu0 0
    %1262 = vmatpush1.bf16.msra.mxu0 %v952
    %1263 = vmatprep.subr.bf16.mxu0 0
    %1264 = vmatpush1.bf16.msra.mxu0 %v953
    %1265 = vmatprep.subr.bf16.mxu0 0
    %1266 = vmatpush1.bf16.msra.mxu0 %v954
    %1267 = vmatprep.subr.bf16.mxu0 0
    %1268 = vmatpush1.bf16.msra.mxu0 %v955
    %1269 = vmatprep.subr.bf16.mxu0 0
    %1270 = vmatpush1.bf16.msra.mxu0 %v956
    %1271 = vmatprep.subr.bf16.mxu0 0
    %1272 = vmatpush1.bf16.msra.mxu0 %v957
    %1273 = vmatprep.subr.bf16.mxu0 0
    %1274 = vmatpush1.bf16.msra.mxu0 %v958
    %1275 = vmatprep.subr.bf16.mxu0 0
    %1276 = vmatpush1.bf16.msra.mxu0 %v959
    %1277 = vmatprep.subr.bf16.mxu0 0
    %1278 = vmatpush1.bf16.msra.mxu0 %v960
    %1279 = vmatprep.subr.bf16.mxu0 0
    %1280 = vmatpush1.bf16.msra.mxu0 %v961
    %1281 = vmatprep.subr.bf16.mxu0 0
    %1282 = vmatpush1.bf16.msra.mxu0 %v962
    %1283 = vmatprep.mubr.bf16.mxu0 %v333
    %1284 = vmatmul.mubr.bf16.gmra.mrb[0].mxu0 %v319
    %v1285 = vpop.f32.mrb[0].mxu0
    %v1286 = vadd.f32 %v1246, %v1285
    %v1287 = vpop.f32.mrb[0].mxu0
    %v1288 = vpop.f32.mrb[0].mxu0
    %v1289 = vpop.f32.mrb[0].mxu0
    %1290 = vdwg.mxu0
    %1291 = vmatprep.subr.bf16.mxu0 0
    %1292 = vmatpush1.bf16.msra.mxu0 %v963
    %1293 = vmatprep.subr.bf16.mxu0 0
    %1294 = vmatpush1.bf16.msra.mxu0 %v964
    %1295 = vmatprep.subr.bf16.mxu0 0
    %1296 = vmatpush1.bf16.msra.mxu0 %v965
    %1297 = vmatprep.subr.bf16.mxu0 0
    %1298 = vmatpush1.bf16.msra.mxu0 %v966
    %1299 = vmatprep.subr.bf16.mxu0 0
    %1300 = vmatpush1.bf16.msra.mxu0 %v967
    %1301 = vmatprep.subr.bf16.mxu0 0
    %1302 = vmatpush1.bf16.msra.mxu0 %v968
    %1303 = vmatprep.subr.bf16.mxu0 0
    %1304 = vmatpush1.bf16.msra.mxu0 %v969
    %1305 = vmatprep.subr.bf16.mxu0 0
    %1306 = vmatpush1.bf16.msra.mxu0 %v970
    %1307 = vmatprep.subr.bf16.mxu0 0
    %1308 = vmatpush1.bf16.msra.mxu0 %v971
    %1309 = vmatprep.subr.bf16.mxu0 0
    %1310 = vmatpush1.bf16.msra.mxu0 %v972
    %1311 = vmatprep.subr.bf16.mxu0 0
    %1312 = vmatpush1.bf16.msra.mxu0 %v973
    %1313 = vmatprep.subr.bf16.mxu0 0
    %1314 = vmatpush1.bf16.msra.mxu0 %v974
    %1315 = vmatprep.subr.bf16.mxu0 0
    %1316 = vmatpush1.bf16.msra.mxu0 %v975
    %1317 = vmatprep.subr.bf16.mxu0 0
    %1318 = vmatpush1.bf16.msra.mxu0 %v976
    %1319 = vmatprep.subr.bf16.mxu0 0
    %1320 = vmatpush1.bf16.msra.mxu0 %v977
    %1321 = vmatprep.subr.bf16.mxu0 0
    %1322 = vmatpush1.bf16.msra.mxu0 %v978
    %1323 = vmatprep.mubr.bf16.mxu0 %v337
    %1324 = vmatmul.mubr.bf16.gmra.mrb[0].mxu0 %v335
    %v1325 = vpop.f32.mrb[0].mxu0
    %v1326 = vadd.f32 %v1286, %v1325
    %v1327 = vpop.f32.mrb[0].mxu0
    %v1328 = vpop.f32.mrb[0].mxu0
    %v1329 = vpop.f32.mrb[0].mxu0
    %1330 = vdwg.mxu0
    %1331 = vmatprep.subr.bf16.mxu0 0
    %1332 = vmatpush1.bf16.msra.mxu0 %v979
    %1333 = vmatprep.subr.bf16.mxu0 0
    %1334 = vmatpush1.bf16.msra.mxu0 %v980
    %1335 = vmatprep.subr.bf16.mxu0 0
    %1336 = vmatpush1.bf16.msra.mxu0 %v981
    %1337 = vmatprep.subr.bf16.mxu0 0
    %1338 = vmatpush1.bf16.msra.mxu0 %v982
    %1339 = vmatprep.subr.bf16.mxu0 0
    %1340 = vmatpush1.bf16.msra.mxu0 %v983
    %1341 = vmatprep.subr.bf16.mxu0 0
    %1342 = vmatpush1.bf16.msra.mxu0 %v984
    %1343 = vmatprep.subr.bf16.mxu0 0
    %1344 = vmatpush1.bf16.msra.mxu0 %v985
    %1345 = vmatprep.subr.bf16.mxu0 0
    %1346 = vmatpush1.bf16.msra.mxu0 %v986
    %1347 = vmatprep.subr.bf16.mxu0 0
    %1348 = vmatpush1.bf16.msra.mxu0 %v987
    %1349 = vmatprep.subr.bf16.mxu0 0
    %1350 = vmatpush1.bf16.msra.mxu0 %v988
    %1351 = vmatprep.subr.bf16.mxu0 0
    %1352 = vmatpush1.bf16.msra.mxu0 %v989
    %1353 = vmatprep.subr.bf16.mxu0 0
    %1354 = vmatpush1.bf16.msra.mxu0 %v990
    %1355 = vmatprep.subr.bf16.mxu0 0
    %1356 = vmatpush1.bf16.msra.mxu0 %v991
    %1357 = vmatprep.subr.bf16.mxu0 0
    %1358 = vmatpush1.bf16.msra.mxu0 %v992
    %1359 = vmatprep.subr.bf16.mxu0 0
    %1360 = vmatpush1.bf16.msra.mxu0 %v993
    %1361 = vmatprep.subr.bf16.mxu0 0
    %1362 = vmatpush1.bf16.msra.mxu0 %v994
    %1363 = vmatprep.mubr.bf16.mxu0 %v375
    %1364 = vmatmul.mubr.bf16.gmra.mrb[0].mxu0 %v361
    %v1365 = vpop.f32.mrb[0].mxu0
    %v1366 = vadd.f32 %v1326, %v1365
    %v1367 = vpop.f32.mrb[0].mxu0
    %v1368 = vpop.f32.mrb[0].mxu0
    %v1369 = vpop.f32.mrb[0].mxu0
    %1370 = vdwg.mxu0
    %1371 = vmatprep.subr.bf16.mxu0 0
    %1372 = vmatpush1.bf16.msra.mxu0 %v995
    %1373 = vmatprep.subr.bf16.mxu0 0
    %1374 = vmatpush1.bf16.msra.mxu0 %v996
    %1375 = vmatprep.subr.bf16.mxu0 0
    %1376 = vmatpush1.bf16.msra.mxu0 %v997
    %1377 = vmatprep.subr.bf16.mxu0 0
    %1378 = vmatpush1.bf16.msra.mxu0 %v998
    %1379 = vmatprep.subr.bf16.mxu0 0
    %1380 = vmatpush1.bf16.msra.mxu0 %v999
    %1381 = vmatprep.subr.bf16.mxu0 0
    %1382 = vmatpush1.bf16.msra.mxu0 %v1000
    %1383 = vmatprep.subr.bf16.mxu0 0
    %1384 = vmatpush1.bf16.msra.mxu0 %v1001
    %1385 = vmatprep.subr.bf16.mxu0 0
    %1386 = vmatpush1.bf16.msra.mxu0 %v1002
    %1387 = vmatprep.subr.bf16.mxu0 0
    %1388 = vmatpush1.bf16.msra.mxu0 %v1003
    %1389 = vmatprep.subr.bf16.mxu0 0
    %1390 = vmatpush1.bf16.msra.mxu0 %v1004
    %1391 = vmatprep.subr.bf16.mxu0 0
    %1392 = vmatpush1.bf16.msra.mxu0 %v1005
    %1393 = vmatprep.subr.bf16.mxu0 0
    %1394 = vmatpush1.bf16.msra.mxu0 %v1006
    %1395 = vmatprep.subr.bf16.mxu0 0
    %1396 = vmatpush1.bf16.msra.mxu0 %v1007
    %1397 = vmatprep.subr.bf16.mxu0 0
    %1398 = vmatpush1.bf16.msra.mxu0 %v1008
    %1399 = vmatprep.subr.bf16.mxu0 0
    %1400 = vmatpush1.bf16.msra.mxu0 %v1009
    %1401 = vmatprep.subr.bf16.mxu0 0
    %1402 = vmatpush1.bf16.msra.mxu0 %v1010
    %1403 = vmatprep.mubr.bf16.mxu0 %v385
    %1404 = vmatmul.mubr.bf16.gmra.mrb[0].mxu0 %v383
    %v1405 = vpop.f32.mrb[0].mxu0
    %v1406 = vadd.f32 %v1366, %v1405
    %v1407 = vpop.f32.mrb[0].mxu0
    %v1408 = vpop.f32.mrb[0].mxu0
    %v1409 = vpop.f32.mrb[0].mxu0
    %1410 = vdwg.mxu0
    %1411 = vmatprep.subr.bf16.mxu0 0
    %1412 = vmatpush1.bf16.msra.mxu0 %v1011
    %1413 = vmatprep.subr.bf16.mxu0 0
    %1414 = vmatpush1.bf16.msra.mxu0 %v1012
    %1415 = vmatprep.subr.bf16.mxu0 0
    %1416 = vmatpush1.bf16.msra.mxu0 %v1013
    %1417 = vmatprep.subr.bf16.mxu0 0
    %1418 = vmatpush1.bf16.msra.mxu0 %v1014
    %1419 = vmatprep.subr.bf16.mxu0 0
    %1420 = vmatpush1.bf16.msra.mxu0 %v1015
    %1421 = vmatprep.subr.bf16.mxu0 0
    %1422 = vmatpush1.bf16.msra.mxu0 %v1016
    %1423 = vmatprep.subr.bf16.mxu0 0
    %1424 = vmatpush1.bf16.msra.mxu0 %v1017
    %1425 = vmatprep.subr.bf16.mxu0 0
    %1426 = vmatpush1.bf16.msra.mxu0 %v1018
    %1427 = vmatprep.subr.bf16.mxu0 0
    %1428 = vmatpush1.bf16.msra.mxu0 %v1019
    %1429 = vmatprep.subr.bf16.mxu0 0
    %1430 = vmatpush1.bf16.msra.mxu0 %v1020
    %1431 = vmatprep.subr.bf16.mxu0 0
    %1432 = vmatpush1.bf16.msra.mxu0 %v1021
    %1433 = vmatprep.subr.bf16.mxu0 0
    %1434 = vmatpush1.bf16.msra.mxu0 %v1022
    %1435 = vmatprep.subr.bf16.mxu0 0
    %1436 = vmatpush1.bf16.msra.mxu0 %v1023
    %1437 = vmatprep.subr.bf16.mxu0 0
    %1438 = vmatpush1.bf16.msra.mxu0 %v1024
    %1439 = vmatprep.subr.bf16.mxu0 0
    %1440 = vmatpush1.bf16.msra.mxu0 %v1025
    %1441 = vmatprep.subr.bf16.mxu0 0
    %1442 = vmatpush1.bf16.msra.mxu0 %v1026
    %1443 = vmatprep.mubr.bf16.mxu0 %v382
    %1444 = vmatmul.mubr.bf16.gmra.mrb[0].mxu0 %v368
    %v1445 = vpop.f32.mrb[0].mxu0
    %v1446 = vadd.f32 %v1406, %v1445
    %v1447 = vpop.f32.mrb[0].mxu0
    %v1448 = vpop.f32.mrb[0].mxu0
    %v1449 = vpop.f32.mrb[0].mxu0
    %1450 = vdwg.mxu0
    %1451 = vmatprep.subr.bf16.mxu0 0
    %1452 = vmatpush1.bf16.msra.mxu0 %v1027
    %1453 = vmatprep.subr.bf16.mxu0 0
    %1454 = vmatpush1.bf16.msra.mxu0 %v1028
    %1455 = vmatprep.subr.bf16.mxu0 0
    %1456 = vmatpush1.bf16.msra.mxu0 %v1029
    %1457 = vmatprep.subr.bf16.mxu0 0
    %1458 = vmatpush1.bf16.msra.mxu0 %v1030
    %1459 = vmatprep.subr.bf16.mxu0 0
    %1460 = vmatpush1.bf16.msra.mxu0 %v1031
    %1461 = vmatprep.subr.bf16.mxu0 0
    %1462 = vmatpush1.bf16.msra.mxu0 %v1032
    %1463 = vmatprep.subr.bf16.mxu0 0
    %1464 = vmatpush1.bf16.msra.mxu0 %v1033
    %1465 = vmatprep.subr.bf16.mxu0 0
    %1466 = vmatpush1.bf16.msra.mxu0 %v1034
    %1467 = vmatprep.subr.bf16.mxu0 0
    %1468 = vmatpush1.bf16.msra.mxu0 %v1035
    %1469 = vmatprep.subr.bf16.mxu0 0
    %1470 = vmatpush1.bf16.msra.mxu0 %v1036
    %1471 = vmatprep.subr.bf16.mxu0 0
    %1472 = vmatpush1.bf16.msra.mxu0 %v1037
    %1473 = vmatprep.subr.bf16.mxu0 0
    %1474 = vmatpush1.bf16.msra.mxu0 %v1038
    %1475 = vmatprep.subr.bf16.mxu0 0
    %1476 = vmatpush1.bf16.msra.mxu0 %v1039
    %1477 = vmatprep.subr.bf16.mxu0 0
    %1478 = vmatpush1.bf16.msra.mxu0 %v1040
    %1479 = vmatprep.subr.bf16.mxu0 0
    %1480 = vmatpush1.bf16.msra.mxu0 %v1041
    %1481 = vmatprep.subr.bf16.mxu0 0
    %1482 = vmatpush1.bf16.msra.mxu0 %v1042
    %1483 = vmatprep.mubr.bf16.mxu0 %v386
    %1484 = vmatmul.mubr.bf16.gmra.mrb[0].mxu0 %v384
    %v1485 = vpop.f32.mrb[0].mxu0
    %v1486 = vadd.f32 %v1446, %v1485
    %v1487 = vpop.f32.mrb[0].mxu0
    %v1488 = vpop.f32.mrb[0].mxu0
    %v1489 = vpop.f32.mrb[0].mxu0
    %1490 = vdwg.mxu0
    %v1491 = vmax.f32 %v1486, 0.0
    %v1492 = vpack.c.bf16 %v1491, %v1491
    %v1493 = vld [vmem:[%s3] sm:$0xf]
    %v1494 = vld [vmem:[%s3 + $0x4] sm:$0xf]
    %v1495 = vld [vmem:[%s3 + $0x8] sm:$0xf]
    %v1496 = vld [vmem:[%s3 + $0xc] sm:$0xf]
    %v1497 = vld [vmem:[%s3 + $0x10] sm:$0xf]
    %v1498 = vld [vmem:[%s3 + $0x14] sm:$0xf]
    %v1499 = vld [vmem:[%s3 + $0x18] sm:$0x1]
    %v1500 = vld [vmem:[%s4] sm:$0x1]
    %v1502 = vlaneseq
    %v1503 = vshrl.u32 %v1502, 7
    %v1504 = vsub.s32 0, %v1503
    %v1505 = vrot.slane %v1500, %v1504
    %v1514 = vunpack.c.l.b16 %v1493
    %v1515 = vunpack.c.l.b16 %v1494
    %v1516 = vunpack.c.l.b16 %v1495
    %v1517 = vunpack.c.l.b16 %v1496
    %v1518 = vunpack.c.l.b16 %v1497
    %v1519 = vunpack.c.l.b16 %v1498
    %v1520 = vunpack.c.l.b16 %v1499
    %v1521 = vpack.c.b16 %v1515, %v1514
    %v1522 = vpack.c.b16 %v1517, %v1516
    %v1523 = vpack.c.b16 %v1519, %v1518
    %v1524 = vpack.c.b16 %v1520, %v1520
    %vm1528 = vcmask 408576
    %v1530 = vsel %vm1528, %v1492, 0
    %vm1532 = vcmask 1040384
    %v1534 = vsel %vm1532, %v1524, 0
    %1536 = vmatprep.subr.bf16.mxu0 0
    %1537 = vmatpush1.bf16.msra.mxu0 %v1521
    %1538 = vmatprep.subr.bf16.mxu0 0
    %1539 = vmatpush1.bf16.msra.mxu0 %v1522
    %1540 = vmatprep.subr.bf16.mxu0 0
    %1541 = vmatpush1.bf16.msra.mxu0 %v1523
    %1542 = vmatprep.subr.bf16.mxu0 0
    %1543 = vmatpush1.bf16.msra.mxu0 %v1534
    %1544 = vmatprep.subr.bf16.mxu0 0
    %1545 = vmatpush1.bf16.msra.mxu0 0
    %1546 = vmatprep.subr.bf16.mxu0 0
    %1547 = vmatpush1.bf16.msra.mxu0 0
    %1548 = vmatprep.subr.bf16.mxu0 0
    %1549 = vmatpush1.bf16.msra.mxu0 0
    %1550 = vmatprep.subr.bf16.mxu0 0
    %1551 = vmatpush1.bf16.msra.mxu0 0
    %1552 = vmatprep.subr.bf16.mxu0 0
    %1553 = vmatpush1.bf16.msra.mxu0 0
    %1554 = vmatprep.subr.bf16.mxu0 0
    %1555 = vmatpush1.bf16.msra.mxu0 0
    %1556 = vmatprep.subr.bf16.mxu0 0
    %1557 = vmatpush1.bf16.msra.mxu0 0
    %1558 = vmatprep.subr.bf16.mxu0 0
    %1559 = vmatpush1.bf16.msra.mxu0 0
    %1560 = vmatprep.subr.bf16.mxu0 0
    %1561 = vmatpush1.bf16.msra.mxu0 0
    %1562 = vmatprep.subr.bf16.mxu0 0
    %1563 = vmatpush1.bf16.msra.mxu0 0
    %1564 = vmatprep.subr.bf16.mxu0 0
    %1565 = vmatpush1.bf16.msra.mxu0 0
    %1566 = vmatprep.subr.bf16.mxu0 0
    %1567 = vmatpush1.bf16.msra.mxu0 0
    %1568 = vmatprep.mubr.bf16.mxu0 0
    %1569 = vmatmul.mubr.bf16.gmra.mrb[0].mxu0 %v1530
    %v1570 = vpop.f32.mrb[0].mxu0
    %v1571 = vadd.f32 %v1505, %v1570
    %v1572 = vpop.f32.mrb[0].mxu0
    %v1573 = vpop.f32.mrb[0].mxu0
    %v1574 = vpop.f32.mrb[0].mxu0
    %1575 = vdwg.mxu0
    %v1576 = vmax.f32 %v1571, 0.0
    %vm1577 = vcmask 17408
    %v1578 = vsel %vm1577, %v1576, -inf
    %1579 = vmax.xlane.f32.xlu0 %v1578
    %v1580 = vpop.xlane.xlu0 %1579
    %v1581 = vsub.f32 %v1576, %v1580
    %v1582 = vmul.f32 %v1581, 1.442695
    %v1583 = vpow.pop %v1582
    %v1584 = vsel %vm1577, %v1583, 0.0
    %1585 = vadd.xlane.f32.xlu0 %v1584
    %v1586 = vpop.xlane.xlu0 %1585
    %v1587 = vlog2.pop %v1586
    %v1588 = vmul.f32 %v1587, 0.6931472
    %v1589 = vsub.f32 %v1581, %v1588
    %1590 = vst.msk [vmem:[#allocation2] sm:$0x3] %vm1577, %v1589
    // Predicated region
    $region22: #{cnnet_forward.5} parent=1 // pred_check
      _
    $region23: #{cnnet_forward.5} parent=1 // pred_check_branch
      %1592 = sbr.rel (0) target = $region25
    $region24: #{cnnet_forward.5} parent=1 // pred_region
      %s1594 = ssub.s32 32, 32
      %1595 = vsyncadd [#allocation3], %s1594
      %s1597 = sshll.u32 [#allocation2], 4
      %s1598 = int_to_ptr.vmem [resolvable:$true] %s1597
      %1600 = dma.vmem_to_hbm [thread:$0]  %s1598, 32, %s5, [#allocation3]
    $region25: #{cnnet_forward.5} parent=1 // pred_fallthru
      _
    // Predicated region
    $region26: #{cnnet_forward.5} parent=1 // pred_check
      _
    $region27: #{cnnet_forward.5} parent=1 // pred_check_branch
      %1602 = sbr.rel (0) target = $region29
    $region28: #{cnnet_forward.5} parent=1 // pred_region
      %1603 = dma.done [#allocation3], 32
    $region29: #{cnnet_forward.5} parent=1 // pred_fallthru
      _
    %1604 = vsyncpa [#allocation3], 1

// kernel: cnnet_forward.4
$region0: #{cnnet_forward.4}
  #allocation0 [shape = 'u32[]', space=smem, size = 0x4, offset = 0x4, fixed_abs, tag = 'smem constant byte address 0x4 - core index']
  #allocation1 [shape = 'u32[144,128]{1,0:T(1,128)}', space=vmem, size = 0x12000, scoped, tag = 'internal scratch']
  %s0 = inlined_call_operand.vmem [shape: bf16[4,32,3200], index: 0, kind: input, shape index: {}]
  %s1 = inlined_call_operand.vmem [shape: bf16[3200,128], index: 1, kind: input, shape index: {}]
  %s2 = inlined_call_operand.vmem [shape: f32[1,128], index: 2, kind: input, shape index: {}]
  %s3 = inlined_call_operand.vmem [shape: bf16[32,128], index: 3, kind: output, shape index: {}]
  %s4 = sld [smem:[#allocation0]]
  $region22: #{cnnet_forward.4} parent=0
    _
  %s6 = ssub.s32 1, %s4
  %s7 = scalar_select 0, %s6, %s4
  // Predicated region
  $region2: #{cnnet_forward.4} parent=0 // pred_check
    _
  $region3: #{cnnet_forward.4} parent=0 // pred_check_branch
    %9 = sbr.rel (0) target = $region5
  $region4: #{cnnet_forward.4} parent=0 // pred_region
    _
  $region5: #{cnnet_forward.4} parent=0 // pred_fallthru
    _
  // Predicated region
  $region6: #{cnnet_forward.4} parent=0 // pred_check
    _
  $region7: #{cnnet_forward.4} parent=0 // pred_check_branch
    %11 = sbr.rel (0) target = $region9
  $region8: #{cnnet_forward.4} parent=0 // pred_region
    _
  $region9: #{cnnet_forward.4} parent=0 // pred_fallthru
    _
  // Predicated region
  $region10: #{cnnet_forward.4} parent=0 // pred_check
    _
  $region11: #{cnnet_forward.4} parent=0 // pred_check_branch
    %13 = sbr.rel (0) target = $region13
  $region12: #{cnnet_forward.4} parent=0 // pred_region
    _
  $region13: #{cnnet_forward.4} parent=0 // pred_fallthru
    _
  %v15 = vld [vmem:[%s1] sm:$0xf]
  %v16 = vld [vmem:[%s1 + $0x4] sm:$0xf]
  %v17 = vld [vmem:[%s1 + $0x8] sm:$0xf]
  %v18 = vld [vmem:[%s1 + $0xc] sm:$0xf]
  %v19 = vld [vmem:[%s1 + $0x10] sm:$0xf]
  %v20 = vld [vmem:[%s1 + $0x14] sm:$0xf]
  %v21 = vld [vmem:[%s1 + $0x18] sm:$0xf]
  %v22 = vld [vmem:[%s1 + $0x1c] sm:$0xf]
  %v23 = vld [vmem:[%s1 + $0x20] sm:$0xf]
  %v24 = vld [vmem:[%s1 + $0x24] sm:$0xf]
  %v25 = vld [vmem:[%s1 + $0x28] sm:$0xf]
  %v26 = vld [vmem:[%s1 + $0x2c] sm:$0xf]
  %v27 = vld [vmem:[%s1 + $0x30] sm:$0xf]
  %v28 = vld [vmem:[%s1 + $0x34] sm:$0xf]
  %v29 = vld [vmem:[%s1 + $0x38] sm:$0xf]
  %v30 = vld [vmem:[%s1 + $0x3c] sm:$0xf]
  %v31 = vld [vmem:[%s1 + $0x40] sm:$0xf]
  %v32 = vld [vmem:[%s1 + $0x44] sm:$0xf]
  %v33 = vld [vmem:[%s1 + $0x48] sm:$0xf]
  %v34 = vld [vmem:[%s1 + $0x4c] sm:$0xf]
  %v35 = vld [vmem:[%s1 + $0x50] sm:$0xf]
  %v36 = vld [vmem:[%s1 + $0x54] sm:$0xf]
  %v37 = vld [vmem:[%s1 + $0x58] sm:$0xf]
  %v38 = vld [vmem:[%s1 + $0x5c] sm:$0xf]
  %v39 = vld [vmem:[%s1 + $0x60] sm:$0xf]
  %v40 = vld [vmem:[%s1 + $0x64] sm:$0xf]
  %v41 = vld [vmem:[%s1 + $0x68] sm:$0xf]
  %v42 = vld [vmem:[%s1 + $0x6c] sm:$0xf]
  %v43 = vld [vmem:[%s1 + $0x70] sm:$0xf]
  %v44 = vld [vmem:[%s1 + $0x74] sm:$0xf]
  %v45 = vld [vmem:[%s1 + $0x78] sm:$0xf]
  %v46 = vld [vmem:[%s1 + $0x7c] sm:$0xf]
  %v47 = vld [vmem:[%s1 + $0x80] sm:$0xf]
  %v48 = vld [vmem:[%s1 + $0x84] sm:$0xf]
  %v49 = vld [vmem:[%s1 + $0x88] sm:$0xf]
  %v50 = vld [vmem:[%s1 + $0x8c] sm:$0xf]
  %v51 = vld [vmem:[%s1 + $0x90] sm:$0xf]
  %v52 = vld [vmem:[%s1 + $0x94] sm:$0xf]
  %v53 = vld [vmem:[%s1 + $0x98] sm:$0xf]
  %v54 = vld [vmem:[%s1 + $0x9c] sm:$0xf]
  %v55 = vld [vmem:[%s1 + $0xa0] sm:$0xf]
  %v56 = vld [vmem:[%s1 + $0xa4] sm:$0xf]
  %v57 = vld [vmem:[%s1 + $0xa8] sm:$0xf]
  %v58 = vld [vmem:[%s1 + $0xac] sm:$0xf]
  %v59 = vld [vmem:[%s1 + $0xb0] sm:$0xf]
  %v60 = vld [vmem:[%s1 + $0xb4] sm:$0xf]
  %v61 = vld [vmem:[%s1 + $0xb8] sm:$0xf]
  %v62 = vld [vmem:[%s1 + $0xbc] sm:$0xf]
  %v63 = vld [vmem:[%s1 + $0xc0] sm:$0xf]
  %v64 = vld [vmem:[%s1 + $0xc4] sm:$0xf]
  %v65 = vld [vmem:[%s1 + $0xc8] sm:$0xf]
  %v66 = vld [vmem:[%s1 + $0xcc] sm:$0xf]
  %v67 = vld [vmem:[%s1 + $0xd0] sm:$0xf]
  %v68 = vld [vmem:[%s1 + $0xd4] sm:$0xf]
  %v69 = vld [vmem:[%s1 + $0xd8] sm:$0xf]
  %v70 = vld [vmem:[%s1 + $0xdc] sm:$0xf]
  %v71 = vld [vmem:[%s1 + $0xe0] sm:$0xf]
  %v72 = vld [vmem:[%s1 + $0xe4] sm:$0xf]
  %v73 = vld [vmem:[%s1 + $0xe8] sm:$0xf]
  %v74 = vld [vmem:[%s1 + $0xec] sm:$0xf]
  %v75 = vld [vmem:[%s1 + $0xf0] sm:$0xf]
  %v76 = vld [vmem:[%s1 + $0xf4] sm:$0xf]
  %v77 = vld [vmem:[%s1 + $0xf8] sm:$0xf]
  %v78 = vld [vmem:[%s1 + $0xfc] sm:$0xf]
  %v79 = vld [vmem:[%s1 + $0x100] sm:$0xf]
  %v80 = vld [vmem:[%s1 + $0x104] sm:$0xf]
  %v81 = vld [vmem:[%s1 + $0x108] sm:$0xf]
  %v82 = vld [vmem:[%s1 + $0x10c] sm:$0xf]
  %v83 = vld [vmem:[%s1 + $0x110] sm:$0xf]
  %v84 = vld [vmem:[%s1 + $0x114] sm:$0xf]
  %v85 = vld [vmem:[%s1 + $0x118] sm:$0xf]
  %v86 = vld [vmem:[%s1 + $0x11c] sm:$0xf]
  %v87 = vld [vmem:[%s1 + $0x120] sm:$0xf]
  %v88 = vld [vmem:[%s1 + $0x124] sm:$0xf]
  %v89 = vld [vmem:[%s1 + $0x128] sm:$0xf]
  %v90 = vld [vmem:[%s1 + $0x12c] sm:$0xf]
  %v91 = vld [vmem:[%s1 + $0x130] sm:$0xf]
  %v92 = vld [vmem:[%s1 + $0x134] sm:$0xf]
  %v93 = vld [vmem:[%s1 + $0x138] sm:$0xf]
  %v94 = vld [vmem:[%s1 + $0x13c] sm:$0xf]
  %v95 = vld [vmem:[%s1 + $0x140] sm:$0xf]
  %v96 = vld [vmem:[%s1 + $0x144] sm:$0xf]
  %v97 = vld [vmem:[%s1 + $0x148] sm:$0xf]
  %v98 = vld [vmem:[%s1 + $0x14c] sm:$0xf]
  %v99 = vld [vmem:[%s1 + $0x150] sm:$0xf]
  %v100 = vld [vmem:[%s1 + $0x154] sm:$0xf]
  %v101 = vld [vmem:[%s1 + $0x158] sm:$0xf]
  %v102 = vld [vmem:[%s1 + $0x15c] sm:$0xf]
  %v103 = vld [vmem:[%s1 + $0x160] sm:$0xf]
  %v104 = vld [vmem:[%s1 + $0x164] sm:$0xf]
  %v105 = vld [vmem:[%s1 + $0x168] sm:$0xf]
  %v106 = vld [vmem:[%s1 + $0x16c] sm:$0xf]
  %v107 = vld [vmem:[%s1 + $0x170] sm:$0xf]
  %v108 = vld [vmem:[%s1 + $0x174] sm:$0xf]
  %v109 = vld [vmem:[%s1 + $0x178] sm:$0xf]
  %v110 = vld [vmem:[%s1 + $0x17c] sm:$0xf]
  %v111 = vld [vmem:[%s1 + $0x180] sm:$0xf]
  %v112 = vld [vmem:[%s1 + $0x184] sm:$0xf]
  %v113 = vld [vmem:[%s1 + $0x188] sm:$0xf]
  %v114 = vld [vmem:[%s1 + $0x18c] sm:$0xf]
  %v115 = vld [vmem:[%s1 + $0x190] sm:$0xf]
  %v116 = vld [vmem:[%s1 + $0x194] sm:$0xf]
  %v117 = vld [vmem:[%s1 + $0x198] sm:$0xf]
  %v118 = vld [vmem:[%s1 + $0x19c] sm:$0xf]
  %v119 = vld [vmem:[%s1 + $0x1a0] sm:$0xf]
  %v120 = vld [vmem:[%s1 + $0x1a4] sm:$0xf]
  %v121 = vld [vmem:[%s1 + $0x1a8] sm:$0xf]
  %v122 = vld [vmem:[%s1 + $0x1ac] sm:$0xf]
  %v123 = vld [vmem:[%s1 + $0x1b0] sm:$0xf]
  %v124 = vld [vmem:[%s1 + $0x1b4] sm:$0xf]
  %v125 = vld [vmem:[%s1 + $0x1b8] sm:$0xf]
  %v126 = vld [vmem:[%s1 + $0x1bc] sm:$0xf]
  %v127 = vld [vmem:[%s1 + $0x1c0] sm:$0xf]
  %v128 = vld [vmem:[%s1 + $0x1c4] sm:$0xf]
  %v129 = vld [vmem:[%s1 + $0x1c8] sm:$0xf]
  %v130 = vld [vmem:[%s1 + $0x1cc] sm:$0xf]
  %v131 = vld [vmem:[%s1 + $0x1d0] sm:$0xf]
  %v132 = vld [vmem:[%s1 + $0x1d4] sm:$0xf]
  %v133 = vld [vmem:[%s1 + $0x1d8] sm:$0xf]
  %v134 = vld [vmem:[%s1 + $0x1dc] sm:$0xf]
  %v135 = vld [vmem:[%s1 + $0x1e0] sm:$0xf]
  %v136 = vld [vmem:[%s1 + $0x1e4] sm:$0xf]
  %v137 = vld [vmem:[%s1 + $0x1e8] sm:$0xf]
  %v138 = vld [vmem:[%s1 + $0x1ec] sm:$0xf]
  %v139 = vld [vmem:[%s1 + $0x1f0] sm:$0xf]
  %v140 = vld [vmem:[%s1 + $0x1f4] sm:$0xf]
  %v141 = vld [vmem:[%s1 + $0x1f8] sm:$0xf]
  %v142 = vld [vmem:[%s1 + $0x1fc] sm:$0xf]
  %v143 = vld [vmem:[%s1 + $0x200] sm:$0xf]
  %v144 = vld [vmem:[%s1 + $0x204] sm:$0xf]
  %v145 = vld [vmem:[%s1 + $0x208] sm:$0xf]
  %v146 = vld [vmem:[%s1 + $0x20c] sm:$0xf]
  %v147 = vld [vmem:[%s1 + $0x210] sm:$0xf]
  %v148 = vld [vmem:[%s1 + $0x214] sm:$0xf]
  %v149 = vld [vmem:[%s1 + $0x218] sm:$0xf]
  %v150 = vld [vmem:[%s1 + $0x21c] sm:$0xf]
  %v151 = vld [vmem:[%s1 + $0x220] sm:$0xf]
  %v152 = vld [vmem:[%s1 + $0x224] sm:$0xf]
  %v153 = vld [vmem:[%s1 + $0x228] sm:$0xf]
  %v154 = vld [vmem:[%s1 + $0x22c] sm:$0xf]
  %v155 = vld [vmem:[%s1 + $0x230] sm:$0xf]
  %v156 = vld [vmem:[%s1 + $0x234] sm:$0xf]
  %v157 = vld [vmem:[%s1 + $0x238] sm:$0xf]
  %v158 = vld [vmem:[%s1 + $0x23c] sm:$0xf]
  %v159 = vld [vmem:[%s1 + $0x240] sm:$0xf]
  %v160 = vld [vmem:[%s1 + $0x244] sm:$0xf]
  %v161 = vld [vmem:[%s1 + $0x248] sm:$0xf]
  %v162 = vld [vmem:[%s1 + $0x24c] sm:$0xf]
  %v163 = vld [vmem:[%s1 + $0x250] sm:$0xf]
  %v164 = vld [vmem:[%s1 + $0x254] sm:$0xf]
  %v165 = vld [vmem:[%s1 + $0x258] sm:$0xf]
  %v166 = vld [vmem:[%s1 + $0x25c] sm:$0xf]
  %v167 = vld [vmem:[%s1 + $0x260] sm:$0xf]
  %v168 = vld [vmem:[%s1 + $0x264] sm:$0xf]
  %v169 = vld [vmem:[%s1 + $0x268] sm:$0xf]
  %v170 = vld [vmem:[%s1 + $0x26c] sm:$0xf]
  %v171 = vld [vmem:[%s1 + $0x270] sm:$0xf]
  %v172 = vld [vmem:[%s1 + $0x274] sm:$0xf]
  %v173 = vld [vmem:[%s1 + $0x278] sm:$0xf]
  %v174 = vld [vmem:[%s1 + $0x27c] sm:$0xf]
  %v175 = vld [vmem:[%s1 + $0x280] sm:$0xf]
  %v176 = vld [vmem:[%s1 + $0x284] sm:$0xf]
  %v177 = vld [vmem:[%s1 + $0x288] sm:$0xf]
  %v178 = vld [vmem:[%s1 + $0x28c] sm:$0xf]
  %v179 = vld [vmem:[%s1 + $0x290] sm:$0xf]
  %v180 = vld [vmem:[%s1 + $0x294] sm:$0xf]
  %v181 = vld [vmem:[%s1 + $0x298] sm:$0xf]
  %v182 = vld [vmem:[%s1 + $0x29c] sm:$0xf]
  %v183 = vld [vmem:[%s1 + $0x2a0] sm:$0xf]
  %v184 = vld [vmem:[%s1 + $0x2a4] sm:$0xf]
  %v185 = vld [vmem:[%s1 + $0x2a8] sm:$0xf]
  %v186 = vld [vmem:[%s1 + $0x2ac] sm:$0xf]
  %v187 = vld [vmem:[%s1 + $0x2b0] sm:$0xf]
  %v188 = vld [vmem:[%s1 + $0x2b4] sm:$0xf]
  %v189 = vld [vmem:[%s1 + $0x2b8] sm:$0xf]
  %v190 = vld [vmem:[%s1 + $0x2bc] sm:$0xf]
  %v191 = vld [vmem:[%s1 + $0x2c0] sm:$0xf]
  %v192 = vld [vmem:[%s1 + $0x2c4] sm:$0xf]
  %v193 = vld [vmem:[%s1 + $0x2c8] sm:$0xf]
  %v194 = vld [vmem:[%s1 + $0x2cc] sm:$0xf]
  %v195 = vld [vmem:[%s1 + $0x2d0] sm:$0xf]
  %v196 = vld [vmem:[%s1 + $0x2d4] sm:$0xf]
  %v197 = vld [vmem:[%s1 + $0x2d8] sm:$0xf]
  %v198 = vld [vmem:[%s1 + $0x2dc] sm:$0xf]
  %v199 = vld [vmem:[%s1 + $0x2e0] sm:$0xf]
  %v200 = vld [vmem:[%s1 + $0x2e4] sm:$0xf]
  %v201 = vld [vmem:[%s1 + $0x2e8] sm:$0xf]
  %v202 = vld [vmem:[%s1 + $0x2ec] sm:$0xf]
  %v203 = vld [vmem:[%s1 + $0x2f0] sm:$0xf]
  %v204 = vld [vmem:[%s1 + $0x2f4] sm:$0xf]
  %v205 = vld [vmem:[%s1 + $0x2f8] sm:$0xf]
  %v206 = vld [vmem:[%s1 + $0x2fc] sm:$0xf]
  %v207 = vld [vmem:[%s1 + $0x300] sm:$0xf]
  %v208 = vld [vmem:[%s1 + $0x304] sm:$0xf]
  %v209 = vld [vmem:[%s1 + $0x308] sm:$0xf]
  %v210 = vld [vmem:[%s1 + $0x30c] sm:$0xf]
  %v211 = vld [vmem:[%s1 + $0x310] sm:$0xf]
  %v212 = vld [vmem:[%s1 + $0x314] sm:$0xf]
  %v213 = vld [vmem:[%s1 + $0x318] sm:$0xf]
  %v214 = vld [vmem:[%s1 + $0x31c] sm:$0xf]
  %v215 = vld [vmem:[%s1 + $0x320] sm:$0xf]
  %v216 = vld [vmem:[%s1 + $0x324] sm:$0xf]
  %v217 = vld [vmem:[%s1 + $0x328] sm:$0xf]
  %v218 = vld [vmem:[%s1 + $0x32c] sm:$0xf]
  %v219 = vld [vmem:[%s1 + $0x330] sm:$0xf]
  %v220 = vld [vmem:[%s1 + $0x334] sm:$0xf]
  %v221 = vld [vmem:[%s1 + $0x338] sm:$0xf]
  %v222 = vld [vmem:[%s1 + $0x33c] sm:$0xf]
  %v223 = vld [vmem:[%s1 + $0x340] sm:$0xf]
  %v224 = vld [vmem:[%s1 + $0x344] sm:$0xf]
  %v225 = vld [vmem:[%s1 + $0x348] sm:$0xf]
  %v226 = vld [vmem:[%s1 + $0x34c] sm:$0xf]
  %v227 = vld [vmem:[%s1 + $0x350] sm:$0xf]
  %v228 = vld [vmem:[%s1 + $0x354] sm:$0xf]
  %v229 = vld [vmem:[%s1 + $0x358] sm:$0xf]
  %v230 = vld [vmem:[%s1 + $0x35c] sm:$0xf]
  %v231 = vld [vmem:[%s1 + $0x360] sm:$0xf]
  %v232 = vld [vmem:[%s1 + $0x364] sm:$0xf]
  %v233 = vld [vmem:[%s1 + $0x368] sm:$0xf]
  %v234 = vld [vmem:[%s1 + $0x36c] sm:$0xf]
  %v235 = vld [vmem:[%s1 + $0x370] sm:$0xf]
  %v236 = vld [vmem:[%s1 + $0x374] sm:$0xf]
  %v237 = vld [vmem:[%s1 + $0x378] sm:$0xf]
  %v238 = vld [vmem:[%s1 + $0x37c] sm:$0xf]
  %v239 = vld [vmem:[%s1 + $0x380] sm:$0xf]
  %v240 = vld [vmem:[%s1 + $0x384] sm:$0xf]
  %v241 = vld [vmem:[%s1 + $0x388] sm:$0xf]
  %v242 = vld [vmem:[%s1 + $0x38c] sm:$0xf]
  %v243 = vld [vmem:[%s1 + $0x390] sm:$0xf]
  %v244 = vld [vmem:[%s1 + $0x394] sm:$0xf]
  %v245 = vld [vmem:[%s1 + $0x398] sm:$0xf]
  %v246 = vld [vmem:[%s1 + $0x39c] sm:$0xf]
  %v247 = vld [vmem:[%s1 + $0x3a0] sm:$0xf]
  %v248 = vld [vmem:[%s1 + $0x3a4] sm:$0xf]
  %v249 = vld [vmem:[%s1 + $0x3a8] sm:$0xf]
  %v250 = vld [vmem:[%s1 + $0x3ac] sm:$0xf]
  %v251 = vld [vmem:[%s1 + $0x3b0] sm:$0xf]
  %v252 = vld [vmem:[%s1 + $0x3b4] sm:$0xf]
  %v253 = vld [vmem:[%s1 + $0x3b8] sm:$0xf]
  %v254 = vld [vmem:[%s1 + $0x3bc] sm:$0xf]
  %v255 = vld [vmem:[%s1 + $0x3c0] sm:$0xf]
  %v256 = vld [vmem:[%s1 + $0x3c4] sm:$0xf]
  %v257 = vld [vmem:[%s1 + $0x3c8] sm:$0xf]
  %v258 = vld [vmem:[%s1 + $0x3cc] sm:$0xf]
  %v259 = vld [vmem:[%s1 + $0x3d0] sm:$0xf]
  %v260 = vld [vmem:[%s1 + $0x3d4] sm:$0xf]
  %v261 = vld [vmem:[%s1 + $0x3d8] sm:$0xf]
  %v262 = vld [vmem:[%s1 + $0x3dc] sm:$0xf]
  %v263 = vld [vmem:[%s1 + $0x3e0] sm:$0xf]
  %v264 = vld [vmem:[%s1 + $0x3e4] sm:$0xf]
  %v265 = vld [vmem:[%s1 + $0x3e8] sm:$0xf]
  %v266 = vld [vmem:[%s1 + $0x3ec] sm:$0xf]
  %v267 = vld [vmem:[%s1 + $0x3f0] sm:$0xf]
  %v268 = vld [vmem:[%s1 + $0x3f4] sm:$0xf]
  %v269 = vld [vmem:[%s1 + $0x3f8] sm:$0xf]
  %v270 = vld [vmem:[%s1 + $0x3fc] sm:$0xf]
  %v271 = vld [vmem:[%s1 + $0x400] sm:$0xf]
  %v272 = vld [vmem:[%s1 + $0x404] sm:$0xf]
  %v273 = vld [vmem:[%s1 + $0x408] sm:$0xf]
  %v274 = vld [vmem:[%s1 + $0x40c] sm:$0xf]
  %v275 = vld [vmem:[%s1 + $0x410] sm:$0xf]
  %v276 = vld [vmem:[%s1 + $0x414] sm:$0xf]
  %v277 = vld [vmem:[%s1 + $0x418] sm:$0xf]
  %v278 = vld [vmem:[%s1 + $0x41c] sm:$0xf]
  %v279 = vld [vmem:[%s1 + $0x420] sm:$0xf]
  %v280 = vld [vmem:[%s1 + $0x424] sm:$0xf]
  %v281 = vld [vmem:[%s1 + $0x428] sm:$0xf]
  %v282 = vld [vmem:[%s1 + $0x42c] sm:$0xf]
  %v283 = vld [vmem:[%s1 + $0x430] sm:$0xf]
  %v284 = vld [vmem:[%s1 + $0x434] sm:$0xf]
  %v285 = vld [vmem:[%s1 + $0x438] sm:$0xf]
  %v286 = vld [vmem:[%s1 + $0x43c] sm:$0xf]
  %v287 = vld [vmem:[%s1 + $0x440] sm:$0xf]
  %v288 = vld [vmem:[%s1 + $0x444] sm:$0xf]
  %v289 = vld [vmem:[%s1 + $0x448] sm:$0xf]
  %v290 = vld [vmem:[%s1 + $0x44c] sm:$0xf]
  %v291 = vld [vmem:[%s1 + $0x450] sm:$0xf]
  %v292 = vld [vmem:[%s1 + $0x454] sm:$0xf]
  %v293 = vld [vmem:[%s1 + $0x458] sm:$0xf]
  %v294 = vld [vmem:[%s1 + $0x45c] sm:$0xf]
  %v295 = vld [vmem:[%s1 + $0x460] sm:$0xf]
  %v296 = vld [vmem:[%s1 + $0x464] sm:$0xf]
  %v297 = vld [vmem:[%s1 + $0x468] sm:$0xf]
  %v298 = vld [vmem:[%s1 + $0x46c] sm:$0xf]
  %v299 = vld [vmem:[%s1 + $0x470] sm:$0xf]
  %v300 = vld [vmem:[%s1 + $0x474] sm:$0xf]
  %v301 = vld [vmem:[%s1 + $0x478] sm:$0xf]
  %v302 = vld [vmem:[%s1 + $0x47c] sm:$0xf]
  %v303 = vld [vmem:[%s1 + $0x480] sm:$0xf]
  %v304 = vld [vmem:[%s1 + $0x484] sm:$0xf]
  %v305 = vld [vmem:[%s1 + $0x488] sm:$0xf]
  %v306 = vld [vmem:[%s1 + $0x48c] sm:$0xf]
  %v307 = vld [vmem:[%s1 + $0x490] sm:$0xf]
  %v308 = vld [vmem:[%s1 + $0x494] sm:$0xf]
  %v309 = vld [vmem:[%s1 + $0x498] sm:$0xf]
  %v310 = vld [vmem:[%s1 + $0x49c] sm:$0xf]
  %v311 = vld [vmem:[%s1 + $0x4a0] sm:$0xf]
  %v312 = vld [vmem:[%s1 + $0x4a4] sm:$0xf]
  %v313 = vld [vmem:[%s1 + $0x4a8] sm:$0xf]
  %v314 = vld [vmem:[%s1 + $0x4ac] sm:$0xf]
  %v315 = vld [vmem:[%s1 + $0x4b0] sm:$0xf]
  %v316 = vld [vmem:[%s1 + $0x4b4] sm:$0xf]
  %v317 = vld [vmem:[%s1 + $0x4b8] sm:$0xf]
  %v318 = vld [vmem:[%s1 + $0x4bc] sm:$0xf]
  %v319 = vld [vmem:[%s1 + $0x4c0] sm:$0xf]
  %v320 = vld [vmem:[%s1 + $0x4c4] sm:$0xf]
  %v321 = vld [vmem:[%s1 + $0x4c8] sm:$0xf]
  %v322 = vld [vmem:[%s1 + $0x4cc] sm:$0xf]
  %v323 = vld [vmem:[%s1 + $0x4d0] sm:$0xf]
  %v324 = vld [vmem:[%s1 + $0x4d4] sm:$0xf]
  %v325 = vld [vmem:[%s1 + $0x4d8] sm:$0xf]
  %v326 = vld [vmem:[%s1 + $0x4dc] sm:$0xf]
  %v327 = vld [vmem:[%s1 + $0x4e0] sm:$0xf]
  %v328 = vld [vmem:[%s1 + $0x4e4] sm:$0xf]
  %v329 = vld [vmem:[%s1 + $0x4e8] sm:$0xf]
  %v330 = vld [vmem:[%s1 + $0x4ec] sm:$0xf]
  %v331 = vld [vmem:[%s1 + $0x4f0] sm:$0xf]
  %v332 = vld [vmem:[%s1 + $0x4f4] sm:$0xf]
  %v333 = vld [vmem:[%s1 + $0x4f8] sm:$0xf]
  %v334 = vld [vmem:[%s1 + $0x4fc] sm:$0xf]
  %v335 = vld [vmem:[%s1 + $0x500] sm:$0xf]
  %v336 = vld [vmem:[%s1 + $0x504] sm:$0xf]
  %v337 = vld [vmem:[%s1 + $0x508] sm:$0xf]
  %v338 = vld [vmem:[%s1 + $0x50c] sm:$0xf]
  %v339 = vld [vmem:[%s1 + $0x510] sm:$0xf]
  %v340 = vld [vmem:[%s1 + $0x514] sm:$0xf]
  %v341 = vld [vmem:[%s1 + $0x518] sm:$0xf]
  %v342 = vld [vmem:[%s1 + $0x51c] sm:$0xf]
  %v343 = vld [vmem:[%s1 + $0x520] sm:$0xf]
  %v344 = vld [vmem:[%s1 + $0x524] sm:$0xf]
  %v345 = vld [vmem:[%s1 + $0x528] sm:$0xf]
  %v346 = vld [vmem:[%s1 + $0x52c] sm:$0xf]
  %v347 = vld [vmem:[%s1 + $0x530] sm:$0xf]
  %v348 = vld [vmem:[%s1 + $0x534] sm:$0xf]
  %v349 = vld [vmem:[%s1 + $0x538] sm:$0xf]
  %v350 = vld [vmem:[%s1 + $0x53c] sm:$0xf]
  %v351 = vld [vmem:[%s1 + $0x540] sm:$0xf]
  %v352 = vld [vmem:[%s1 + $0x544] sm:$0xf]
  %v353 = vld [vmem:[%s1 + $0x548] sm:$0xf]
  %v354 = vld [vmem:[%s1 + $0x54c] sm:$0xf]
  %v355 = vld [vmem:[%s1 + $0x550] sm:$0xf]
  %v356 = vld [vmem:[%s1 + $0x554] sm:$0xf]
  %v357 = vld [vmem:[%s1 + $0x558] sm:$0xf]
  %v358 = vld [vmem:[%s1 + $0x55c] sm:$0xf]
  %v359 = vld [vmem:[%s1 + $0x560] sm:$0xf]
  %v360 = vld [vmem:[%s1 + $0x564] sm:$0xf]
  %v361 = vld [vmem:[%s1 + $0x568] sm:$0xf]
  %v362 = vld [vmem:[%s1 + $0x56c] sm:$0xf]
  %v363 = vld [vmem:[%s1 + $0x570] sm:$0xf]
  %v364 = vld [vmem:[%s1 + $0x574] sm:$0xf]
  %v365 = vld [vmem:[%s1 + $0x578] sm:$0xf]
  %v366 = vld [vmem:[%s1 + $0x57c] sm:$0xf]
  %v367 = vld [vmem:[%s1 + $0x580] sm:$0xf]
  %v368 = vld [vmem:[%s1 + $0x584] sm:$0xf]
  %v369 = vld [vmem:[%s1 + $0x588] sm:$0xf]
  %v370 = vld [vmem:[%s1 + $0x58c] sm:$0xf]
  %v371 = vld [vmem:[%s1 + $0x590] sm:$0xf]
  %v372 = vld [vmem:[%s1 + $0x594] sm:$0xf]
  %v373 = vld [vmem:[%s1 + $0x598] sm:$0xf]
  %v374 = vld [vmem:[%s1 + $0x59c] sm:$0xf]
  %v375 = vld [vmem:[%s1 + $0x5a0] sm:$0xf]
  %v376 = vld [vmem:[%s1 + $0x5a4] sm:$0xf]
  %v377 = vld [vmem:[%s1 + $0x5a8] sm:$0xf]
  %v378 = vld [vmem:[%s1 + $0x5ac] sm:$0xf]
  %v379 = vld [vmem:[%s1 + $0x5b0] sm:$0xf]
  %v380 = vld [vmem:[%s1 + $0x5b4] sm:$0xf]
  %v381 = vld [vmem:[%s1 + $0x5b8] sm:$0xf]
  %v382 = vld [vmem:[%s1 + $0x5bc] sm:$0xf]
  %v383 = vld [vmem:[%s1 + $0x5c0] sm:$0xf]
  %v384 = vld [vmem:[%s1 + $0x5c4] sm:$0xf]
  %v385 = vld [vmem:[%s1 + $0x5c8] sm:$0xf]
  %v386 = vld [vmem:[%s1 + $0x5cc] sm:$0xf]
  %v387 = vld [vmem:[%s1 + $0x5d0] sm:$0xf]
  %v388 = vld [vmem:[%s1 + $0x5d4] sm:$0xf]
  %v389 = vld [vmem:[%s1 + $0x5d8] sm:$0xf]
  %v390 = vld [vmem:[%s1 + $0x5dc] sm:$0xf]
  %v391 = vld [vmem:[%s1 + $0x5e0] sm:$0xf]
  %v392 = vld [vmem:[%s1 + $0x5e4] sm:$0xf]
  %v393 = vld [vmem:[%s1 + $0x5e8] sm:$0xf]
  %v394 = vld [vmem:[%s1 + $0x5ec] sm:$0xf]
  %v395 = vld [vmem:[%s1 + $0x5f0] sm:$0xf]
  %v396 = vld [vmem:[%s1 + $0x5f4] sm:$0xf]
  %v397 = vld [vmem:[%s1 + $0x5f8] sm:$0xf]
  %v398 = vld [vmem:[%s1 + $0x5fc] sm:$0xf]
  %v399 = vld [vmem:[%s1 + $0x600] sm:$0xf]
  %v400 = vld [vmem:[%s1 + $0x604] sm:$0xf]
  %v401 = vld [vmem:[%s1 + $0x608] sm:$0xf]
  %v402 = vld [vmem:[%s1 + $0x60c] sm:$0xf]
  %v403 = vld [vmem:[%s1 + $0x610] sm:$0xf]
  %v404 = vld [vmem:[%s1 + $0x614] sm:$0xf]
  %v405 = vld [vmem:[%s1 + $0x618] sm:$0xf]
  %v406 = vld [vmem:[%s1 + $0x61c] sm:$0xf]
  %v407 = vld [vmem:[%s1 + $0x620] sm:$0xf]
  %v408 = vld [vmem:[%s1 + $0x624] sm:$0xf]
  %v409 = vld [vmem:[%s1 + $0x628] sm:$0xf]
  %v410 = vld [vmem:[%s1 + $0x62c] sm:$0xf]
  %v411 = vld [vmem:[%s1 + $0x630] sm:$0xf]
  %v412 = vld [vmem:[%s1 + $0x634] sm:$0xf]
  %v413 = vld [vmem:[%s1 + $0x638] sm:$0xf]
  %v414 = vld [vmem:[%s1 + $0x63c] sm:$0xf]
  %v415 = vld [vmem:[%s0] sm:$0xff]
  %v416 = vld [vmem:[%s0 + $0x8] sm:$0xff]
  %v417 = vld [vmem:[%s0 + $0x10] sm:$0xff]
  %v418 = vld [vmem:[%s0 + $0x18] sm:$0xff]
  %v419 = vld [vmem:[%s0 + $0x20] sm:$0xff]
  %v420 = vld [vmem:[%s0 + $0x28] sm:$0xff]
  %v421 = vld [vmem:[%s0 + $0x30] sm:$0xff]
  %v422 = vld [vmem:[%s0 + $0x38] sm:$0xff]
  %v423 = vld [vmem:[%s0 + $0x40] sm:$0xff]
  %v424 = vld [vmem:[%s0 + $0x48] sm:$0xff]
  %v425 = vld [vmem:[%s0 + $0x50] sm:$0xff]
  %v426 = vld [vmem:[%s0 + $0x58] sm:$0xff]
  %v427 = vld [vmem:[%s0 + $0x60] sm:$0xf]
  %v428 = vld [vmem:[%s0 + $0x64] sm:$0xff]
  %v429 = vld [vmem:[%s0 + $0x6c] sm:$0xff]
  %v430 = vld [vmem:[%s0 + $0x74] sm:$0xff]
  %v431 = vld [vmem:[%s0 + $0x7c] sm:$0xff]
  %v432 = vld [vmem:[%s0 + $0x84] sm:$0xff]
  %v433 = vld [vmem:[%s0 + $0x8c] sm:$0xff]
  %v434 = vld [vmem:[%s0 + $0x94] sm:$0xff]
  %v435 = vld [vmem:[%s0 + $0x9c] sm:$0xff]
  %v436 = vld [vmem:[%s0 + $0xa4] sm:$0xff]
  %v437 = vld [vmem:[%s0 + $0xac] sm:$0xff]
  %v438 = vld [vmem:[%s0 + $0xb4] sm:$0xff]
  %v439 = vld [vmem:[%s0 + $0xbc] sm:$0xff]
  %v440 = vld [vmem:[%s0 + $0xc4] sm:$0xf]
  %v441 = vld [vmem:[%s0 + $0xc8] sm:$0xff]
  %v442 = vld [vmem:[%s0 + $0xd0] sm:$0xff]
  %v443 = vld [vmem:[%s0 + $0xd8] sm:$0xff]
  %v444 = vld [vmem:[%s0 + $0xe0] sm:$0xff]
  %v445 = vld [vmem:[%s0 + $0xe8] sm:$0xff]
  %v446 = vld [vmem:[%s0 + $0xf0] sm:$0xff]
  %v447 = vld [vmem:[%s0 + $0xf8] sm:$0xff]
  %v448 = vld [vmem:[%s0 + $0x100] sm:$0xff]
  %v449 = vld [vmem:[%s0 + $0x108] sm:$0xff]
  %v450 = vld [vmem:[%s0 + $0x110] sm:$0xff]
  %v451 = vld [vmem:[%s0 + $0x118] sm:$0xff]
  %v452 = vld [vmem:[%s0 + $0x120] sm:$0xff]
  %v453 = vld [vmem:[%s0 + $0x128] sm:$0xf]
  %v454 = vld [vmem:[%s0 + $0x12c] sm:$0xff]
  %v455 = vld [vmem:[%s0 + $0x134] sm:$0xff]
  %v456 = vld [vmem:[%s0 + $0x13c] sm:$0xff]
  %v457 = vld [vmem:[%s0 + $0x144] sm:$0xff]
  %v458 = vld [vmem:[%s0 + $0x14c] sm:$0xff]
  %v459 = vld [vmem:[%s0 + $0x154] sm:$0xff]
  %v460 = vld [vmem:[%s0 + $0x15c] sm:$0xff]
  %v461 = vld [vmem:[%s0 + $0x164] sm:$0xff]
  %v462 = vld [vmem:[%s0 + $0x16c] sm:$0xff]
  %v463 = vld [vmem:[%s0 + $0x174] sm:$0xff]
  %v464 = vld [vmem:[%s0 + $0x17c] sm:$0xff]
  %v465 = vld [vmem:[%s0 + $0x184] sm:$0xff]
  %v466 = vld [vmem:[%s0 + $0x18c] sm:$0xf]
  %v519 = vunpack.c.l.b16 %v415
  %v520 = vunpack.c.h.b16 %v415
  %v521 = vunpack.c.l.b16 %v416
  %v522 = vunpack.c.h.b16 %v416
  %v523 = vunpack.c.l.b16 %v417
  %v524 = vunpack.c.h.b16 %v417
  %v525 = vunpack.c.l.b16 %v418
  %v526 = vunpack.c.h.b16 %v418
  %v527 = vunpack.c.l.b16 %v419
  %v528 = vunpack.c.h.b16 %v419
  %v529 = vunpack.c.l.b16 %v420
  %v530 = vunpack.c.h.b16 %v420
  %v531 = vunpack.c.l.b16 %v421
  %v532 = vunpack.c.h.b16 %v421
  %v533 = vunpack.c.l.b16 %v422
  %v534 = vunpack.c.h.b16 %v422
  %v535 = vunpack.c.l.b16 %v423
  %v536 = vunpack.c.h.b16 %v423
  %v537 = vunpack.c.l.b16 %v424
  %v538 = vunpack.c.h.b16 %v424
  %v539 = vunpack.c.l.b16 %v425
  %v540 = vunpack.c.h.b16 %v425
  %v541 = vunpack.c.l.b16 %v426
  %v542 = vunpack.c.h.b16 %v426
  %v543 = vunpack.c.l.b16 %v427
  %v544 = vunpack.c.l.b16 %v428
  %v545 = vunpack.c.h.b16 %v428
  %v546 = vunpack.c.l.b16 %v429
  %v547 = vunpack.c.h.b16 %v429
  %v548 = vunpack.c.l.b16 %v430
  %v549 = vunpack.c.h.b16 %v430
  %v550 = vunpack.c.l.b16 %v431
  %v551 = vunpack.c.h.b16 %v431
  %v552 = vunpack.c.l.b16 %v432
  %v553 = vunpack.c.h.b16 %v432
  %v554 = vunpack.c.l.b16 %v433
  %v555 = vunpack.c.h.b16 %v433
  %v556 = vunpack.c.l.b16 %v434
  %v557 = vunpack.c.h.b16 %v434
  %v558 = vunpack.c.l.b16 %v435
  %v559 = vunpack.c.h.b16 %v435
  %v560 = vunpack.c.l.b16 %v436
  %v561 = vunpack.c.h.b16 %v436
  %v562 = vunpack.c.l.b16 %v437
  %v563 = vunpack.c.h.b16 %v437
  %v564 = vunpack.c.l.b16 %v438
  %v565 = vunpack.c.h.b16 %v438
  %v566 = vunpack.c.l.b16 %v439
  %v567 = vunpack.c.h.b16 %v439
  %v568 = vunpack.c.l.b16 %v440
  %v569 = vunpack.c.l.b16 %v441
  %v570 = vunpack.c.h.b16 %v441
  %v571 = vunpack.c.l.b16 %v442
  %v572 = vunpack.c.h.b16 %v442
  %v573 = vunpack.c.l.b16 %v443
  %v574 = vunpack.c.h.b16 %v443
  %v575 = vunpack.c.l.b16 %v444
  %v576 = vunpack.c.h.b16 %v444
  %v577 = vunpack.c.l.b16 %v445
  %v578 = vunpack.c.h.b16 %v445
  %v579 = vunpack.c.l.b16 %v446
  %v580 = vunpack.c.h.b16 %v446
  %v581 = vunpack.c.l.b16 %v447
  %v582 = vunpack.c.h.b16 %v447
  %v583 = vunpack.c.l.b16 %v448
  %v584 = vunpack.c.h.b16 %v448
  %v585 = vunpack.c.l.b16 %v449
  %v586 = vunpack.c.h.b16 %v449
  %v587 = vunpack.c.l.b16 %v450
  %v588 = vunpack.c.h.b16 %v450
  %v589 = vunpack.c.l.b16 %v451
  %v590 = vunpack.c.h.b16 %v451
  %v591 = vunpack.c.l.b16 %v452
  %v592 = vunpack.c.h.b16 %v452
  %v593 = vunpack.c.l.b16 %v453
  %v594 = vunpack.c.l.b16 %v454
  %v595 = vunpack.c.h.b16 %v454
  %v596 = vunpack.c.l.b16 %v455
  %v597 = vunpack.c.h.b16 %v455
  %v598 = vunpack.c.l.b16 %v456
  %v599 = vunpack.c.h.b16 %v456
  %v600 = vunpack.c.l.b16 %v457
  %v601 = vunpack.c.h.b16 %v457
  %v602 = vunpack.c.l.b16 %v458
  %v603 = vunpack.c.h.b16 %v458
  %v604 = vunpack.c.l.b16 %v459
  %v605 = vunpack.c.h.b16 %v459
  %v606 = vunpack.c.l.b16 %v460
  %v607 = vunpack.c.h.b16 %v460
  %v608 = vunpack.c.l.b16 %v461
  %v609 = vunpack.c.h.b16 %v461
  %v610 = vunpack.c.l.b16 %v462
  %v611 = vunpack.c.h.b16 %v462
  %v612 = vunpack.c.l.b16 %v463
  %v613 = vunpack.c.h.b16 %v463
  %v614 = vunpack.c.l.b16 %v464
  %v615 = vunpack.c.h.b16 %v464
  %v616 = vunpack.c.l.b16 %v465
  %v617 = vunpack.c.h.b16 %v465
  %v618 = vunpack.c.l.b16 %v466
  %v619 = vpack.c.b16 %v544, %v519
  %v620 = vpack.c.b16 %v545, %v520
  %v621 = vpack.c.b16 %v546, %v521
  %v622 = vpack.c.b16 %v547, %v522
  %v623 = vpack.c.b16 %v548, %v523
  %v624 = vpack.c.b16 %v549, %v524
  %v625 = vpack.c.b16 %v550, %v525
  %v626 = vpack.c.b16 %v551, %v526
  %v627 = vpack.c.b16 %v552, %v527
  %v628 = vpack.c.b16 %v553, %v528
  %v629 = vpack.c.b16 %v554, %v529
  %v630 = vpack.c.b16 %v555, %v530
  %v631 = vpack.c.b16 %v556, %v531
  %v632 = vpack.c.b16 %v557, %v532
  %v633 = vpack.c.b16 %v558, %v533
  %v634 = vpack.c.b16 %v559, %v534
  %v635 = vpack.c.b16 %v560, %v535
  %v636 = vpack.c.b16 %v561, %v536
  %v637 = vpack.c.b16 %v562, %v537
  %v638 = vpack.c.b16 %v563, %v538
  %v639 = vpack.c.b16 %v564, %v539
  %v640 = vpack.c.b16 %v565, %v540
  %v641 = vpack.c.b16 %v566, %v541
  %v642 = vpack.c.b16 %v567, %v542
  %v643 = vpack.c.b16 %v568, %v543
  %v644 = vpack.c.b16 %v594, %v569
  %v645 = vpack.c.b16 %v595, %v570
  %v646 = vpack.c.b16 %v596, %v571
  %v647 = vpack.c.b16 %v597, %v572
  %v648 = vpack.c.b16 %v598, %v573
  %v649 = vpack.c.b16 %v599, %v574
  %v650 = vpack.c.b16 %v600, %v575
  %v651 = vpack.c.b16 %v601, %v576
  %v652 = vpack.c.b16 %v602, %v577
  %v653 = vpack.c.b16 %v603, %v578
  %v654 = vpack.c.b16 %v604, %v579
  %v655 = vpack.c.b16 %v605, %v580
  %v656 = vpack.c.b16 %v606, %v581
  %v657 = vpack.c.b16 %v607, %v582
  %v658 = vpack.c.b16 %v608, %v583
  %v659 = vpack.c.b16 %v609, %v584
  %v660 = vpack.c.b16 %v610, %v585
  %v661 = vpack.c.b16 %v611, %v586
  %v662 = vpack.c.b16 %v612, %v587
  %v663 = vpack.c.b16 %v613, %v588
  %v664 = vpack.c.b16 %v614, %v589
  %v665 = vpack.c.b16 %v615, %v590
  %v666 = vpack.c.b16 %v616, %v591
  %v667 = vpack.c.b16 %v617, %v592
  %v668 = vpack.c.b16 %v618, %v593
  %v1119 = vunpack.c.l.b16 %v15
  %v1120 = vunpack.c.l.b16 %v16
  %v1121 = vunpack.c.l.b16 %v17
  %v1122 = vunpack.c.l.b16 %v18
  %v1123 = vunpack.c.l.b16 %v19
  %v1124 = vunpack.c.l.b16 %v20
  %v1125 = vunpack.c.l.b16 %v21
  %v1126 = vunpack.c.l.b16 %v22
  %v1127 = vunpack.c.l.b16 %v23
  %v1128 = vunpack.c.l.b16 %v24
  %v1129 = vunpack.c.l.b16 %v25
  %v1130 = vunpack.c.l.b16 %v26
  %v1131 = vunpack.c.l.b16 %v27
  %v1132 = vunpack.c.l.b16 %v28
  %v1133 = vunpack.c.l.b16 %v29
  %v1134 = vunpack.c.l.b16 %v30
  %v1135 = vunpack.c.l.b16 %v31
  %v1136 = vunpack.c.l.b16 %v32
  %v1137 = vunpack.c.l.b16 %v33
  %v1138 = vunpack.c.l.b16 %v34
  %v1139 = vunpack.c.l.b16 %v35
  %v1140 = vunpack.c.l.b16 %v36
  %v1141 = vunpack.c.l.b16 %v37
  %v1142 = vunpack.c.l.b16 %v38
  %v1143 = vunpack.c.l.b16 %v39
  %v1144 = vunpack.c.l.b16 %v40
  %v1145 = vunpack.c.l.b16 %v41
  %v1146 = vunpack.c.l.b16 %v42
  %v1147 = vunpack.c.l.b16 %v43
  %v1148 = vunpack.c.l.b16 %v44
  %v1149 = vunpack.c.l.b16 %v45
  %v1150 = vunpack.c.l.b16 %v46
  %v1151 = vunpack.c.l.b16 %v47
  %v1152 = vunpack.c.l.b16 %v48
  %v1153 = vunpack.c.l.b16 %v49
  %v1154 = vunpack.c.l.b16 %v50
  %v1155 = vunpack.c.l.b16 %v51
  %v1156 = vunpack.c.l.b16 %v52
  %v1157 = vunpack.c.l.b16 %v53
  %v1158 = vunpack.c.l.b16 %v54
  %v1159 = vunpack.c.l.b16 %v55
  %v1160 = vunpack.c.l.b16 %v56
  %v1161 = vunpack.c.l.b16 %v57
  %v1162 = vunpack.c.l.b16 %v58
  %v1163 = vunpack.c.l.b16 %v59
  %v1164 = vunpack.c.l.b16 %v60
  %v1165 = vunpack.c.l.b16 %v61
  %v1166 = vunpack.c.l.b16 %v62
  %v1167 = vunpack.c.l.b16 %v63
  %v1168 = vunpack.c.l.b16 %v64
  %v1169 = vunpack.c.l.b16 %v65
  %v1170 = vunpack.c.l.b16 %v66
  %v1171 = vunpack.c.l.b16 %v67
  %v1172 = vunpack.c.l.b16 %v68
  %v1173 = vunpack.c.l.b16 %v69
  %v1174 = vunpack.c.l.b16 %v70
  %v1175 = vunpack.c.l.b16 %v71
  %v1176 = vunpack.c.l.b16 %v72
  %v1177 = vunpack.c.l.b16 %v73
  %v1178 = vunpack.c.l.b16 %v74
  %v1179 = vunpack.c.l.b16 %v75
  %v1180 = vunpack.c.l.b16 %v76
  %v1181 = vunpack.c.l.b16 %v77
  %v1182 = vunpack.c.l.b16 %v78
  %v1183 = vunpack.c.l.b16 %v79
  %v1184 = vunpack.c.l.b16 %v80
  %v1185 = vunpack.c.l.b16 %v81
  %v1186 = vunpack.c.l.b16 %v82
  %v1187 = vunpack.c.l.b16 %v83
  %v1188 = vunpack.c.l.b16 %v84
  %v1189 = vunpack.c.l.b16 %v85
  %v1190 = vunpack.c.l.b16 %v86
  %v1191 = vunpack.c.l.b16 %v87
  %v1192 = vunpack.c.l.b16 %v88
  %v1193 = vunpack.c.l.b16 %v89
  %v1194 = vunpack.c.l.b16 %v90
  %v1195 = vunpack.c.l.b16 %v91
  %v1196 = vunpack.c.l.b16 %v92
  %v1197 = vunpack.c.l.b16 %v93
  %v1198 = vunpack.c.l.b16 %v94
  %v1199 = vunpack.c.l.b16 %v95
  %v1200 = vunpack.c.l.b16 %v96
  %v1201 = vunpack.c.l.b16 %v97
  %v1202 = vunpack.c.l.b16 %v98
  %v1203 = vunpack.c.l.b16 %v99
  %v1204 = vunpack.c.l.b16 %v100
  %v1205 = vunpack.c.l.b16 %v101
  %v1206 = vunpack.c.l.b16 %v102
  %v1207 = vunpack.c.l.b16 %v103
  %v1208 = vunpack.c.l.b16 %v104
  %v1209 = vunpack.c.l.b16 %v105
  %v1210 = vunpack.c.l.b16 %v106
  %v1211 = vunpack.c.l.b16 %v107
  %v1212 = vunpack.c.l.b16 %v108
  %v1213 = vunpack.c.l.b16 %v109
  %v1214 = vunpack.c.l.b16 %v110
  %v1215 = vunpack.c.l.b16 %v111
  %v1216 = vunpack.c.l.b16 %v112
  %v1217 = vunpack.c.l.b16 %v113
  %v1218 = vunpack.c.l.b16 %v114
  %v1219 = vunpack.c.l.b16 %v115
  %v1220 = vunpack.c.l.b16 %v116
  %v1221 = vunpack.c.l.b16 %v117
  %v1222 = vunpack.c.l.b16 %v118
  %v1223 = vunpack.c.l.b16 %v119
  %v1224 = vunpack.c.l.b16 %v120
  %v1225 = vunpack.c.l.b16 %v121
  %v1226 = vunpack.c.l.b16 %v122
  %v1227 = vunpack.c.l.b16 %v123
  %v1228 = vunpack.c.l.b16 %v124
  %v1229 = vunpack.c.l.b16 %v125
  %v1230 = vunpack.c.l.b16 %v126
  %v1231 = vunpack.c.l.b16 %v127
  %v1232 = vunpack.c.l.b16 %v128
  %v1233 = vunpack.c.l.b16 %v129
  %v1234 = vunpack.c.l.b16 %v130
  %v1235 = vunpack.c.l.b16 %v131
  %v1236 = vunpack.c.l.b16 %v132
  %v1237 = vunpack.c.l.b16 %v133
  %v1238 = vunpack.c.l.b16 %v134
  %v1239 = vunpack.c.l.b16 %v135
  %v1240 = vunpack.c.l.b16 %v136
  %v1241 = vunpack.c.l.b16 %v137
  %v1242 = vunpack.c.l.b16 %v138
  %v1243 = vunpack.c.l.b16 %v139
  %v1244 = vunpack.c.l.b16 %v140
  %v1245 = vunpack.c.l.b16 %v141
  %v1246 = vunpack.c.l.b16 %v142
  %v1247 = vunpack.c.l.b16 %v143
  %v1248 = vunpack.c.l.b16 %v144
  %v1249 = vunpack.c.l.b16 %v145
  %v1250 = vunpack.c.l.b16 %v146
  %v1251 = vunpack.c.l.b16 %v147
  %v1252 = vunpack.c.l.b16 %v148
  %v1253 = vunpack.c.l.b16 %v149
  %v1254 = vunpack.c.l.b16 %v150
  %v1255 = vunpack.c.l.b16 %v151
  %v1256 = vunpack.c.l.b16 %v152
  %v1257 = vunpack.c.l.b16 %v153
  %v1258 = vunpack.c.l.b16 %v154
  %v1259 = vunpack.c.l.b16 %v155
  %v1260 = vunpack.c.l.b16 %v156
  %v1261 = vunpack.c.l.b16 %v157
  %v1262 = vunpack.c.l.b16 %v158
  %v1263 = vunpack.c.l.b16 %v159
  %v1264 = vunpack.c.l.b16 %v160
  %v1265 = vunpack.c.l.b16 %v161
  %v1266 = vunpack.c.l.b16 %v162
  %v1267 = vunpack.c.l.b16 %v163
  %v1268 = vunpack.c.l.b16 %v164
  %v1269 = vunpack.c.l.b16 %v165
  %v1270 = vunpack.c.l.b16 %v166
  %v1271 = vunpack.c.l.b16 %v167
  %v1272 = vunpack.c.l.b16 %v168
  %v1273 = vunpack.c.l.b16 %v169
  %v1274 = vunpack.c.l.b16 %v170
  %v1275 = vunpack.c.l.b16 %v171
  %v1276 = vunpack.c.l.b16 %v172
  %v1277 = vunpack.c.l.b16 %v173
  %v1278 = vunpack.c.l.b16 %v174
  %v1279 = vunpack.c.l.b16 %v175
  %v1280 = vunpack.c.l.b16 %v176
  %v1281 = vunpack.c.l.b16 %v177
  %v1282 = vunpack.c.l.b16 %v178
  %v1283 = vunpack.c.l.b16 %v179
  %v1284 = vunpack.c.l.b16 %v180
  %v1285 = vunpack.c.l.b16 %v181
  %v1286 = vunpack.c.l.b16 %v182
  %v1287 = vunpack.c.l.b16 %v183
  %v1288 = vunpack.c.l.b16 %v184
  %v1289 = vunpack.c.l.b16 %v185
  %v1290 = vunpack.c.l.b16 %v186
  %v1291 = vunpack.c.l.b16 %v187
  %v1292 = vunpack.c.l.b16 %v188
  %v1293 = vunpack.c.l.b16 %v189
  %v1294 = vunpack.c.l.b16 %v190
  %v1295 = vunpack.c.l.b16 %v191
  %v1296 = vunpack.c.l.b16 %v192
  %v1297 = vunpack.c.l.b16 %v193
  %v1298 = vunpack.c.l.b16 %v194
  %v1299 = vunpack.c.l.b16 %v195
  %v1300 = vunpack.c.l.b16 %v196
  %v1301 = vunpack.c.l.b16 %v197
  %v1302 = vunpack.c.l.b16 %v198
  %v1303 = vunpack.c.l.b16 %v199
  %v1304 = vunpack.c.l.b16 %v200
  %v1305 = vunpack.c.l.b16 %v201
  %v1306 = vunpack.c.l.b16 %v202
  %v1307 = vunpack.c.l.b16 %v203
  %v1308 = vunpack.c.l.b16 %v204
  %v1309 = vunpack.c.l.b16 %v205
  %v1310 = vunpack.c.l.b16 %v206
  %v1311 = vunpack.c.l.b16 %v207
  %v1312 = vunpack.c.l.b16 %v208
  %v1313 = vunpack.c.l.b16 %v209
  %v1314 = vunpack.c.l.b16 %v210
  %v1315 = vunpack.c.l.b16 %v211
  %v1316 = vunpack.c.l.b16 %v212
  %v1317 = vunpack.c.l.b16 %v213
  %v1318 = vunpack.c.l.b16 %v214
  %v1319 = vunpack.c.l.b16 %v215
  %v1320 = vunpack.c.l.b16 %v216
  %v1321 = vunpack.c.l.b16 %v217
  %v1322 = vunpack.c.l.b16 %v218
  %v1323 = vunpack.c.l.b16 %v219
  %v1324 = vunpack.c.l.b16 %v220
  %v1325 = vunpack.c.l.b16 %v221
  %v1326 = vunpack.c.l.b16 %v222
  %v1327 = vunpack.c.l.b16 %v223
  %v1328 = vunpack.c.l.b16 %v224
  %v1329 = vunpack.c.l.b16 %v225
  %v1330 = vunpack.c.l.b16 %v226
  %v1331 = vunpack.c.l.b16 %v227
  %v1332 = vunpack.c.l.b16 %v228
  %v1333 = vunpack.c.l.b16 %v229
  %v1334 = vunpack.c.l.b16 %v230
  %v1335 = vunpack.c.l.b16 %v231
  %v1336 = vunpack.c.l.b16 %v232
  %v1337 = vunpack.c.l.b16 %v233
  %v1338 = vunpack.c.l.b16 %v234
  %v1339 = vunpack.c.l.b16 %v235
  %v1340 = vunpack.c.l.b16 %v236
  %v1341 = vunpack.c.l.b16 %v237
  %v1342 = vunpack.c.l.b16 %v238
  %v1343 = vunpack.c.l.b16 %v239
  %v1344 = vunpack.c.l.b16 %v240
  %v1345 = vunpack.c.l.b16 %v241
  %v1346 = vunpack.c.l.b16 %v242
  %v1347 = vunpack.c.l.b16 %v243
  %v1348 = vunpack.c.l.b16 %v244
  %v1349 = vunpack.c.l.b16 %v245
  %v1350 = vunpack.c.l.b16 %v246
  %v1351 = vunpack.c.l.b16 %v247
  %v1352 = vunpack.c.l.b16 %v248
  %v1353 = vunpack.c.l.b16 %v249
  %v1354 = vunpack.c.l.b16 %v250
  %v1355 = vunpack.c.l.b16 %v251
  %v1356 = vunpack.c.l.b16 %v252
  %v1357 = vunpack.c.l.b16 %v253
  %v1358 = vunpack.c.l.b16 %v254
  %v1359 = vunpack.c.l.b16 %v255
  %v1360 = vunpack.c.l.b16 %v256
  %v1361 = vunpack.c.l.b16 %v257
  %v1362 = vunpack.c.l.b16 %v258
  %v1363 = vunpack.c.l.b16 %v259
  %v1364 = vunpack.c.l.b16 %v260
  %v1365 = vunpack.c.l.b16 %v261
  %v1366 = vunpack.c.l.b16 %v262
  %v1367 = vunpack.c.l.b16 %v263
  %v1368 = vunpack.c.l.b16 %v264
  %v1369 = vunpack.c.l.b16 %v265
  %v1370 = vunpack.c.l.b16 %v266
  %v1371 = vunpack.c.l.b16 %v267
  %v1372 = vunpack.c.l.b16 %v268
  %v1373 = vunpack.c.l.b16 %v269
  %v1374 = vunpack.c.l.b16 %v270
  %v1375 = vunpack.c.l.b16 %v271
  %v1376 = vunpack.c.l.b16 %v272
  %v1377 = vunpack.c.l.b16 %v273
  %v1378 = vunpack.c.l.b16 %v274
  %v1379 = vunpack.c.l.b16 %v275
  %v1380 = vunpack.c.l.b16 %v276
  %v1381 = vunpack.c.l.b16 %v277
  %v1382 = vunpack.c.l.b16 %v278
  %v1383 = vunpack.c.l.b16 %v279
  %v1384 = vunpack.c.l.b16 %v280
  %v1385 = vunpack.c.l.b16 %v281
  %v1386 = vunpack.c.l.b16 %v282
  %v1387 = vunpack.c.l.b16 %v283
  %v1388 = vunpack.c.l.b16 %v284
  %v1389 = vunpack.c.l.b16 %v285
  %v1390 = vunpack.c.l.b16 %v286
  %v1391 = vunpack.c.l.b16 %v287
  %v1392 = vunpack.c.l.b16 %v288
  %v1393 = vunpack.c.l.b16 %v289
  %v1394 = vunpack.c.l.b16 %v290
  %v1395 = vunpack.c.l.b16 %v291
  %v1396 = vunpack.c.l.b16 %v292
  %v1397 = vunpack.c.l.b16 %v293
  %v1398 = vunpack.c.l.b16 %v294
  %v1399 = vunpack.c.l.b16 %v295
  %v1400 = vunpack.c.l.b16 %v296
  %v1401 = vunpack.c.l.b16 %v297
  %v1402 = vunpack.c.l.b16 %v298
  %v1403 = vunpack.c.l.b16 %v299
  %v1404 = vunpack.c.l.b16 %v300
  %v1405 = vunpack.c.l.b16 %v301
  %v1406 = vunpack.c.l.b16 %v302
  %v1407 = vunpack.c.l.b16 %v303
  %v1408 = vunpack.c.l.b16 %v304
  %v1409 = vunpack.c.l.b16 %v305
  %v1410 = vunpack.c.l.b16 %v306
  %v1411 = vunpack.c.l.b16 %v307
  %v1412 = vunpack.c.l.b16 %v308
  %v1413 = vunpack.c.l.b16 %v309
  %v1414 = vunpack.c.l.b16 %v310
  %v1415 = vunpack.c.l.b16 %v311
  %v1416 = vunpack.c.l.b16 %v312
  %v1417 = vunpack.c.l.b16 %v313
  %v1418 = vunpack.c.l.b16 %v314
  %v1419 = vunpack.c.l.b16 %v315
  %v1420 = vunpack.c.l.b16 %v316
  %v1421 = vunpack.c.l.b16 %v317
  %v1422 = vunpack.c.l.b16 %v318
  %v1423 = vunpack.c.l.b16 %v319
  %v1424 = vunpack.c.l.b16 %v320
  %v1425 = vunpack.c.l.b16 %v321
  %v1426 = vunpack.c.l.b16 %v322
  %v1427 = vunpack.c.l.b16 %v323
  %v1428 = vunpack.c.l.b16 %v324
  %v1429 = vunpack.c.l.b16 %v325
  %v1430 = vunpack.c.l.b16 %v326
  %v1431 = vunpack.c.l.b16 %v327
  %v1432 = vunpack.c.l.b16 %v328
  %v1433 = vunpack.c.l.b16 %v329
  %v1434 = vunpack.c.l.b16 %v330
  %v1435 = vunpack.c.l.b16 %v331
  %v1436 = vunpack.c.l.b16 %v332
  %v1437 = vunpack.c.l.b16 %v333
  %v1438 = vunpack.c.l.b16 %v334
  %v1439 = vunpack.c.l.b16 %v335
  %v1440 = vunpack.c.l.b16 %v336
  %v1441 = vunpack.c.l.b16 %v337
  %v1442 = vunpack.c.l.b16 %v338
  %v1443 = vunpack.c.l.b16 %v339
  %v1444 = vunpack.c.l.b16 %v340
  %v1445 = vunpack.c.l.b16 %v341
  %v1446 = vunpack.c.l.b16 %v342
  %v1447 = vunpack.c.l.b16 %v343
  %v1448 = vunpack.c.l.b16 %v344
  %v1449 = vunpack.c.l.b16 %v345
  %v1450 = vunpack.c.l.b16 %v346
  %v1451 = vunpack.c.l.b16 %v347
  %v1452 = vunpack.c.l.b16 %v348
  %v1453 = vunpack.c.l.b16 %v349
  %v1454 = vunpack.c.l.b16 %v350
  %v1455 = vunpack.c.l.b16 %v351
  %v1456 = vunpack.c.l.b16 %v352
  %v1457 = vunpack.c.l.b16 %v353
  %v1458 = vunpack.c.l.b16 %v354
  %v1459 = vunpack.c.l.b16 %v355
  %v1460 = vunpack.c.l.b16 %v356
  %v1461 = vunpack.c.l.b16 %v357
  %v1462 = vunpack.c.l.b16 %v358
  %v1463 = vunpack.c.l.b16 %v359
  %v1464 = vunpack.c.l.b16 %v360
  %v1465 = vunpack.c.l.b16 %v361
  %v1466 = vunpack.c.l.b16 %v362
  %v1467 = vunpack.c.l.b16 %v363
  %v1468 = vunpack.c.l.b16 %v364
  %v1469 = vunpack.c.l.b16 %v365
  %v1470 = vunpack.c.l.b16 %v366
  %v1471 = vunpack.c.l.b16 %v367
  %v1472 = vunpack.c.l.b16 %v368
  %v1473 = vunpack.c.l.b16 %v369
  %v1474 = vunpack.c.l.b16 %v370
  %v1475 = vunpack.c.l.b16 %v371
  %v1476 = vunpack.c.l.b16 %v372
  %v1477 = vunpack.c.l.b16 %v373
  %v1478 = vunpack.c.l.b16 %v374
  %v1479 = vunpack.c.l.b16 %v375
  %v1480 = vunpack.c.l.b16 %v376
  %v1481 = vunpack.c.l.b16 %v377
  %v1482 = vunpack.c.l.b16 %v378
  %v1483 = vunpack.c.l.b16 %v379
  %v1484 = vunpack.c.l.b16 %v380
  %v1485 = vunpack.c.l.b16 %v381
  %v1486 = vunpack.c.l.b16 %v382
  %v1487 = vunpack.c.l.b16 %v383
  %v1488 = vunpack.c.l.b16 %v384
  %v1489 = vunpack.c.l.b16 %v385
  %v1490 = vunpack.c.l.b16 %v386
  %v1491 = vunpack.c.l.b16 %v387
  %v1492 = vunpack.c.l.b16 %v388
  %v1493 = vunpack.c.l.b16 %v389
  %v1494 = vunpack.c.l.b16 %v390
  %v1495 = vunpack.c.l.b16 %v391
  %v1496 = vunpack.c.l.b16 %v392
  %v1497 = vunpack.c.l.b16 %v393
  %v1498 = vunpack.c.l.b16 %v394
  %v1499 = vunpack.c.l.b16 %v395
  %v1500 = vunpack.c.l.b16 %v396
  %v1501 = vunpack.c.l.b16 %v397
  %v1502 = vunpack.c.l.b16 %v398
  %v1503 = vunpack.c.l.b16 %v399
  %v1504 = vunpack.c.l.b16 %v400
  %v1505 = vunpack.c.l.b16 %v401
  %v1506 = vunpack.c.l.b16 %v402
  %v1507 = vunpack.c.l.b16 %v403
  %v1508 = vunpack.c.l.b16 %v404
  %v1509 = vunpack.c.l.b16 %v405
  %v1510 = vunpack.c.l.b16 %v406
  %v1511 = vunpack.c.l.b16 %v407
  %v1512 = vunpack.c.l.b16 %v408
  %v1513 = vunpack.c.l.b16 %v409
  %v1514 = vunpack.c.l.b16 %v410
  %v1515 = vunpack.c.l.b16 %v411
  %v1516 = vunpack.c.l.b16 %v412
  %v1517 = vunpack.c.l.b16 %v413
  %v1518 = vunpack.c.l.b16 %v414
  %v1519 = vpack.c.b16 %v1120, %v1119
  %v1520 = vpack.c.b16 %v1122, %v1121
  %v1521 = vpack.c.b16 %v1124, %v1123
  %v1522 = vpack.c.b16 %v1126, %v1125
  %v1523 = vpack.c.b16 %v1128, %v1127
  %v1524 = vpack.c.b16 %v1130, %v1129
  %v1525 = vpack.c.b16 %v1132, %v1131
  %v1526 = vpack.c.b16 %v1134, %v1133
  %v1527 = vpack.c.b16 %v1136, %v1135
  %v1528 = vpack.c.b16 %v1138, %v1137
  %v1529 = vpack.c.b16 %v1140, %v1139
  %v1530 = vpack.c.b16 %v1142, %v1141
  %v1531 = vpack.c.b16 %v1144, %v1143
  %v1532 = vpack.c.b16 %v1146, %v1145
  %v1533 = vpack.c.b16 %v1148, %v1147
  %v1534 = vpack.c.b16 %v1150, %v1149
  %v1535 = vpack.c.b16 %v1152, %v1151
  %v1536 = vpack.c.b16 %v1154, %v1153
  %v1537 = vpack.c.b16 %v1156, %v1155
  %v1538 = vpack.c.b16 %v1158, %v1157
  %v1539 = vpack.c.b16 %v1160, %v1159
  %v1540 = vpack.c.b16 %v1162, %v1161
  %v1541 = vpack.c.b16 %v1164, %v1163
  %v1542 = vpack.c.b16 %v1166, %v1165
  %v1543 = vpack.c.b16 %v1168, %v1167
  %v1544 = vpack.c.b16 %v1170, %v1169
  %v1545 = vpack.c.b16 %v1172, %v1171
  %v1546 = vpack.c.b16 %v1174, %v1173
  %v1547 = vpack.c.b16 %v1176, %v1175
  %v1548 = vpack.c.b16 %v1178, %v1177
  %v1549 = vpack.c.b16 %v1180, %v1179
  %v1550 = vpack.c.b16 %v1182, %v1181
  %v1551 = vpack.c.b16 %v1184, %v1183
  %v1552 = vpack.c.b16 %v1186, %v1185
  %v1553 = vpack.c.b16 %v1188, %v1187
  %v1554 = vpack.c.b16 %v1190, %v1189
  %v1555 = vpack.c.b16 %v1192, %v1191
  %v1556 = vpack.c.b16 %v1194, %v1193
  %v1557 = vpack.c.b16 %v1196, %v1195
  %v1558 = vpack.c.b16 %v1198, %v1197
  %v1559 = vpack.c.b16 %v1200, %v1199
  %v1560 = vpack.c.b16 %v1202, %v1201
  %v1561 = vpack.c.b16 %v1204, %v1203
  %v1562 = vpack.c.b16 %v1206, %v1205
  %v1563 = vpack.c.b16 %v1208, %v1207
  %v1564 = vpack.c.b16 %v1210, %v1209
  %v1565 = vpack.c.b16 %v1212, %v1211
  %v1566 = vpack.c.b16 %v1214, %v1213
  %v1567 = vpack.c.b16 %v1216, %v1215
  %v1568 = vpack.c.b16 %v1218, %v1217
  %v1569 = vpack.c.b16 %v1220, %v1219
  %v1570 = vpack.c.b16 %v1222, %v1221
  %v1571 = vpack.c.b16 %v1224, %v1223
  %v1572 = vpack.c.b16 %v1226, %v1225
  %v1573 = vpack.c.b16 %v1228, %v1227
  %v1574 = vpack.c.b16 %v1230, %v1229
  %v1575 = vpack.c.b16 %v1232, %v1231
  %v1576 = vpack.c.b16 %v1234, %v1233
  %v1577 = vpack.c.b16 %v1236, %v1235
  %v1578 = vpack.c.b16 %v1238, %v1237
  %v1579 = vpack.c.b16 %v1240, %v1239
  %v1580 = vpack.c.b16 %v1242, %v1241
  %v1581 = vpack.c.b16 %v1244, %v1243
  %v1582 = vpack.c.b16 %v1246, %v1245
  %v1583 = vpack.c.b16 %v1248, %v1247
  %v1584 = vpack.c.b16 %v1250, %v1249
  %v1585 = vpack.c.b16 %v1252, %v1251
  %v1586 = vpack.c.b16 %v1254, %v1253
  %v1587 = vpack.c.b16 %v1256, %v1255
  %v1588 = vpack.c.b16 %v1258, %v1257
  %v1589 = vpack.c.b16 %v1260, %v1259
  %v1590 = vpack.c.b16 %v1262, %v1261
  %v1591 = vpack.c.b16 %v1264, %v1263
  %v1592 = vpack.c.b16 %v1266, %v1265
  %v1593 = vpack.c.b16 %v1268, %v1267
  %v1594 = vpack.c.b16 %v1270, %v1269
  %v1595 = vpack.c.b16 %v1272, %v1271
  %v1596 = vpack.c.b16 %v1274, %v1273
  %v1597 = vpack.c.b16 %v1276, %v1275
  %v1598 = vpack.c.b16 %v1278, %v1277
  %v1599 = vpack.c.b16 %v1280, %v1279
  %v1600 = vpack.c.b16 %v1282, %v1281
  %v1601 = vpack.c.b16 %v1284, %v1283
  %v1602 = vpack.c.b16 %v1286, %v1285
  %v1603 = vpack.c.b16 %v1288, %v1287
  %v1604 = vpack.c.b16 %v1290, %v1289
  %v1605 = vpack.c.b16 %v1292, %v1291
  %v1606 = vpack.c.b16 %v1294, %v1293
  %v1607 = vpack.c.b16 %v1296, %v1295
  %v1608 = vpack.c.b16 %v1298, %v1297
  %v1609 = vpack.c.b16 %v1300, %v1299
  %v1610 = vpack.c.b16 %v1302, %v1301
  %v1611 = vpack.c.b16 %v1304, %v1303
  %v1612 = vpack.c.b16 %v1306, %v1305
  %v1613 = vpack.c.b16 %v1308, %v1307
  %v1614 = vpack.c.b16 %v1310, %v1309
  %v1615 = vpack.c.b16 %v1312, %v1311
  %v1616 = vpack.c.b16 %v1314, %v1313
  %v1617 = vpack.c.b16 %v1316, %v1315
  %v1618 = vpack.c.b16 %v1318, %v1317
  %v1619 = vpack.c.b16 %v1320, %v1319
  %v1620 = vpack.c.b16 %v1322, %v1321
  %v1621 = vpack.c.b16 %v1324, %v1323
  %v1622 = vpack.c.b16 %v1326, %v1325
  %v1623 = vpack.c.b16 %v1328, %v1327
  %v1624 = vpack.c.b16 %v1330, %v1329
  %v1625 = vpack.c.b16 %v1332, %v1331
  %v1626 = vpack.c.b16 %v1334, %v1333
  %v1627 = vpack.c.b16 %v1336, %v1335
  %v1628 = vpack.c.b16 %v1338, %v1337
  %v1629 = vpack.c.b16 %v1340, %v1339
  %v1630 = vpack.c.b16 %v1342, %v1341
  %v1631 = vpack.c.b16 %v1344, %v1343
  %v1632 = vpack.c.b16 %v1346, %v1345
  %v1633 = vpack.c.b16 %v1348, %v1347
  %v1634 = vpack.c.b16 %v1350, %v1349
  %v1635 = vpack.c.b16 %v1352, %v1351
  %v1636 = vpack.c.b16 %v1354, %v1353
  %v1637 = vpack.c.b16 %v1356, %v1355
  %v1638 = vpack.c.b16 %v1358, %v1357
  %v1639 = vpack.c.b16 %v1360, %v1359
  %v1640 = vpack.c.b16 %v1362, %v1361
  %v1641 = vpack.c.b16 %v1364, %v1363
  %v1642 = vpack.c.b16 %v1366, %v1365
  %v1643 = vpack.c.b16 %v1368, %v1367
  %v1644 = vpack.c.b16 %v1370, %v1369
  %v1645 = vpack.c.b16 %v1372, %v1371
  %v1646 = vpack.c.b16 %v1374, %v1373
  %v1647 = vpack.c.b16 %v1376, %v1375
  %v1648 = vpack.c.b16 %v1378, %v1377
  %v1649 = vpack.c.b16 %v1380, %v1379
  %v1650 = vpack.c.b16 %v1382, %v1381
  %v1651 = vpack.c.b16 %v1384, %v1383
  %v1652 = vpack.c.b16 %v1386, %v1385
  %v1653 = vpack.c.b16 %v1388, %v1387
  %v1654 = vpack.c.b16 %v1390, %v1389
  %v1655 = vpack.c.b16 %v1392, %v1391
  %v1656 = vpack.c.b16 %v1394, %v1393
  %v1657 = vpack.c.b16 %v1396, %v1395
  %v1658 = vpack.c.b16 %v1398, %v1397
  %v1659 = vpack.c.b16 %v1400, %v1399
  %v1660 = vpack.c.b16 %v1402, %v1401
  %v1661 = vpack.c.b16 %v1404, %v1403
  %v1662 = vpack.c.b16 %v1406, %v1405
  %v1663 = vpack.c.b16 %v1408, %v1407
  %v1664 = vpack.c.b16 %v1410, %v1409
  %v1665 = vpack.c.b16 %v1412, %v1411
  %v1666 = vpack.c.b16 %v1414, %v1413
  %v1667 = vpack.c.b16 %v1416, %v1415
  %v1668 = vpack.c.b16 %v1418, %v1417
  %v1669 = vpack.c.b16 %v1420, %v1419
  %v1670 = vpack.c.b16 %v1422, %v1421
  %v1671 = vpack.c.b16 %v1424, %v1423
  %v1672 = vpack.c.b16 %v1426, %v1425
  %v1673 = vpack.c.b16 %v1428, %v1427
  %v1674 = vpack.c.b16 %v1430, %v1429
  %v1675 = vpack.c.b16 %v1432, %v1431
  %v1676 = vpack.c.b16 %v1434, %v1433
  %v1677 = vpack.c.b16 %v1436, %v1435
  %v1678 = vpack.c.b16 %v1438, %v1437
  %v1679 = vpack.c.b16 %v1440, %v1439
  %v1680 = vpack.c.b16 %v1442, %v1441
  %v1681 = vpack.c.b16 %v1444, %v1443
  %v1682 = vpack.c.b16 %v1446, %v1445
  %v1683 = vpack.c.b16 %v1448, %v1447
  %v1684 = vpack.c.b16 %v1450, %v1449
  %v1685 = vpack.c.b16 %v1452, %v1451
  %v1686 = vpack.c.b16 %v1454, %v1453
  %v1687 = vpack.c.b16 %v1456, %v1455
  %v1688 = vpack.c.b16 %v1458, %v1457
  %v1689 = vpack.c.b16 %v1460, %v1459
  %v1690 = vpack.c.b16 %v1462, %v1461
  %v1691 = vpack.c.b16 %v1464, %v1463
  %v1692 = vpack.c.b16 %v1466, %v1465
  %v1693 = vpack.c.b16 %v1468, %v1467
  %v1694 = vpack.c.b16 %v1470, %v1469
  %v1695 = vpack.c.b16 %v1472, %v1471
  %v1696 = vpack.c.b16 %v1474, %v1473
  %v1697 = vpack.c.b16 %v1476, %v1475
  %v1698 = vpack.c.b16 %v1478, %v1477
  %v1699 = vpack.c.b16 %v1480, %v1479
  %v1700 = vpack.c.b16 %v1482, %v1481
  %v1701 = vpack.c.b16 %v1484, %v1483
  %v1702 = vpack.c.b16 %v1486, %v1485
  %v1703 = vpack.c.b16 %v1488, %v1487
  %v1704 = vpack.c.b16 %v1490, %v1489
  %v1705 = vpack.c.b16 %v1492, %v1491
  %v1706 = vpack.c.b16 %v1494, %v1493
  %v1707 = vpack.c.b16 %v1496, %v1495
  %v1708 = vpack.c.b16 %v1498, %v1497
  %v1709 = vpack.c.b16 %v1500, %v1499
  %v1710 = vpack.c.b16 %v1502, %v1501
  %v1711 = vpack.c.b16 %v1504, %v1503
  %v1712 = vpack.c.b16 %v1506, %v1505
  %v1713 = vpack.c.b16 %v1508, %v1507
  %v1714 = vpack.c.b16 %v1510, %v1509
  %v1715 = vpack.c.b16 %v1512, %v1511
  %v1716 = vpack.c.b16 %v1514, %v1513
  %v1717 = vpack.c.b16 %v1516, %v1515
  %v1718 = vpack.c.b16 %v1518, %v1517
  %1919 = vmatprep.subr.bf16.mxu0 0
  %1920 = vmatpush1.bf16.msra.mxu0 %v1519
  %1921 = vmatprep.subr.bf16.mxu0 0
  %1922 = vmatpush1.bf16.msra.mxu0 %v1520
  %1923 = vmatprep.subr.bf16.mxu0 0
  %1924 = vmatpush1.bf16.msra.mxu0 %v1521
  %1925 = vmatprep.subr.bf16.mxu0 0
  %1926 = vmatpush1.bf16.msra.mxu0 %v1522
  %1927 = vmatprep.subr.bf16.mxu0 0
  %1928 = vmatpush1.bf16.msra.mxu0 %v1523
  %1929 = vmatprep.subr.bf16.mxu0 0
  %1930 = vmatpush1.bf16.msra.mxu0 %v1524
  %1931 = vmatprep.subr.bf16.mxu0 0
  %1932 = vmatpush1.bf16.msra.mxu0 %v1525
  %1933 = vmatprep.subr.bf16.mxu0 0
  %1934 = vmatpush1.bf16.msra.mxu0 %v1526
  %1935 = vmatprep.subr.bf16.mxu0 0
  %1936 = vmatpush1.bf16.msra.mxu0 %v1527
  %1937 = vmatprep.subr.bf16.mxu0 0
  %1938 = vmatpush1.bf16.msra.mxu0 %v1528
  %1939 = vmatprep.subr.bf16.mxu0 0
  %1940 = vmatpush1.bf16.msra.mxu0 %v1529
  %1941 = vmatprep.subr.bf16.mxu0 0
  %1942 = vmatpush1.bf16.msra.mxu0 %v1530
  %1943 = vmatprep.subr.bf16.mxu0 0
  %1944 = vmatpush1.bf16.msra.mxu0 %v1531
  %1945 = vmatprep.subr.bf16.mxu0 0
  %1946 = vmatpush1.bf16.msra.mxu0 %v1532
  %1947 = vmatprep.subr.bf16.mxu0 0
  %1948 = vmatpush1.bf16.msra.mxu0 %v1533
  %1949 = vmatprep.subr.bf16.mxu0 0
  %1950 = vmatpush1.bf16.msra.mxu0 %v1534
  %1951 = vmatprep.mubr.bf16.mxu0 %v620
  %1952 = vmatmul.mubr.bf16.gmra.mrb[0].mxu0 %v619
  %v1953 = vpop.f32.mrb[0].mxu0
  %v1954 = vadd.f32 0.0, %v1953
  %v1955 = vpop.f32.mrb[0].mxu0
  %v1956 = vpop.f32.mrb[0].mxu0
  %v1957 = vadd.f32 0.0, %v1956
  %v1958 = vpop.f32.mrb[0].mxu0
  %1959 = vmatprep.mubr.bf16.mxu0 %v645
  %1960 = vmatmul.mubr.bf16.gmra.mrb[0].mxu0 %v644
  %v1961 = vpop.f32.mrb[0].mxu0
  %v1962 = vadd.f32 0.0, %v1961
  %v1963 = vpop.f32.mrb[0].mxu0
  %v1964 = vpop.f32.mrb[0].mxu0
  %v1965 = vadd.f32 0.0, %v1964
  %v1966 = vpop.f32.mrb[0].mxu0
  %1967 = vdwg.mxu0
  %1968 = vmatprep.subr.bf16.mxu0 0
  %1969 = vmatpush1.bf16.msra.mxu0 %v1535
  %1970 = vmatprep.subr.bf16.mxu0 0
  %1971 = vmatpush1.bf16.msra.mxu0 %v1536
  %1972 = vmatprep.subr.bf16.mxu0 0
  %1973 = vmatpush1.bf16.msra.mxu0 %v1537
  %1974 = vmatprep.subr.bf16.mxu0 0
  %1975 = vmatpush1.bf16.msra.mxu0 %v1538
  %1976 = vmatprep.subr.bf16.mxu0 0
  %1977 = vmatpush1.bf16.msra.mxu0 %v1539
  %1978 = vmatprep.subr.bf16.mxu0 0
  %1979 = vmatpush1.bf16.msra.mxu0 %v1540
  %1980 = vmatprep.subr.bf16.mxu0 0
  %1981 = vmatpush1.bf16.msra.mxu0 %v1541
  %1982 = vmatprep.subr.bf16.mxu0 0
  %1983 = vmatpush1.bf16.msra.mxu0 %v1542
  %1984 = vmatprep.subr.bf16.mxu0 0
  %1985 = vmatpush1.bf16.msra.mxu0 %v1543
  %1986 = vmatprep.subr.bf16.mxu0 0
  %1987 = vmatpush1.bf16.msra.mxu0 %v1544
  %1988 = vmatprep.subr.bf16.mxu0 0
  %1989 = vmatpush1.bf16.msra.mxu0 %v1545
  %1990 = vmatprep.subr.bf16.mxu0 0
  %1991 = vmatpush1.bf16.msra.mxu0 %v1546
  %1992 = vmatprep.subr.bf16.mxu0 0
  %1993 = vmatpush1.bf16.msra.mxu0 %v1547
  %1994 = vmatprep.subr.bf16.mxu0 0
  %1995 = vmatpush1.bf16.msra.mxu0 %v1548
  %1996 = vmatprep.subr.bf16.mxu0 0
  %1997 = vmatpush1.bf16.msra.mxu0 %v1549
  %1998 = vmatprep.subr.bf16.mxu0 0
  %1999 = vmatpush1.bf16.msra.mxu0 %v1550
  %2000 = vmatprep.mubr.bf16.mxu0 %v622
  %2001 = vmatmul.mubr.bf16.gmra.mrb[0].mxu0 %v621
  %v2002 = vpop.f32.mrb[0].mxu0
  %v2003 = vadd.f32 %v1954, %v2002
  %v2004 = vpop.f32.mrb[0].mxu0
  %v2005 = vpop.f32.mrb[0].mxu0
  %v2006 = vadd.f32 %v1957, %v2005
  %v2007 = vpop.f32.mrb[0].mxu0
  %2008 = vmatprep.mubr.bf16.mxu0 %v647
  %2009 = vmatmul.mubr.bf16.gmra.mrb[0].mxu0 %v646
  %v2010 = vpop.f32.mrb[0].mxu0
  %v2011 = vadd.f32 %v1962, %v2010
  %v2012 = vpop.f32.mrb[0].mxu0
  %v2013 = vpop.f32.mrb[0].mxu0
  %v2014 = vadd.f32 %v1965, %v2013
  %v2015 = vpop.f32.mrb[0].mxu0
  %2016 = vdwg.mxu0
  %2017 = vmatprep.subr.bf16.mxu0 0
  %2018 = vmatpush1.bf16.msra.mxu0 %v1551
  %2019 = vmatprep.subr.bf16.mxu0 0
  %2020 = vmatpush1.bf16.msra.mxu0 %v1552
  %2021 = vmatprep.subr.bf16.mxu0 0
  %2022 = vmatpush1.bf16.msra.mxu0 %v1553
  %2023 = vmatprep.subr.bf16.mxu0 0
  %2024 = vmatpush1.bf16.msra.mxu0 %v1554
  %2025 = vmatprep.subr.bf16.mxu0 0
  %2026 = vmatpush1.bf16.msra.mxu0 %v1555
  %2027 = vmatprep.subr.bf16.mxu0 0
  %2028 = vmatpush1.bf16.msra.mxu0 %v1556
  %2029 = vmatprep.subr.bf16.mxu0 0
  %2030 = vmatpush1.bf16.msra.mxu0 %v1557
  %2031 = vmatprep.subr.bf16.mxu0 0
  %2032 = vmatpush1.bf16.msra.mxu0 %v1558
  %2033 = vmatprep.subr.bf16.mxu0 0
  %2034 = vmatpush1.bf16.msra.mxu0 %v1559
  %2035 = vmatprep.subr.bf16.mxu0 0
  %2036 = vmatpush1.bf16.msra.mxu0 %v1560
  %2037 = vmatprep.subr.bf16.mxu0 0
  %2038 = vmatpush1.bf16.msra.mxu0 %v1561
  %2039 = vmatprep.subr.bf16.mxu0 0
  %2040 = vmatpush1.bf16.msra.mxu0 %v1562
  %2041 = vmatprep.subr.bf16.mxu0 0
  %2042 = vmatpush1.bf16.msra.mxu0 %v1563
  %2043 = vmatprep.subr.bf16.mxu0 0
  %2044 = vmatpush1.bf16.msra.mxu0 %v1564
  %2045 = vmatprep.subr.bf16.mxu0 0
  %2046 = vmatpush1.bf16.msra.mxu0 %v1565
  %2047 = vmatprep.subr.bf16.mxu0 0
  %2048 = vmatpush1.bf16.msra.mxu0 %v1566
  %2049 = vmatprep.mubr.bf16.mxu0 %v624
  %2050 = vmatmul.mubr.bf16.gmra.mrb[0].mxu0 %v623
  %v2051 = vpop.f32.mrb[0].mxu0
  %v2052 = vadd.f32 %v2003, %v2051
  %v2053 = vpop.f32.mrb[0].mxu0
  %v2054 = vpop.f32.mrb[0].mxu0
  %v2055 = vadd.f32 %v2006, %v2054
  %v2056 = vpop.f32.mrb[0].mxu0
  %2057 = vmatprep.mubr.bf16.mxu0 %v649
  %2058 = vmatmul.mubr.bf16.gmra.mrb[0].mxu0 %v648
  %v2059 = vpop.f32.mrb[0].mxu0
  %v2060 = vadd.f32 %v2011, %v2059
  %v2061 = vpop.f32.mrb[0].mxu0
  %v2062 = vpop.f32.mrb[0].mxu0
  %v2063 = vadd.f32 %v2014, %v2062
  %v2064 = vpop.f32.mrb[0].mxu0
  %2065 = vdwg.mxu0
  %2066 = vmatprep.subr.bf16.mxu0 0
  %2067 = vmatpush1.bf16.msra.mxu0 %v1567
  %2068 = vmatprep.subr.bf16.mxu0 0
  %2069 = vmatpush1.bf16.msra.mxu0 %v1568
  %2070 = vmatprep.subr.bf16.mxu0 0
  %2071 = vmatpush1.bf16.msra.mxu0 %v1569
  %2072 = vmatprep.subr.bf16.mxu0 0
  %2073 = vmatpush1.bf16.msra.mxu0 %v1570
  %2074 = vmatprep.subr.bf16.mxu0 0
  %2075 = vmatpush1.bf16.msra.mxu0 %v1571
  %2076 = vmatprep.subr.bf16.mxu0 0
  %2077 = vmatpush1.bf16.msra.mxu0 %v1572
  %2078 = vmatprep.subr.bf16.mxu0 0
  %2079 = vmatpush1.bf16.msra.mxu0 %v1573
  %2080 = vmatprep.subr.bf16.mxu0 0
  %2081 = vmatpush1.bf16.msra.mxu0 %v1574
  %2082 = vmatprep.subr.bf16.mxu0 0
  %2083 = vmatpush1.bf16.msra.mxu0 %v1575
  %2084 = vmatprep.subr.bf16.mxu0 0
  %2085 = vmatpush1.bf16.msra.mxu0 %v1576
  %2086 = vmatprep.subr.bf16.mxu0 0
  %2087 = vmatpush1.bf16.msra.mxu0 %v1577
  %2088 = vmatprep.subr.bf16.mxu0 0
  %2089 = vmatpush1.bf16.msra.mxu0 %v1578
  %2090 = vmatprep.subr.bf16.mxu0 0
  %2091 = vmatpush1.bf16.msra.mxu0 %v1579
  %2092 = vmatprep.subr.bf16.mxu0 0
  %2093 = vmatpush1.bf16.msra.mxu0 %v1580
  %2094 = vmatprep.subr.bf16.mxu0 0
  %2095 = vmatpush1.bf16.msra.mxu0 %v1581
  %2096 = vmatprep.subr.bf16.mxu0 0
  %2097 = vmatpush1.bf16.msra.mxu0 %v1582
  %2098 = vmatprep.mubr.bf16.mxu0 %v626
  %2099 = vmatmul.mubr.bf16.gmra.mrb[0].mxu0 %v625
  %v2100 = vpop.f32.mrb[0].mxu0
  %v2101 = vadd.f32 %v2052, %v2100
  %v2102 = vpop.f32.mrb[0].mxu0
  %v2103 = vpop.f32.mrb[0].mxu0
  %v2104 = vadd.f32 %v2055, %v2103
  %v2105 = vpop.f32.mrb[0].mxu0
  %2106 = vmatprep.mubr.bf16.mxu0 %v651
  %2107 = vmatmul.mubr.bf16.gmra.mrb[0].mxu0 %v650
  %v2108 = vpop.f32.mrb[0].mxu0
  %v2109 = vadd.f32 %v2060, %v2108
  %v2110 = vpop.f32.mrb[0].mxu0
  %v2111 = vpop.f32.mrb[0].mxu0
  %v2112 = vadd.f32 %v2063, %v2111
  %v2113 = vpop.f32.mrb[0].mxu0
  %2114 = vdwg.mxu0
  %2115 = vmatprep.subr.bf16.mxu0 0
  %2116 = vmatpush1.bf16.msra.mxu0 %v1583
  %2117 = vmatprep.subr.bf16.mxu0 0
  %2118 = vmatpush1.bf16.msra.mxu0 %v1584
  %2119 = vmatprep.subr.bf16.mxu0 0
  %2120 = vmatpush1.bf16.msra.mxu0 %v1585
  %2121 = vmatprep.subr.bf16.mxu0 0
  %2122 = vmatpush1.bf16.msra.mxu0 %v1586
  %2123 = vmatprep.subr.bf16.mxu0 0
  %2124 = vmatpush1.bf16.msra.mxu0 %v1587
  %2125 = vmatprep.subr.bf16.mxu0 0
  %2126 = vmatpush1.bf16.msra.mxu0 %v1588
  %2127 = vmatprep.subr.bf16.mxu0 0
  %2128 = vmatpush1.bf16.msra.mxu0 %v1589
  %2129 = vmatprep.subr.bf16.mxu0 0
  %2130 = vmatpush1.bf16.msra.mxu0 %v1590
  %2131 = vmatprep.subr.bf16.mxu0 0
  %2132 = vmatpush1.bf16.msra.mxu0 %v1591
  %2133 = vmatprep.subr.bf16.mxu0 0
  %2134 = vmatpush1.bf16.msra.mxu0 %v1592
  %2135 = vmatprep.subr.bf16.mxu0 0
  %2136 = vmatpush1.bf16.msra.mxu0 %v1593
  %2137 = vmatprep.subr.bf16.mxu0 0
  %2138 = vmatpush1.bf16.msra.mxu0 %v1594
  %2139 = vmatprep.subr.bf16.mxu0 0
  %2140 = vmatpush1.bf16.msra.mxu0 %v1595
  %2141 = vmatprep.subr.bf16.mxu0 0
  %2142 = vmatpush1.bf16.msra.mxu0 %v1596
  %2143 = vmatprep.subr.bf16.mxu0 0
  %2144 = vmatpush1.bf16.msra.mxu0 %v1597
  %2145 = vmatprep.subr.bf16.mxu0 0
  %2146 = vmatpush1.bf16.msra.mxu0 %v1598
  %2147 = vmatprep.mubr.bf16.mxu0 %v628
  %2148 = vmatmul.mubr.bf16.gmra.mrb[0].mxu0 %v627
  %v2149 = vpop.f32.mrb[0].mxu0
  %v2150 = vadd.f32 %v2101, %v2149
  %v2151 = vpop.f32.mrb[0].mxu0
  %v2152 = vpop.f32.mrb[0].mxu0
  %v2153 = vadd.f32 %v2104, %v2152
  %v2154 = vpop.f32.mrb[0].mxu0
  %2155 = vmatprep.mubr.bf16.mxu0 %v653
  %2156 = vmatmul.mubr.bf16.gmra.mrb[0].mxu0 %v652
  %v2157 = vpop.f32.mrb[0].mxu0
  %v2158 = vadd.f32 %v2109, %v2157
  %v2159 = vpop.f32.mrb[0].mxu0
  %v2160 = vpop.f32.mrb[0].mxu0
  %v2161 = vadd.f32 %v2112, %v2160
  %v2162 = vpop.f32.mrb[0].mxu0
  %2163 = vdwg.mxu0
  %2164 = vmatprep.subr.bf16.mxu0 0
  %2165 = vmatpush1.bf16.msra.mxu0 %v1599
  %2166 = vmatprep.subr.bf16.mxu0 0
  %2167 = vmatpush1.bf16.msra.mxu0 %v1600
  %2168 = vmatprep.subr.bf16.mxu0 0
  %2169 = vmatpush1.bf16.msra.mxu0 %v1601
  %2170 = vmatprep.subr.bf16.mxu0 0
  %2171 = vmatpush1.bf16.msra.mxu0 %v1602
  %2172 = vmatprep.subr.bf16.mxu0 0
  %2173 = vmatpush1.bf16.msra.mxu0 %v1603
  %2174 = vmatprep.subr.bf16.mxu0 0
  %2175 = vmatpush1.bf16.msra.mxu0 %v1604
  %2176 = vmatprep.subr.bf16.mxu0 0
  %2177 = vmatpush1.bf16.msra.mxu0 %v1605
  %2178 = vmatprep.subr.bf16.mxu0 0
  %2179 = vmatpush1.bf16.msra.mxu0 %v1606
  %2180 = vmatprep.subr.bf16.mxu0 0
  %2181 = vmatpush1.bf16.msra.mxu0 %v1607
  %2182 = vmatprep.subr.bf16.mxu0 0
  %2183 = vmatpush1.bf16.msra.mxu0 %v1608
  %2184 = vmatprep.subr.bf16.mxu0 0
  %2185 = vmatpush1.bf16.msra.mxu0 %v1609
  %2186 = vmatprep.subr.bf16.mxu0 0
  %2187 = vmatpush1.bf16.msra.mxu0 %v1610
  %2188 = vmatprep.subr.bf16.mxu0 0
  %2189 = vmatpush1.bf16.msra.mxu0 %v1611
  %2190 = vmatprep.subr.bf16.mxu0 0
  %2191 = vmatpush1.bf16.msra.mxu0 %v1612
  %2192 = vmatprep.subr.bf16.mxu0 0
  %2193 = vmatpush1.bf16.msra.mxu0 %v1613
  %2194 = vmatprep.subr.bf16.mxu0 0
  %2195 = vmatpush1.bf16.msra.mxu0 %v1614
  %2196 = vmatprep.mubr.bf16.mxu0 %v630
  %2197 = vmatmul.mubr.bf16.gmra.mrb[0].mxu0 %v629
  %v2198 = vpop.f32.mrb[0].mxu0
  %v2199 = vadd.f32 %v2150, %v2198
  %v2200 = vpop.f32.mrb[0].mxu0
  %v2201 = vpop.f32.mrb[0].mxu0
  %v2202 = vadd.f32 %v2153, %v2201
  %v2203 = vpop.f32.mrb[0].mxu0
  %2204 = vmatprep.mubr.bf16.mxu0 %v655
  %2205 = vmatmul.mubr.bf16.gmra.mrb[0].mxu0 %v654
  %v2206 = vpop.f32.mrb[0].mxu0
  %v2207 = vadd.f32 %v2158, %v2206
  %v2208 = vpop.f32.mrb[0].mxu0
  %v2209 = vpop.f32.mrb[0].mxu0
  %v2210 = vadd.f32 %v2161, %v2209
  %v2211 = vpop.f32.mrb[0].mxu0
  %2212 = vdwg.mxu0
  %2213 = vmatprep.subr.bf16.mxu0 0
  %2214 = vmatpush1.bf16.msra.mxu0 %v1615
  %2215 = vmatprep.subr.bf16.mxu0 0
  %2216 = vmatpush1.bf16.msra.mxu0 %v1616
  %2217 = vmatprep.subr.bf16.mxu0 0
  %2218 = vmatpush1.bf16.msra.mxu0 %v1617
  %2219 = vmatprep.subr.bf16.mxu0 0
  %2220 = vmatpush1.bf16.msra.mxu0 %v1618
  %2221 = vmatprep.subr.bf16.mxu0 0
  %2222 = vmatpush1.bf16.msra.mxu0 %v1619
  %2223 = vmatprep.subr.bf16.mxu0 0
  %2224 = vmatpush1.bf16.msra.mxu0 %v1620
  %2225 = vmatprep.subr.bf16.mxu0 0
  %2226 = vmatpush1.bf16.msra.mxu0 %v1621
  %2227 = vmatprep.subr.bf16.mxu0 0
  %2228 = vmatpush1.bf16.msra.mxu0 %v1622
  %2229 = vmatprep.subr.bf16.mxu0 0
  %2230 = vmatpush1.bf16.msra.mxu0 %v1623
  %2231 = vmatprep.subr.bf16.mxu0 0
  %2232 = vmatpush1.bf16.msra.mxu0 %v1624
  %2233 = vmatprep.subr.bf16.mxu0 0
  %2234 = vmatpush1.bf16.msra.mxu0 %v1625
  %2235 = vmatprep.subr.bf16.mxu0 0
  %2236 = vmatpush1.bf16.msra.mxu0 %v1626
  %2237 = vmatprep.subr.bf16.mxu0 0
  %2238 = vmatpush1.bf16.msra.mxu0 %v1627
  %2239 = vmatprep.subr.bf16.mxu0 0
  %2240 = vmatpush1.bf16.msra.mxu0 %v1628
  %2241 = vmatprep.subr.bf16.mxu0 0
  %2242 = vmatpush1.bf16.msra.mxu0 %v1629
  %2243 = vmatprep.subr.bf16.mxu0 0
  %2244 = vmatpush1.bf16.msra.mxu0 %v1630
  %2245 = vmatprep.mubr.bf16.mxu0 %v632
  %2246 = vmatmul.mubr.bf16.gmra.mrb[0].mxu0 %v631
  %v2247 = vpop.f32.mrb[0].mxu0
  %v2248 = vadd.f32 %v2199, %v2247
  %v2249 = vpop.f32.mrb[0].mxu0
  %v2250 = vpop.f32.mrb[0].mxu0
  %v2251 = vadd.f32 %v2202, %v2250
  %v2252 = vpop.f32.mrb[0].mxu0
  %2253 = vmatprep.mubr.bf16.mxu0 %v657
  %2254 = vmatmul.mubr.bf16.gmra.mrb[0].mxu0 %v656
  %v2255 = vpop.f32.mrb[0].mxu0
  %v2256 = vadd.f32 %v2207, %v2255
  %v2257 = vpop.f32.mrb[0].mxu0
  %v2258 = vpop.f32.mrb[0].mxu0
  %v2259 = vadd.f32 %v2210, %v2258
  %v2260 = vpop.f32.mrb[0].mxu0
  %2261 = vdwg.mxu0
  %2262 = vmatprep.subr.bf16.mxu0 0
  %2263 = vmatpush1.bf16.msra.mxu0 %v1631
  %2264 = vmatprep.subr.bf16.mxu0 0
  %2265 = vmatpush1.bf16.msra.mxu0 %v1632
  %2266 = vmatprep.subr.bf16.mxu0 0
  %2267 = vmatpush1.bf16.msra.mxu0 %v1633
  %2268 = vmatprep.subr.bf16.mxu0 0
  %2269 = vmatpush1.bf16.msra.mxu0 %v1634
  %2270 = vmatprep.subr.bf16.mxu0 0
  %2271 = vmatpush1.bf16.msra.mxu0 %v1635
  %2272 = vmatprep.subr.bf16.mxu0 0
  %2273 = vmatpush1.bf16.msra.mxu0 %v1636
  %2274 = vmatprep.subr.bf16.mxu0 0
  %2275 = vmatpush1.bf16.msra.mxu0 %v1637
  %2276 = vmatprep.subr.bf16.mxu0 0
  %2277 = vmatpush1.bf16.msra.mxu0 %v1638
  %2278 = vmatprep.subr.bf16.mxu0 0
  %2279 = vmatpush1.bf16.msra.mxu0 %v1639
  %2280 = vmatprep.subr.bf16.mxu0 0
  %2281 = vmatpush1.bf16.msra.mxu0 %v1640
  %2282 = vmatprep.subr.bf16.mxu0 0
  %2283 = vmatpush1.bf16.msra.mxu0 %v1641
  %2284 = vmatprep.subr.bf16.mxu0 0
  %2285 = vmatpush1.bf16.msra.mxu0 %v1642
  %2286 = vmatprep.subr.bf16.mxu0 0
  %2287 = vmatpush1.bf16.msra.mxu0 %v1643
  %2288 = vmatprep.subr.bf16.mxu0 0
  %2289 = vmatpush1.bf16.msra.mxu0 %v1644
  %2290 = vmatprep.subr.bf16.mxu0 0
  %2291 = vmatpush1.bf16.msra.mxu0 %v1645
  %2292 = vmatprep.subr.bf16.mxu0 0
  %2293 = vmatpush1.bf16.msra.mxu0 %v1646
  %2294 = vmatprep.mubr.bf16.mxu0 %v634
  %2295 = vmatmul.mubr.bf16.gmra.mrb[0].mxu0 %v633
  %v2296 = vpop.f32.mrb[0].mxu0
  %v2297 = vadd.f32 %v2248, %v2296
  %v2298 = vpop.f32.mrb[0].mxu0
  %v2299 = vpop.f32.mrb[0].mxu0
  %v2300 = vadd.f32 %v2251, %v2299
  %v2301 = vpop.f32.mrb[0].mxu0
  %2302 = vmatprep.mubr.bf16.mxu0 %v659
  %2303 = vmatmul.mubr.bf16.gmra.mrb[0].mxu0 %v658
  %v2304 = vpop.f32.mrb[0].mxu0
  %v2305 = vadd.f32 %v2256, %v2304
  %v2306 = vpop.f32.mrb[0].mxu0
  %v2307 = vpop.f32.mrb[0].mxu0
  %v2308 = vadd.f32 %v2259, %v2307
  %v2309 = vpop.f32.mrb[0].mxu0
  %2310 = vdwg.mxu0
  %2311 = vmatprep.subr.bf16.mxu0 0
  %2312 = vmatpush1.bf16.msra.mxu0 %v1647
  %2313 = vmatprep.subr.bf16.mxu0 0
  %2314 = vmatpush1.bf16.msra.mxu0 %v1648
  %2315 = vmatprep.subr.bf16.mxu0 0
  %2316 = vmatpush1.bf16.msra.mxu0 %v1649
  %2317 = vmatprep.subr.bf16.mxu0 0
  %2318 = vmatpush1.bf16.msra.mxu0 %v1650
  %2319 = vmatprep.subr.bf16.mxu0 0
  %2320 = vmatpush1.bf16.msra.mxu0 %v1651
  %2321 = vmatprep.subr.bf16.mxu0 0
  %2322 = vmatpush1.bf16.msra.mxu0 %v1652
  %2323 = vmatprep.subr.bf16.mxu0 0
  %2324 = vmatpush1.bf16.msra.mxu0 %v1653
  %2325 = vmatprep.subr.bf16.mxu0 0
  %2326 = vmatpush1.bf16.msra.mxu0 %v1654
  %2327 = vmatprep.subr.bf16.mxu0 0
  %2328 = vmatpush1.bf16.msra.mxu0 %v1655
  %2329 = vmatprep.subr.bf16.mxu0 0
  %2330 = vmatpush1.bf16.msra.mxu0 %v1656
  %2331 = vmatprep.subr.bf16.mxu0 0
  %2332 = vmatpush1.bf16.msra.mxu0 %v1657
  %2333 = vmatprep.subr.bf16.mxu0 0
  %2334 = vmatpush1.bf16.msra.mxu0 %v1658
  %2335 = vmatprep.subr.bf16.mxu0 0
  %2336 = vmatpush1.bf16.msra.mxu0 %v1659
  %2337 = vmatprep.subr.bf16.mxu0 0
  %2338 = vmatpush1.bf16.msra.mxu0 %v1660
  %2339 = vmatprep.subr.bf16.mxu0 0
  %2340 = vmatpush1.bf16.msra.mxu0 %v1661
  %2341 = vmatprep.subr.bf16.mxu0 0
  %2342 = vmatpush1.bf16.msra.mxu0 %v1662
  %2343 = vmatprep.mubr.bf16.mxu0 %v636
  %2344 = vmatmul.mubr.bf16.gmra.mrb[0].mxu0 %v635
  %v2345 = vpop.f32.mrb[0].mxu0
  %v2346 = vadd.f32 %v2297, %v2345
  %v2347 = vpop.f32.mrb[0].mxu0
  %v2348 = vpop.f32.mrb[0].mxu0
  %v2349 = vadd.f32 %v2300, %v2348
  %v2350 = vpop.f32.mrb[0].mxu0
  %2351 = vmatprep.mubr.bf16.mxu0 %v661
  %2352 = vmatmul.mubr.bf16.gmra.mrb[0].mxu0 %v660
  %v2353 = vpop.f32.mrb[0].mxu0
  %v2354 = vadd.f32 %v2305, %v2353
  %v2355 = vpop.f32.mrb[0].mxu0
  %v2356 = vpop.f32.mrb[0].mxu0
  %v2357 = vadd.f32 %v2308, %v2356
  %v2358 = vpop.f32.mrb[0].mxu0
  %2359 = vdwg.mxu0
  %2360 = vmatprep.subr.bf16.mxu0 0
  %2361 = vmatpush1.bf16.msra.mxu0 %v1663
  %2362 = vmatprep.subr.bf16.mxu0 0
  %2363 = vmatpush1.bf16.msra.mxu0 %v1664
  %2364 = vmatprep.subr.bf16.mxu0 0
  %2365 = vmatpush1.bf16.msra.mxu0 %v1665
  %2366 = vmatprep.subr.bf16.mxu0 0
  %2367 = vmatpush1.bf16.msra.mxu0 %v1666
  %2368 = vmatprep.subr.bf16.mxu0 0
  %2369 = vmatpush1.bf16.msra.mxu0 %v1667
  %2370 = vmatprep.subr.bf16.mxu0 0
  %2371 = vmatpush1.bf16.msra.mxu0 %v1668
  %2372 = vmatprep.subr.bf16.mxu0 0
  %2373 = vmatpush1.bf16.msra.mxu0 %v1669
  %2374 = vmatprep.subr.bf16.mxu0 0
  %2375 = vmatpush1.bf16.msra.mxu0 %v1670
  %2376 = vmatprep.subr.bf16.mxu0 0
  %2377 = vmatpush1.bf16.msra.mxu0 %v1671
  %2378 = vmatprep.subr.bf16.mxu0 0
  %2379 = vmatpush1.bf16.msra.mxu0 %v1672
  %2380 = vmatprep.subr.bf16.mxu0 0
  %2381 = vmatpush1.bf16.msra.mxu0 %v1673
  %2382 = vmatprep.subr.bf16.mxu0 0
  %2383 = vmatpush1.bf16.msra.mxu0 %v1674
  %2384 = vmatprep.subr.bf16.mxu0 0
  %2385 = vmatpush1.bf16.msra.mxu0 %v1675
  %2386 = vmatprep.subr.bf16.mxu0 0
  %2387 = vmatpush1.bf16.msra.mxu0 %v1676
  %2388 = vmatprep.subr.bf16.mxu0 0
  %2389 = vmatpush1.bf16.msra.mxu0 %v1677
  %2390 = vmatprep.subr.bf16.mxu0 0
  %2391 = vmatpush1.bf16.msra.mxu0 %v1678
  %2392 = vmatprep.mubr.bf16.mxu0 %v638
  %2393 = vmatmul.mubr.bf16.gmra.mrb[0].mxu0 %v637
  %v2394 = vpop.f32.mrb[0].mxu0
  %v2395 = vadd.f32 %v2346, %v2394
  %v2396 = vpop.f32.mrb[0].mxu0
  %v2397 = vpop.f32.mrb[0].mxu0
  %v2398 = vadd.f32 %v2349, %v2397
  %v2399 = vpop.f32.mrb[0].mxu0
  %2400 = vmatprep.mubr.bf16.mxu0 %v663
  %2401 = vmatmul.mubr.bf16.gmra.mrb[0].mxu0 %v662
  %v2402 = vpop.f32.mrb[0].mxu0
  %v2403 = vadd.f32 %v2354, %v2402
  %v2404 = vpop.f32.mrb[0].mxu0
  %v2405 = vpop.f32.mrb[0].mxu0
  %v2406 = vadd.f32 %v2357, %v2405
  %v2407 = vpop.f32.mrb[0].mxu0
  %2408 = vdwg.mxu0
  %2409 = vmatprep.subr.bf16.mxu0 0
  %2410 = vmatpush1.bf16.msra.mxu0 %v1679
  %2411 = vmatprep.subr.bf16.mxu0 0
  %2412 = vmatpush1.bf16.msra.mxu0 %v1680
  %2413 = vmatprep.subr.bf16.mxu0 0
  %2414 = vmatpush1.bf16.msra.mxu0 %v1681
  %2415 = vmatprep.subr.bf16.mxu0 0
  %2416 = vmatpush1.bf16.msra.mxu0 %v1682
  %2417 = vmatprep.subr.bf16.mxu0 0
  %2418 = vmatpush1.bf16.msra.mxu0 %v1683
  %2419 = vmatprep.subr.bf16.mxu0 0
  %2420 = vmatpush1.bf16.msra.mxu0 %v1684
  %2421 = vmatprep.subr.bf16.mxu0 0
  %2422 = vmatpush1.bf16.msra.mxu0 %v1685
  %2423 = vmatprep.subr.bf16.mxu0 0
  %2424 = vmatpush1.bf16.msra.mxu0 %v1686
  %2425 = vmatprep.subr.bf16.mxu0 0
  %2426 = vmatpush1.bf16.msra.mxu0 %v1687
  %2427 = vmatprep.subr.bf16.mxu0 0
  %2428 = vmatpush1.bf16.msra.mxu0 %v1688
  %2429 = vmatprep.subr.bf16.mxu0 0
  %2430 = vmatpush1.bf16.msra.mxu0 %v1689
  %2431 = vmatprep.subr.bf16.mxu0 0
  %2432 = vmatpush1.bf16.msra.mxu0 %v1690
  %2433 = vmatprep.subr.bf16.mxu0 0
  %2434 = vmatpush1.bf16.msra.mxu0 %v1691
  %2435 = vmatprep.subr.bf16.mxu0 0
  %2436 = vmatpush1.bf16.msra.mxu0 %v1692
  %2437 = vmatprep.subr.bf16.mxu0 0
  %2438 = vmatpush1.bf16.msra.mxu0 %v1693
  %2439 = vmatprep.subr.bf16.mxu0 0
  %2440 = vmatpush1.bf16.msra.mxu0 %v1694
  %2441 = vmatprep.mubr.bf16.mxu0 %v640
  %2442 = vmatmul.mubr.bf16.gmra.mrb[0].mxu0 %v639
  %v2443 = vpop.f32.mrb[0].mxu0
  %v2444 = vadd.f32 %v2395, %v2443
  %v2445 = vpop.f32.mrb[0].mxu0
  %v2446 = vpop.f32.mrb[0].mxu0
  %v2447 = vadd.f32 %v2398, %v2446
  %v2448 = vpop.f32.mrb[0].mxu0
  %2449 = vmatprep.mubr.bf16.mxu0 %v665
  %2450 = vmatmul.mubr.bf16.gmra.mrb[0].mxu0 %v664
  %v2451 = vpop.f32.mrb[0].mxu0
  %v2452 = vadd.f32 %v2403, %v2451
  %v2453 = vpop.f32.mrb[0].mxu0
  %v2454 = vpop.f32.mrb[0].mxu0
  %v2455 = vadd.f32 %v2406, %v2454
  %v2456 = vpop.f32.mrb[0].mxu0
  %2457 = vdwg.mxu0
  %2458 = vmatprep.subr.bf16.mxu0 0
  %2459 = vmatpush1.bf16.msra.mxu0 %v1695
  %2460 = vmatprep.subr.bf16.mxu0 0
  %2461 = vmatpush1.bf16.msra.mxu0 %v1696
  %2462 = vmatprep.subr.bf16.mxu0 0
  %2463 = vmatpush1.bf16.msra.mxu0 %v1697
  %2464 = vmatprep.subr.bf16.mxu0 0
  %2465 = vmatpush1.bf16.msra.mxu0 %v1698
  %2466 = vmatprep.subr.bf16.mxu0 0
  %2467 = vmatpush1.bf16.msra.mxu0 %v1699
  %2468 = vmatprep.subr.bf16.mxu0 0
  %2469 = vmatpush1.bf16.msra.mxu0 %v1700
  %2470 = vmatprep.subr.bf16.mxu0 0
  %2471 = vmatpush1.bf16.msra.mxu0 %v1701
  %2472 = vmatprep.subr.bf16.mxu0 0
  %2473 = vmatpush1.bf16.msra.mxu0 %v1702
  %2474 = vmatprep.subr.bf16.mxu0 0
  %2475 = vmatpush1.bf16.msra.mxu0 %v1703
  %2476 = vmatprep.subr.bf16.mxu0 0
  %2477 = vmatpush1.bf16.msra.mxu0 %v1704
  %2478 = vmatprep.subr.bf16.mxu0 0
  %2479 = vmatpush1.bf16.msra.mxu0 %v1705
  %2480 = vmatprep.subr.bf16.mxu0 0
  %2481 = vmatpush1.bf16.msra.mxu0 %v1706
  %2482 = vmatprep.subr.bf16.mxu0 0
  %2483 = vmatpush1.bf16.msra.mxu0 %v1707
  %2484 = vmatprep.subr.bf16.mxu0 0
  %2485 = vmatpush1.bf16.msra.mxu0 %v1708
  %2486 = vmatprep.subr.bf16.mxu0 0
  %2487 = vmatpush1.bf16.msra.mxu0 %v1709
  %2488 = vmatprep.subr.bf16.mxu0 0
  %2489 = vmatpush1.bf16.msra.mxu0 %v1710
  %2490 = vmatprep.mubr.bf16.mxu0 %v642
  %2491 = vmatmul.mubr.bf16.gmra.mrb[0].mxu0 %v641
  %v2492 = vpop.f32.mrb[0].mxu0
  %v2493 = vadd.f32 %v2444, %v2492
  %v2494 = vpop.f32.mrb[0].mxu0
  %v2495 = vpop.f32.mrb[0].mxu0
  %v2496 = vadd.f32 %v2447, %v2495
  %v2497 = vpop.f32.mrb[0].mxu0
  %2498 = vmatprep.mubr.bf16.mxu0 %v667
  %2499 = vmatmul.mubr.bf16.gmra.mrb[0].mxu0 %v666
  %v2500 = vpop.f32.mrb[0].mxu0
  %v2501 = vadd.f32 %v2452, %v2500
  %v2502 = vpop.f32.mrb[0].mxu0
  %v2503 = vpop.f32.mrb[0].mxu0
  %v2504 = vadd.f32 %v2455, %v2503
  %v2505 = vpop.f32.mrb[0].mxu0
  %2506 = vdwg.mxu0
  %2507 = vmatprep.subr.bf16.mxu0 0
  %2508 = vmatpush1.bf16.msra.mxu0 %v1711
  %2509 = vmatprep.subr.bf16.mxu0 0
  %2510 = vmatpush1.bf16.msra.mxu0 %v1712
  %2511 = vmatprep.subr.bf16.mxu0 0
  %2512 = vmatpush1.bf16.msra.mxu0 %v1713
  %2513 = vmatprep.subr.bf16.mxu0 0
  %2514 = vmatpush1.bf16.msra.mxu0 %v1714
  %2515 = vmatprep.subr.bf16.mxu0 0
  %2516 = vmatpush1.bf16.msra.mxu0 %v1715
  %2517 = vmatprep.subr.bf16.mxu0 0
  %2518 = vmatpush1.bf16.msra.mxu0 %v1716
  %2519 = vmatprep.subr.bf16.mxu0 0
  %2520 = vmatpush1.bf16.msra.mxu0 %v1717
  %2521 = vmatprep.subr.bf16.mxu0 0
  %2522 = vmatpush1.bf16.msra.mxu0 %v1718
  %2523 = vmatprep.subr.bf16.mxu0 0
  %2524 = vmatpush1.bf16.msra.mxu0 0
  %2525 = vmatprep.subr.bf16.mxu0 0
  %2526 = vmatpush1.bf16.msra.mxu0 0
  %2527 = vmatprep.subr.bf16.mxu0 0
  %2528 = vmatpush1.bf16.msra.mxu0 0
  %2529 = vmatprep.subr.bf16.mxu0 0
  %2530 = vmatpush1.bf16.msra.mxu0 0
  %2531 = vmatprep.subr.bf16.mxu0 0
  %2532 = vmatpush1.bf16.msra.mxu0 0
  %2533 = vmatprep.subr.bf16.mxu0 0
  %2534 = vmatpush1.bf16.msra.mxu0 0
  %2535 = vmatprep.subr.bf16.mxu0 0
  %2536 = vmatpush1.bf16.msra.mxu0 0
  %2537 = vmatprep.subr.bf16.mxu0 0
  %2538 = vmatpush1.bf16.msra.mxu0 0
  %2539 = vmatprep.mubr.bf16.mxu0 0
  %2540 = vmatmul.mubr.bf16.gmra.mrb[0].mxu0 %v643
  %v2541 = vpop.f32.mrb[0].mxu0
  %v2542 = vadd.f32 %v2493, %v2541
  %v2543 = vpop.f32.mrb[0].mxu0
  %v2544 = vpop.f32.mrb[0].mxu0
  %v2545 = vadd.f32 %v2496, %v2544
  %v2546 = vpop.f32.mrb[0].mxu0
  %2547 = vmatprep.mubr.bf16.mxu0 0
  %2548 = vmatmul.mubr.bf16.gmra.mrb[0].mxu0 %v668
  %v2549 = vpop.f32.mrb[0].mxu0
  %v2550 = vadd.f32 %v2501, %v2549
  %v2551 = vpop.f32.mrb[0].mxu0
  %v2552 = vpop.f32.mrb[0].mxu0
  %v2553 = vadd.f32 %v2504, %v2552
  %v2554 = vpop.f32.mrb[0].mxu0
  %2555 = vdwg.mxu0
  %s2556 = scalar_lea.vmem %s0, 400
  %v2557 = vld [vmem:[%s2556] sm:$0xff]
  %v2558 = vld [vmem:[%s2556 + $0x8] sm:$0xff]
  %v2559 = vld [vmem:[%s2556 + $0x10] sm:$0xff]
  %v2560 = vld [vmem:[%s2556 + $0x18] sm:$0xff]
  %v2561 = vld [vmem:[%s2556 + $0x20] sm:$0xff]
  %v2562 = vld [vmem:[%s2556 + $0x28] sm:$0xff]
  %v2563 = vld [vmem:[%s2556 + $0x30] sm:$0xff]
  %v2564 = vld [vmem:[%s2556 + $0x38] sm:$0xff]
  %v2565 = vld [vmem:[%s2556 + $0x40] sm:$0xff]
  %v2566 = vld [vmem:[%s2556 + $0x48] sm:$0xff]
  %v2567 = vld [vmem:[%s2556 + $0x50] sm:$0xff]
  %v2568 = vld [vmem:[%s2556 + $0x58] sm:$0xff]
  %v2569 = vld [vmem:[%s2556 + $0x60] sm:$0xf]
  %v2570 = vld [vmem:[%s2556 + $0x64] sm:$0xff]
  %v2571 = vld [vmem:[%s2556 + $0x6c] sm:$0xff]
  %v2572 = vld [vmem:[%s2556 + $0x74] sm:$0xff]
  %v2573 = vld [vmem:[%s2556 + $0x7c] sm:$0xff]
  %v2574 = vld [vmem:[%s2556 + $0x84] sm:$0xff]
  %v2575 = vld [vmem:[%s2556 + $0x8c] sm:$0xff]
  %v2576 = vld [vmem:[%s2556 + $0x94] sm:$0xff]
  %v2577 = vld [vmem:[%s2556 + $0x9c] sm:$0xff]
  %v2578 = vld [vmem:[%s2556 + $0xa4] sm:$0xff]
  %v2579 = vld [vmem:[%s2556 + $0xac] sm:$0xff]
  %v2580 = vld [vmem:[%s2556 + $0xb4] sm:$0xff]
  %v2581 = vld [vmem:[%s2556 + $0xbc] sm:$0xff]
  %v2582 = vld [vmem:[%s2556 + $0xc4] sm:$0xf]
  %v2583 = vld [vmem:[%s2556 + $0xc8] sm:$0xff]
  %v2584 = vld [vmem:[%s2556 + $0xd0] sm:$0xff]
  %v2585 = vld [vmem:[%s2556 + $0xd8] sm:$0xff]
  %v2586 = vld [vmem:[%s2556 + $0xe0] sm:$0xff]
  %v2587 = vld [vmem:[%s2556 + $0xe8] sm:$0xff]
  %v2588 = vld [vmem:[%s2556 + $0xf0] sm:$0xff]
  %v2589 = vld [vmem:[%s2556 + $0xf8] sm:$0xff]
  %v2590 = vld [vmem:[%s2556 + $0x100] sm:$0xff]
  %v2591 = vld [vmem:[%s2556 + $0x108] sm:$0xff]
  %v2592 = vld [vmem:[%s2556 + $0x110] sm:$0xff]
  %v2593 = vld [vmem:[%s2556 + $0x118] sm:$0xff]
  %v2594 = vld [vmem:[%s2556 + $0x120] sm:$0xff]
  %v2595 = vld [vmem:[%s2556 + $0x128] sm:$0xf]
  %v2596 = vld [vmem:[%s2556 + $0x12c] sm:$0xff]
  %v2597 = vld [vmem:[%s2556 + $0x134] sm:$0xff]
  %v2598 = vld [vmem:[%s2556 + $0x13c] sm:$0xff]
  %v2599 = vld [vmem:[%s2556 + $0x144] sm:$0xff]
  %v2600 = vld [vmem:[%s2556 + $0x14c] sm:$0xff]
  %v2601 = vld [vmem:[%s2556 + $0x154] sm:$0xff]
  %v2602 = vld [vmem:[%s2556 + $0x15c] sm:$0xff]
  %v2603 = vld [vmem:[%s2556 + $0x164] sm:$0xff]
  %v2604 = vld [vmem:[%s2556 + $0x16c] sm:$0xff]
  %v2605 = vld [vmem:[%s2556 + $0x174] sm:$0xff]
  %v2606 = vld [vmem:[%s2556 + $0x17c] sm:$0xff]
  %v2607 = vld [vmem:[%s2556 + $0x184] sm:$0xff]
  %v2608 = vld [vmem:[%s2556 + $0x18c] sm:$0xf]
  %v2661 = vunpack.c.l.b16 %v2557
  %v2662 = vunpack.c.h.b16 %v2557
  %v2663 = vunpack.c.l.b16 %v2558
  %v2664 = vunpack.c.h.b16 %v2558
  %v2665 = vunpack.c.l.b16 %v2559
  %v2666 = vunpack.c.h.b16 %v2559
  %v2667 = vunpack.c.l.b16 %v2560
  %v2668 = vunpack.c.h.b16 %v2560
  %v2669 = vunpack.c.l.b16 %v2561
  %v2670 = vunpack.c.h.b16 %v2561
  %v2671 = vunpack.c.l.b16 %v2562
  %v2672 = vunpack.c.h.b16 %v2562
  %v2673 = vunpack.c.l.b16 %v2563
  %v2674 = vunpack.c.h.b16 %v2563
  %v2675 = vunpack.c.l.b16 %v2564
  %v2676 = vunpack.c.h.b16 %v2564
  %v2677 = vunpack.c.l.b16 %v2565
  %v2678 = vunpack.c.h.b16 %v2565
  %v2679 = vunpack.c.l.b16 %v2566
  %v2680 = vunpack.c.h.b16 %v2566
  %v2681 = vunpack.c.l.b16 %v2567
  %v2682 = vunpack.c.h.b16 %v2567
  %v2683 = vunpack.c.l.b16 %v2568
  %v2684 = vunpack.c.h.b16 %v2568
  %v2685 = vunpack.c.l.b16 %v2569
  %v2686 = vunpack.c.l.b16 %v2570
  %v2687 = vunpack.c.h.b16 %v2570
  %v2688 = vunpack.c.l.b16 %v2571
  %v2689 = vunpack.c.h.b16 %v2571
  %v2690 = vunpack.c.l.b16 %v2572
  %v2691 = vunpack.c.h.b16 %v2572
  %v2692 = vunpack.c.l.b16 %v2573
  %v2693 = vunpack.c.h.b16 %v2573
  %v2694 = vunpack.c.l.b16 %v2574
  %v2695 = vunpack.c.h.b16 %v2574
  %v2696 = vunpack.c.l.b16 %v2575
  %v2697 = vunpack.c.h.b16 %v2575
  %v2698 = vunpack.c.l.b16 %v2576
  %v2699 = vunpack.c.h.b16 %v2576
  %v2700 = vunpack.c.l.b16 %v2577
  %v2701 = vunpack.c.h.b16 %v2577
  %v2702 = vunpack.c.l.b16 %v2578
  %v2703 = vunpack.c.h.b16 %v2578
  %v2704 = vunpack.c.l.b16 %v2579
  %v2705 = vunpack.c.h.b16 %v2579
  %v2706 = vunpack.c.l.b16 %v2580
  %v2707 = vunpack.c.h.b16 %v2580
  %v2708 = vunpack.c.l.b16 %v2581
  %v2709 = vunpack.c.h.b16 %v2581
  %v2710 = vunpack.c.l.b16 %v2582
  %v2711 = vunpack.c.l.b16 %v2583
  %v2712 = vunpack.c.h.b16 %v2583
  %v2713 = vunpack.c.l.b16 %v2584
  %v2714 = vunpack.c.h.b16 %v2584
  %v2715 = vunpack.c.l.b16 %v2585
  %v2716 = vunpack.c.h.b16 %v2585
  %v2717 = vunpack.c.l.b16 %v2586
  %v2718 = vunpack.c.h.b16 %v2586
  %v2719 = vunpack.c.l.b16 %v2587
  %v2720 = vunpack.c.h.b16 %v2587
  %v2721 = vunpack.c.l.b16 %v2588
  %v2722 = vunpack.c.h.b16 %v2588
  %v2723 = vunpack.c.l.b16 %v2589
  %v2724 = vunpack.c.h.b16 %v2589
  %v2725 = vunpack.c.l.b16 %v2590
  %v2726 = vunpack.c.h.b16 %v2590
  %v2727 = vunpack.c.l.b16 %v2591
  %v2728 = vunpack.c.h.b16 %v2591
  %v2729 = vunpack.c.l.b16 %v2592
  %v2730 = vunpack.c.h.b16 %v2592
  %v2731 = vunpack.c.l.b16 %v2593
  %v2732 = vunpack.c.h.b16 %v2593
  %v2733 = vunpack.c.l.b16 %v2594
  %v2734 = vunpack.c.h.b16 %v2594
  %v2735 = vunpack.c.l.b16 %v2595
  %v2736 = vunpack.c.l.b16 %v2596
  %v2737 = vunpack.c.h.b16 %v2596
  %v2738 = vunpack.c.l.b16 %v2597
  %v2739 = vunpack.c.h.b16 %v2597
  %v2740 = vunpack.c.l.b16 %v2598
  %v2741 = vunpack.c.h.b16 %v2598
  %v2742 = vunpack.c.l.b16 %v2599
  %v2743 = vunpack.c.h.b16 %v2599
  %v2744 = vunpack.c.l.b16 %v2600
  %v2745 = vunpack.c.h.b16 %v2600
  %v2746 = vunpack.c.l.b16 %v2601
  %v2747 = vunpack.c.h.b16 %v2601
  %v2748 = vunpack.c.l.b16 %v2602
  %v2749 = vunpack.c.h.b16 %v2602
  %v2750 = vunpack.c.l.b16 %v2603
  %v2751 = vunpack.c.h.b16 %v2603
  %v2752 = vunpack.c.l.b16 %v2604
  %v2753 = vunpack.c.h.b16 %v2604
  %v2754 = vunpack.c.l.b16 %v2605
  %v2755 = vunpack.c.h.b16 %v2605
  %v2756 = vunpack.c.l.b16 %v2606
  %v2757 = vunpack.c.h.b16 %v2606
  %v2758 = vunpack.c.l.b16 %v2607
  %v2759 = vunpack.c.h.b16 %v2607
  %v2760 = vunpack.c.l.b16 %v2608
  %v2761 = vpack.c.b16 %v2686, %v2661
  %v2762 = vpack.c.b16 %v2687, %v2662
  %v2763 = vpack.c.b16 %v2688, %v2663
  %v2764 = vpack.c.b16 %v2689, %v2664
  %v2765 = vpack.c.b16 %v2690, %v2665
  %v2766 = vpack.c.b16 %v2691, %v2666
  %v2767 = vpack.c.b16 %v2692, %v2667
  %v2768 = vpack.c.b16 %v2693, %v2668
  %v2769 = vpack.c.b16 %v2694, %v2669
  %v2770 = vpack.c.b16 %v2695, %v2670
  %v2771 = vpack.c.b16 %v2696, %v2671
  %v2772 = vpack.c.b16 %v2697, %v2672
  %v2773 = vpack.c.b16 %v2698, %v2673
  %v2774 = vpack.c.b16 %v2699, %v2674
  %v2775 = vpack.c.b16 %v2700, %v2675
  %v2776 = vpack.c.b16 %v2701, %v2676
  %v2777 = vpack.c.b16 %v2702, %v2677
  %v2778 = vpack.c.b16 %v2703, %v2678
  %v2779 = vpack.c.b16 %v2704, %v2679
  %v2780 = vpack.c.b16 %v2705, %v2680
  %v2781 = vpack.c.b16 %v2706, %v2681
  %v2782 = vpack.c.b16 %v2707, %v2682
  %v2783 = vpack.c.b16 %v2708, %v2683
  %v2784 = vpack.c.b16 %v2709, %v2684
  %v2785 = vpack.c.b16 %v2710, %v2685
  %v2786 = vpack.c.b16 %v2736, %v2711
  %v2787 = vpack.c.b16 %v2737, %v2712
  %v2788 = vpack.c.b16 %v2738, %v2713
  %v2789 = vpack.c.b16 %v2739, %v2714
  %v2790 = vpack.c.b16 %v2740, %v2715
  %v2791 = vpack.c.b16 %v2741, %v2716
  %v2792 = vpack.c.b16 %v2742, %v2717
  %v2793 = vpack.c.b16 %v2743, %v2718
  %v2794 = vpack.c.b16 %v2744, %v2719
  %v2795 = vpack.c.b16 %v2745, %v2720
  %v2796 = vpack.c.b16 %v2746, %v2721
  %v2797 = vpack.c.b16 %v2747, %v2722
  %v2798 = vpack.c.b16 %v2748, %v2723
  %v2799 = vpack.c.b16 %v2749, %v2724
  %v2800 = vpack.c.b16 %v2750, %v2725
  %v2801 = vpack.c.b16 %v2751, %v2726
  %v2802 = vpack.c.b16 %v2752, %v2727
  %v2803 = vpack.c.b16 %v2753, %v2728
  %v2804 = vpack.c.b16 %v2754, %v2729
  %v2805 = vpack.c.b16 %v2755, %v2730
  %v2806 = vpack.c.b16 %v2756, %v2731
  %v2807 = vpack.c.b16 %v2757, %v2732
  %v2808 = vpack.c.b16 %v2758, %v2733
  %v2809 = vpack.c.b16 %v2759, %v2734
  %v2810 = vpack.c.b16 %v2760, %v2735
  %2861 = vmatprep.subr.bf16.mxu0 0
  %2862 = vmatpush1.bf16.msra.mxu0 %v1519
  %2863 = vmatprep.subr.bf16.mxu0 0
  %2864 = vmatpush1.bf16.msra.mxu0 %v1520
  %2865 = vmatprep.subr.bf16.mxu0 0
  %2866 = vmatpush1.bf16.msra.mxu0 %v1521
  %2867 = vmatprep.subr.bf16.mxu0 0
  %2868 = vmatpush1.bf16.msra.mxu0 %v1522
  %2869 = vmatprep.subr.bf16.mxu0 0
  %2870 = vmatpush1.bf16.msra.mxu0 %v1523
  %2871 = vmatprep.subr.bf16.mxu0 0
  %2872 = vmatpush1.bf16.msra.mxu0 %v1524
  %2873 = vmatprep.subr.bf16.mxu0 0
  %2874 = vmatpush1.bf16.msra.mxu0 %v1525
  %2875 = vmatprep.subr.bf16.mxu0 0
  %2876 = vmatpush1.bf16.msra.mxu0 %v1526
  %2877 = vmatprep.subr.bf16.mxu0 0
  %2878 = vmatpush1.bf16.msra.mxu0 %v1527
  %2879 = vmatprep.subr.bf16.mxu0 0
  %2880 = vmatpush1.bf16.msra.mxu0 %v1528
  %2881 = vmatprep.subr.bf16.mxu0 0
  %2882 = vmatpush1.bf16.msra.mxu0 %v1529
  %2883 = vmatprep.subr.bf16.mxu0 0
  %2884 = vmatpush1.bf16.msra.mxu0 %v1530
  %2885 = vmatprep.subr.bf16.mxu0 0
  %2886 = vmatpush1.bf16.msra.mxu0 %v1531
  %2887 = vmatprep.subr.bf16.mxu0 0
  %2888 = vmatpush1.bf16.msra.mxu0 %v1532
  %2889 = vmatprep.subr.bf16.mxu0 0
  %2890 = vmatpush1.bf16.msra.mxu0 %v1533
  %2891 = vmatprep.subr.bf16.mxu0 0
  %2892 = vmatpush1.bf16.msra.mxu0 %v1534
  %2893 = vmatprep.mubr.bf16.mxu0 %v2762
  %2894 = vmatmul.mubr.bf16.gmra.mrb[0].mxu0 %v2761
  %v2895 = vpop.f32.mrb[0].mxu0
  %v2896 = vadd.f32 0.0, %v2895
  %v2897 = vpop.f32.mrb[0].mxu0
  %v2898 = vpop.f32.mrb[0].mxu0
  %v2899 = vadd.f32 0.0, %v2898
  %v2900 = vpop.f32.mrb[0].mxu0
  %2901 = vmatprep.mubr.bf16.mxu0 %v2787
  %2902 = vmatmul.mubr.bf16.gmra.mrb[0].mxu0 %v2786
  %v2903 = vpop.f32.mrb[0].mxu0
  %v2904 = vadd.f32 0.0, %v2903
  %v2905 = vpop.f32.mrb[0].mxu0
  %v2906 = vpop.f32.mrb[0].mxu0
  %v2907 = vadd.f32 0.0, %v2906
  %v2908 = vpop.f32.mrb[0].mxu0
  %2909 = vdwg.mxu0
  %2910 = vmatprep.subr.bf16.mxu0 0
  %2911 = vmatpush1.bf16.msra.mxu0 %v1535
  %2912 = vmatprep.subr.bf16.mxu0 0
  %2913 = vmatpush1.bf16.msra.mxu0 %v1536
  %2914 = vmatprep.subr.bf16.mxu0 0
  %2915 = vmatpush1.bf16.msra.mxu0 %v1537
  %2916 = vmatprep.subr.bf16.mxu0 0
  %2917 = vmatpush1.bf16.msra.mxu0 %v1538
  %2918 = vmatprep.subr.bf16.mxu0 0
  %2919 = vmatpush1.bf16.msra.mxu0 %v1539
  %2920 = vmatprep.subr.bf16.mxu0 0
  %2921 = vmatpush1.bf16.msra.mxu0 %v1540
  %2922 = vmatprep.subr.bf16.mxu0 0
  %2923 = vmatpush1.bf16.msra.mxu0 %v1541
  %2924 = vmatprep.subr.bf16.mxu0 0
  %2925 = vmatpush1.bf16.msra.mxu0 %v1542
  %2926 = vmatprep.subr.bf16.mxu0 0
  %2927 = vmatpush1.bf16.msra.mxu0 %v1543
  %2928 = vmatprep.subr.bf16.mxu0 0
  %2929 = vmatpush1.bf16.msra.mxu0 %v1544
  %2930 = vmatprep.subr.bf16.mxu0 0
  %2931 = vmatpush1.bf16.msra.mxu0 %v1545
  %2932 = vmatprep.subr.bf16.mxu0 0
  %2933 = vmatpush1.bf16.msra.mxu0 %v1546
  %2934 = vmatprep.subr.bf16.mxu0 0
  %2935 = vmatpush1.bf16.msra.mxu0 %v1547
  %2936 = vmatprep.subr.bf16.mxu0 0
  %2937 = vmatpush1.bf16.msra.mxu0 %v1548
  %2938 = vmatprep.subr.bf16.mxu0 0
  %2939 = vmatpush1.bf16.msra.mxu0 %v1549
  %2940 = vmatprep.subr.bf16.mxu0 0
  %2941 = vmatpush1.bf16.msra.mxu0 %v1550
  %2942 = vmatprep.mubr.bf16.mxu0 %v2764
  %2943 = vmatmul.mubr.bf16.gmra.mrb[0].mxu0 %v2763
  %v2944 = vpop.f32.mrb[0].mxu0
  %v2945 = vadd.f32 %v2896, %v2944
  %v2946 = vpop.f32.mrb[0].mxu0
  %v2947 = vpop.f32.mrb[0].mxu0
  %v2948 = vadd.f32 %v2899, %v2947
  %v2949 = vpop.f32.mrb[0].mxu0
  %2950 = vmatprep.mubr.bf16.mxu0 %v2789
  %2951 = vmatmul.mubr.bf16.gmra.mrb[0].mxu0 %v2788
  %v2952 = vpop.f32.mrb[0].mxu0
  %v2953 = vadd.f32 %v2904, %v2952
  %v2954 = vpop.f32.mrb[0].mxu0
  %v2955 = vpop.f32.mrb[0].mxu0
  %v2956 = vadd.f32 %v2907, %v2955
  %v2957 = vpop.f32.mrb[0].mxu0
  %2958 = vdwg.mxu0
  %2959 = vmatprep.subr.bf16.mxu0 0
  %2960 = vmatpush1.bf16.msra.mxu0 %v1551
  %2961 = vmatprep.subr.bf16.mxu0 0
  %2962 = vmatpush1.bf16.msra.mxu0 %v1552
  %2963 = vmatprep.subr.bf16.mxu0 0
  %2964 = vmatpush1.bf16.msra.mxu0 %v1553
  %2965 = vmatprep.subr.bf16.mxu0 0
  %2966 = vmatpush1.bf16.msra.mxu0 %v1554
  %2967 = vmatprep.subr.bf16.mxu0 0
  %2968 = vmatpush1.bf16.msra.mxu0 %v1555
  %2969 = vmatprep.subr.bf16.mxu0 0
  %2970 = vmatpush1.bf16.msra.mxu0 %v1556
  %2971 = vmatprep.subr.bf16.mxu0 0
  %2972 = vmatpush1.bf16.msra.mxu0 %v1557
  %2973 = vmatprep.subr.bf16.mxu0 0
  %2974 = vmatpush1.bf16.msra.mxu0 %v1558
  %2975 = vmatprep.subr.bf16.mxu0 0
  %2976 = vmatpush1.bf16.msra.mxu0 %v1559
  %2977 = vmatprep.subr.bf16.mxu0 0
  %2978 = vmatpush1.bf16.msra.mxu0 %v1560
  %2979 = vmatprep.subr.bf16.mxu0 0
  %2980 = vmatpush1.bf16.msra.mxu0 %v1561
  %2981 = vmatprep.subr.bf16.mxu0 0
  %2982 = vmatpush1.bf16.msra.mxu0 %v1562
  %2983 = vmatprep.subr.bf16.mxu0 0
  %2984 = vmatpush1.bf16.msra.mxu0 %v1563
  %2985 = vmatprep.subr.bf16.mxu0 0
  %2986 = vmatpush1.bf16.msra.mxu0 %v1564
  %2987 = vmatprep.subr.bf16.mxu0 0
  %2988 = vmatpush1.bf16.msra.mxu0 %v1565
  %2989 = vmatprep.subr.bf16.mxu0 0
  %2990 = vmatpush1.bf16.msra.mxu0 %v1566
  %2991 = vmatprep.mubr.bf16.mxu0 %v2766
  %2992 = vmatmul.mubr.bf16.gmra.mrb[0].mxu0 %v2765
  %v2993 = vpop.f32.mrb[0].mxu0
  %v2994 = vadd.f32 %v2945, %v2993
  %v2995 = vpop.f32.mrb[0].mxu0
  %v2996 = vpop.f32.mrb[0].mxu0
  %v2997 = vadd.f32 %v2948, %v2996
  %v2998 = vpop.f32.mrb[0].mxu0
  %2999 = vmatprep.mubr.bf16.mxu0 %v2791
  %3000 = vmatmul.mubr.bf16.gmra.mrb[0].mxu0 %v2790
  %v3001 = vpop.f32.mrb[0].mxu0
  %v3002 = vadd.f32 %v2953, %v3001
  %v3003 = vpop.f32.mrb[0].mxu0
  %v3004 = vpop.f32.mrb[0].mxu0
  %v3005 = vadd.f32 %v2956, %v3004
  %v3006 = vpop.f32.mrb[0].mxu0
  %3007 = vdwg.mxu0
  %3008 = vmatprep.subr.bf16.mxu0 0
  %3009 = vmatpush1.bf16.msra.mxu0 %v1567
  %3010 = vmatprep.subr.bf16.mxu0 0
  %3011 = vmatpush1.bf16.msra.mxu0 %v1568
  %3012 = vmatprep.subr.bf16.mxu0 0
  %3013 = vmatpush1.bf16.msra.mxu0 %v1569
  %3014 = vmatprep.subr.bf16.mxu0 0
  %3015 = vmatpush1.bf16.msra.mxu0 %v1570
  %3016 = vmatprep.subr.bf16.mxu0 0
  %3017 = vmatpush1.bf16.msra.mxu0 %v1571
  %3018 = vmatprep.subr.bf16.mxu0 0
  %3019 = vmatpush1.bf16.msra.mxu0 %v1572
  %3020 = vmatprep.subr.bf16.mxu0 0
  %3021 = vmatpush1.bf16.msra.mxu0 %v1573
  %3022 = vmatprep.subr.bf16.mxu0 0
  %3023 = vmatpush1.bf16.msra.mxu0 %v1574
  %3024 = vmatprep.subr.bf16.mxu0 0
  %3025 = vmatpush1.bf16.msra.mxu0 %v1575
  %3026 = vmatprep.subr.bf16.mxu0 0
  %3027 = vmatpush1.bf16.msra.mxu0 %v1576
  %3028 = vmatprep.subr.bf16.mxu0 0
  %3029 = vmatpush1.bf16.msra.mxu0 %v1577
  %3030 = vmatprep.subr.bf16.mxu0 0
  %3031 = vmatpush1.bf16.msra.mxu0 %v1578
  %3032 = vmatprep.subr.bf16.mxu0 0
  %3033 = vmatpush1.bf16.msra.mxu0 %v1579
  %3034 = vmatprep.subr.bf16.mxu0 0
  %3035 = vmatpush1.bf16.msra.mxu0 %v1580
  %3036 = vmatprep.subr.bf16.mxu0 0
  %3037 = vmatpush1.bf16.msra.mxu0 %v1581
  %3038 = vmatprep.subr.bf16.mxu0 0
  %3039 = vmatpush1.bf16.msra.mxu0 %v1582
  %3040 = vmatprep.mubr.bf16.mxu0 %v2768
  %3041 = vmatmul.mubr.bf16.gmra.mrb[0].mxu0 %v2767
  %v3042 = vpop.f32.mrb[0].mxu0
  %v3043 = vadd.f32 %v2994, %v3042
  %v3044 = vpop.f32.mrb[0].mxu0
  %v3045 = vpop.f32.mrb[0].mxu0
  %v3046 = vadd.f32 %v2997, %v3045
  %v3047 = vpop.f32.mrb[0].mxu0
  %3048 = vmatprep.mubr.bf16.mxu0 %v2793
  %3049 = vmatmul.mubr.bf16.gmra.mrb[0].mxu0 %v2792
  %v3050 = vpop.f32.mrb[0].mxu0
  %v3051 = vadd.f32 %v3002, %v3050
  %v3052 = vpop.f32.mrb[0].mxu0
  %v3053 = vpop.f32.mrb[0].mxu0
  %v3054 = vadd.f32 %v3005, %v3053
  %v3055 = vpop.f32.mrb[0].mxu0
  %3056 = vdwg.mxu0
  %3057 = vmatprep.subr.bf16.mxu0 0
  %3058 = vmatpush1.bf16.msra.mxu0 %v1583
  %3059 = vmatprep.subr.bf16.mxu0 0
  %3060 = vmatpush1.bf16.msra.mxu0 %v1584
  %3061 = vmatprep.subr.bf16.mxu0 0
  %3062 = vmatpush1.bf16.msra.mxu0 %v1585
  %3063 = vmatprep.subr.bf16.mxu0 0
  %3064 = vmatpush1.bf16.msra.mxu0 %v1586
  %3065 = vmatprep.subr.bf16.mxu0 0
  %3066 = vmatpush1.bf16.msra.mxu0 %v1587
  %3067 = vmatprep.subr.bf16.mxu0 0
  %3068 = vmatpush1.bf16.msra.mxu0 %v1588
  %3069 = vmatprep.subr.bf16.mxu0 0
  %3070 = vmatpush1.bf16.msra.mxu0 %v1589
  %3071 = vmatprep.subr.bf16.mxu0 0
  %3072 = vmatpush1.bf16.msra.mxu0 %v1590
  %3073 = vmatprep.subr.bf16.mxu0 0
  %3074 = vmatpush1.bf16.msra.mxu0 %v1591
  %3075 = vmatprep.subr.bf16.mxu0 0
  %3076 = vmatpush1.bf16.msra.mxu0 %v1592
  %3077 = vmatprep.subr.bf16.mxu0 0
  %3078 = vmatpush1.bf16.msra.mxu0 %v1593
  %3079 = vmatprep.subr.bf16.mxu0 0
  %3080 = vmatpush1.bf16.msra.mxu0 %v1594
  %3081 = vmatprep.subr.bf16.mxu0 0
  %3082 = vmatpush1.bf16.msra.mxu0 %v1595
  %3083 = vmatprep.subr.bf16.mxu0 0
  %3084 = vmatpush1.bf16.msra.mxu0 %v1596
  %3085 = vmatprep.subr.bf16.mxu0 0
  %3086 = vmatpush1.bf16.msra.mxu0 %v1597
  %3087 = vmatprep.subr.bf16.mxu0 0
  %3088 = vmatpush1.bf16.msra.mxu0 %v1598
  %3089 = vmatprep.mubr.bf16.mxu0 %v2770
  %3090 = vmatmul.mubr.bf16.gmra.mrb[0].mxu0 %v2769
  %v3091 = vpop.f32.mrb[0].mxu0
  %v3092 = vadd.f32 %v3043, %v3091
  %v3093 = vpop.f32.mrb[0].mxu0
  %v3094 = vpop.f32.mrb[0].mxu0
  %v3095 = vadd.f32 %v3046, %v3094
  %v3096 = vpop.f32.mrb[0].mxu0
  %3097 = vmatprep.mubr.bf16.mxu0 %v2795
  %3098 = vmatmul.mubr.bf16.gmra.mrb[0].mxu0 %v2794
  %v3099 = vpop.f32.mrb[0].mxu0
  %v3100 = vadd.f32 %v3051, %v3099
  %v3101 = vpop.f32.mrb[0].mxu0
  %v3102 = vpop.f32.mrb[0].mxu0
  %v3103 = vadd.f32 %v3054, %v3102
  %v3104 = vpop.f32.mrb[0].mxu0
  %3105 = vdwg.mxu0
  %3106 = vmatprep.subr.bf16.mxu0 0
  %3107 = vmatpush1.bf16.msra.mxu0 %v1599
  %3108 = vmatprep.subr.bf16.mxu0 0
  %3109 = vmatpush1.bf16.msra.mxu0 %v1600
  %3110 = vmatprep.subr.bf16.mxu0 0
  %3111 = vmatpush1.bf16.msra.mxu0 %v1601
  %3112 = vmatprep.subr.bf16.mxu0 0
  %3113 = vmatpush1.bf16.msra.mxu0 %v1602
  %3114 = vmatprep.subr.bf16.mxu0 0
  %3115 = vmatpush1.bf16.msra.mxu0 %v1603
  %3116 = vmatprep.subr.bf16.mxu0 0
  %3117 = vmatpush1.bf16.msra.mxu0 %v1604
  %3118 = vmatprep.subr.bf16.mxu0 0
  %3119 = vmatpush1.bf16.msra.mxu0 %v1605
  %3120 = vmatprep.subr.bf16.mxu0 0
  %3121 = vmatpush1.bf16.msra.mxu0 %v1606
  %3122 = vmatprep.subr.bf16.mxu0 0
  %3123 = vmatpush1.bf16.msra.mxu0 %v1607
  %3124 = vmatprep.subr.bf16.mxu0 0
  %3125 = vmatpush1.bf16.msra.mxu0 %v1608
  %3126 = vmatprep.subr.bf16.mxu0 0
  %3127 = vmatpush1.bf16.msra.mxu0 %v1609
  %3128 = vmatprep.subr.bf16.mxu0 0
  %3129 = vmatpush1.bf16.msra.mxu0 %v1610
  %3130 = vmatprep.subr.bf16.mxu0 0
  %3131 = vmatpush1.bf16.msra.mxu0 %v1611
  %3132 = vmatprep.subr.bf16.mxu0 0
  %3133 = vmatpush1.bf16.msra.mxu0 %v1612
  %3134 = vmatprep.subr.bf16.mxu0 0
  %3135 = vmatpush1.bf16.msra.mxu0 %v1613
  %3136 = vmatprep.subr.bf16.mxu0 0
  %3137 = vmatpush1.bf16.msra.mxu0 %v1614
  %3138 = vmatprep.mubr.bf16.mxu0 %v2772
  %3139 = vmatmul.mubr.bf16.gmra.mrb[0].mxu0 %v2771
  %v3140 = vpop.f32.mrb[0].mxu0
  %v3141 = vadd.f32 %v3092, %v3140
  %v3142 = vpop.f32.mrb[0].mxu0
  %v3143 = vpop.f32.mrb[0].mxu0
  %v3144 = vadd.f32 %v3095, %v3143
  %v3145 = vpop.f32.mrb[0].mxu0
  %3146 = vmatprep.mubr.bf16.mxu0 %v2797
  %3147 = vmatmul.mubr.bf16.gmra.mrb[0].mxu0 %v2796
  %v3148 = vpop.f32.mrb[0].mxu0
  %v3149 = vadd.f32 %v3100, %v3148
  %v3150 = vpop.f32.mrb[0].mxu0
  %v3151 = vpop.f32.mrb[0].mxu0
  %v3152 = vadd.f32 %v3103, %v3151
  %v3153 = vpop.f32.mrb[0].mxu0
  %3154 = vdwg.mxu0
  %3155 = vmatprep.subr.bf16.mxu0 0
  %3156 = vmatpush1.bf16.msra.mxu0 %v1615
  %3157 = vmatprep.subr.bf16.mxu0 0
  %3158 = vmatpush1.bf16.msra.mxu0 %v1616
  %3159 = vmatprep.subr.bf16.mxu0 0
  %3160 = vmatpush1.bf16.msra.mxu0 %v1617
  %3161 = vmatprep.subr.bf16.mxu0 0
  %3162 = vmatpush1.bf16.msra.mxu0 %v1618
  %3163 = vmatprep.subr.bf16.mxu0 0
  %3164 = vmatpush1.bf16.msra.mxu0 %v1619
  %3165 = vmatprep.subr.bf16.mxu0 0
  %3166 = vmatpush1.bf16.msra.mxu0 %v1620
  %3167 = vmatprep.subr.bf16.mxu0 0
  %3168 = vmatpush1.bf16.msra.mxu0 %v1621
  %3169 = vmatprep.subr.bf16.mxu0 0
  %3170 = vmatpush1.bf16.msra.mxu0 %v1622
  %3171 = vmatprep.subr.bf16.mxu0 0
  %3172 = vmatpush1.bf16.msra.mxu0 %v1623
  %3173 = vmatprep.subr.bf16.mxu0 0
  %3174 = vmatpush1.bf16.msra.mxu0 %v1624
  %3175 = vmatprep.subr.bf16.mxu0 0
  %3176 = vmatpush1.bf16.msra.mxu0 %v1625
  %3177 = vmatprep.subr.bf16.mxu0 0
  %3178 = vmatpush1.bf16.msra.mxu0 %v1626
  %3179 = vmatprep.subr.bf16.mxu0 0
  %3180 = vmatpush1.bf16.msra.mxu0 %v1627
  %3181 = vmatprep.subr.bf16.mxu0 0
  %3182 = vmatpush1.bf16.msra.mxu0 %v1628
  %3183 = vmatprep.subr.bf16.mxu0 0
  %3184 = vmatpush1.bf16.msra.mxu0 %v1629
  %3185 = vmatprep.subr.bf16.mxu0 0
  %3186 = vmatpush1.bf16.msra.mxu0 %v1630
  %3187 = vmatprep.mubr.bf16.mxu0 %v2774
  %3188 = vmatmul.mubr.bf16.gmra.mrb[0].mxu0 %v2773
  %v3189 = vpop.f32.mrb[0].mxu0
  %v3190 = vadd.f32 %v3141, %v3189
  %v3191 = vpop.f32.mrb[0].mxu0
  %v3192 = vpop.f32.mrb[0].mxu0
  %v3193 = vadd.f32 %v3144, %v3192
  %v3194 = vpop.f32.mrb[0].mxu0
  %3195 = vmatprep.mubr.bf16.mxu0 %v2799
  %3196 = vmatmul.mubr.bf16.gmra.mrb[0].mxu0 %v2798
  %v3197 = vpop.f32.mrb[0].mxu0
  %v3198 = vadd.f32 %v3149, %v3197
  %v3199 = vpop.f32.mrb[0].mxu0
  %v3200 = vpop.f32.mrb[0].mxu0
  %v3201 = vadd.f32 %v3152, %v3200
  %v3202 = vpop.f32.mrb[0].mxu0
  %3203 = vdwg.mxu0
  %3204 = vmatprep.subr.bf16.mxu0 0
  %3205 = vmatpush1.bf16.msra.mxu0 %v1631
  %3206 = vmatprep.subr.bf16.mxu0 0
  %3207 = vmatpush1.bf16.msra.mxu0 %v1632
  %3208 = vmatprep.subr.bf16.mxu0 0
  %3209 = vmatpush1.bf16.msra.mxu0 %v1633
  %3210 = vmatprep.subr.bf16.mxu0 0
  %3211 = vmatpush1.bf16.msra.mxu0 %v1634
  %3212 = vmatprep.subr.bf16.mxu0 0
  %3213 = vmatpush1.bf16.msra.mxu0 %v1635
  %3214 = vmatprep.subr.bf16.mxu0 0
  %3215 = vmatpush1.bf16.msra.mxu0 %v1636
  %3216 = vmatprep.subr.bf16.mxu0 0
  %3217 = vmatpush1.bf16.msra.mxu0 %v1637
  %3218 = vmatprep.subr.bf16.mxu0 0
  %3219 = vmatpush1.bf16.msra.mxu0 %v1638
  %3220 = vmatprep.subr.bf16.mxu0 0
  %3221 = vmatpush1.bf16.msra.mxu0 %v1639
  %3222 = vmatprep.subr.bf16.mxu0 0
  %3223 = vmatpush1.bf16.msra.mxu0 %v1640
  %3224 = vmatprep.subr.bf16.mxu0 0
  %3225 = vmatpush1.bf16.msra.mxu0 %v1641
  %3226 = vmatprep.subr.bf16.mxu0 0
  %3227 = vmatpush1.bf16.msra.mxu0 %v1642
  %3228 = vmatprep.subr.bf16.mxu0 0
  %3229 = vmatpush1.bf16.msra.mxu0 %v1643
  %3230 = vmatprep.subr.bf16.mxu0 0
  %3231 = vmatpush1.bf16.msra.mxu0 %v1644
  %3232 = vmatprep.subr.bf16.mxu0 0
  %3233 = vmatpush1.bf16.msra.mxu0 %v1645
  %3234 = vmatprep.subr.bf16.mxu0 0
  %3235 = vmatpush1.bf16.msra.mxu0 %v1646
  %3236 = vmatprep.mubr.bf16.mxu0 %v2776
  %3237 = vmatmul.mubr.bf16.gmra.mrb[0].mxu0 %v2775
  %v3238 = vpop.f32.mrb[0].mxu0
  %v3239 = vadd.f32 %v3190, %v3238
  %v3240 = vpop.f32.mrb[0].mxu0
  %v3241 = vpop.f32.mrb[0].mxu0
  %v3242 = vadd.f32 %v3193, %v3241
  %v3243 = vpop.f32.mrb[0].mxu0
  %3244 = vmatprep.mubr.bf16.mxu0 %v2801
  %3245 = vmatmul.mubr.bf16.gmra.mrb[0].mxu0 %v2800
  %v3246 = vpop.f32.mrb[0].mxu0
  %v3247 = vadd.f32 %v3198, %v3246
  %v3248 = vpop.f32.mrb[0].mxu0
  %v3249 = vpop.f32.mrb[0].mxu0
  %v3250 = vadd.f32 %v3201, %v3249
  %v3251 = vpop.f32.mrb[0].mxu0
  %3252 = vdwg.mxu0
  %3253 = vmatprep.subr.bf16.mxu0 0
  %3254 = vmatpush1.bf16.msra.mxu0 %v1647
  %3255 = vmatprep.subr.bf16.mxu0 0
  %3256 = vmatpush1.bf16.msra.mxu0 %v1648
  %3257 = vmatprep.subr.bf16.mxu0 0
  %3258 = vmatpush1.bf16.msra.mxu0 %v1649
  %3259 = vmatprep.subr.bf16.mxu0 0
  %3260 = vmatpush1.bf16.msra.mxu0 %v1650
  %3261 = vmatprep.subr.bf16.mxu0 0
  %3262 = vmatpush1.bf16.msra.mxu0 %v1651
  %3263 = vmatprep.subr.bf16.mxu0 0
  %3264 = vmatpush1.bf16.msra.mxu0 %v1652
  %3265 = vmatprep.subr.bf16.mxu0 0
  %3266 = vmatpush1.bf16.msra.mxu0 %v1653
  %3267 = vmatprep.subr.bf16.mxu0 0
  %3268 = vmatpush1.bf16.msra.mxu0 %v1654
  %3269 = vmatprep.subr.bf16.mxu0 0
  %3270 = vmatpush1.bf16.msra.mxu0 %v1655
  %3271 = vmatprep.subr.bf16.mxu0 0
  %3272 = vmatpush1.bf16.msra.mxu0 %v1656
  %3273 = vmatprep.subr.bf16.mxu0 0
  %3274 = vmatpush1.bf16.msra.mxu0 %v1657
  %3275 = vmatprep.subr.bf16.mxu0 0
  %3276 = vmatpush1.bf16.msra.mxu0 %v1658
  %3277 = vmatprep.subr.bf16.mxu0 0
  %3278 = vmatpush1.bf16.msra.mxu0 %v1659
  %3279 = vmatprep.subr.bf16.mxu0 0
  %3280 = vmatpush1.bf16.msra.mxu0 %v1660
  %3281 = vmatprep.subr.bf16.mxu0 0
  %3282 = vmatpush1.bf16.msra.mxu0 %v1661
  %3283 = vmatprep.subr.bf16.mxu0 0
  %3284 = vmatpush1.bf16.msra.mxu0 %v1662
  %3285 = vmatprep.mubr.bf16.mxu0 %v2778
  %3286 = vmatmul.mubr.bf16.gmra.mrb[0].mxu0 %v2777
  %v3287 = vpop.f32.mrb[0].mxu0
  %v3288 = vadd.f32 %v3239, %v3287
  %v3289 = vpop.f32.mrb[0].mxu0
  %v3290 = vpop.f32.mrb[0].mxu0
  %v3291 = vadd.f32 %v3242, %v3290
  %v3292 = vpop.f32.mrb[0].mxu0
  %3293 = vmatprep.mubr.bf16.mxu0 %v2803
  %3294 = vmatmul.mubr.bf16.gmra.mrb[0].mxu0 %v2802
  %v3295 = vpop.f32.mrb[0].mxu0
  %v3296 = vadd.f32 %v3247, %v3295
  %v3297 = vpop.f32.mrb[0].mxu0
  %v3298 = vpop.f32.mrb[0].mxu0
  %v3299 = vadd.f32 %v3250, %v3298
  %v3300 = vpop.f32.mrb[0].mxu0
  %3301 = vdwg.mxu0
  %3302 = vmatprep.subr.bf16.mxu0 0
  %3303 = vmatpush1.bf16.msra.mxu0 %v1663
  %3304 = vmatprep.subr.bf16.mxu0 0
  %3305 = vmatpush1.bf16.msra.mxu0 %v1664
  %3306 = vmatprep.subr.bf16.mxu0 0
  %3307 = vmatpush1.bf16.msra.mxu0 %v1665
  %3308 = vmatprep.subr.bf16.mxu0 0
  %3309 = vmatpush1.bf16.msra.mxu0 %v1666
  %3310 = vmatprep.subr.bf16.mxu0 0
  %3311 = vmatpush1.bf16.msra.mxu0 %v1667
  %3312 = vmatprep.subr.bf16.mxu0 0
  %3313 = vmatpush1.bf16.msra.mxu0 %v1668
  %3314 = vmatprep.subr.bf16.mxu0 0
  %3315 = vmatpush1.bf16.msra.mxu0 %v1669
  %3316 = vmatprep.subr.bf16.mxu0 0
  %3317 = vmatpush1.bf16.msra.mxu0 %v1670
  %3318 = vmatprep.subr.bf16.mxu0 0
  %3319 = vmatpush1.bf16.msra.mxu0 %v1671
  %3320 = vmatprep.subr.bf16.mxu0 0
  %3321 = vmatpush1.bf16.msra.mxu0 %v1672
  %3322 = vmatprep.subr.bf16.mxu0 0
  %3323 = vmatpush1.bf16.msra.mxu0 %v1673
  %3324 = vmatprep.subr.bf16.mxu0 0
  %3325 = vmatpush1.bf16.msra.mxu0 %v1674
  %3326 = vmatprep.subr.bf16.mxu0 0
  %3327 = vmatpush1.bf16.msra.mxu0 %v1675
  %3328 = vmatprep.subr.bf16.mxu0 0
  %3329 = vmatpush1.bf16.msra.mxu0 %v1676
  %3330 = vmatprep.subr.bf16.mxu0 0
  %3331 = vmatpush1.bf16.msra.mxu0 %v1677
  %3332 = vmatprep.subr.bf16.mxu0 0
  %3333 = vmatpush1.bf16.msra.mxu0 %v1678
  %3334 = vmatprep.mubr.bf16.mxu0 %v2780
  %3335 = vmatmul.mubr.bf16.gmra.mrb[0].mxu0 %v2779
  %v3336 = vpop.f32.mrb[0].mxu0
  %v3337 = vadd.f32 %v3288, %v3336
  %v3338 = vpop.f32.mrb[0].mxu0
  %v3339 = vpop.f32.mrb[0].mxu0
  %v3340 = vadd.f32 %v3291, %v3339
  %v3341 = vpop.f32.mrb[0].mxu0
  %3342 = vmatprep.mubr.bf16.mxu0 %v2805
  %3343 = vmatmul.mubr.bf16.gmra.mrb[0].mxu0 %v2804
  %v3344 = vpop.f32.mrb[0].mxu0
  %v3345 = vadd.f32 %v3296, %v3344
  %v3346 = vpop.f32.mrb[0].mxu0
  %v3347 = vpop.f32.mrb[0].mxu0
  %v3348 = vadd.f32 %v3299, %v3347
  %v3349 = vpop.f32.mrb[0].mxu0
  %3350 = vdwg.mxu0
  %3351 = vmatprep.subr.bf16.mxu0 0
  %3352 = vmatpush1.bf16.msra.mxu0 %v1679
  %3353 = vmatprep.subr.bf16.mxu0 0
  %3354 = vmatpush1.bf16.msra.mxu0 %v1680
  %3355 = vmatprep.subr.bf16.mxu0 0
  %3356 = vmatpush1.bf16.msra.mxu0 %v1681
  %3357 = vmatprep.subr.bf16.mxu0 0
  %3358 = vmatpush1.bf16.msra.mxu0 %v1682
  %3359 = vmatprep.subr.bf16.mxu0 0
  %3360 = vmatpush1.bf16.msra.mxu0 %v1683
  %3361 = vmatprep.subr.bf16.mxu0 0
  %3362 = vmatpush1.bf16.msra.mxu0 %v1684
  %3363 = vmatprep.subr.bf16.mxu0 0
  %3364 = vmatpush1.bf16.msra.mxu0 %v1685
  %3365 = vmatprep.subr.bf16.mxu0 0
  %3366 = vmatpush1.bf16.msra.mxu0 %v1686
  %3367 = vmatprep.subr.bf16.mxu0 0
  %3368 = vmatpush1.bf16.msra.mxu0 %v1687
  %3369 = vmatprep.subr.bf16.mxu0 0
  %3370 = vmatpush1.bf16.msra.mxu0 %v1688
  %3371 = vmatprep.subr.bf16.mxu0 0
  %3372 = vmatpush1.bf16.msra.mxu0 %v1689
  %3373 = vmatprep.subr.bf16.mxu0 0
  %3374 = vmatpush1.bf16.msra.mxu0 %v1690
  %3375 = vmatprep.subr.bf16.mxu0 0
  %3376 = vmatpush1.bf16.msra.mxu0 %v1691
  %3377 = vmatprep.subr.bf16.mxu0 0
  %3378 = vmatpush1.bf16.msra.mxu0 %v1692
  %3379 = vmatprep.subr.bf16.mxu0 0
  %3380 = vmatpush1.bf16.msra.mxu0 %v1693
  %3381 = vmatprep.subr.bf16.mxu0 0
  %3382 = vmatpush1.bf16.msra.mxu0 %v1694
  %3383 = vmatprep.mubr.bf16.mxu0 %v2782
  %3384 = vmatmul.mubr.bf16.gmra.mrb[0].mxu0 %v2781
  %v3385 = vpop.f32.mrb[0].mxu0
  %v3386 = vadd.f32 %v3337, %v3385
  %v3387 = vpop.f32.mrb[0].mxu0
  %v3388 = vpop.f32.mrb[0].mxu0
  %v3389 = vadd.f32 %v3340, %v3388
  %v3390 = vpop.f32.mrb[0].mxu0
  %3391 = vmatprep.mubr.bf16.mxu0 %v2807
  %3392 = vmatmul.mubr.bf16.gmra.mrb[0].mxu0 %v2806
  %v3393 = vpop.f32.mrb[0].mxu0
  %v3394 = vadd.f32 %v3345, %v3393
  %v3395 = vpop.f32.mrb[0].mxu0
  %v3396 = vpop.f32.mrb[0].mxu0
  %v3397 = vadd.f32 %v3348, %v3396
  %v3398 = vpop.f32.mrb[0].mxu0
  %3399 = vdwg.mxu0
  %3400 = vmatprep.subr.bf16.mxu0 0
  %3401 = vmatpush1.bf16.msra.mxu0 %v1695
  %3402 = vmatprep.subr.bf16.mxu0 0
  %3403 = vmatpush1.bf16.msra.mxu0 %v1696
  %3404 = vmatprep.subr.bf16.mxu0 0
  %3405 = vmatpush1.bf16.msra.mxu0 %v1697
  %3406 = vmatprep.subr.bf16.mxu0 0
  %3407 = vmatpush1.bf16.msra.mxu0 %v1698
  %3408 = vmatprep.subr.bf16.mxu0 0
  %3409 = vmatpush1.bf16.msra.mxu0 %v1699
  %3410 = vmatprep.subr.bf16.mxu0 0
  %3411 = vmatpush1.bf16.msra.mxu0 %v1700
  %3412 = vmatprep.subr.bf16.mxu0 0
  %3413 = vmatpush1.bf16.msra.mxu0 %v1701
  %3414 = vmatprep.subr.bf16.mxu0 0
  %3415 = vmatpush1.bf16.msra.mxu0 %v1702
  %3416 = vmatprep.subr.bf16.mxu0 0
  %3417 = vmatpush1.bf16.msra.mxu0 %v1703
  %3418 = vmatprep.subr.bf16.mxu0 0
  %3419 = vmatpush1.bf16.msra.mxu0 %v1704
  %3420 = vmatprep.subr.bf16.mxu0 0
  %3421 = vmatpush1.bf16.msra.mxu0 %v1705
  %3422 = vmatprep.subr.bf16.mxu0 0
  %3423 = vmatpush1.bf16.msra.mxu0 %v1706
  %3424 = vmatprep.subr.bf16.mxu0 0
  %3425 = vmatpush1.bf16.msra.mxu0 %v1707
  %3426 = vmatprep.subr.bf16.mxu0 0
  %3427 = vmatpush1.bf16.msra.mxu0 %v1708
  %3428 = vmatprep.subr.bf16.mxu0 0
  %3429 = vmatpush1.bf16.msra.mxu0 %v1709
  %3430 = vmatprep.subr.bf16.mxu0 0
  %3431 = vmatpush1.bf16.msra.mxu0 %v1710
  %3432 = vmatprep.mubr.bf16.mxu0 %v2784
  %3433 = vmatmul.mubr.bf16.gmra.mrb[0].mxu0 %v2783
  %v3434 = vpop.f32.mrb[0].mxu0
  %v3435 = vadd.f32 %v3386, %v3434
  %v3436 = vpop.f32.mrb[0].mxu0
  %v3437 = vpop.f32.mrb[0].mxu0
  %v3438 = vadd.f32 %v3389, %v3437
  %v3439 = vpop.f32.mrb[0].mxu0
  %3440 = vmatprep.mubr.bf16.mxu0 %v2809
  %3441 = vmatmul.mubr.bf16.gmra.mrb[0].mxu0 %v2808
  %v3442 = vpop.f32.mrb[0].mxu0
  %v3443 = vadd.f32 %v3394, %v3442
  %v3444 = vpop.f32.mrb[0].mxu0
  %v3445 = vpop.f32.mrb[0].mxu0
  %v3446 = vadd.f32 %v3397, %v3445
  %v3447 = vpop.f32.mrb[0].mxu0
  %3448 = vdwg.mxu0
  %3449 = vmatprep.subr.bf16.mxu0 0
  %3450 = vmatpush1.bf16.msra.mxu0 %v1711
  %3451 = vmatprep.subr.bf16.mxu0 0
  %3452 = vmatpush1.bf16.msra.mxu0 %v1712
  %3453 = vmatprep.subr.bf16.mxu0 0
  %3454 = vmatpush1.bf16.msra.mxu0 %v1713
  %3455 = vmatprep.subr.bf16.mxu0 0
  %3456 = vmatpush1.bf16.msra.mxu0 %v1714
  %3457 = vmatprep.subr.bf16.mxu0 0
  %3458 = vmatpush1.bf16.msra.mxu0 %v1715
  %3459 = vmatprep.subr.bf16.mxu0 0
  %3460 = vmatpush1.bf16.msra.mxu0 %v1716
  %3461 = vmatprep.subr.bf16.mxu0 0
  %3462 = vmatpush1.bf16.msra.mxu0 %v1717
  %3463 = vmatprep.subr.bf16.mxu0 0
  %3464 = vmatpush1.bf16.msra.mxu0 %v1718
  %3465 = vmatprep.subr.bf16.mxu0 0
  %3466 = vmatpush1.bf16.msra.mxu0 0
  %3467 = vmatprep.subr.bf16.mxu0 0
  %3468 = vmatpush1.bf16.msra.mxu0 0
  %3469 = vmatprep.subr.bf16.mxu0 0
  %3470 = vmatpush1.bf16.msra.mxu0 0
  %3471 = vmatprep.subr.bf16.mxu0 0
  %3472 = vmatpush1.bf16.msra.mxu0 0
  %3473 = vmatprep.subr.bf16.mxu0 0
  %3474 = vmatpush1.bf16.msra.mxu0 0
  %3475 = vmatprep.subr.bf16.mxu0 0
  %3476 = vmatpush1.bf16.msra.mxu0 0
  %3477 = vmatprep.subr.bf16.mxu0 0
  %3478 = vmatpush1.bf16.msra.mxu0 0
  %3479 = vmatprep.subr.bf16.mxu0 0
  %3480 = vmatpush1.bf16.msra.mxu0 0
  %3481 = vmatprep.mubr.bf16.mxu0 0
  %3482 = vmatmul.mubr.bf16.gmra.mrb[0].mxu0 %v2785
  %v3483 = vpop.f32.mrb[0].mxu0
  %v3484 = vadd.f32 %v3435, %v3483
  %v3485 = vpop.f32.mrb[0].mxu0
  %v3486 = vpop.f32.mrb[0].mxu0
  %v3487 = vadd.f32 %v3438, %v3486
  %v3488 = vpop.f32.mrb[0].mxu0
  %3489 = vmatprep.mubr.bf16.mxu0 0
  %3490 = vmatmul.mubr.bf16.gmra.mrb[0].mxu0 %v2810
  %v3491 = vpop.f32.mrb[0].mxu0
  %v3492 = vadd.f32 %v3443, %v3491
  %v3493 = vpop.f32.mrb[0].mxu0
  %v3494 = vpop.f32.mrb[0].mxu0
  %v3495 = vadd.f32 %v3446, %v3494
  %v3496 = vpop.f32.mrb[0].mxu0
  %3497 = vdwg.mxu0
  %s3498 = scalar_lea.vmem %s0, 800
  %v3499 = vld [vmem:[%s3498] sm:$0xff]
  %v3500 = vld [vmem:[%s3498 + $0x8] sm:$0xff]
  %v3501 = vld [vmem:[%s3498 + $0x10] sm:$0xff]
  %v3502 = vld [vmem:[%s3498 + $0x18] sm:$0xff]
  %v3503 = vld [vmem:[%s3498 + $0x20] sm:$0xff]
  %v3504 = vld [vmem:[%s3498 + $0x28] sm:$0xff]
  %v3505 = vld [vmem:[%s3498 + $0x30] sm:$0xff]
  %v3506 = vld [vmem:[%s3498 + $0x38] sm:$0xff]
  %v3507 = vld [vmem:[%s3498 + $0x40] sm:$0xff]
  %v3508 = vld [vmem:[%s3498 + $0x48] sm:$0xff]
  %v3509 = vld [vmem:[%s3498 + $0x50] sm:$0xff]
  %v3510 = vld [vmem:[%s3498 + $0x58] sm:$0xff]
  %v3511 = vld [vmem:[%s3498 + $0x60] sm:$0xf]
  %v3512 = vld [vmem:[%s3498 + $0x64] sm:$0xff]
  %v3513 = vld [vmem:[%s3498 + $0x6c] sm:$0xff]
  %v3514 = vld [vmem:[%s3498 + $0x74] sm:$0xff]
  %v3515 = vld [vmem:[%s3498 + $0x7c] sm:$0xff]
  %v3516 = vld [vmem:[%s3498 + $0x84] sm:$0xff]
  %v3517 = vld [vmem:[%s3498 + $0x8c] sm:$0xff]
  %v3518 = vld [vmem:[%s3498 + $0x94] sm:$0xff]
  %v3519 = vld [vmem:[%s3498 + $0x9c] sm:$0xff]
  %v3520 = vld [vmem:[%s3498 + $0xa4] sm:$0xff]
  %v3521 = vld [vmem:[%s3498 + $0xac] sm:$0xff]
  %v3522 = vld [vmem:[%s3498 + $0xb4] sm:$0xff]
  %v3523 = vld [vmem:[%s3498 + $0xbc] sm:$0xff]
  %v3524 = vld [vmem:[%s3498 + $0xc4] sm:$0xf]
  %v3525 = vld [vmem:[%s3498 + $0xc8] sm:$0xff]
  %v3526 = vld [vmem:[%s3498 + $0xd0] sm:$0xff]
  %v3527 = vld [vmem:[%s3498 + $0xd8] sm:$0xff]
  %v3528 = vld [vmem:[%s3498 + $0xe0] sm:$0xff]
  %v3529 = vld [vmem:[%s3498 + $0xe8] sm:$0xff]
  %v3530 = vld [vmem:[%s3498 + $0xf0] sm:$0xff]
  %v3531 = vld [vmem:[%s3498 + $0xf8] sm:$0xff]
  %v3532 = vld [vmem:[%s3498 + $0x100] sm:$0xff]
  %v3533 = vld [vmem:[%s3498 + $0x108] sm:$0xff]
  %v3534 = vld [vmem:[%s3498 + $0x110] sm:$0xff]
  %v3535 = vld [vmem:[%s3498 + $0x118] sm:$0xff]
  %v3536 = vld [vmem:[%s3498 + $0x120] sm:$0xff]
  %v3537 = vld [vmem:[%s3498 + $0x128] sm:$0xf]
  %v3538 = vld [vmem:[%s3498 + $0x12c] sm:$0xff]
  %v3539 = vld [vmem:[%s3498 + $0x134] sm:$0xff]
  %v3540 = vld [vmem:[%s3498 + $0x13c] sm:$0xff]
  %v3541 = vld [vmem:[%s3498 + $0x144] sm:$0xff]
  %v3542 = vld [vmem:[%s3498 + $0x14c] sm:$0xff]
  %v3543 = vld [vmem:[%s3498 + $0x154] sm:$0xff]
  %v3544 = vld [vmem:[%s3498 + $0x15c] sm:$0xff]
  %v3545 = vld [vmem:[%s3498 + $0x164] sm:$0xff]
  %v3546 = vld [vmem:[%s3498 + $0x16c] sm:$0xff]
  %v3547 = vld [vmem:[%s3498 + $0x174] sm:$0xff]
  %v3548 = vld [vmem:[%s3498 + $0x17c] sm:$0xff]
  %v3549 = vld [vmem:[%s3498 + $0x184] sm:$0xff]
  %v3550 = vld [vmem:[%s3498 + $0x18c] sm:$0xf]
  %v3603 = vunpack.c.l.b16 %v3499
  %v3604 = vunpack.c.h.b16 %v3499
  %v3605 = vunpack.c.l.b16 %v3500
  %v3606 = vunpack.c.h.b16 %v3500
  %v3607 = vunpack.c.l.b16 %v3501
  %v3608 = vunpack.c.h.b16 %v3501
  %v3609 = vunpack.c.l.b16 %v3502
  %v3610 = vunpack.c.h.b16 %v3502
  %v3611 = vunpack.c.l.b16 %v3503
  %v3612 = vunpack.c.h.b16 %v3503
  %v3613 = vunpack.c.l.b16 %v3504
  %v3614 = vunpack.c.h.b16 %v3504
  %v3615 = vunpack.c.l.b16 %v3505
  %v3616 = vunpack.c.h.b16 %v3505
  %v3617 = vunpack.c.l.b16 %v3506
  %v3618 = vunpack.c.h.b16 %v3506
  %v3619 = vunpack.c.l.b16 %v3507
  %v3620 = vunpack.c.h.b16 %v3507
  %v3621 = vunpack.c.l.b16 %v3508
  %v3622 = vunpack.c.h.b16 %v3508
  %v3623 = vunpack.c.l.b16 %v3509
  %v3624 = vunpack.c.h.b16 %v3509
  %v3625 = vunpack.c.l.b16 %v3510
  %v3626 = vunpack.c.h.b16 %v3510
  %v3627 = vunpack.c.l.b16 %v3511
  %v3628 = vunpack.c.l.b16 %v3512
  %v3629 = vunpack.c.h.b16 %v3512
  %v3630 = vunpack.c.l.b16 %v3513
  %v3631 = vunpack.c.h.b16 %v3513
  %v3632 = vunpack.c.l.b16 %v3514
  %v3633 = vunpack.c.h.b16 %v3514
  %v3634 = vunpack.c.l.b16 %v3515
  %v3635 = vunpack.c.h.b16 %v3515
  %v3636 = vunpack.c.l.b16 %v3516
  %v3637 = vunpack.c.h.b16 %v3516
  %v3638 = vunpack.c.l.b16 %v3517
  %v3639 = vunpack.c.h.b16 %v3517
  %v3640 = vunpack.c.l.b16 %v3518
  %v3641 = vunpack.c.h.b16 %v3518
  %v3642 = vunpack.c.l.b16 %v3519
  %v3643 = vunpack.c.h.b16 %v3519
  %v3644 = vunpack.c.l.b16 %v3520
  %v3645 = vunpack.c.h.b16 %v3520
  %v3646 = vunpack.c.l.b16 %v3521
  %v3647 = vunpack.c.h.b16 %v3521
  %v3648 = vunpack.c.l.b16 %v3522
  %v3649 = vunpack.c.h.b16 %v3522
  %v3650 = vunpack.c.l.b16 %v3523
  %v3651 = vunpack.c.h.b16 %v3523
  %v3652 = vunpack.c.l.b16 %v3524
  %v3653 = vunpack.c.l.b16 %v3525
  %v3654 = vunpack.c.h.b16 %v3525
  %v3655 = vunpack.c.l.b16 %v3526
  %v3656 = vunpack.c.h.b16 %v3526
  %v3657 = vunpack.c.l.b16 %v3527
  %v3658 = vunpack.c.h.b16 %v3527
  %v3659 = vunpack.c.l.b16 %v3528
  %v3660 = vunpack.c.h.b16 %v3528
  %v3661 = vunpack.c.l.b16 %v3529
  %v3662 = vunpack.c.h.b16 %v3529
  %v3663 = vunpack.c.l.b16 %v3530
  %v3664 = vunpack.c.h.b16 %v3530
  %v3665 = vunpack.c.l.b16 %v3531
  %v3666 = vunpack.c.h.b16 %v3531
  %v3667 = vunpack.c.l.b16 %v3532
  %v3668 = vunpack.c.h.b16 %v3532
  %v3669 = vunpack.c.l.b16 %v3533
  %v3670 = vunpack.c.h.b16 %v3533
  %v3671 = vunpack.c.l.b16 %v3534
  %v3672 = vunpack.c.h.b16 %v3534
  %v3673 = vunpack.c.l.b16 %v3535
  %v3674 = vunpack.c.h.b16 %v3535
  %v3675 = vunpack.c.l.b16 %v3536
  %v3676 = vunpack.c.h.b16 %v3536
  %v3677 = vunpack.c.l.b16 %v3537
  %v3678 = vunpack.c.l.b16 %v3538
  %v3679 = vunpack.c.h.b16 %v3538
  %v3680 = vunpack.c.l.b16 %v3539
  %v3681 = vunpack.c.h.b16 %v3539
  %v3682 = vunpack.c.l.b16 %v3540
  %v3683 = vunpack.c.h.b16 %v3540
  %v3684 = vunpack.c.l.b16 %v3541
  %v3685 = vunpack.c.h.b16 %v3541
  %v3686 = vunpack.c.l.b16 %v3542
  %v3687 = vunpack.c.h.b16 %v3542
  %v3688 = vunpack.c.l.b16 %v3543
  %v3689 = vunpack.c.h.b16 %v3543
  %v3690 = vunpack.c.l.b16 %v3544
  %v3691 = vunpack.c.h.b16 %v3544
  %v3692 = vunpack.c.l.b16 %v3545
  %v3693 = vunpack.c.h.b16 %v3545
  %v3694 = vunpack.c.l.b16 %v3546
  %v3695 = vunpack.c.h.b16 %v3546
  %v3696 = vunpack.c.l.b16 %v3547
  %v3697 = vunpack.c.h.b16 %v3547
  %v3698 = vunpack.c.l.b16 %v3548
  %v3699 = vunpack.c.h.b16 %v3548
  %v3700 = vunpack.c.l.b16 %v3549
  %v3701 = vunpack.c.h.b16 %v3549
  %v3702 = vunpack.c.l.b16 %v3550
  %v3703 = vpack.c.b16 %v3628, %v3603
  %v3704 = vpack.c.b16 %v3629, %v3604
  %v3705 = vpack.c.b16 %v3630, %v3605
  %v3706 = vpack.c.b16 %v3631, %v3606
  %v3707 = vpack.c.b16 %v3632, %v3607
  %v3708 = vpack.c.b16 %v3633, %v3608
  %v3709 = vpack.c.b16 %v3634, %v3609
  %v3710 = vpack.c.b16 %v3635, %v3610
  %v3711 = vpack.c.b16 %v3636, %v3611
  %v3712 = vpack.c.b16 %v3637, %v3612
  %v3713 = vpack.c.b16 %v3638, %v3613
  %v3714 = vpack.c.b16 %v3639, %v3614
  %v3715 = vpack.c.b16 %v3640, %v3615
  %v3716 = vpack.c.b16 %v3641, %v3616
  %v3717 = vpack.c.b16 %v3642, %v3617
  %v3718 = vpack.c.b16 %v3643, %v3618
  %v3719 = vpack.c.b16 %v3644, %v3619
  %v3720 = vpack.c.b16 %v3645, %v3620
  %v3721 = vpack.c.b16 %v3646, %v3621
  %v3722 = vpack.c.b16 %v3647, %v3622
  %v3723 = vpack.c.b16 %v3648, %v3623
  %v3724 = vpack.c.b16 %v3649, %v3624
  %v3725 = vpack.c.b16 %v3650, %v3625
  %v3726 = vpack.c.b16 %v3651, %v3626
  %v3727 = vpack.c.b16 %v3652, %v3627
  %v3728 = vpack.c.b16 %v3678, %v3653
  %v3729 = vpack.c.b16 %v3679, %v3654
  %v3730 = vpack.c.b16 %v3680, %v3655
  %v3731 = vpack.c.b16 %v3681, %v3656
  %v3732 = vpack.c.b16 %v3682, %v3657
  %v3733 = vpack.c.b16 %v3683, %v3658
  %v3734 = vpack.c.b16 %v3684, %v3659
  %v3735 = vpack.c.b16 %v3685, %v3660
  %v3736 = vpack.c.b16 %v3686, %v3661
  %v3737 = vpack.c.b16 %v3687, %v3662
  %v3738 = vpack.c.b16 %v3688, %v3663
  %v3739 = vpack.c.b16 %v3689, %v3664
  %v3740 = vpack.c.b16 %v3690, %v3665
  %v3741 = vpack.c.b16 %v3691, %v3666
  %v3742 = vpack.c.b16 %v3692, %v3667
  %v3743 = vpack.c.b16 %v3693, %v3668
  %v3744 = vpack.c.b16 %v3694, %v3669
  %v3745 = vpack.c.b16 %v3695, %v3670
  %v3746 = vpack.c.b16 %v3696, %v3671
  %v3747 = vpack.c.b16 %v3697, %v3672
  %v3748 = vpack.c.b16 %v3698, %v3673
  %v3749 = vpack.c.b16 %v3699, %v3674
  %v3750 = vpack.c.b16 %v3700, %v3675
  %v3751 = vpack.c.b16 %v3701, %v3676
  %v3752 = vpack.c.b16 %v3702, %v3677
  %3803 = vmatprep.subr.bf16.mxu0 0
  %3804 = vmatpush1.bf16.msra.mxu0 %v1519
  %3805 = vmatprep.subr.bf16.mxu0 0
  %3806 = vmatpush1.bf16.msra.mxu0 %v1520
  %3807 = vmatprep.subr.bf16.mxu0 0
  %3808 = vmatpush1.bf16.msra.mxu0 %v1521
  %3809 = vmatprep.subr.bf16.mxu0 0
  %3810 = vmatpush1.bf16.msra.mxu0 %v1522
  %3811 = vmatprep.subr.bf16.mxu0 0
  %3812 = vmatpush1.bf16.msra.mxu0 %v1523
  %3813 = vmatprep.subr.bf16.mxu0 0
  %3814 = vmatpush1.bf16.msra.mxu0 %v1524
  %3815 = vmatprep.subr.bf16.mxu0 0
  %3816 = vmatpush1.bf16.msra.mxu0 %v1525
  %3817 = vmatprep.subr.bf16.mxu0 0
  %3818 = vmatpush1.bf16.msra.mxu0 %v1526
  %3819 = vmatprep.subr.bf16.mxu0 0
  %3820 = vmatpush1.bf16.msra.mxu0 %v1527
  %3821 = vmatprep.subr.bf16.mxu0 0
  %3822 = vmatpush1.bf16.msra.mxu0 %v1528
  %3823 = vmatprep.subr.bf16.mxu0 0
  %3824 = vmatpush1.bf16.msra.mxu0 %v1529
  %3825 = vmatprep.subr.bf16.mxu0 0
  %3826 = vmatpush1.bf16.msra.mxu0 %v1530
  %3827 = vmatprep.subr.bf16.mxu0 0
  %3828 = vmatpush1.bf16.msra.mxu0 %v1531
  %3829 = vmatprep.subr.bf16.mxu0 0
  %3830 = vmatpush1.bf16.msra.mxu0 %v1532
  %3831 = vmatprep.subr.bf16.mxu0 0
  %3832 = vmatpush1.bf16.msra.mxu0 %v1533
  %3833 = vmatprep.subr.bf16.mxu0 0
  %3834 = vmatpush1.bf16.msra.mxu0 %v1534
  %3835 = vmatprep.mubr.bf16.mxu0 %v3704
  %3836 = vmatmul.mubr.bf16.gmra.mrb[0].mxu0 %v3703
  %v3837 = vpop.f32.mrb[0].mxu0
  %v3838 = vadd.f32 0.0, %v3837
  %v3839 = vpop.f32.mrb[0].mxu0
  %v3840 = vpop.f32.mrb[0].mxu0
  %v3841 = vadd.f32 0.0, %v3840
  %v3842 = vpop.f32.mrb[0].mxu0
  %3843 = vmatprep.mubr.bf16.mxu0 %v3729
  %3844 = vmatmul.mubr.bf16.gmra.mrb[0].mxu0 %v3728
  %v3845 = vpop.f32.mrb[0].mxu0
  %v3846 = vadd.f32 0.0, %v3845
  %v3847 = vpop.f32.mrb[0].mxu0
  %v3848 = vpop.f32.mrb[0].mxu0
  %v3849 = vadd.f32 0.0, %v3848
  %v3850 = vpop.f32.mrb[0].mxu0
  %3851 = vdwg.mxu0
  %3852 = vmatprep.subr.bf16.mxu0 0
  %3853 = vmatpush1.bf16.msra.mxu0 %v1535
  %3854 = vmatprep.subr.bf16.mxu0 0
  %3855 = vmatpush1.bf16.msra.mxu0 %v1536
  %3856 = vmatprep.subr.bf16.mxu0 0
  %3857 = vmatpush1.bf16.msra.mxu0 %v1537
  %3858 = vmatprep.subr.bf16.mxu0 0
  %3859 = vmatpush1.bf16.msra.mxu0 %v1538
  %3860 = vmatprep.subr.bf16.mxu0 0
  %3861 = vmatpush1.bf16.msra.mxu0 %v1539
  %3862 = vmatprep.subr.bf16.mxu0 0
  %3863 = vmatpush1.bf16.msra.mxu0 %v1540
  %3864 = vmatprep.subr.bf16.mxu0 0
  %3865 = vmatpush1.bf16.msra.mxu0 %v1541
  %3866 = vmatprep.subr.bf16.mxu0 0
  %3867 = vmatpush1.bf16.msra.mxu0 %v1542
  %3868 = vmatprep.subr.bf16.mxu0 0
  %3869 = vmatpush1.bf16.msra.mxu0 %v1543
  %3870 = vmatprep.subr.bf16.mxu0 0
  %3871 = vmatpush1.bf16.msra.mxu0 %v1544
  %3872 = vmatprep.subr.bf16.mxu0 0
  %3873 = vmatpush1.bf16.msra.mxu0 %v1545
  %3874 = vmatprep.subr.bf16.mxu0 0
  %3875 = vmatpush1.bf16.msra.mxu0 %v1546
  %3876 = vmatprep.subr.bf16.mxu0 0
  %3877 = vmatpush1.bf16.msra.mxu0 %v1547
  %3878 = vmatprep.subr.bf16.mxu0 0
  %3879 = vmatpush1.bf16.msra.mxu0 %v1548
  %3880 = vmatprep.subr.bf16.mxu0 0
  %3881 = vmatpush1.bf16.msra.mxu0 %v1549
  %3882 = vmatprep.subr.bf16.mxu0 0
  %3883 = vmatpush1.bf16.msra.mxu0 %v1550
  %3884 = vmatprep.mubr.bf16.mxu0 %v3706
  %3885 = vmatmul.mubr.bf16.gmra.mrb[0].mxu0 %v3705
  %v3886 = vpop.f32.mrb[0].mxu0
  %v3887 = vadd.f32 %v3838, %v3886
  %v3888 = vpop.f32.mrb[0].mxu0
  %v3889 = vpop.f32.mrb[0].mxu0
  %v3890 = vadd.f32 %v3841, %v3889
  %v3891 = vpop.f32.mrb[0].mxu0
  %3892 = vmatprep.mubr.bf16.mxu0 %v3731
  %3893 = vmatmul.mubr.bf16.gmra.mrb[0].mxu0 %v3730
  %v3894 = vpop.f32.mrb[0].mxu0
  %v3895 = vadd.f32 %v3846, %v3894
  %v3896 = vpop.f32.mrb[0].mxu0
  %v3897 = vpop.f32.mrb[0].mxu0
  %v3898 = vadd.f32 %v3849, %v3897
  %v3899 = vpop.f32.mrb[0].mxu0
  %3900 = vdwg.mxu0
  %3901 = vmatprep.subr.bf16.mxu0 0
  %3902 = vmatpush1.bf16.msra.mxu0 %v1551
  %3903 = vmatprep.subr.bf16.mxu0 0
  %3904 = vmatpush1.bf16.msra.mxu0 %v1552
  %3905 = vmatprep.subr.bf16.mxu0 0
  %3906 = vmatpush1.bf16.msra.mxu0 %v1553
  %3907 = vmatprep.subr.bf16.mxu0 0
  %3908 = vmatpush1.bf16.msra.mxu0 %v1554
  %3909 = vmatprep.subr.bf16.mxu0 0
  %3910 = vmatpush1.bf16.msra.mxu0 %v1555
  %3911 = vmatprep.subr.bf16.mxu0 0
  %3912 = vmatpush1.bf16.msra.mxu0 %v1556
  %3913 = vmatprep.subr.bf16.mxu0 0
  %3914 = vmatpush1.bf16.msra.mxu0 %v1557
  %3915 = vmatprep.subr.bf16.mxu0 0
  %3916 = vmatpush1.bf16.msra.mxu0 %v1558
  %3917 = vmatprep.subr.bf16.mxu0 0
  %3918 = vmatpush1.bf16.msra.mxu0 %v1559
  %3919 = vmatprep.subr.bf16.mxu0 0
  %3920 = vmatpush1.bf16.msra.mxu0 %v1560
  %3921 = vmatprep.subr.bf16.mxu0 0
  %3922 = vmatpush1.bf16.msra.mxu0 %v1561
  %3923 = vmatprep.subr.bf16.mxu0 0
  %3924 = vmatpush1.bf16.msra.mxu0 %v1562
  %3925 = vmatprep.subr.bf16.mxu0 0
  %3926 = vmatpush1.bf16.msra.mxu0 %v1563
  %3927 = vmatprep.subr.bf16.mxu0 0
  %3928 = vmatpush1.bf16.msra.mxu0 %v1564
  %3929 = vmatprep.subr.bf16.mxu0 0
  %3930 = vmatpush1.bf16.msra.mxu0 %v1565
  %3931 = vmatprep.subr.bf16.mxu0 0
  %3932 = vmatpush1.bf16.msra.mxu0 %v1566
  %3933 = vmatprep.mubr.bf16.mxu0 %v3708
  %3934 = vmatmul.mubr.bf16.gmra.mrb[0].mxu0 %v3707
  %v3935 = vpop.f32.mrb[0].mxu0
  %v3936 = vadd.f32 %v3887, %v3935
  %v3937 = vpop.f32.mrb[0].mxu0
  %v3938 = vpop.f32.mrb[0].mxu0
  %v3939 = vadd.f32 %v3890, %v3938
  %v3940 = vpop.f32.mrb[0].mxu0
  %3941 = vmatprep.mubr.bf16.mxu0 %v3733
  %3942 = vmatmul.mubr.bf16.gmra.mrb[0].mxu0 %v3732
  %v3943 = vpop.f32.mrb[0].mxu0
  %v3944 = vadd.f32 %v3895, %v3943
  %v3945 = vpop.f32.mrb[0].mxu0
  %v3946 = vpop.f32.mrb[0].mxu0
  %v3947 = vadd.f32 %v3898, %v3946
  %v3948 = vpop.f32.mrb[0].mxu0
  %3949 = vdwg.mxu0
  %3950 = vmatprep.subr.bf16.mxu0 0
  %3951 = vmatpush1.bf16.msra.mxu0 %v1567
  %3952 = vmatprep.subr.bf16.mxu0 0
  %3953 = vmatpush1.bf16.msra.mxu0 %v1568
  %3954 = vmatprep.subr.bf16.mxu0 0
  %3955 = vmatpush1.bf16.msra.mxu0 %v1569
  %3956 = vmatprep.subr.bf16.mxu0 0
  %3957 = vmatpush1.bf16.msra.mxu0 %v1570
  %3958 = vmatprep.subr.bf16.mxu0 0
  %3959 = vmatpush1.bf16.msra.mxu0 %v1571
  %3960 = vmatprep.subr.bf16.mxu0 0
  %3961 = vmatpush1.bf16.msra.mxu0 %v1572
  %3962 = vmatprep.subr.bf16.mxu0 0
  %3963 = vmatpush1.bf16.msra.mxu0 %v1573
  %3964 = vmatprep.subr.bf16.mxu0 0
  %3965 = vmatpush1.bf16.msra.mxu0 %v1574
  %3966 = vmatprep.subr.bf16.mxu0 0
  %3967 = vmatpush1.bf16.msra.mxu0 %v1575
  %3968 = vmatprep.subr.bf16.mxu0 0
  %3969 = vmatpush1.bf16.msra.mxu0 %v1576
  %3970 = vmatprep.subr.bf16.mxu0 0
  %3971 = vmatpush1.bf16.msra.mxu0 %v1577
  %3972 = vmatprep.subr.bf16.mxu0 0
  %3973 = vmatpush1.bf16.msra.mxu0 %v1578
  %3974 = vmatprep.subr.bf16.mxu0 0
  %3975 = vmatpush1.bf16.msra.mxu0 %v1579
  %3976 = vmatprep.subr.bf16.mxu0 0
  %3977 = vmatpush1.bf16.msra.mxu0 %v1580
  %3978 = vmatprep.subr.bf16.mxu0 0
  %3979 = vmatpush1.bf16.msra.mxu0 %v1581
  %3980 = vmatprep.subr.bf16.mxu0 0
  %3981 = vmatpush1.bf16.msra.mxu0 %v1582
  %3982 = vmatprep.mubr.bf16.mxu0 %v3710
  %3983 = vmatmul.mubr.bf16.gmra.mrb[0].mxu0 %v3709
  %v3984 = vpop.f32.mrb[0].mxu0
  %v3985 = vadd.f32 %v3936, %v3984
  %v3986 = vpop.f32.mrb[0].mxu0
  %v3987 = vpop.f32.mrb[0].mxu0
  %v3988 = vadd.f32 %v3939, %v3987
  %v3989 = vpop.f32.mrb[0].mxu0
  %3990 = vmatprep.mubr.bf16.mxu0 %v3735
  %3991 = vmatmul.mubr.bf16.gmra.mrb[0].mxu0 %v3734
  %v3992 = vpop.f32.mrb[0].mxu0
  %v3993 = vadd.f32 %v3944, %v3992
  %v3994 = vpop.f32.mrb[0].mxu0
  %v3995 = vpop.f32.mrb[0].mxu0
  %v3996 = vadd.f32 %v3947, %v3995
  %v3997 = vpop.f32.mrb[0].mxu0
  %3998 = vdwg.mxu0
  %3999 = vmatprep.subr.bf16.mxu0 0
  %4000 = vmatpush1.bf16.msra.mxu0 %v1583
  %4001 = vmatprep.subr.bf16.mxu0 0
  %4002 = vmatpush1.bf16.msra.mxu0 %v1584
  %4003 = vmatprep.subr.bf16.mxu0 0
  %4004 = vmatpush1.bf16.msra.mxu0 %v1585
  %4005 = vmatprep.subr.bf16.mxu0 0
  %4006 = vmatpush1.bf16.msra.mxu0 %v1586
  %4007 = vmatprep.subr.bf16.mxu0 0
  %4008 = vmatpush1.bf16.msra.mxu0 %v1587
  %4009 = vmatprep.subr.bf16.mxu0 0
  %4010 = vmatpush1.bf16.msra.mxu0 %v1588
  %4011 = vmatprep.subr.bf16.mxu0 0
  %4012 = vmatpush1.bf16.msra.mxu0 %v1589
  %4013 = vmatprep.subr.bf16.mxu0 0
  %4014 = vmatpush1.bf16.msra.mxu0 %v1590
  %4015 = vmatprep.subr.bf16.mxu0 0
  %4016 = vmatpush1.bf16.msra.mxu0 %v1591
  %4017 = vmatprep.subr.bf16.mxu0 0
  %4018 = vmatpush1.bf16.msra.mxu0 %v1592
  %4019 = vmatprep.subr.bf16.mxu0 0
  %4020 = vmatpush1.bf16.msra.mxu0 %v1593
  %4021 = vmatprep.subr.bf16.mxu0 0
  %4022 = vmatpush1.bf16.msra.mxu0 %v1594
  %4023 = vmatprep.subr.bf16.mxu0 0
  %4024 = vmatpush1.bf16.msra.mxu0 %v1595
  %4025 = vmatprep.subr.bf16.mxu0 0
  %4026 = vmatpush1.bf16.msra.mxu0 %v1596
  %4027 = vmatprep.subr.bf16.mxu0 0
  %4028 = vmatpush1.bf16.msra.mxu0 %v1597
  %4029 = vmatprep.subr.bf16.mxu0 0
  %4030 = vmatpush1.bf16.msra.mxu0 %v1598
  %4031 = vmatprep.mubr.bf16.mxu0 %v3712
  %4032 = vmatmul.mubr.bf16.gmra.mrb[0].mxu0 %v3711
  %v4033 = vpop.f32.mrb[0].mxu0
  %v4034 = vadd.f32 %v3985, %v4033
  %v4035 = vpop.f32.mrb[0].mxu0
  %v4036 = vpop.f32.mrb[0].mxu0
  %v4037 = vadd.f32 %v3988, %v4036
  %v4038 = vpop.f32.mrb[0].mxu0
  %4039 = vmatprep.mubr.bf16.mxu0 %v3737
  %4040 = vmatmul.mubr.bf16.gmra.mrb[0].mxu0 %v3736
  %v4041 = vpop.f32.mrb[0].mxu0
  %v4042 = vadd.f32 %v3993, %v4041
  %v4043 = vpop.f32.mrb[0].mxu0
  %v4044 = vpop.f32.mrb[0].mxu0
  %v4045 = vadd.f32 %v3996, %v4044
  %v4046 = vpop.f32.mrb[0].mxu0
  %4047 = vdwg.mxu0
  %4048 = vmatprep.subr.bf16.mxu0 0
  %4049 = vmatpush1.bf16.msra.mxu0 %v1599
  %4050 = vmatprep.subr.bf16.mxu0 0
  %4051 = vmatpush1.bf16.msra.mxu0 %v1600
  %4052 = vmatprep.subr.bf16.mxu0 0
  %4053 = vmatpush1.bf16.msra.mxu0 %v1601
  %4054 = vmatprep.subr.bf16.mxu0 0
  %4055 = vmatpush1.bf16.msra.mxu0 %v1602
  %4056 = vmatprep.subr.bf16.mxu0 0
  %4057 = vmatpush1.bf16.msra.mxu0 %v1603
  %4058 = vmatprep.subr.bf16.mxu0 0
  %4059 = vmatpush1.bf16.msra.mxu0 %v1604
  %4060 = vmatprep.subr.bf16.mxu0 0
  %4061 = vmatpush1.bf16.msra.mxu0 %v1605
  %4062 = vmatprep.subr.bf16.mxu0 0
  %4063 = vmatpush1.bf16.msra.mxu0 %v1606
  %4064 = vmatprep.subr.bf16.mxu0 0
  %4065 = vmatpush1.bf16.msra.mxu0 %v1607
  %4066 = vmatprep.subr.bf16.mxu0 0
  %4067 = vmatpush1.bf16.msra.mxu0 %v1608
  %4068 = vmatprep.subr.bf16.mxu0 0
  %4069 = vmatpush1.bf16.msra.mxu0 %v1609
  %4070 = vmatprep.subr.bf16.mxu0 0
  %4071 = vmatpush1.bf16.msra.mxu0 %v1610
  %4072 = vmatprep.subr.bf16.mxu0 0
  %4073 = vmatpush1.bf16.msra.mxu0 %v1611
  %4074 = vmatprep.subr.bf16.mxu0 0
  %4075 = vmatpush1.bf16.msra.mxu0 %v1612
  %4076 = vmatprep.subr.bf16.mxu0 0
  %4077 = vmatpush1.bf16.msra.mxu0 %v1613
  %4078 = vmatprep.subr.bf16.mxu0 0
  %4079 = vmatpush1.bf16.msra.mxu0 %v1614
  %4080 = vmatprep.mubr.bf16.mxu0 %v3714
  %4081 = vmatmul.mubr.bf16.gmra.mrb[0].mxu0 %v3713
  %v4082 = vpop.f32.mrb[0].mxu0
  %v4083 = vadd.f32 %v4034, %v4082
  %v4084 = vpop.f32.mrb[0].mxu0
  %v4085 = vpop.f32.mrb[0].mxu0
  %v4086 = vadd.f32 %v4037, %v4085
  %v4087 = vpop.f32.mrb[0].mxu0
  %4088 = vmatprep.mubr.bf16.mxu0 %v3739
  %4089 = vmatmul.mubr.bf16.gmra.mrb[0].mxu0 %v3738
  %v4090 = vpop.f32.mrb[0].mxu0
  %v4091 = vadd.f32 %v4042, %v4090
  %v4092 = vpop.f32.mrb[0].mxu0
  %v4093 = vpop.f32.mrb[0].mxu0
  %v4094 = vadd.f32 %v4045, %v4093
  %v4095 = vpop.f32.mrb[0].mxu0
  %4096 = vdwg.mxu0
  %4097 = vmatprep.subr.bf16.mxu0 0
  %4098 = vmatpush1.bf16.msra.mxu0 %v1615
  %4099 = vmatprep.subr.bf16.mxu0 0
  %4100 = vmatpush1.bf16.msra.mxu0 %v1616
  %4101 = vmatprep.subr.bf16.mxu0 0
  %4102 = vmatpush1.bf16.msra.mxu0 %v1617
  %4103 = vmatprep.subr.bf16.mxu0 0
  %4104 = vmatpush1.bf16.msra.mxu0 %v1618
  %4105 = vmatprep.subr.bf16.mxu0 0
  %4106 = vmatpush1.bf16.msra.mxu0 %v1619
  %4107 = vmatprep.subr.bf16.mxu0 0
  %4108 = vmatpush1.bf16.msra.mxu0 %v1620
  %4109 = vmatprep.subr.bf16.mxu0 0
  %4110 = vmatpush1.bf16.msra.mxu0 %v1621
  %4111 = vmatprep.subr.bf16.mxu0 0
  %4112 = vmatpush1.bf16.msra.mxu0 %v1622
  %4113 = vmatprep.subr.bf16.mxu0 0
  %4114 = vmatpush1.bf16.msra.mxu0 %v1623
  %4115 = vmatprep.subr.bf16.mxu0 0
  %4116 = vmatpush1.bf16.msra.mxu0 %v1624
  %4117 = vmatprep.subr.bf16.mxu0 0
  %4118 = vmatpush1.bf16.msra.mxu0 %v1625
  %4119 = vmatprep.subr.bf16.mxu0 0
  %4120 = vmatpush1.bf16.msra.mxu0 %v1626
  %4121 = vmatprep.subr.bf16.mxu0 0
  %4122 = vmatpush1.bf16.msra.mxu0 %v1627
  %4123 = vmatprep.subr.bf16.mxu0 0
  %4124 = vmatpush1.bf16.msra.mxu0 %v1628
  %4125 = vmatprep.subr.bf16.mxu0 0
  %4126 = vmatpush1.bf16.msra.mxu0 %v1629
  %4127 = vmatprep.subr.bf16.mxu0 0
  %4128 = vmatpush1.bf16.msra.mxu0 %v1630
  %4129 = vmatprep.mubr.bf16.mxu0 %v3716
  %4130 = vmatmul.mubr.bf16.gmra.mrb[0].mxu0 %v3715
  %v4131 = vpop.f32.mrb[0].mxu0
  %v4132 = vadd.f32 %v4083, %v4131
  %v4133 = vpop.f32.mrb[0].mxu0
  %v4134 = vpop.f32.mrb[0].mxu0
  %v4135 = vadd.f32 %v4086, %v4134
  %v4136 = vpop.f32.mrb[0].mxu0
  %4137 = vmatprep.mubr.bf16.mxu0 %v3741
  %4138 = vmatmul.mubr.bf16.gmra.mrb[0].mxu0 %v3740
  %v4139 = vpop.f32.mrb[0].mxu0
  %v4140 = vadd.f32 %v4091, %v4139
  %v4141 = vpop.f32.mrb[0].mxu0
  %v4142 = vpop.f32.mrb[0].mxu0
  %v4143 = vadd.f32 %v4094, %v4142
  %v4144 = vpop.f32.mrb[0].mxu0
  %4145 = vdwg.mxu0
  %4146 = vmatprep.subr.bf16.mxu0 0
  %4147 = vmatpush1.bf16.msra.mxu0 %v1631
  %4148 = vmatprep.subr.bf16.mxu0 0
  %4149 = vmatpush1.bf16.msra.mxu0 %v1632
  %4150 = vmatprep.subr.bf16.mxu0 0
  %4151 = vmatpush1.bf16.msra.mxu0 %v1633
  %4152 = vmatprep.subr.bf16.mxu0 0
  %4153 = vmatpush1.bf16.msra.mxu0 %v1634
  %4154 = vmatprep.subr.bf16.mxu0 0
  %4155 = vmatpush1.bf16.msra.mxu0 %v1635
  %4156 = vmatprep.subr.bf16.mxu0 0
  %4157 = vmatpush1.bf16.msra.mxu0 %v1636
  %4158 = vmatprep.subr.bf16.mxu0 0
  %4159 = vmatpush1.bf16.msra.mxu0 %v1637
  %4160 = vmatprep.subr.bf16.mxu0 0
  %4161 = vmatpush1.bf16.msra.mxu0 %v1638
  %4162 = vmatprep.subr.bf16.mxu0 0
  %4163 = vmatpush1.bf16.msra.mxu0 %v1639
  %4164 = vmatprep.subr.bf16.mxu0 0
  %4165 = vmatpush1.bf16.msra.mxu0 %v1640
  %4166 = vmatprep.subr.bf16.mxu0 0
  %4167 = vmatpush1.bf16.msra.mxu0 %v1641
  %4168 = vmatprep.subr.bf16.mxu0 0
  %4169 = vmatpush1.bf16.msra.mxu0 %v1642
  %4170 = vmatprep.subr.bf16.mxu0 0
  %4171 = vmatpush1.bf16.msra.mxu0 %v1643
  %4172 = vmatprep.subr.bf16.mxu0 0
  %4173 = vmatpush1.bf16.msra.mxu0 %v1644
  %4174 = vmatprep.subr.bf16.mxu0 0
  %4175 = vmatpush1.bf16.msra.mxu0 %v1645
  %4176 = vmatprep.subr.bf16.mxu0 0
  %4177 = vmatpush1.bf16.msra.mxu0 %v1646
  %4178 = vmatprep.mubr.bf16.mxu0 %v3718
  %4179 = vmatmul.mubr.bf16.gmra.mrb[0].mxu0 %v3717
  %v4180 = vpop.f32.mrb[0].mxu0
  %v4181 = vadd.f32 %v4132, %v4180
  %v4182 = vpop.f32.mrb[0].mxu0
  %v4183 = vpop.f32.mrb[0].mxu0
  %v4184 = vadd.f32 %v4135, %v4183
  %v4185 = vpop.f32.mrb[0].mxu0
  %4186 = vmatprep.mubr.bf16.mxu0 %v3743
  %4187 = vmatmul.mubr.bf16.gmra.mrb[0].mxu0 %v3742
  %v4188 = vpop.f32.mrb[0].mxu0
  %v4189 = vadd.f32 %v4140, %v4188
  %v4190 = vpop.f32.mrb[0].mxu0
  %v4191 = vpop.f32.mrb[0].mxu0
  %v4192 = vadd.f32 %v4143, %v4191
  %v4193 = vpop.f32.mrb[0].mxu0
  %4194 = vdwg.mxu0
  %4195 = vmatprep.subr.bf16.mxu0 0
  %4196 = vmatpush1.bf16.msra.mxu0 %v1647
  %4197 = vmatprep.subr.bf16.mxu0 0
  %4198 = vmatpush1.bf16.msra.mxu0 %v1648
  %4199 = vmatprep.subr.bf16.mxu0 0
  %4200 = vmatpush1.bf16.msra.mxu0 %v1649
  %4201 = vmatprep.subr.bf16.mxu0 0
  %4202 = vmatpush1.bf16.msra.mxu0 %v1650
  %4203 = vmatprep.subr.bf16.mxu0 0
  %4204 = vmatpush1.bf16.msra.mxu0 %v1651
  %4205 = vmatprep.subr.bf16.mxu0 0
  %4206 = vmatpush1.bf16.msra.mxu0 %v1652
  %4207 = vmatprep.subr.bf16.mxu0 0
  %4208 = vmatpush1.bf16.msra.mxu0 %v1653
  %4209 = vmatprep.subr.bf16.mxu0 0
  %4210 = vmatpush1.bf16.msra.mxu0 %v1654
  %4211 = vmatprep.subr.bf16.mxu0 0
  %4212 = vmatpush1.bf16.msra.mxu0 %v1655
  %4213 = vmatprep.subr.bf16.mxu0 0
  %4214 = vmatpush1.bf16.msra.mxu0 %v1656
  %4215 = vmatprep.subr.bf16.mxu0 0
  %4216 = vmatpush1.bf16.msra.mxu0 %v1657
  %4217 = vmatprep.subr.bf16.mxu0 0
  %4218 = vmatpush1.bf16.msra.mxu0 %v1658
  %4219 = vmatprep.subr.bf16.mxu0 0
  %4220 = vmatpush1.bf16.msra.mxu0 %v1659
  %4221 = vmatprep.subr.bf16.mxu0 0
  %4222 = vmatpush1.bf16.msra.mxu0 %v1660
  %4223 = vmatprep.subr.bf16.mxu0 0
  %4224 = vmatpush1.bf16.msra.mxu0 %v1661
  %4225 = vmatprep.subr.bf16.mxu0 0
  %4226 = vmatpush1.bf16.msra.mxu0 %v1662
  %4227 = vmatprep.mubr.bf16.mxu0 %v3720
  %4228 = vmatmul.mubr.bf16.gmra.mrb[0].mxu0 %v3719
  %v4229 = vpop.f32.mrb[0].mxu0
  %v4230 = vadd.f32 %v4181, %v4229
  %v4231 = vpop.f32.mrb[0].mxu0
  %v4232 = vpop.f32.mrb[0].mxu0
  %v4233 = vadd.f32 %v4184, %v4232
  %v4234 = vpop.f32.mrb[0].mxu0
  %4235 = vmatprep.mubr.bf16.mxu0 %v3745
  %4236 = vmatmul.mubr.bf16.gmra.mrb[0].mxu0 %v3744
  %v4237 = vpop.f32.mrb[0].mxu0
  %v4238 = vadd.f32 %v4189, %v4237
  %v4239 = vpop.f32.mrb[0].mxu0
  %v4240 = vpop.f32.mrb[0].mxu0
  %v4241 = vadd.f32 %v4192, %v4240
  %v4242 = vpop.f32.mrb[0].mxu0
  %4243 = vdwg.mxu0
  %4244 = vmatprep.subr.bf16.mxu0 0
  %4245 = vmatpush1.bf16.msra.mxu0 %v1663
  %4246 = vmatprep.subr.bf16.mxu0 0
  %4247 = vmatpush1.bf16.msra.mxu0 %v1664
  %4248 = vmatprep.subr.bf16.mxu0 0
  %4249 = vmatpush1.bf16.msra.mxu0 %v1665
  %4250 = vmatprep.subr.bf16.mxu0 0
  %4251 = vmatpush1.bf16.msra.mxu0 %v1666
  %4252 = vmatprep.subr.bf16.mxu0 0
  %4253 = vmatpush1.bf16.msra.mxu0 %v1667
  %4254 = vmatprep.subr.bf16.mxu0 0
  %4255 = vmatpush1.bf16.msra.mxu0 %v1668
  %4256 = vmatprep.subr.bf16.mxu0 0
  %4257 = vmatpush1.bf16.msra.mxu0 %v1669
  %4258 = vmatprep.subr.bf16.mxu0 0
  %4259 = vmatpush1.bf16.msra.mxu0 %v1670
  %4260 = vmatprep.subr.bf16.mxu0 0
  %4261 = vmatpush1.bf16.msra.mxu0 %v1671
  %4262 = vmatprep.subr.bf16.mxu0 0
  %4263 = vmatpush1.bf16.msra.mxu0 %v1672
  %4264 = vmatprep.subr.bf16.mxu0 0
  %4265 = vmatpush1.bf16.msra.mxu0 %v1673
  %4266 = vmatprep.subr.bf16.mxu0 0
  %4267 = vmatpush1.bf16.msra.mxu0 %v1674
  %4268 = vmatprep.subr.bf16.mxu0 0
  %4269 = vmatpush1.bf16.msra.mxu0 %v1675
  %4270 = vmatprep.subr.bf16.mxu0 0
  %4271 = vmatpush1.bf16.msra.mxu0 %v1676
  %4272 = vmatprep.subr.bf16.mxu0 0
  %4273 = vmatpush1.bf16.msra.mxu0 %v1677
  %4274 = vmatprep.subr.bf16.mxu0 0
  %4275 = vmatpush1.bf16.msra.mxu0 %v1678
  %4276 = vmatprep.mubr.bf16.mxu0 %v3722
  %4277 = vmatmul.mubr.bf16.gmra.mrb[0].mxu0 %v3721
  %v4278 = vpop.f32.mrb[0].mxu0
  %v4279 = vadd.f32 %v4230, %v4278
  %v4280 = vpop.f32.mrb[0].mxu0
  %v4281 = vpop.f32.mrb[0].mxu0
  %v4282 = vadd.f32 %v4233, %v4281
  %v4283 = vpop.f32.mrb[0].mxu0
  %4284 = vmatprep.mubr.bf16.mxu0 %v3747
  %4285 = vmatmul.mubr.bf16.gmra.mrb[0].mxu0 %v3746
  %v4286 = vpop.f32.mrb[0].mxu0
  %v4287 = vadd.f32 %v4238, %v4286
  %v4288 = vpop.f32.mrb[0].mxu0
  %v4289 = vpop.f32.mrb[0].mxu0
  %v4290 = vadd.f32 %v4241, %v4289
  %v4291 = vpop.f32.mrb[0].mxu0
  %4292 = vdwg.mxu0
  %4293 = vmatprep.subr.bf16.mxu0 0
  %4294 = vmatpush1.bf16.msra.mxu0 %v1679
  %4295 = vmatprep.subr.bf16.mxu0 0
  %4296 = vmatpush1.bf16.msra.mxu0 %v1680
  %4297 = vmatprep.subr.bf16.mxu0 0
  %4298 = vmatpush1.bf16.msra.mxu0 %v1681
  %4299 = vmatprep.subr.bf16.mxu0 0
  %4300 = vmatpush1.bf16.msra.mxu0 %v1682
  %4301 = vmatprep.subr.bf16.mxu0 0
  %4302 = vmatpush1.bf16.msra.mxu0 %v1683
  %4303 = vmatprep.subr.bf16.mxu0 0
  %4304 = vmatpush1.bf16.msra.mxu0 %v1684
  %4305 = vmatprep.subr.bf16.mxu0 0
  %4306 = vmatpush1.bf16.msra.mxu0 %v1685
  %4307 = vmatprep.subr.bf16.mxu0 0
  %4308 = vmatpush1.bf16.msra.mxu0 %v1686
  %4309 = vmatprep.subr.bf16.mxu0 0
  %4310 = vmatpush1.bf16.msra.mxu0 %v1687
  %4311 = vmatprep.subr.bf16.mxu0 0
  %4312 = vmatpush1.bf16.msra.mxu0 %v1688
  %4313 = vmatprep.subr.bf16.mxu0 0
  %4314 = vmatpush1.bf16.msra.mxu0 %v1689
  %4315 = vmatprep.subr.bf16.mxu0 0
  %4316 = vmatpush1.bf16.msra.mxu0 %v1690
  %4317 = vmatprep.subr.bf16.mxu0 0
  %4318 = vmatpush1.bf16.msra.mxu0 %v1691
  %4319 = vmatprep.subr.bf16.mxu0 0
  %4320 = vmatpush1.bf16.msra.mxu0 %v1692
  %4321 = vmatprep.subr.bf16.mxu0 0
  %4322 = vmatpush1.bf16.msra.mxu0 %v1693
  %4323 = vmatprep.subr.bf16.mxu0 0
  %4324 = vmatpush1.bf16.msra.mxu0 %v1694
  %4325 = vmatprep.mubr.bf16.mxu0 %v3724
  %4326 = vmatmul.mubr.bf16.gmra.mrb[0].mxu0 %v3723
  %v4327 = vpop.f32.mrb[0].mxu0
  %v4328 = vadd.f32 %v4279, %v4327
  %v4329 = vpop.f32.mrb[0].mxu0
  %v4330 = vpop.f32.mrb[0].mxu0
  %v4331 = vadd.f32 %v4282, %v4330
  %v4332 = vpop.f32.mrb[0].mxu0
  %4333 = vmatprep.mubr.bf16.mxu0 %v3749
  %4334 = vmatmul.mubr.bf16.gmra.mrb[0].mxu0 %v3748
  %v4335 = vpop.f32.mrb[0].mxu0
  %v4336 = vadd.f32 %v4287, %v4335
  %v4337 = vpop.f32.mrb[0].mxu0
  %v4338 = vpop.f32.mrb[0].mxu0
  %v4339 = vadd.f32 %v4290, %v4338
  %v4340 = vpop.f32.mrb[0].mxu0
  %4341 = vdwg.mxu0
  %4342 = vmatprep.subr.bf16.mxu0 0
  %4343 = vmatpush1.bf16.msra.mxu0 %v1695
  %4344 = vmatprep.subr.bf16.mxu0 0
  %4345 = vmatpush1.bf16.msra.mxu0 %v1696
  %4346 = vmatprep.subr.bf16.mxu0 0
  %4347 = vmatpush1.bf16.msra.mxu0 %v1697
  %4348 = vmatprep.subr.bf16.mxu0 0
  %4349 = vmatpush1.bf16.msra.mxu0 %v1698
  %4350 = vmatprep.subr.bf16.mxu0 0
  %4351 = vmatpush1.bf16.msra.mxu0 %v1699
  %4352 = vmatprep.subr.bf16.mxu0 0
  %4353 = vmatpush1.bf16.msra.mxu0 %v1700
  %4354 = vmatprep.subr.bf16.mxu0 0
  %4355 = vmatpush1.bf16.msra.mxu0 %v1701
  %4356 = vmatprep.subr.bf16.mxu0 0
  %4357 = vmatpush1.bf16.msra.mxu0 %v1702
  %4358 = vmatprep.subr.bf16.mxu0 0
  %4359 = vmatpush1.bf16.msra.mxu0 %v1703
  %4360 = vmatprep.subr.bf16.mxu0 0
  %4361 = vmatpush1.bf16.msra.mxu0 %v1704
  %4362 = vmatprep.subr.bf16.mxu0 0
  %4363 = vmatpush1.bf16.msra.mxu0 %v1705
  %4364 = vmatprep.subr.bf16.mxu0 0
  %4365 = vmatpush1.bf16.msra.mxu0 %v1706
  %4366 = vmatprep.subr.bf16.mxu0 0
  %4367 = vmatpush1.bf16.msra.mxu0 %v1707
  %4368 = vmatprep.subr.bf16.mxu0 0
  %4369 = vmatpush1.bf16.msra.mxu0 %v1708
  %4370 = vmatprep.subr.bf16.mxu0 0
  %4371 = vmatpush1.bf16.msra.mxu0 %v1709
  %4372 = vmatprep.subr.bf16.mxu0 0
  %4373 = vmatpush1.bf16.msra.mxu0 %v1710
  %4374 = vmatprep.mubr.bf16.mxu0 %v3726
  %4375 = vmatmul.mubr.bf16.gmra.mrb[0].mxu0 %v3725
  %v4376 = vpop.f32.mrb[0].mxu0
  %v4377 = vadd.f32 %v4328, %v4376
  %v4378 = vpop.f32.mrb[0].mxu0
  %v4379 = vpop.f32.mrb[0].mxu0
  %v4380 = vadd.f32 %v4331, %v4379
  %v4381 = vpop.f32.mrb[0].mxu0
  %4382 = vmatprep.mubr.bf16.mxu0 %v3751
  %4383 = vmatmul.mubr.bf16.gmra.mrb[0].mxu0 %v3750
  %v4384 = vpop.f32.mrb[0].mxu0
  %v4385 = vadd.f32 %v4336, %v4384
  %v4386 = vpop.f32.mrb[0].mxu0
  %v4387 = vpop.f32.mrb[0].mxu0
  %v4388 = vadd.f32 %v4339, %v4387
  %v4389 = vpop.f32.mrb[0].mxu0
  %4390 = vdwg.mxu0
  %4391 = vmatprep.subr.bf16.mxu0 0
  %4392 = vmatpush1.bf16.msra.mxu0 %v1711
  %4393 = vmatprep.subr.bf16.mxu0 0
  %4394 = vmatpush1.bf16.msra.mxu0 %v1712
  %4395 = vmatprep.subr.bf16.mxu0 0
  %4396 = vmatpush1.bf16.msra.mxu0 %v1713
  %4397 = vmatprep.subr.bf16.mxu0 0
  %4398 = vmatpush1.bf16.msra.mxu0 %v1714
  %4399 = vmatprep.subr.bf16.mxu0 0
  %4400 = vmatpush1.bf16.msra.mxu0 %v1715
  %4401 = vmatprep.subr.bf16.mxu0 0
  %4402 = vmatpush1.bf16.msra.mxu0 %v1716
  %4403 = vmatprep.subr.bf16.mxu0 0
  %4404 = vmatpush1.bf16.msra.mxu0 %v1717
  %4405 = vmatprep.subr.bf16.mxu0 0
  %4406 = vmatpush1.bf16.msra.mxu0 %v1718
  %4407 = vmatprep.subr.bf16.mxu0 0
  %4408 = vmatpush1.bf16.msra.mxu0 0
  %4409 = vmatprep.subr.bf16.mxu0 0
  %4410 = vmatpush1.bf16.msra.mxu0 0
  %4411 = vmatprep.subr.bf16.mxu0 0
  %4412 = vmatpush1.bf16.msra.mxu0 0
  %4413 = vmatprep.subr.bf16.mxu0 0
  %4414 = vmatpush1.bf16.msra.mxu0 0
  %4415 = vmatprep.subr.bf16.mxu0 0
  %4416 = vmatpush1.bf16.msra.mxu0 0
  %4417 = vmatprep.subr.bf16.mxu0 0
  %4418 = vmatpush1.bf16.msra.mxu0 0
  %4419 = vmatprep.subr.bf16.mxu0 0
  %4420 = vmatpush1.bf16.msra.mxu0 0
  %4421 = vmatprep.subr.bf16.mxu0 0
  %4422 = vmatpush1.bf16.msra.mxu0 0
  %4423 = vmatprep.mubr.bf16.mxu0 0
  %4424 = vmatmul.mubr.bf16.gmra.mrb[0].mxu0 %v3727
  %v4425 = vpop.f32.mrb[0].mxu0
  %v4426 = vadd.f32 %v4377, %v4425
  %v4427 = vpop.f32.mrb[0].mxu0
  %v4428 = vpop.f32.mrb[0].mxu0
  %v4429 = vadd.f32 %v4380, %v4428
  %v4430 = vpop.f32.mrb[0].mxu0
  %4431 = vmatprep.mubr.bf16.mxu0 0
  %4432 = vmatmul.mubr.bf16.gmra.mrb[0].mxu0 %v3752
  %v4433 = vpop.f32.mrb[0].mxu0
  %v4434 = vadd.f32 %v4385, %v4433
  %v4435 = vpop.f32.mrb[0].mxu0
  %v4436 = vpop.f32.mrb[0].mxu0
  %v4437 = vadd.f32 %v4388, %v4436
  %v4438 = vpop.f32.mrb[0].mxu0
  %4439 = vdwg.mxu0
  %s4440 = scalar_lea.vmem %s0, 1200
  %v4441 = vld [vmem:[%s4440] sm:$0xff]
  %v4442 = vld [vmem:[%s4440 + $0x8] sm:$0xff]
  %v4443 = vld [vmem:[%s4440 + $0x10] sm:$0xff]
  %v4444 = vld [vmem:[%s4440 + $0x18] sm:$0xff]
  %v4445 = vld [vmem:[%s4440 + $0x20] sm:$0xff]
  %v4446 = vld [vmem:[%s4440 + $0x28] sm:$0xff]
  %v4447 = vld [vmem:[%s4440 + $0x30] sm:$0xff]
  %v4448 = vld [vmem:[%s4440 + $0x38] sm:$0xff]
  %v4449 = vld [vmem:[%s4440 + $0x40] sm:$0xff]
  %v4450 = vld [vmem:[%s4440 + $0x48] sm:$0xff]
  %v4451 = vld [vmem:[%s4440 + $0x50] sm:$0xff]
  %v4452 = vld [vmem:[%s4440 + $0x58] sm:$0xff]
  %v4453 = vld [vmem:[%s4440 + $0x60] sm:$0xf]
  %v4454 = vld [vmem:[%s4440 + $0x64] sm:$0xff]
  %v4455 = vld [vmem:[%s4440 + $0x6c] sm:$0xff]
  %v4456 = vld [vmem:[%s4440 + $0x74] sm:$0xff]
  %v4457 = vld [vmem:[%s4440 + $0x7c] sm:$0xff]
  %v4458 = vld [vmem:[%s4440 + $0x84] sm:$0xff]
  %v4459 = vld [vmem:[%s4440 + $0x8c] sm:$0xff]
  %v4460 = vld [vmem:[%s4440 + $0x94] sm:$0xff]
  %v4461 = vld [vmem:[%s4440 + $0x9c] sm:$0xff]
  %v4462 = vld [vmem:[%s4440 + $0xa4] sm:$0xff]
  %v4463 = vld [vmem:[%s4440 + $0xac] sm:$0xff]
  %v4464 = vld [vmem:[%s4440 + $0xb4] sm:$0xff]
  %v4465 = vld [vmem:[%s4440 + $0xbc] sm:$0xff]
  %v4466 = vld [vmem:[%s4440 + $0xc4] sm:$0xf]
  %v4467 = vld [vmem:[%s4440 + $0xc8] sm:$0xff]
  %v4468 = vld [vmem:[%s4440 + $0xd0] sm:$0xff]
  %v4469 = vld [vmem:[%s4440 + $0xd8] sm:$0xff]
  %v4470 = vld [vmem:[%s4440 + $0xe0] sm:$0xff]
  %v4471 = vld [vmem:[%s4440 + $0xe8] sm:$0xff]
  %v4472 = vld [vmem:[%s4440 + $0xf0] sm:$0xff]
  %v4473 = vld [vmem:[%s4440 + $0xf8] sm:$0xff]
  %v4474 = vld [vmem:[%s4440 + $0x100] sm:$0xff]
  %v4475 = vld [vmem:[%s4440 + $0x108] sm:$0xff]
  %v4476 = vld [vmem:[%s4440 + $0x110] sm:$0xff]
  %v4477 = vld [vmem:[%s4440 + $0x118] sm:$0xff]
  %v4478 = vld [vmem:[%s4440 + $0x120] sm:$0xff]
  %v4479 = vld [vmem:[%s4440 + $0x128] sm:$0xf]
  %v4480 = vld [vmem:[%s4440 + $0x12c] sm:$0xff]
  %v4481 = vld [vmem:[%s4440 + $0x134] sm:$0xff]
  %v4482 = vld [vmem:[%s4440 + $0x13c] sm:$0xff]
  %v4483 = vld [vmem:[%s4440 + $0x144] sm:$0xff]
  %v4484 = vld [vmem:[%s4440 + $0x14c] sm:$0xff]
  %v4485 = vld [vmem:[%s4440 + $0x154] sm:$0xff]
  %v4486 = vld [vmem:[%s4440 + $0x15c] sm:$0xff]
  %v4487 = vld [vmem:[%s4440 + $0x164] sm:$0xff]
  %v4488 = vld [vmem:[%s4440 + $0x16c] sm:$0xff]
  %v4489 = vld [vmem:[%s4440 + $0x174] sm:$0xff]
  %v4490 = vld [vmem:[%s4440 + $0x17c] sm:$0xff]
  %v4491 = vld [vmem:[%s4440 + $0x184] sm:$0xff]
  %v4492 = vld [vmem:[%s4440 + $0x18c] sm:$0xf]
  %v4545 = vunpack.c.l.b16 %v4441
  %v4546 = vunpack.c.h.b16 %v4441
  %v4547 = vunpack.c.l.b16 %v4442
  %v4548 = vunpack.c.h.b16 %v4442
  %v4549 = vunpack.c.l.b16 %v4443
  %v4550 = vunpack.c.h.b16 %v4443
  %v4551 = vunpack.c.l.b16 %v4444
  %v4552 = vunpack.c.h.b16 %v4444
  %v4553 = vunpack.c.l.b16 %v4445
  %v4554 = vunpack.c.h.b16 %v4445
  %v4555 = vunpack.c.l.b16 %v4446
  %v4556 = vunpack.c.h.b16 %v4446
  %v4557 = vunpack.c.l.b16 %v4447
  %v4558 = vunpack.c.h.b16 %v4447
  %v4559 = vunpack.c.l.b16 %v4448
  %v4560 = vunpack.c.h.b16 %v4448
  %v4561 = vunpack.c.l.b16 %v4449
  %v4562 = vunpack.c.h.b16 %v4449
  %v4563 = vunpack.c.l.b16 %v4450
  %v4564 = vunpack.c.h.b16 %v4450
  %v4565 = vunpack.c.l.b16 %v4451
  %v4566 = vunpack.c.h.b16 %v4451
  %v4567 = vunpack.c.l.b16 %v4452
  %v4568 = vunpack.c.h.b16 %v4452
  %v4569 = vunpack.c.l.b16 %v4453
  %v4570 = vunpack.c.l.b16 %v4454
  %v4571 = vunpack.c.h.b16 %v4454
  %v4572 = vunpack.c.l.b16 %v4455
  %v4573 = vunpack.c.h.b16 %v4455
  %v4574 = vunpack.c.l.b16 %v4456
  %v4575 = vunpack.c.h.b16 %v4456
  %v4576 = vunpack.c.l.b16 %v4457
  %v4577 = vunpack.c.h.b16 %v4457
  %v4578 = vunpack.c.l.b16 %v4458
  %v4579 = vunpack.c.h.b16 %v4458
  %v4580 = vunpack.c.l.b16 %v4459
  %v4581 = vunpack.c.h.b16 %v4459
  %v4582 = vunpack.c.l.b16 %v4460
  %v4583 = vunpack.c.h.b16 %v4460
  %v4584 = vunpack.c.l.b16 %v4461
  %v4585 = vunpack.c.h.b16 %v4461
  %v4586 = vunpack.c.l.b16 %v4462
  %v4587 = vunpack.c.h.b16 %v4462
  %v4588 = vunpack.c.l.b16 %v4463
  %v4589 = vunpack.c.h.b16 %v4463
  %v4590 = vunpack.c.l.b16 %v4464
  %v4591 = vunpack.c.h.b16 %v4464
  %v4592 = vunpack.c.l.b16 %v4465
  %v4593 = vunpack.c.h.b16 %v4465
  %v4594 = vunpack.c.l.b16 %v4466
  %v4595 = vunpack.c.l.b16 %v4467
  %v4596 = vunpack.c.h.b16 %v4467
  %v4597 = vunpack.c.l.b16 %v4468
  %v4598 = vunpack.c.h.b16 %v4468
  %v4599 = vunpack.c.l.b16 %v4469
  %v4600 = vunpack.c.h.b16 %v4469
  %v4601 = vunpack.c.l.b16 %v4470
  %v4602 = vunpack.c.h.b16 %v4470
  %v4603 = vunpack.c.l.b16 %v4471
  %v4604 = vunpack.c.h.b16 %v4471
  %v4605 = vunpack.c.l.b16 %v4472
  %v4606 = vunpack.c.h.b16 %v4472
  %v4607 = vunpack.c.l.b16 %v4473
  %v4608 = vunpack.c.h.b16 %v4473
  %v4609 = vunpack.c.l.b16 %v4474
  %v4610 = vunpack.c.h.b16 %v4474
  %v4611 = vunpack.c.l.b16 %v4475
  %v4612 = vunpack.c.h.b16 %v4475
  %v4613 = vunpack.c.l.b16 %v4476
  %v4614 = vunpack.c.h.b16 %v4476
  %v4615 = vunpack.c.l.b16 %v4477
  %v4616 = vunpack.c.h.b16 %v4477
  %v4617 = vunpack.c.l.b16 %v4478
  %v4618 = vunpack.c.h.b16 %v4478
  %v4619 = vunpack.c.l.b16 %v4479
  %v4620 = vunpack.c.l.b16 %v4480
  %v4621 = vunpack.c.h.b16 %v4480
  %v4622 = vunpack.c.l.b16 %v4481
  %v4623 = vunpack.c.h.b16 %v4481
  %v4624 = vunpack.c.l.b16 %v4482
  %v4625 = vunpack.c.h.b16 %v4482
  %v4626 = vunpack.c.l.b16 %v4483
  %v4627 = vunpack.c.h.b16 %v4483
  %v4628 = vunpack.c.l.b16 %v4484
  %v4629 = vunpack.c.h.b16 %v4484
  %v4630 = vunpack.c.l.b16 %v4485
  %v4631 = vunpack.c.h.b16 %v4485
  %v4632 = vunpack.c.l.b16 %v4486
  %v4633 = vunpack.c.h.b16 %v4486
  %v4634 = vunpack.c.l.b16 %v4487
  %v4635 = vunpack.c.h.b16 %v4487
  %v4636 = vunpack.c.l.b16 %v4488
  %v4637 = vunpack.c.h.b16 %v4488
  %v4638 = vunpack.c.l.b16 %v4489
  %v4639 = vunpack.c.h.b16 %v4489
  %v4640 = vunpack.c.l.b16 %v4490
  %v4641 = vunpack.c.h.b16 %v4490
  %v4642 = vunpack.c.l.b16 %v4491
  %v4643 = vunpack.c.h.b16 %v4491
  %v4644 = vunpack.c.l.b16 %v4492
  %v4645 = vpack.c.b16 %v4570, %v4545
  %v4646 = vpack.c.b16 %v4571, %v4546
  %v4647 = vpack.c.b16 %v4572, %v4547
  %v4648 = vpack.c.b16 %v4573, %v4548
  %v4649 = vpack.c.b16 %v4574, %v4549
  %v4650 = vpack.c.b16 %v4575, %v4550
  %v4651 = vpack.c.b16 %v4576, %v4551
  %v4652 = vpack.c.b16 %v4577, %v4552
  %v4653 = vpack.c.b16 %v4578, %v4553
  %v4654 = vpack.c.b16 %v4579, %v4554
  %v4655 = vpack.c.b16 %v4580, %v4555
  %v4656 = vpack.c.b16 %v4581, %v4556
  %v4657 = vpack.c.b16 %v4582, %v4557
  %v4658 = vpack.c.b16 %v4583, %v4558
  %v4659 = vpack.c.b16 %v4584, %v4559
  %v4660 = vpack.c.b16 %v4585, %v4560
  %v4661 = vpack.c.b16 %v4586, %v4561
  %v4662 = vpack.c.b16 %v4587, %v4562
  %v4663 = vpack.c.b16 %v4588, %v4563
  %v4664 = vpack.c.b16 %v4589, %v4564
  %v4665 = vpack.c.b16 %v4590, %v4565
  %v4666 = vpack.c.b16 %v4591, %v4566
  %v4667 = vpack.c.b16 %v4592, %v4567
  %v4668 = vpack.c.b16 %v4593, %v4568
  %v4669 = vpack.c.b16 %v4594, %v4569
  %v4670 = vpack.c.b16 %v4620, %v4595
  %v4671 = vpack.c.b16 %v4621, %v4596
  %v4672 = vpack.c.b16 %v4622, %v4597
  %v4673 = vpack.c.b16 %v4623, %v4598
  %v4674 = vpack.c.b16 %v4624, %v4599
  %v4675 = vpack.c.b16 %v4625, %v4600
  %v4676 = vpack.c.b16 %v4626, %v4601
  %v4677 = vpack.c.b16 %v4627, %v4602
  %v4678 = vpack.c.b16 %v4628, %v4603
  %v4679 = vpack.c.b16 %v4629, %v4604
  %v4680 = vpack.c.b16 %v4630, %v4605
  %v4681 = vpack.c.b16 %v4631, %v4606
  %v4682 = vpack.c.b16 %v4632, %v4607
  %v4683 = vpack.c.b16 %v4633, %v4608
  %v4684 = vpack.c.b16 %v4634, %v4609
  %v4685 = vpack.c.b16 %v4635, %v4610
  %v4686 = vpack.c.b16 %v4636, %v4611
  %v4687 = vpack.c.b16 %v4637, %v4612
  %v4688 = vpack.c.b16 %v4638, %v4613
  %v4689 = vpack.c.b16 %v4639, %v4614
  %v4690 = vpack.c.b16 %v4640, %v4615
  %v4691 = vpack.c.b16 %v4641, %v4616
  %v4692 = vpack.c.b16 %v4642, %v4617
  %v4693 = vpack.c.b16 %v4643, %v4618
  %v4694 = vpack.c.b16 %v4644, %v4619
  %4745 = vmatprep.subr.bf16.mxu0 0
  %4746 = vmatpush1.bf16.msra.mxu0 %v1519
  %4747 = vmatprep.subr.bf16.mxu0 0
  %4748 = vmatpush1.bf16.msra.mxu0 %v1520
  %4749 = vmatprep.subr.bf16.mxu0 0
  %4750 = vmatpush1.bf16.msra.mxu0 %v1521
  %4751 = vmatprep.subr.bf16.mxu0 0
  %4752 = vmatpush1.bf16.msra.mxu0 %v1522
  %4753 = vmatprep.subr.bf16.mxu0 0
  %4754 = vmatpush1.bf16.msra.mxu0 %v1523
  %4755 = vmatprep.subr.bf16.mxu0 0
  %4756 = vmatpush1.bf16.msra.mxu0 %v1524
  %4757 = vmatprep.subr.bf16.mxu0 0
  %4758 = vmatpush1.bf16.msra.mxu0 %v1525
  %4759 = vmatprep.subr.bf16.mxu0 0
  %4760 = vmatpush1.bf16.msra.mxu0 %v1526
  %4761 = vmatprep.subr.bf16.mxu0 0
  %4762 = vmatpush1.bf16.msra.mxu0 %v1527
  %4763 = vmatprep.subr.bf16.mxu0 0
  %4764 = vmatpush1.bf16.msra.mxu0 %v1528
  %4765 = vmatprep.subr.bf16.mxu0 0
  %4766 = vmatpush1.bf16.msra.mxu0 %v1529
  %4767 = vmatprep.subr.bf16.mxu0 0
  %4768 = vmatpush1.bf16.msra.mxu0 %v1530
  %4769 = vmatprep.subr.bf16.mxu0 0
  %4770 = vmatpush1.bf16.msra.mxu0 %v1531
  %4771 = vmatprep.subr.bf16.mxu0 0
  %4772 = vmatpush1.bf16.msra.mxu0 %v1532
  %4773 = vmatprep.subr.bf16.mxu0 0
  %4774 = vmatpush1.bf16.msra.mxu0 %v1533
  %4775 = vmatprep.subr.bf16.mxu0 0
  %4776 = vmatpush1.bf16.msra.mxu0 %v1534
  %4777 = vmatprep.mubr.bf16.mxu0 %v4646
  %4778 = vmatmul.mubr.bf16.gmra.mrb[0].mxu0 %v4645
  %v4779 = vpop.f32.mrb[0].mxu0
  %v4780 = vadd.f32 0.0, %v4779
  %v4781 = vpop.f32.mrb[0].mxu0
  %v4782 = vpop.f32.mrb[0].mxu0
  %v4783 = vadd.f32 0.0, %v4782
  %v4784 = vpop.f32.mrb[0].mxu0
  %4785 = vmatprep.mubr.bf16.mxu0 %v4671
  %4786 = vmatmul.mubr.bf16.gmra.mrb[0].mxu0 %v4670
  %v4787 = vpop.f32.mrb[0].mxu0
  %v4788 = vadd.f32 0.0, %v4787
  %v4789 = vpop.f32.mrb[0].mxu0
  %v4790 = vpop.f32.mrb[0].mxu0
  %v4791 = vadd.f32 0.0, %v4790
  %v4792 = vpop.f32.mrb[0].mxu0
  %4793 = vdwg.mxu0
  %4794 = vmatprep.subr.bf16.mxu0 0
  %4795 = vmatpush1.bf16.msra.mxu0 %v1535
  %4796 = vmatprep.subr.bf16.mxu0 0
  %4797 = vmatpush1.bf16.msra.mxu0 %v1536
  %4798 = vmatprep.subr.bf16.mxu0 0
  %4799 = vmatpush1.bf16.msra.mxu0 %v1537
  %4800 = vmatprep.subr.bf16.mxu0 0
  %4801 = vmatpush1.bf16.msra.mxu0 %v1538
  %4802 = vmatprep.subr.bf16.mxu0 0
  %4803 = vmatpush1.bf16.msra.mxu0 %v1539
  %4804 = vmatprep.subr.bf16.mxu0 0
  %4805 = vmatpush1.bf16.msra.mxu0 %v1540
  %4806 = vmatprep.subr.bf16.mxu0 0
  %4807 = vmatpush1.bf16.msra.mxu0 %v1541
  %4808 = vmatprep.subr.bf16.mxu0 0
  %4809 = vmatpush1.bf16.msra.mxu0 %v1542
  %4810 = vmatprep.subr.bf16.mxu0 0
  %4811 = vmatpush1.bf16.msra.mxu0 %v1543
  %4812 = vmatprep.subr.bf16.mxu0 0
  %4813 = vmatpush1.bf16.msra.mxu0 %v1544
  %4814 = vmatprep.subr.bf16.mxu0 0
  %4815 = vmatpush1.bf16.msra.mxu0 %v1545
  %4816 = vmatprep.subr.bf16.mxu0 0
  %4817 = vmatpush1.bf16.msra.mxu0 %v1546
  %4818 = vmatprep.subr.bf16.mxu0 0
  %4819 = vmatpush1.bf16.msra.mxu0 %v1547
  %4820 = vmatprep.subr.bf16.mxu0 0
  %4821 = vmatpush1.bf16.msra.mxu0 %v1548
  %4822 = vmatprep.subr.bf16.mxu0 0
  %4823 = vmatpush1.bf16.msra.mxu0 %v1549
  %4824 = vmatprep.subr.bf16.mxu0 0
  %4825 = vmatpush1.bf16.msra.mxu0 %v1550
  %4826 = vmatprep.mubr.bf16.mxu0 %v4648
  %4827 = vmatmul.mubr.bf16.gmra.mrb[0].mxu0 %v4647
  %v4828 = vpop.f32.mrb[0].mxu0
  %v4829 = vadd.f32 %v4780, %v4828
  %v4830 = vpop.f32.mrb[0].mxu0
  %v4831 = vpop.f32.mrb[0].mxu0
  %v4832 = vadd.f32 %v4783, %v4831
  %v4833 = vpop.f32.mrb[0].mxu0
  %4834 = vmatprep.mubr.bf16.mxu0 %v4673
  %4835 = vmatmul.mubr.bf16.gmra.mrb[0].mxu0 %v4672
  %v4836 = vpop.f32.mrb[0].mxu0
  %v4837 = vadd.f32 %v4788, %v4836
  %v4838 = vpop.f32.mrb[0].mxu0
  %v4839 = vpop.f32.mrb[0].mxu0
  %v4840 = vadd.f32 %v4791, %v4839
  %v4841 = vpop.f32.mrb[0].mxu0
  %4842 = vdwg.mxu0
  %4843 = vmatprep.subr.bf16.mxu0 0
  %4844 = vmatpush1.bf16.msra.mxu0 %v1551
  %4845 = vmatprep.subr.bf16.mxu0 0
  %4846 = vmatpush1.bf16.msra.mxu0 %v1552
  %4847 = vmatprep.subr.bf16.mxu0 0
  %4848 = vmatpush1.bf16.msra.mxu0 %v1553
  %4849 = vmatprep.subr.bf16.mxu0 0
  %4850 = vmatpush1.bf16.msra.mxu0 %v1554
  %4851 = vmatprep.subr.bf16.mxu0 0
  %4852 = vmatpush1.bf16.msra.mxu0 %v1555
  %4853 = vmatprep.subr.bf16.mxu0 0
  %4854 = vmatpush1.bf16.msra.mxu0 %v1556
  %4855 = vmatprep.subr.bf16.mxu0 0
  %4856 = vmatpush1.bf16.msra.mxu0 %v1557
  %4857 = vmatprep.subr.bf16.mxu0 0
  %4858 = vmatpush1.bf16.msra.mxu0 %v1558
  %4859 = vmatprep.subr.bf16.mxu0 0
  %4860 = vmatpush1.bf16.msra.mxu0 %v1559
  %4861 = vmatprep.subr.bf16.mxu0 0
  %4862 = vmatpush1.bf16.msra.mxu0 %v1560
  %4863 = vmatprep.subr.bf16.mxu0 0
  %4864 = vmatpush1.bf16.msra.mxu0 %v1561
  %4865 = vmatprep.subr.bf16.mxu0 0
  %4866 = vmatpush1.bf16.msra.mxu0 %v1562
  %4867 = vmatprep.subr.bf16.mxu0 0
  %4868 = vmatpush1.bf16.msra.mxu0 %v1563
  %4869 = vmatprep.subr.bf16.mxu0 0
  %4870 = vmatpush1.bf16.msra.mxu0 %v1564
  %4871 = vmatprep.subr.bf16.mxu0 0
  %4872 = vmatpush1.bf16.msra.mxu0 %v1565
  %4873 = vmatprep.subr.bf16.mxu0 0
  %4874 = vmatpush1.bf16.msra.mxu0 %v1566
  %4875 = vmatprep.mubr.bf16.mxu0 %v4650
  %4876 = vmatmul.mubr.bf16.gmra.mrb[0].mxu0 %v4649
  %v4877 = vpop.f32.mrb[0].mxu0
  %v4878 = vadd.f32 %v4829, %v4877
  %v4879 = vpop.f32.mrb[0].mxu0
  %v4880 = vpop.f32.mrb[0].mxu0
  %v4881 = vadd.f32 %v4832, %v4880
  %v4882 = vpop.f32.mrb[0].mxu0
  %4883 = vmatprep.mubr.bf16.mxu0 %v4675
  %4884 = vmatmul.mubr.bf16.gmra.mrb[0].mxu0 %v4674
  %v4885 = vpop.f32.mrb[0].mxu0
  %v4886 = vadd.f32 %v4837, %v4885
  %v4887 = vpop.f32.mrb[0].mxu0
  %v4888 = vpop.f32.mrb[0].mxu0
  %v4889 = vadd.f32 %v4840, %v4888
  %v4890 = vpop.f32.mrb[0].mxu0
  %4891 = vdwg.mxu0
  %4892 = vmatprep.subr.bf16.mxu0 0
  %4893 = vmatpush1.bf16.msra.mxu0 %v1567
  %4894 = vmatprep.subr.bf16.mxu0 0
  %4895 = vmatpush1.bf16.msra.mxu0 %v1568
  %4896 = vmatprep.subr.bf16.mxu0 0
  %4897 = vmatpush1.bf16.msra.mxu0 %v1569
  %4898 = vmatprep.subr.bf16.mxu0 0
  %4899 = vmatpush1.bf16.msra.mxu0 %v1570
  %4900 = vmatprep.subr.bf16.mxu0 0
  %4901 = vmatpush1.bf16.msra.mxu0 %v1571
  %4902 = vmatprep.subr.bf16.mxu0 0
  %4903 = vmatpush1.bf16.msra.mxu0 %v1572
  %4904 = vmatprep.subr.bf16.mxu0 0
  %4905 = vmatpush1.bf16.msra.mxu0 %v1573
  %4906 = vmatprep.subr.bf16.mxu0 0
  %4907 = vmatpush1.bf16.msra.mxu0 %v1574
  %4908 = vmatprep.subr.bf16.mxu0 0
  %4909 = vmatpush1.bf16.msra.mxu0 %v1575
  %4910 = vmatprep.subr.bf16.mxu0 0
  %4911 = vmatpush1.bf16.msra.mxu0 %v1576
  %4912 = vmatprep.subr.bf16.mxu0 0
  %4913 = vmatpush1.bf16.msra.mxu0 %v1577
  %4914 = vmatprep.subr.bf16.mxu0 0
  %4915 = vmatpush1.bf16.msra.mxu0 %v1578
  %4916 = vmatprep.subr.bf16.mxu0 0
  %4917 = vmatpush1.bf16.msra.mxu0 %v1579
  %4918 = vmatprep.subr.bf16.mxu0 0
  %4919 = vmatpush1.bf16.msra.mxu0 %v1580
  %4920 = vmatprep.subr.bf16.mxu0 0
  %4921 = vmatpush1.bf16.msra.mxu0 %v1581
  %4922 = vmatprep.subr.bf16.mxu0 0
  %4923 = vmatpush1.bf16.msra.mxu0 %v1582
  %4924 = vmatprep.mubr.bf16.mxu0 %v4652
  %4925 = vmatmul.mubr.bf16.gmra.mrb[0].mxu0 %v4651
  %v4926 = vpop.f32.mrb[0].mxu0
  %v4927 = vadd.f32 %v4878, %v4926
  %v4928 = vpop.f32.mrb[0].mxu0
  %v4929 = vpop.f32.mrb[0].mxu0
  %v4930 = vadd.f32 %v4881, %v4929
  %v4931 = vpop.f32.mrb[0].mxu0
  %4932 = vmatprep.mubr.bf16.mxu0 %v4677
  %4933 = vmatmul.mubr.bf16.gmra.mrb[0].mxu0 %v4676
  %v4934 = vpop.f32.mrb[0].mxu0
  %v4935 = vadd.f32 %v4886, %v4934
  %v4936 = vpop.f32.mrb[0].mxu0
  %v4937 = vpop.f32.mrb[0].mxu0
  %v4938 = vadd.f32 %v4889, %v4937
  %v4939 = vpop.f32.mrb[0].mxu0
  %4940 = vdwg.mxu0
  %4941 = vmatprep.subr.bf16.mxu0 0
  %4942 = vmatpush1.bf16.msra.mxu0 %v1583
  %4943 = vmatprep.subr.bf16.mxu0 0
  %4944 = vmatpush1.bf16.msra.mxu0 %v1584
  %4945 = vmatprep.subr.bf16.mxu0 0
  %4946 = vmatpush1.bf16.msra.mxu0 %v1585
  %4947 = vmatprep.subr.bf16.mxu0 0
  %4948 = vmatpush1.bf16.msra.mxu0 %v1586
  %4949 = vmatprep.subr.bf16.mxu0 0
  %4950 = vmatpush1.bf16.msra.mxu0 %v1587
  %4951 = vmatprep.subr.bf16.mxu0 0
  %4952 = vmatpush1.bf16.msra.mxu0 %v1588
  %4953 = vmatprep.subr.bf16.mxu0 0
  %4954 = vmatpush1.bf16.msra.mxu0 %v1589
  %4955 = vmatprep.subr.bf16.mxu0 0
  %4956 = vmatpush1.bf16.msra.mxu0 %v1590
  %4957 = vmatprep.subr.bf16.mxu0 0
  %4958 = vmatpush1.bf16.msra.mxu0 %v1591
  %4959 = vmatprep.subr.bf16.mxu0 0
  %4960 = vmatpush1.bf16.msra.mxu0 %v1592
  %4961 = vmatprep.subr.bf16.mxu0 0
  %4962 = vmatpush1.bf16.msra.mxu0 %v1593
  %4963 = vmatprep.subr.bf16.mxu0 0
  %4964 = vmatpush1.bf16.msra.mxu0 %v1594
  %4965 = vmatprep.subr.bf16.mxu0 0
  %4966 = vmatpush1.bf16.msra.mxu0 %v1595
  %4967 = vmatprep.subr.bf16.mxu0 0
  %4968 = vmatpush1.bf16.msra.mxu0 %v1596
  %4969 = vmatprep.subr.bf16.mxu0 0
  %4970 = vmatpush1.bf16.msra.mxu0 %v1597
  %4971 = vmatprep.subr.bf16.mxu0 0
  %4972 = vmatpush1.bf16.msra.mxu0 %v1598
  %4973 = vmatprep.mubr.bf16.mxu0 %v4654
  %4974 = vmatmul.mubr.bf16.gmra.mrb[0].mxu0 %v4653
  %v4975 = vpop.f32.mrb[0].mxu0
  %v4976 = vadd.f32 %v4927, %v4975
  %v4977 = vpop.f32.mrb[0].mxu0
  %v4978 = vpop.f32.mrb[0].mxu0
  %v4979 = vadd.f32 %v4930, %v4978
  %v4980 = vpop.f32.mrb[0].mxu0
  %4981 = vmatprep.mubr.bf16.mxu0 %v4679
  %4982 = vmatmul.mubr.bf16.gmra.mrb[0].mxu0 %v4678
  %v4983 = vpop.f32.mrb[0].mxu0
  %v4984 = vadd.f32 %v4935, %v4983
  %v4985 = vpop.f32.mrb[0].mxu0
  %v4986 = vpop.f32.mrb[0].mxu0
  %v4987 = vadd.f32 %v4938, %v4986
  %v4988 = vpop.f32.mrb[0].mxu0
  %4989 = vdwg.mxu0
  %4990 = vmatprep.subr.bf16.mxu0 0
  %4991 = vmatpush1.bf16.msra.mxu0 %v1599
  %4992 = vmatprep.subr.bf16.mxu0 0
  %4993 = vmatpush1.bf16.msra.mxu0 %v1600
  %4994 = vmatprep.subr.bf16.mxu0 0
  %4995 = vmatpush1.bf16.msra.mxu0 %v1601
  %4996 = vmatprep.subr.bf16.mxu0 0
  %4997 = vmatpush1.bf16.msra.mxu0 %v1602
  %4998 = vmatprep.subr.bf16.mxu0 0
  %4999 = vmatpush1.bf16.msra.mxu0 %v1603
  %5000 = vmatprep.subr.bf16.mxu0 0
  %5001 = vmatpush1.bf16.msra.mxu0 %v1604
  %5002 = vmatprep.subr.bf16.mxu0 0
  %5003 = vmatpush1.bf16.msra.mxu0 %v1605
  %5004 = vmatprep.subr.bf16.mxu0 0
  %5005 = vmatpush1.bf16.msra.mxu0 %v1606
  %5006 = vmatprep.subr.bf16.mxu0 0
  %5007 = vmatpush1.bf16.msra.mxu0 %v1607
  %5008 = vmatprep.subr.bf16.mxu0 0
  %5009 = vmatpush1.bf16.msra.mxu0 %v1608
  %5010 = vmatprep.subr.bf16.mxu0 0
  %5011 = vmatpush1.bf16.msra.mxu0 %v1609
  %5012 = vmatprep.subr.bf16.mxu0 0
  %5013 = vmatpush1.bf16.msra.mxu0 %v1610
  %5014 = vmatprep.subr.bf16.mxu0 0
  %5015 = vmatpush1.bf16.msra.mxu0 %v1611
  %5016 = vmatprep.subr.bf16.mxu0 0
  %5017 = vmatpush1.bf16.msra.mxu0 %v1612
  %5018 = vmatprep.subr.bf16.mxu0 0
  %5019 = vmatpush1.bf16.msra.mxu0 %v1613
  %5020 = vmatprep.subr.bf16.mxu0 0
  %5021 = vmatpush1.bf16.msra.mxu0 %v1614
  %5022 = vmatprep.mubr.bf16.mxu0 %v4656
  %5023 = vmatmul.mubr.bf16.gmra.mrb[0].mxu0 %v4655
  %v5024 = vpop.f32.mrb[0].mxu0
  %v5025 = vadd.f32 %v4976, %v5024
  %v5026 = vpop.f32.mrb[0].mxu0
  %v5027 = vpop.f32.mrb[0].mxu0
  %v5028 = vadd.f32 %v4979, %v5027
  %v5029 = vpop.f32.mrb[0].mxu0
  %5030 = vmatprep.mubr.bf16.mxu0 %v4681
  %5031 = vmatmul.mubr.bf16.gmra.mrb[0].mxu0 %v4680
  %v5032 = vpop.f32.mrb[0].mxu0
  %v5033 = vadd.f32 %v4984, %v5032
  %v5034 = vpop.f32.mrb[0].mxu0
  %v5035 = vpop.f32.mrb[0].mxu0
  %v5036 = vadd.f32 %v4987, %v5035
  %v5037 = vpop.f32.mrb[0].mxu0
  %5038 = vdwg.mxu0
  %5039 = vmatprep.subr.bf16.mxu0 0
  %5040 = vmatpush1.bf16.msra.mxu0 %v1615
  %5041 = vmatprep.subr.bf16.mxu0 0
  %5042 = vmatpush1.bf16.msra.mxu0 %v1616
  %5043 = vmatprep.subr.bf16.mxu0 0
  %5044 = vmatpush1.bf16.msra.mxu0 %v1617
  %5045 = vmatprep.subr.bf16.mxu0 0
  %5046 = vmatpush1.bf16.msra.mxu0 %v1618
  %5047 = vmatprep.subr.bf16.mxu0 0
  %5048 = vmatpush1.bf16.msra.mxu0 %v1619
  %5049 = vmatprep.subr.bf16.mxu0 0
  %5050 = vmatpush1.bf16.msra.mxu0 %v1620
  %5051 = vmatprep.subr.bf16.mxu0 0
  %5052 = vmatpush1.bf16.msra.mxu0 %v1621
  %5053 = vmatprep.subr.bf16.mxu0 0
  %5054 = vmatpush1.bf16.msra.mxu0 %v1622
  %5055 = vmatprep.subr.bf16.mxu0 0
  %5056 = vmatpush1.bf16.msra.mxu0 %v1623
  %5057 = vmatprep.subr.bf16.mxu0 0
  %5058 = vmatpush1.bf16.msra.mxu0 %v1624
  %5059 = vmatprep.subr.bf16.mxu0 0
  %5060 = vmatpush1.bf16.msra.mxu0 %v1625
  %5061 = vmatprep.subr.bf16.mxu0 0
  %5062 = vmatpush1.bf16.msra.mxu0 %v1626
  %5063 = vmatprep.subr.bf16.mxu0 0
  %5064 = vmatpush1.bf16.msra.mxu0 %v1627
  %5065 = vmatprep.subr.bf16.mxu0 0
  %5066 = vmatpush1.bf16.msra.mxu0 %v1628
  %5067 = vmatprep.subr.bf16.mxu0 0
  %5068 = vmatpush1.bf16.msra.mxu0 %v1629
  %5069 = vmatprep.subr.bf16.mxu0 0
  %5070 = vmatpush1.bf16.msra.mxu0 %v1630
  %5071 = vmatprep.mubr.bf16.mxu0 %v4658
  %5072 = vmatmul.mubr.bf16.gmra.mrb[0].mxu0 %v4657
  %v5073 = vpop.f32.mrb[0].mxu0
  %v5074 = vadd.f32 %v5025, %v5073
  %v5075 = vpop.f32.mrb[0].mxu0
  %v5076 = vpop.f32.mrb[0].mxu0
  %v5077 = vadd.f32 %v5028, %v5076
  %v5078 = vpop.f32.mrb[0].mxu0
  %5079 = vmatprep.mubr.bf16.mxu0 %v4683
  %5080 = vmatmul.mubr.bf16.gmra.mrb[0].mxu0 %v4682
  %v5081 = vpop.f32.mrb[0].mxu0
  %v5082 = vadd.f32 %v5033, %v5081
  %v5083 = vpop.f32.mrb[0].mxu0
  %v5084 = vpop.f32.mrb[0].mxu0
  %v5085 = vadd.f32 %v5036, %v5084
  %v5086 = vpop.f32.mrb[0].mxu0
  %5087 = vdwg.mxu0
  %5088 = vmatprep.subr.bf16.mxu0 0
  %5089 = vmatpush1.bf16.msra.mxu0 %v1631
  %5090 = vmatprep.subr.bf16.mxu0 0
  %5091 = vmatpush1.bf16.msra.mxu0 %v1632
  %5092 = vmatprep.subr.bf16.mxu0 0
  %5093 = vmatpush1.bf16.msra.mxu0 %v1633
  %5094 = vmatprep.subr.bf16.mxu0 0
  %5095 = vmatpush1.bf16.msra.mxu0 %v1634
  %5096 = vmatprep.subr.bf16.mxu0 0
  %5097 = vmatpush1.bf16.msra.mxu0 %v1635
  %5098 = vmatprep.subr.bf16.mxu0 0
  %5099 = vmatpush1.bf16.msra.mxu0 %v1636
  %5100 = vmatprep.subr.bf16.mxu0 0
  %5101 = vmatpush1.bf16.msra.mxu0 %v1637
  %5102 = vmatprep.subr.bf16.mxu0 0
  %5103 = vmatpush1.bf16.msra.mxu0 %v1638
  %5104 = vmatprep.subr.bf16.mxu0 0
  %5105 = vmatpush1.bf16.msra.mxu0 %v1639
  %5106 = vmatprep.subr.bf16.mxu0 0
  %5107 = vmatpush1.bf16.msra.mxu0 %v1640
  %5108 = vmatprep.subr.bf16.mxu0 0
  %5109 = vmatpush1.bf16.msra.mxu0 %v1641
  %5110 = vmatprep.subr.bf16.mxu0 0
  %5111 = vmatpush1.bf16.msra.mxu0 %v1642
  %5112 = vmatprep.subr.bf16.mxu0 0
  %5113 = vmatpush1.bf16.msra.mxu0 %v1643
  %5114 = vmatprep.subr.bf16.mxu0 0
  %5115 = vmatpush1.bf16.msra.mxu0 %v1644
  %5116 = vmatprep.subr.bf16.mxu0 0
  %5117 = vmatpush1.bf16.msra.mxu0 %v1645
  %5118 = vmatprep.subr.bf16.mxu0 0
  %5119 = vmatpush1.bf16.msra.mxu0 %v1646
  %5120 = vmatprep.mubr.bf16.mxu0 %v4660
  %5121 = vmatmul.mubr.bf16.gmra.mrb[0].mxu0 %v4659
  %v5122 = vpop.f32.mrb[0].mxu0
  %v5123 = vadd.f32 %v5074, %v5122
  %v5124 = vpop.f32.mrb[0].mxu0
  %v5125 = vpop.f32.mrb[0].mxu0
  %v5126 = vadd.f32 %v5077, %v5125
  %v5127 = vpop.f32.mrb[0].mxu0
  %5128 = vmatprep.mubr.bf16.mxu0 %v4685
  %5129 = vmatmul.mubr.bf16.gmra.mrb[0].mxu0 %v4684
  %v5130 = vpop.f32.mrb[0].mxu0
  %v5131 = vadd.f32 %v5082, %v5130
  %v5132 = vpop.f32.mrb[0].mxu0
  %v5133 = vpop.f32.mrb[0].mxu0
  %v5134 = vadd.f32 %v5085, %v5133
  %v5135 = vpop.f32.mrb[0].mxu0
  %5136 = vdwg.mxu0
  %5137 = vmatprep.subr.bf16.mxu0 0
  %5138 = vmatpush1.bf16.msra.mxu0 %v1647
  %5139 = vmatprep.subr.bf16.mxu0 0
  %5140 = vmatpush1.bf16.msra.mxu0 %v1648
  %5141 = vmatprep.subr.bf16.mxu0 0
  %5142 = vmatpush1.bf16.msra.mxu0 %v1649
  %5143 = vmatprep.subr.bf16.mxu0 0
  %5144 = vmatpush1.bf16.msra.mxu0 %v1650
  %5145 = vmatprep.subr.bf16.mxu0 0
  %5146 = vmatpush1.bf16.msra.mxu0 %v1651
  %5147 = vmatprep.subr.bf16.mxu0 0
  %5148 = vmatpush1.bf16.msra.mxu0 %v1652
  %5149 = vmatprep.subr.bf16.mxu0 0
  %5150 = vmatpush1.bf16.msra.mxu0 %v1653
  %5151 = vmatprep.subr.bf16.mxu0 0
  %5152 = vmatpush1.bf16.msra.mxu0 %v1654
  %5153 = vmatprep.subr.bf16.mxu0 0
  %5154 = vmatpush1.bf16.msra.mxu0 %v1655
  %5155 = vmatprep.subr.bf16.mxu0 0
  %5156 = vmatpush1.bf16.msra.mxu0 %v1656
  %5157 = vmatprep.subr.bf16.mxu0 0
  %5158 = vmatpush1.bf16.msra.mxu0 %v1657
  %5159 = vmatprep.subr.bf16.mxu0 0
  %5160 = vmatpush1.bf16.msra.mxu0 %v1658
  %5161 = vmatprep.subr.bf16.mxu0 0
  %5162 = vmatpush1.bf16.msra.mxu0 %v1659
  %5163 = vmatprep.subr.bf16.mxu0 0
  %5164 = vmatpush1.bf16.msra.mxu0 %v1660
  %5165 = vmatprep.subr.bf16.mxu0 0
  %5166 = vmatpush1.bf16.msra.mxu0 %v1661
  %5167 = vmatprep.subr.bf16.mxu0 0
  %5168 = vmatpush1.bf16.msra.mxu0 %v1662
  %5169 = vmatprep.mubr.bf16.mxu0 %v4662
  %5170 = vmatmul.mubr.bf16.gmra.mrb[0].mxu0 %v4661
  %v5171 = vpop.f32.mrb[0].mxu0
  %v5172 = vadd.f32 %v5123, %v5171
  %v5173 = vpop.f32.mrb[0].mxu0
  %v5174 = vpop.f32.mrb[0].mxu0
  %v5175 = vadd.f32 %v5126, %v5174
  %v5176 = vpop.f32.mrb[0].mxu0
  %5177 = vmatprep.mubr.bf16.mxu0 %v4687
  %5178 = vmatmul.mubr.bf16.gmra.mrb[0].mxu0 %v4686
  %v5179 = vpop.f32.mrb[0].mxu0
  %v5180 = vadd.f32 %v5131, %v5179
  %v5181 = vpop.f32.mrb[0].mxu0
  %v5182 = vpop.f32.mrb[0].mxu0
  %v5183 = vadd.f32 %v5134, %v5182
  %v5184 = vpop.f32.mrb[0].mxu0
  %5185 = vdwg.mxu0
  %5186 = vmatprep.subr.bf16.mxu0 0
  %5187 = vmatpush1.bf16.msra.mxu0 %v1663
  %5188 = vmatprep.subr.bf16.mxu0 0
  %5189 = vmatpush1.bf16.msra.mxu0 %v1664
  %5190 = vmatprep.subr.bf16.mxu0 0
  %5191 = vmatpush1.bf16.msra.mxu0 %v1665
  %5192 = vmatprep.subr.bf16.mxu0 0
  %5193 = vmatpush1.bf16.msra.mxu0 %v1666
  %5194 = vmatprep.subr.bf16.mxu0 0
  %5195 = vmatpush1.bf16.msra.mxu0 %v1667
  %5196 = vmatprep.subr.bf16.mxu0 0
  %5197 = vmatpush1.bf16.msra.mxu0 %v1668
  %5198 = vmatprep.subr.bf16.mxu0 0
  %5199 = vmatpush1.bf16.msra.mxu0 %v1669
  %5200 = vmatprep.subr.bf16.mxu0 0
  %5201 = vmatpush1.bf16.msra.mxu0 %v1670
  %5202 = vmatprep.subr.bf16.mxu0 0
  %5203 = vmatpush1.bf16.msra.mxu0 %v1671
  %5204 = vmatprep.subr.bf16.mxu0 0
  %5205 = vmatpush1.bf16.msra.mxu0 %v1672
  %5206 = vmatprep.subr.bf16.mxu0 0
  %5207 = vmatpush1.bf16.msra.mxu0 %v1673
  %5208 = vmatprep.subr.bf16.mxu0 0
  %5209 = vmatpush1.bf16.msra.mxu0 %v1674
  %5210 = vmatprep.subr.bf16.mxu0 0
  %5211 = vmatpush1.bf16.msra.mxu0 %v1675
  %5212 = vmatprep.subr.bf16.mxu0 0
  %5213 = vmatpush1.bf16.msra.mxu0 %v1676
  %5214 = vmatprep.subr.bf16.mxu0 0
  %5215 = vmatpush1.bf16.msra.mxu0 %v1677
  %5216 = vmatprep.subr.bf16.mxu0 0
  %5217 = vmatpush1.bf16.msra.mxu0 %v1678
  %5218 = vmatprep.mubr.bf16.mxu0 %v4664
  %5219 = vmatmul.mubr.bf16.gmra.mrb[0].mxu0 %v4663
  %v5220 = vpop.f32.mrb[0].mxu0
  %v5221 = vadd.f32 %v5172, %v5220
  %v5222 = vpop.f32.mrb[0].mxu0
  %v5223 = vpop.f32.mrb[0].mxu0
  %v5224 = vadd.f32 %v5175, %v5223
  %v5225 = vpop.f32.mrb[0].mxu0
  %5226 = vmatprep.mubr.bf16.mxu0 %v4689
  %5227 = vmatmul.mubr.bf16.gmra.mrb[0].mxu0 %v4688
  %v5228 = vpop.f32.mrb[0].mxu0
  %v5229 = vadd.f32 %v5180, %v5228
  %v5230 = vpop.f32.mrb[0].mxu0
  %v5231 = vpop.f32.mrb[0].mxu0
  %v5232 = vadd.f32 %v5183, %v5231
  %v5233 = vpop.f32.mrb[0].mxu0
  %5234 = vdwg.mxu0
  %5235 = vmatprep.subr.bf16.mxu0 0
  %5236 = vmatpush1.bf16.msra.mxu0 %v1679
  %5237 = vmatprep.subr.bf16.mxu0 0
  %5238 = vmatpush1.bf16.msra.mxu0 %v1680
  %5239 = vmatprep.subr.bf16.mxu0 0
  %5240 = vmatpush1.bf16.msra.mxu0 %v1681
  %5241 = vmatprep.subr.bf16.mxu0 0
  %5242 = vmatpush1.bf16.msra.mxu0 %v1682
  %5243 = vmatprep.subr.bf16.mxu0 0
  %5244 = vmatpush1.bf16.msra.mxu0 %v1683
  %5245 = vmatprep.subr.bf16.mxu0 0
  %5246 = vmatpush1.bf16.msra.mxu0 %v1684
  %5247 = vmatprep.subr.bf16.mxu0 0
  %5248 = vmatpush1.bf16.msra.mxu0 %v1685
  %5249 = vmatprep.subr.bf16.mxu0 0
  %5250 = vmatpush1.bf16.msra.mxu0 %v1686
  %5251 = vmatprep.subr.bf16.mxu0 0
  %5252 = vmatpush1.bf16.msra.mxu0 %v1687
  %5253 = vmatprep.subr.bf16.mxu0 0
  %5254 = vmatpush1.bf16.msra.mxu0 %v1688
  %5255 = vmatprep.subr.bf16.mxu0 0
  %5256 = vmatpush1.bf16.msra.mxu0 %v1689
  %5257 = vmatprep.subr.bf16.mxu0 0
  %5258 = vmatpush1.bf16.msra.mxu0 %v1690
  %5259 = vmatprep.subr.bf16.mxu0 0
  %5260 = vmatpush1.bf16.msra.mxu0 %v1691
  %5261 = vmatprep.subr.bf16.mxu0 0
  %5262 = vmatpush1.bf16.msra.mxu0 %v1692
  %5263 = vmatprep.subr.bf16.mxu0 0
  %5264 = vmatpush1.bf16.msra.mxu0 %v1693
  %5265 = vmatprep.subr.bf16.mxu0 0
  %5266 = vmatpush1.bf16.msra.mxu0 %v1694
  %5267 = vmatprep.mubr.bf16.mxu0 %v4666
  %5268 = vmatmul.mubr.bf16.gmra.mrb[0].mxu0 %v4665
  %v5269 = vpop.f32.mrb[0].mxu0
  %v5270 = vadd.f32 %v5221, %v5269
  %v5271 = vpop.f32.mrb[0].mxu0
  %v5272 = vpop.f32.mrb[0].mxu0
  %v5273 = vadd.f32 %v5224, %v5272
  %v5274 = vpop.f32.mrb[0].mxu0
  %5275 = vmatprep.mubr.bf16.mxu0 %v4691
  %5276 = vmatmul.mubr.bf16.gmra.mrb[0].mxu0 %v4690
  %v5277 = vpop.f32.mrb[0].mxu0
  %v5278 = vadd.f32 %v5229, %v5277
  %v5279 = vpop.f32.mrb[0].mxu0
  %v5280 = vpop.f32.mrb[0].mxu0
  %v5281 = vadd.f32 %v5232, %v5280
  %v5282 = vpop.f32.mrb[0].mxu0
  %5283 = vdwg.mxu0
  %5284 = vmatprep.subr.bf16.mxu0 0
  %5285 = vmatpush1.bf16.msra.mxu0 %v1695
  %5286 = vmatprep.subr.bf16.mxu0 0
  %5287 = vmatpush1.bf16.msra.mxu0 %v1696
  %5288 = vmatprep.subr.bf16.mxu0 0
  %5289 = vmatpush1.bf16.msra.mxu0 %v1697
  %5290 = vmatprep.subr.bf16.mxu0 0
  %5291 = vmatpush1.bf16.msra.mxu0 %v1698
  %5292 = vmatprep.subr.bf16.mxu0 0
  %5293 = vmatpush1.bf16.msra.mxu0 %v1699
  %5294 = vmatprep.subr.bf16.mxu0 0
  %5295 = vmatpush1.bf16.msra.mxu0 %v1700
  %5296 = vmatprep.subr.bf16.mxu0 0
  %5297 = vmatpush1.bf16.msra.mxu0 %v1701
  %5298 = vmatprep.subr.bf16.mxu0 0
  %5299 = vmatpush1.bf16.msra.mxu0 %v1702
  %5300 = vmatprep.subr.bf16.mxu0 0
  %5301 = vmatpush1.bf16.msra.mxu0 %v1703
  %5302 = vmatprep.subr.bf16.mxu0 0
  %5303 = vmatpush1.bf16.msra.mxu0 %v1704
  %5304 = vmatprep.subr.bf16.mxu0 0
  %5305 = vmatpush1.bf16.msra.mxu0 %v1705
  %5306 = vmatprep.subr.bf16.mxu0 0
  %5307 = vmatpush1.bf16.msra.mxu0 %v1706
  %5308 = vmatprep.subr.bf16.mxu0 0
  %5309 = vmatpush1.bf16.msra.mxu0 %v1707
  %5310 = vmatprep.subr.bf16.mxu0 0
  %5311 = vmatpush1.bf16.msra.mxu0 %v1708
  %5312 = vmatprep.subr.bf16.mxu0 0
  %5313 = vmatpush1.bf16.msra.mxu0 %v1709
  %5314 = vmatprep.subr.bf16.mxu0 0
  %5315 = vmatpush1.bf16.msra.mxu0 %v1710
  %5316 = vmatprep.mubr.bf16.mxu0 %v4668
  %5317 = vmatmul.mubr.bf16.gmra.mrb[0].mxu0 %v4667
  %v5318 = vpop.f32.mrb[0].mxu0
  %v5319 = vadd.f32 %v5270, %v5318
  %v5320 = vpop.f32.mrb[0].mxu0
  %v5321 = vpop.f32.mrb[0].mxu0
  %v5322 = vadd.f32 %v5273, %v5321
  %v5323 = vpop.f32.mrb[0].mxu0
  %5324 = vmatprep.mubr.bf16.mxu0 %v4693
  %5325 = vmatmul.mubr.bf16.gmra.mrb[0].mxu0 %v4692
  %v5326 = vpop.f32.mrb[0].mxu0
  %v5327 = vadd.f32 %v5278, %v5326
  %v5328 = vpop.f32.mrb[0].mxu0
  %v5329 = vpop.f32.mrb[0].mxu0
  %v5330 = vadd.f32 %v5281, %v5329
  %v5331 = vpop.f32.mrb[0].mxu0
  %5332 = vdwg.mxu0
  %5333 = vmatprep.subr.bf16.mxu0 0
  %5334 = vmatpush1.bf16.msra.mxu0 %v1711
  %5335 = vmatprep.subr.bf16.mxu0 0
  %5336 = vmatpush1.bf16.msra.mxu0 %v1712
  %5337 = vmatprep.subr.bf16.mxu0 0
  %5338 = vmatpush1.bf16.msra.mxu0 %v1713
  %5339 = vmatprep.subr.bf16.mxu0 0
  %5340 = vmatpush1.bf16.msra.mxu0 %v1714
  %5341 = vmatprep.subr.bf16.mxu0 0
  %5342 = vmatpush1.bf16.msra.mxu0 %v1715
  %5343 = vmatprep.subr.bf16.mxu0 0
  %5344 = vmatpush1.bf16.msra.mxu0 %v1716
  %5345 = vmatprep.subr.bf16.mxu0 0
  %5346 = vmatpush1.bf16.msra.mxu0 %v1717
  %5347 = vmatprep.subr.bf16.mxu0 0
  %5348 = vmatpush1.bf16.msra.mxu0 %v1718
  %5349 = vmatprep.subr.bf16.mxu0 0
  %5350 = vmatpush1.bf16.msra.mxu0 0
  %5351 = vmatprep.subr.bf16.mxu0 0
  %5352 = vmatpush1.bf16.msra.mxu0 0
  %5353 = vmatprep.subr.bf16.mxu0 0
  %5354 = vmatpush1.bf16.msra.mxu0 0
  %5355 = vmatprep.subr.bf16.mxu0 0
  %5356 = vmatpush1.bf16.msra.mxu0 0
  %5357 = vmatprep.subr.bf16.mxu0 0
  %5358 = vmatpush1.bf16.msra.mxu0 0
  %5359 = vmatprep.subr.bf16.mxu0 0
  %5360 = vmatpush1.bf16.msra.mxu0 0
  %5361 = vmatprep.subr.bf16.mxu0 0
  %5362 = vmatpush1.bf16.msra.mxu0 0
  %5363 = vmatprep.subr.bf16.mxu0 0
  %5364 = vmatpush1.bf16.msra.mxu0 0
  %5365 = vmatprep.mubr.bf16.mxu0 0
  %5366 = vmatmul.mubr.bf16.gmra.mrb[0].mxu0 %v4669
  %v5367 = vpop.f32.mrb[0].mxu0
  %v5368 = vadd.f32 %v5319, %v5367
  %v5369 = vpop.f32.mrb[0].mxu0
  %v5370 = vpop.f32.mrb[0].mxu0
  %v5371 = vadd.f32 %v5322, %v5370
  %v5372 = vpop.f32.mrb[0].mxu0
  %5373 = vmatprep.mubr.bf16.mxu0 0
  %5374 = vmatmul.mubr.bf16.gmra.mrb[0].mxu0 %v4694
  %v5375 = vpop.f32.mrb[0].mxu0
  %v5376 = vadd.f32 %v5327, %v5375
  %v5377 = vpop.f32.mrb[0].mxu0
  %v5378 = vpop.f32.mrb[0].mxu0
  %v5379 = vadd.f32 %v5330, %v5378
  %v5380 = vpop.f32.mrb[0].mxu0
  %5381 = vdwg.mxu0
  %v5382 = vmax.f32 %v2542, %v3484
  %v5383 = vmax.f32 %v2545, %v3487
  %v5384 = vmax.f32 %v2550, %v3492
  %v5385 = vmax.f32 %v2553, %v3495
  %v5386 = vmax.f32 %v4426, %v5368
  %v5387 = vmax.f32 %v4429, %v5371
  %v5388 = vmax.f32 %v4434, %v5376
  %v5389 = vmax.f32 %v4437, %v5379
  %v5390 = vmax.f32 %v5382, %v5386
  %v5391 = vmax.f32 %v5383, %v5387
  %v5392 = vmax.f32 %v5384, %v5388
  %v5393 = vmax.f32 %v5385, %v5389
  %v5394 = vld [vmem:[%s2] sm:$0x1]
  %v5396 = vlaneseq
  %v5397 = vshrl.u32 %v5396, 7
  %v5398 = vsub.s32 0, %v5397
  %v5399 = vrot.slane %v5394, %v5398
  %v5401 = vadd.f32 %v5390, %v5399
  %v5402 = vadd.f32 %v5391, %v5399
  %v5403 = vadd.f32 %v5392, %v5399
  %v5404 = vadd.f32 %v5393, %v5399
  %v5405 = vmax.f32 %v5401, 0.0
  %v5406 = vmax.f32 %v5402, 0.0
  %v5407 = vmax.f32 %v5403, 0.0
  %v5408 = vmax.f32 %v5404, 0.0
  %v5409 = vpack.c.bf16 %v5406, %v5405
  %v5410 = vpack.c.bf16 %v5408, %v5407
  %v5413 = vunpack.c.l.b16 %v5409
  %v5414 = vunpack.c.h.b16 %v5409
  %v5415 = vunpack.c.l.b16 %v5410
  %v5416 = vunpack.c.h.b16 %v5410
  %v5417 = vpack.c.b16 %v5413, %v5413
  %v5418 = vpack.c.b16 %v5414, %v5414
  %v5419 = vpack.c.b16 %v5415, %v5415
  %v5420 = vpack.c.b16 %v5416, %v5416
  %5425 = vst [vmem:[%s3] sm:$0xf] %v5417
  %5426 = vst [vmem:[%s3 + $0x4] sm:$0xf] %v5418
  %5427 = vst [vmem:[%s3 + $0x8] sm:$0xf] %v5419
  %5428 = vst [vmem:[%s3 + $0xc] sm:$0xf] %v5420
  // Predicated region
  $region14: #{cnnet_forward.4} parent=0 // pred_check
    _
  $region15: #{cnnet_forward.4} parent=0 // pred_check_branch
    %5430 = sbr.rel (0) target = $region17
  $region16: #{cnnet_forward.4} parent=0 // pred_region
    _
  $region17: #{cnnet_forward.4} parent=0 // pred_fallthru
    _
  // Predicated region
  $region18: #{cnnet_forward.4} parent=0 // pred_check
    _
  $region19: #{cnnet_forward.4} parent=0 // pred_check_branch
    %5432 = sbr.rel (0) target = $region21
  $region20: #{cnnet_forward.4} parent=0 // pred_region
    _
  $region21: #{cnnet_forward.4} parent=0 // pred_fallthru
    _

</llo_original>
